<compile_context>
chip_gen: v6e
topology: v6e:2x2x1
jax: 0.10.0
libtpu: 0.0.40
codegen_flags: <defaults>
</compile_context>

<pallas_src>
import jax
import jax.numpy as jnp
from jax.experimental import pallas as pl
from jax.experimental.pallas import tpu as pltpu


def _basic_block_kernel(x_ref, w1_ref, w2_ref, b1_ref, b2_ref, o_ref,
                        pad_ref, col_ref, y_ref):
    """One batch element per grid step.

    x_ref  : (1, H*W, Cp) f32   input (NHWC flattened, channels padded to Cp)
    w*_ref : (9*Cp, Cp)   bf16  conv weights (HWIO flattened, BN scale folded)
    b*_ref : (1, Cp)      f32   folded BN shift
    o_ref  : (1, H*W, Cp) f32   output
    pad_ref: (H+2, W+2, Cp) f32 zero-padded conv-input scratch
    col_ref: (H*W, 9*Cp)  bf16  im2col slab
    y_ref  : (H*W, Cp)    f32   conv output (VMEM accumulator)
    """
    HW, Cp = x_ref.shape[1], x_ref.shape[2]
    Hp2, Wp2 = pad_ref.shape[0], pad_ref.shape[1]
    H, W = Hp2 - 2, Wp2 - 2

    # Zero only the 1-pixel border of the pad scratch; the interior is fully
    # overwritten before each conv.  Re-done every step (cheap strips) so the
    # kernel stays correct even if the parallel batch axis is split across
    # TensorCores (per-core scratch).
    zero_row = jnp.zeros((1, Wp2, Cp), jnp.float32)
    zero_col = jnp.zeros((Hp2, 1, Cp), jnp.float32)
    pad_ref[0:1, :, :] = zero_row
    pad_ref[H + 1:H + 2, :, :] = zero_row
    pad_ref[:, 0:1, :] = zero_col
    pad_ref[:, W + 1:W + 2, :] = zero_col

    def conv3x3(w_ref):
        # Build the (H*W, 9*Cp) im2col slab: 9 lane-aligned stores, one per tap.
        for kh in range(3):
            for kw in range(3):
                t = kh * 3 + kw
                patch = pad_ref[kh:kh + H, kw:kw + W, :]          # (H, W, Cp) f32
                col_ref[:, t * Cp:(t + 1) * Cp] = (
                    patch.reshape(H * W, Cp).astype(jnp.bfloat16))
        # Single MXU matmul: (H*W, 9*Cp) x (9*Cp, Cp), bf16 in, f32 accumulate.
        y_ref[...] = jnp.dot(col_ref[...], w_ref[...],
                             preferred_element_type=jnp.float32)

    # conv1 (BN1 scale folded into w1) -> shift -> ReLU
    pad_ref[1:H + 1, 1:W + 1, :] = x_ref[0].reshape(H, W, Cp)
    conv3x3(w1_ref)
    h1 = jnp.maximum(y_ref[...] + b1_ref[0], 0.0)

    # conv2 (BN2 scale folded into w2) -> shift -> residual add -> ReLU
    pad_ref[1:H + 1, 1:W + 1, :] = h1.reshape(H, W, Cp)
    conv3x3(w2_ref)
    # Re-read x here (short live range) for the identity residual.
    o_ref[0] = jnp.maximum(y_ref[...] + b2_ref[0] + x_ref[0], 0.0)


def basic_block_forward(x_nchw, w1_oihw, w2_oihw, bn1, bn2, eps=1e-5):
    """x_nchw: (N, C, H, W) f32.  bn* = (gamma, beta, running_mean, running_var)."""
    N, C, H, W = x_nchw.shape
    assert w1_oihw.shape == (C, C, 3, 3) and w2_oihw.shape == (C, C, 3, 3)
    Cp = ((C + 127) // 128) * 128            # lane-dense channel padding

    def fold_bn(gamma, beta, mean, var):
        scale = (gamma / jnp.sqrt(var + eps)).astype(jnp.float32)
        shift = (beta - mean * scale).astype(jnp.float32)
        return scale, shift

    s1, b1 = fold_bn(*bn1)
    s2, b2 = fold_bn(*bn2)

    def prep_w(w_oihw, scale):
        # OIHW -> HWIO, fold BN scale over Cout, pad channels, flatten to
        # (9*Cp, Cp) with row index = (kh*3+kw)*Cp + ci (matches im2col slab),
        # and cast ONCE to bf16 for the MXU.
        w = jnp.transpose(w_oihw, (2, 3, 1, 0)).astype(jnp.float32)   # (3,3,Ci,Co)
        w = w * scale[None, None, None, :]
        w = jnp.pad(w, ((0, 0), (0, 0), (0, Cp - C), (0, Cp - C)))
        return w.reshape(9 * Cp, Cp).astype(jnp.bfloat16)

    w1 = prep_w(w1_oihw, s1)
    w2 = prep_w(w2_oihw, s2)
    b1p = jnp.pad(b1, (0, Cp - C)).reshape(1, Cp)
    b2p = jnp.pad(b2, (0, Cp - C)).reshape(1, Cp)

    x_nhwc = jnp.transpose(x_nchw, (0, 2, 3, 1)).astype(jnp.float32)
    x_flat = jnp.pad(x_nhwc, ((0, 0), (0, 0), (0, 0), (0, Cp - C))
                     ).reshape(N, H * W, Cp)

    HW = H * W
    out_flat = pl.pallas_call(
        _basic_block_kernel,
        out_shape=jax.ShapeDtypeStruct((N, HW, Cp), jnp.float32),
        grid_spec=pltpu.PrefetchScalarGridSpec(
            num_scalar_prefetch=0,
            grid=(N,),
            in_specs=[
                pl.BlockSpec((1, HW, Cp), lambda n: (n, 0, 0)),   # x
                pl.BlockSpec((9 * Cp, Cp), lambda n: (0, 0)),     # w1 (const)
                pl.BlockSpec((9 * Cp, Cp), lambda n: (0, 0)),     # w2 (const)
                pl.BlockSpec((1, Cp), lambda n: (0, 0)),          # bn1 shift
                pl.BlockSpec((1, Cp), lambda n: (0, 0)),          # bn2 shift
            ],
            out_specs=pl.BlockSpec((1, HW, Cp), lambda n: (n, 0, 0)),
            scratch_shapes=[
                pltpu.VMEM((H + 2, W + 2, Cp), jnp.float32),      # padded input
                pltpu.VMEM((HW, 9 * Cp), jnp.bfloat16),           # im2col slab
                pltpu.VMEM((HW, Cp), jnp.float32),                # conv output
            ],
        ),
        compiler_params=pltpu.CompilerParams(
            dimension_semantics=("parallel",),
            vmem_limit_bytes=64 * 1024 * 1024,
        ),
    )(x_flat, w1, w2, b1p, b2p)

    out = out_flat.reshape(N, H, W, Cp)[..., :C]
    return jnp.transpose(out, (0, 3, 1, 2))    # back to NCHW


def _reference(x_nchw, w1, w2, bn1, bn2, eps=1e-5):
    def conv(x, w):
        return jax.lax.conv_general_dilated(
            x, w, window_strides=(1, 1), padding=((1, 1), (1, 1)),
            dimension_numbers=("NCHW", "OIHW", "NCHW"))

    def bn(x, p):
        g, b, m, v = p
        return ((x - m[None, :, None, None]) / jnp.sqrt(v[None, :, None, None] + eps)
                * g[None, :, None, None] + b[None, :, None, None])

    out = jax.nn.relu(bn(conv(x_nchw, w1), bn1))
    out = bn(conv(out, w2), bn2)
    return jax.nn.relu(out + x_nchw)


if __name__ == "__main__":
    # Small shapes: inplanes = planes = 4 (identity residual requires equal
    # channels), batch=2, spatial=16x16.
    N, C, H, W = 2, 4, 16, 16
    key = jax.random.PRNGKey(0)
    k = jax.random.split(key, 9)

    x = jax.random.normal(k[0], (N, C, H, W), jnp.float32)
    w1 = jax.random.normal(k[1], (C, C, 3, 3), jnp.float32) * 0.1   # conv1.weight (OIHW)
    w2 = jax.random.normal(k[2], (C, C, 3, 3), jnp.float32) * 0.1   # conv2.weight (OIHW)

    # BatchNorm parameters / running stats (inference-mode BN).
    bn1 = (jax.random.normal(k[3], (C,)) * 0.1 + 1.0,   # gamma
           jax.random.normal(k[4], (C,)) * 0.1,         # beta
           jax.random.normal(k[5], (C,)) * 0.1,         # running_mean
           jax.random.uniform(k[6], (C,)) + 0.5)        # running_var > 0
    bn2 = (jax.random.normal(k[7], (C,)) * 0.1 + 1.0,
           jax.random.normal(k[8], (C,)) * 0.1,
           jnp.zeros((C,), jnp.float32),
           jnp.ones((C,), jnp.float32))

    out = basic_block_forward(x, w1, w2, bn1, bn2)
    out = jax.block_until_ready(out)

    ref = _reference(x, w1, w2, bn1, bn2)
    assert out.shape == (N, C, H, W)
    # bf16 MXU operands (f32 accumulation) -> tolerance loosened vs the pure-f32
    # reference; structural errors would still be O(1) and caught here.
    assert jnp.allclose(out, ref, atol=5e-2, rtol=5e-2), "mismatch vs reference"

    print("KERNEL_OK")
</pallas_src>

<mosaic_0001>
module attributes {stable_mosaic.version = 11 : i64} {
  func.func @_basic_block_kernel(%arg0: i32, %arg1: memref<1x256x128xf32, #tpu.memory_space<vmem>>, %arg2: memref<1152x128xbf16, #tpu.memory_space<vmem>>, %arg3: memref<1152x128xbf16, #tpu.memory_space<vmem>>, %arg4: memref<1x128xf32, #tpu.memory_space<vmem>>, %arg5: memref<1x128xf32, #tpu.memory_space<vmem>>, %arg6: memref<1x256x128xf32, #tpu.memory_space<vmem>>, %arg7: memref<18x18x128xf32, #tpu.memory_space<vmem>>, %arg8: memref<256x1152xbf16, #tpu.memory_space<vmem>>, %arg9: memref<256x128xf32, #tpu.memory_space<vmem>>) attributes {dimension_semantics = [#tpu.dimension_semantics<parallel>], iteration_bounds = array<i64: 2>, scalar_prefetch = 0 : i64, scratch_operands = 3 : i64, tpu.core_type = #tpu.core_type<tc>, window_params = [{transform_indices = @transform_0, window_bounds = array<i64: 1, 256, 128>}, {pipeline_mode = #tpu.pipeline_mode<synchronous>, transform_indices = @transform_1, window_bounds = array<i64: 1152, 128>}, {pipeline_mode = #tpu.pipeline_mode<synchronous>, transform_indices = @transform_2, window_bounds = array<i64: 1152, 128>}, {pipeline_mode = #tpu.pipeline_mode<synchronous>, transform_indices = @transform_3, window_bounds = array<i64: 1, 128>}, {pipeline_mode = #tpu.pipeline_mode<synchronous>, transform_indices = @transform_4, window_bounds = array<i64: 1, 128>}, {transform_indices = @transform_5, window_bounds = array<i64: 1, 256, 128>}]} {
    %cst = arith.constant 0.000000e+00 : f32
    %0 = vector.broadcast %cst : f32 to vector<1x18x128xf32>
    %cst_0 = arith.constant 0.000000e+00 : f32
    %1 = vector.broadcast %cst_0 : f32 to vector<18x1x128xf32>
    %c0 = arith.constant 0 : index
    %c0_1 = arith.constant 0 : index
    %c0_2 = arith.constant 0 : index
    %2 = vector.load %arg7[%c0, %c0_1, %c0_2] : memref<18x18x128xf32, #tpu.memory_space<vmem>>, vector<1x18x128xf32>
    tpu.vector_store %arg7[%c0, %c0_1, %c0_2], %0 {strides = array<i32>} : memref<18x18x128xf32, #tpu.memory_space<vmem>>, vector<1x18x128xf32>,
    %c17 = arith.constant 17 : index
    %c0_3 = arith.constant 0 : index
    %c0_4 = arith.constant 0 : index
    %3 = vector.load %arg7[%c17, %c0_3, %c0_4] : memref<18x18x128xf32, #tpu.memory_space<vmem>>, vector<1x18x128xf32>
    tpu.vector_store %arg7[%c17, %c0_3, %c0_4], %0 {strides = array<i32>} : memref<18x18x128xf32, #tpu.memory_space<vmem>>, vector<1x18x128xf32>,
    %c0_5 = arith.constant 0 : index
    %c0_6 = arith.constant 0 : index
    %c0_7 = arith.constant 0 : index
    %4 = vector.load %arg7[%c0_5, %c0_6, %c0_7] : memref<18x18x128xf32, #tpu.memory_space<vmem>>, vector<18x1x128xf32>
    tpu.vector_store %arg7[%c0_5, %c0_6, %c0_7], %1 {strides = array<i32>} : memref<18x18x128xf32, #tpu.memory_space<vmem>>, vector<18x1x128xf32>,
    %c0_8 = arith.constant 0 : index
    %c17_9 = arith.constant 17 : index
    %c0_10 = arith.constant 0 : index
    %5 = vector.load %arg7[%c0_8, %c17_9, %c0_10] : memref<18x18x128xf32, #tpu.memory_space<vmem>>, vector<18x1x128xf32>
    tpu.vector_store %arg7[%c0_8, %c17_9, %c0_10], %1 {strides = array<i32>} : memref<18x18x128xf32, #tpu.memory_space<vmem>>, vector<18x1x128xf32>,
    %c0_11 = arith.constant 0 : index
    %c0_12 = arith.constant 0 : index
    %c0_13 = arith.constant 0 : index
    %6 = vector.load %arg1[%c0_11, %c0_12, %c0_13] : memref<1x256x128xf32, #tpu.memory_space<vmem>>, vector<1x256x128xf32>
    %7 = vector.shape_cast %6 : vector<1x256x128xf32> to vector<256x128xf32>
    %8 = vector.shape_cast %7 : vector<256x128xf32> to vector<16x16x128xf32>
    %c1 = arith.constant 1 : index
    %c1_14 = arith.constant 1 : index
    %c0_15 = arith.constant 0 : index
    %9 = vector.load %arg7[%c1, %c1_14, %c0_15] : memref<18x18x128xf32, #tpu.memory_space<vmem>>, vector<16x16x128xf32>
    tpu.vector_store %arg7[%c1, %c1_14, %c0_15], %8 {strides = array<i32>} : memref<18x18x128xf32, #tpu.memory_space<vmem>>, vector<16x16x128xf32>,
    %c0_16 = arith.constant 0 : index
    %c0_17 = arith.constant 0 : index
    %c0_18 = arith.constant 0 : index
    %10 = vector.load %arg7[%c0_16, %c0_17, %c0_18] : memref<18x18x128xf32, #tpu.memory_space<vmem>>, vector<16x16x128xf32>
    %11 = vector.shape_cast %10 : vector<16x16x128xf32> to vector<256x128xf32>
    %12 = arith.truncf %11 : vector<256x128xf32> to vector<256x128xbf16>
    %c0_19 = arith.constant 0 : index
    %c0_20 = arith.constant 0 : index
    %13 = vector.load %arg8[%c0_19, %c0_20] : memref<256x1152xbf16, #tpu.memory_space<vmem>>, vector<256x128xbf16>
    tpu.vector_store %arg8[%c0_19, %c0_20], %12 {strides = array<i32>} : memref<256x1152xbf16, #tpu.memory_space<vmem>>, vector<256x128xbf16>,
    %c0_21 = arith.constant 0 : index
    %c1_22 = arith.constant 1 : index
    %c0_23 = arith.constant 0 : index
    %14 = vector.load %arg7[%c0_21, %c1_22, %c0_23] : memref<18x18x128xf32, #tpu.memory_space<vmem>>, vector<16x16x128xf32>
    %15 = vector.shape_cast %14 : vector<16x16x128xf32> to vector<256x128xf32>
    %16 = arith.truncf %15 : vector<256x128xf32> to vector<256x128xbf16>
    %c0_24 = arith.constant 0 : index
    %c128 = arith.constant 128 : index
    %17 = vector.load %arg8[%c0_24, %c128] : memref<256x1152xbf16, #tpu.memory_space<vmem>>, vector<256x128xbf16>
    tpu.vector_store %arg8[%c0_24, %c128], %16 {strides = array<i32>} : memref<256x1152xbf16, #tpu.memory_space<vmem>>, vector<256x128xbf16>,
    %c0_25 = arith.constant 0 : index
    %c2 = arith.constant 2 : index
    %c0_26 = arith.constant 0 : index
    %18 = vector.load %arg7[%c0_25, %c2, %c0_26] : memref<18x18x128xf32, #tpu.memory_space<vmem>>, vector<16x16x128xf32>
    %19 = vector.shape_cast %18 : vector<16x16x128xf32> to vector<256x128xf32>
    %20 = arith.truncf %19 : vector<256x128xf32> to vector<256x128xbf16>
    %c0_27 = arith.constant 0 : index
    %c256 = arith.constant 256 : index
    %21 = vector.load %arg8[%c0_27, %c256] : memref<256x1152xbf16, #tpu.memory_space<vmem>>, vector<256x128xbf16>
    tpu.vector_store %arg8[%c0_27, %c256], %20 {strides = array<i32>} : memref<256x1152xbf16, #tpu.memory_space<vmem>>, vector<256x128xbf16>,
    %c1_28 = arith.constant 1 : index
    %c0_29 = arith.constant 0 : index
    %c0_30 = arith.constant 0 : index
    %22 = vector.load %arg7[%c1_28, %c0_29, %c0_30] : memref<18x18x128xf32, #tpu.memory_space<vmem>>, vector<16x16x128xf32>
    %23 = vector.shape_cast %22 : vector<16x16x128xf32> to vector<256x128xf32>
    %24 = arith.truncf %23 : vector<256x128xf32> to vector<256x128xbf16>
    %c0_31 = arith.constant 0 : index
    %c384 = arith.constant 384 : index
    %25 = vector.load %arg8[%c0_31, %c384] : memref<256x1152xbf16, #tpu.memory_space<vmem>>, vector<256x128xbf16>
    tpu.vector_store %arg8[%c0_31, %c384], %24 {strides = array<i32>} : memref<256x1152xbf16, #tpu.memory_space<vmem>>, vector<256x128xbf16>,
    %c1_32 = arith.constant 1 : index
    %c1_33 = arith.constant 1 : index
    %c0_34 = arith.constant 0 : index
    %26 = vector.load %arg7[%c1_32, %c1_33, %c0_34] : memref<18x18x128xf32, #tpu.memory_space<vmem>>, vector<16x16x128xf32>
    %27 = vector.shape_cast %26 : vector<16x16x128xf32> to vector<256x128xf32>
    %28 = arith.truncf %27 : vector<256x128xf32> to vector<256x128xbf16>
    %c0_35 = arith.constant 0 : index
    %c512 = arith.constant 512 : index
    %29 = vector.load %arg8[%c0_35, %c512] : memref<256x1152xbf16, #tpu.memory_space<vmem>>, vector<256x128xbf16>
    tpu.vector_store %arg8[%c0_35, %c512], %28 {strides = array<i32>} : memref<256x1152xbf16, #tpu.memory_space<vmem>>, vector<256x128xbf16>,
    %c1_36 = arith.constant 1 : index
    %c2_37 = arith.constant 2 : index
    %c0_38 = arith.constant 0 : index
    %30 = vector.load %arg7[%c1_36, %c2_37, %c0_38] : memref<18x18x128xf32, #tpu.memory_space<vmem>>, vector<16x16x128xf32>
    %31 = vector.shape_cast %30 : vector<16x16x128xf32> to vector<256x128xf32>
    %32 = arith.truncf %31 : vector<256x128xf32> to vector<256x128xbf16>
    %c0_39 = arith.constant 0 : index
    %c640 = arith.constant 640 : index
    %33 = vector.load %arg8[%c0_39, %c640] : memref<256x1152xbf16, #tpu.memory_space<vmem>>, vector<256x128xbf16>
    tpu.vector_store %arg8[%c0_39, %c640], %32 {strides = array<i32>} : memref<256x1152xbf16, #tpu.memory_space<vmem>>, vector<256x128xbf16>,
    %c2_40 = arith.constant 2 : index
    %c0_41 = arith.constant 0 : index
    %c0_42 = arith.constant 0 : index
    %34 = vector.load %arg7[%c2_40, %c0_41, %c0_42] : memref<18x18x128xf32, #tpu.memory_space<vmem>>, vector<16x16x128xf32>
    %35 = vector.shape_cast %34 : vector<16x16x128xf32> to vector<256x128xf32>
    %36 = arith.truncf %35 : vector<256x128xf32> to vector<256x128xbf16>
    %c0_43 = arith.constant 0 : index
    %c768 = arith.constant 768 : index
    %37 = vector.load %arg8[%c0_43, %c768] : memref<256x1152xbf16, #tpu.memory_space<vmem>>, vector<256x128xbf16>
    tpu.vector_store %arg8[%c0_43, %c768], %36 {strides = array<i32>} : memref<256x1152xbf16, #tpu.memory_space<vmem>>, vector<256x128xbf16>,
    %c2_44 = arith.constant 2 : index
    %c1_45 = arith.constant 1 : index
    %c0_46 = arith.constant 0 : index
    %38 = vector.load %arg7[%c2_44, %c1_45, %c0_46] : memref<18x18x128xf32, #tpu.memory_space<vmem>>, vector<16x16x128xf32>
    %39 = vector.shape_cast %38 : vector<16x16x128xf32> to vector<256x128xf32>
    %40 = arith.truncf %39 : vector<256x128xf32> to vector<256x128xbf16>
    %c0_47 = arith.constant 0 : index
    %c896 = arith.constant 896 : index
    %41 = vector.load %arg8[%c0_47, %c896] : memref<256x1152xbf16, #tpu.memory_space<vmem>>, vector<256x128xbf16>
    tpu.vector_store %arg8[%c0_47, %c896], %40 {strides = array<i32>} : memref<256x1152xbf16, #tpu.memory_space<vmem>>, vector<256x128xbf16>,
    %c2_48 = arith.constant 2 : index
    %c2_49 = arith.constant 2 : index
    %c0_50 = arith.constant 0 : index
    %42 = vector.load %arg7[%c2_48, %c2_49, %c0_50] : memref<18x18x128xf32, #tpu.memory_space<vmem>>, vector<16x16x128xf32>
    %43 = vector.shape_cast %42 : vector<16x16x128xf32> to vector<256x128xf32>
    %44 = arith.truncf %43 : vector<256x128xf32> to vector<256x128xbf16>
    %c0_51 = arith.constant 0 : index
    %c1024 = arith.constant 1024 : index
    %45 = vector.load %arg8[%c0_51, %c1024] : memref<256x1152xbf16, #tpu.memory_space<vmem>>, vector<256x128xbf16>
    tpu.vector_store %arg8[%c0_51, %c1024], %44 {strides = array<i32>} : memref<256x1152xbf16, #tpu.memory_space<vmem>>, vector<256x128xbf16>,
    %c0_52 = arith.constant 0 : index
    %c0_53 = arith.constant 0 : index
    %46 = vector.load %arg8[%c0_52, %c0_53] : memref<256x1152xbf16, #tpu.memory_space<vmem>>, vector<256x1152xbf16>
    %c0_54 = arith.constant 0 : index
    %c0_55 = arith.constant 0 : index
    %47 = vector.load %arg2[%c0_54, %c0_55] : memref<1152x128xbf16, #tpu.memory_space<vmem>>, vector<1152x128xbf16>
    %cst_56 = arith.constant dense<0.000000e+00> : vector<256x128xf32>
    %48 = tpu.matmul %46, %47, %cst_56 {dimension_numbers = #tpu.dot_dimension_numbers<[1], [0], [0], [1], [0, 0, 1, 1], [], []>} : vector<256x1152xbf16>, vector<1152x128xbf16>, vector<256x128xf32> -> vector<256x128xf32>
    %c0_57 = arith.constant 0 : index
    %c0_58 = arith.constant 0 : index
    %49 = vector.load %arg9[%c0_57, %c0_58] : memref<256x128xf32, #tpu.memory_space<vmem>>, vector<256x128xf32>
    tpu.vector_store %arg9[%c0_57, %c0_58], %48 {strides = array<i32>} : memref<256x128xf32, #tpu.memory_space<vmem>>, vector<256x128xf32>,
    %c0_59 = arith.constant 0 : index
    %c0_60 = arith.constant 0 : index
    %50 = vector.load %arg9[%c0_59, %c0_60] : memref<256x128xf32, #tpu.memory_space<vmem>>, vector<256x128xf32>
    %c0_61 = arith.constant 0 : index
    %c0_62 = arith.constant 0 : index
    %51 = vector.load %arg4[%c0_61, %c0_62] : memref<1x128xf32, #tpu.memory_space<vmem>>, vector<1x128xf32>
    %52 = vector.shape_cast %51 : vector<1x128xf32> to vector<128xf32>
    %53 = vector.shape_cast %52 : vector<128xf32> to vector<1x128xf32>
    %54 = vector.broadcast %53 : vector<1x128xf32> to vector<256x128xf32>
    %55 = arith.addf %50, %54 : vector<256x128xf32>
    %cst_63 = arith.constant 0.000000e+00 : f32
    %56 = vector.broadcast %cst_63 : f32 to vector<256x128xf32>
    %57 = arith.maximumf %55, %56 : vector<256x128xf32>
    %58 = vector.shape_cast %57 : vector<256x128xf32> to vector<16x16x128xf32>
    %c1_64 = arith.constant 1 : index
    %c1_65 = arith.constant 1 : index
    %c0_66 = arith.constant 0 : index
    %59 = vector.load %arg7[%c1_64, %c1_65, %c0_66] : memref<18x18x128xf32, #tpu.memory_space<vmem>>, vector<16x16x128xf32>
    tpu.vector_store %arg7[%c1_64, %c1_65, %c0_66], %58 {strides = array<i32>} : memref<18x18x128xf32, #tpu.memory_space<vmem>>, vector<16x16x128xf32>,
    %c0_67 = arith.constant 0 : index
    %c0_68 = arith.constant 0 : index
    %c0_69 = arith.constant 0 : index
    %60 = vector.load %arg7[%c0_67, %c0_68, %c0_69] : memref<18x18x128xf32, #tpu.memory_space<vmem>>, vector<16x16x128xf32>
    %61 = vector.shape_cast %60 : vector<16x16x128xf32> to vector<256x128xf32>
    %62 = arith.truncf %61 : vector<256x128xf32> to vector<256x128xbf16>
    %c0_70 = arith.constant 0 : index
    %c0_71 = arith.constant 0 : index
    %63 = vector.load %arg8[%c0_70, %c0_71] : memref<256x1152xbf16, #tpu.memory_space<vmem>>, vector<256x128xbf16>
    tpu.vector_store %arg8[%c0_70, %c0_71], %62 {strides = array<i32>} : memref<256x1152xbf16, #tpu.memory_space<vmem>>, vector<256x128xbf16>,
    %c0_72 = arith.constant 0 : index
    %c1_73 = arith.constant 1 : index
    %c0_74 = arith.constant 0 : index
    %64 = vector.load %arg7[%c0_72, %c1_73, %c0_74] : memref<18x18x128xf32, #tpu.memory_space<vmem>>, vector<16x16x128xf32>
    %65 = vector.shape_cast %64 : vector<16x16x128xf32> to vector<256x128xf32>
    %66 = arith.truncf %65 : vector<256x128xf32> to vector<256x128xbf16>
    %c0_75 = arith.constant 0 : index
    %c128_76 = arith.constant 128 : index
    %67 = vector.load %arg8[%c0_75, %c128_76] : memref<256x1152xbf16, #tpu.memory_space<vmem>>, vector<256x128xbf16>
    tpu.vector_store %arg8[%c0_75, %c128_76], %66 {strides = array<i32>} : memref<256x1152xbf16, #tpu.memory_space<vmem>>, vector<256x128xbf16>,
    %c0_77 = arith.constant 0 : index
    %c2_78 = arith.constant 2 : index
    %c0_79 = arith.constant 0 : index
    %68 = vector.load %arg7[%c0_77, %c2_78, %c0_79] : memref<18x18x128xf32, #tpu.memory_space<vmem>>, vector<16x16x128xf32>
    %69 = vector.shape_cast %68 : vector<16x16x128xf32> to vector<256x128xf32>
    %70 = arith.truncf %69 : vector<256x128xf32> to vector<256x128xbf16>
    %c0_80 = arith.constant 0 : index
    %c256_81 = arith.constant 256 : index
    %71 = vector.load %arg8[%c0_80, %c256_81] : memref<256x1152xbf16, #tpu.memory_space<vmem>>, vector<256x128xbf16>
    tpu.vector_store %arg8[%c0_80, %c256_81], %70 {strides = array<i32>} : memref<256x1152xbf16, #tpu.memory_space<vmem>>, vector<256x128xbf16>,
    %c1_82 = arith.constant 1 : index
    %c0_83 = arith.constant 0 : index
    %c0_84 = arith.constant 0 : index
    %72 = vector.load %arg7[%c1_82, %c0_83, %c0_84] : memref<18x18x128xf32, #tpu.memory_space<vmem>>, vector<16x16x128xf32>
    %73 = vector.shape_cast %72 : vector<16x16x128xf32> to vector<256x128xf32>
    %74 = arith.truncf %73 : vector<256x128xf32> to vector<256x128xbf16>
    %c0_85 = arith.constant 0 : index
    %c384_86 = arith.constant 384 : index
    %75 = vector.load %arg8[%c0_85, %c384_86] : memref<256x1152xbf16, #tpu.memory_space<vmem>>, vector<256x128xbf16>
    tpu.vector_store %arg8[%c0_85, %c384_86], %74 {strides = array<i32>} : memref<256x1152xbf16, #tpu.memory_space<vmem>>, vector<256x128xbf16>,
    %c1_87 = arith.constant 1 : index
    %c1_88 = arith.constant 1 : index
    %c0_89 = arith.constant 0 : index
    %76 = vector.load %arg7[%c1_87, %c1_88, %c0_89] : memref<18x18x128xf32, #tpu.memory_space<vmem>>, vector<16x16x128xf32>
    %77 = vector.shape_cast %76 : vector<16x16x128xf32> to vector<256x128xf32>
    %78 = arith.truncf %77 : vector<256x128xf32> to vector<256x128xbf16>
    %c0_90 = arith.constant 0 : index
    %c512_91 = arith.constant 512 : index
    %79 = vector.load %arg8[%c0_90, %c512_91] : memref<256x1152xbf16, #tpu.memory_space<vmem>>, vector<256x128xbf16>
    tpu.vector_store %arg8[%c0_90, %c512_91], %78 {strides = array<i32>} : memref<256x1152xbf16, #tpu.memory_space<vmem>>, vector<256x128xbf16>,
    %c1_92 = arith.constant 1 : index
    %c2_93 = arith.constant 2 : index
    %c0_94 = arith.constant 0 : index
    %80 = vector.load %arg7[%c1_92, %c2_93, %c0_94] : memref<18x18x128xf32, #tpu.memory_space<vmem>>, vector<16x16x128xf32>
    %81 = vector.shape_cast %80 : vector<16x16x128xf32> to vector<256x128xf32>
    %82 = arith.truncf %81 : vector<256x128xf32> to vector<256x128xbf16>
    %c0_95 = arith.constant 0 : index
    %c640_96 = arith.constant 640 : index
    %83 = vector.load %arg8[%c0_95, %c640_96] : memref<256x1152xbf16, #tpu.memory_space<vmem>>, vector<256x128xbf16>
    tpu.vector_store %arg8[%c0_95, %c640_96], %82 {strides = array<i32>} : memref<256x1152xbf16, #tpu.memory_space<vmem>>, vector<256x128xbf16>,
    %c2_97 = arith.constant 2 : index
    %c0_98 = arith.constant 0 : index
    %c0_99 = arith.constant 0 : index
    %84 = vector.load %arg7[%c2_97, %c0_98, %c0_99] : memref<18x18x128xf32, #tpu.memory_space<vmem>>, vector<16x16x128xf32>
    %85 = vector.shape_cast %84 : vector<16x16x128xf32> to vector<256x128xf32>
    %86 = arith.truncf %85 : vector<256x128xf32> to vector<256x128xbf16>
    %c0_100 = arith.constant 0 : index
    %c768_101 = arith.constant 768 : index
    %87 = vector.load %arg8[%c0_100, %c768_101] : memref<256x1152xbf16, #tpu.memory_space<vmem>>, vector<256x128xbf16>
    tpu.vector_store %arg8[%c0_100, %c768_101], %86 {strides = array<i32>} : memref<256x1152xbf16, #tpu.memory_space<vmem>>, vector<256x128xbf16>,
    %c2_102 = arith.constant 2 : index
    %c1_103 = arith.constant 1 : index
    %c0_104 = arith.constant 0 : index
    %88 = vector.load %arg7[%c2_102, %c1_103, %c0_104] : memref<18x18x128xf32, #tpu.memory_space<vmem>>, vector<16x16x128xf32>
    %89 = vector.shape_cast %88 : vector<16x16x128xf32> to vector<256x128xf32>
    %90 = arith.truncf %89 : vector<256x128xf32> to vector<256x128xbf16>
    %c0_105 = arith.constant 0 : index
    %c896_106 = arith.constant 896 : index
    %91 = vector.load %arg8[%c0_105, %c896_106] : memref<256x1152xbf16, #tpu.memory_space<vmem>>, vector<256x128xbf16>
    tpu.vector_store %arg8[%c0_105, %c896_106], %90 {strides = array<i32>} : memref<256x1152xbf16, #tpu.memory_space<vmem>>, vector<256x128xbf16>,
    %c2_107 = arith.constant 2 : index
    %c2_108 = arith.constant 2 : index
    %c0_109 = arith.constant 0 : index
    %92 = vector.load %arg7[%c2_107, %c2_108, %c0_109] : memref<18x18x128xf32, #tpu.memory_space<vmem>>, vector<16x16x128xf32>
    %93 = vector.shape_cast %92 : vector<16x16x128xf32> to vector<256x128xf32>
    %94 = arith.truncf %93 : vector<256x128xf32> to vector<256x128xbf16>
    %c0_110 = arith.constant 0 : index
    %c1024_111 = arith.constant 1024 : index
    %95 = vector.load %arg8[%c0_110, %c1024_111] : memref<256x1152xbf16, #tpu.memory_space<vmem>>, vector<256x128xbf16>
    tpu.vector_store %arg8[%c0_110, %c1024_111], %94 {strides = array<i32>} : memref<256x1152xbf16, #tpu.memory_space<vmem>>, vector<256x128xbf16>,
    %c0_112 = arith.constant 0 : index
    %c0_113 = arith.constant 0 : index
    %96 = vector.load %arg8[%c0_112, %c0_113] : memref<256x1152xbf16, #tpu.memory_space<vmem>>, vector<256x1152xbf16>
    %c0_114 = arith.constant 0 : index
    %c0_115 = arith.constant 0 : index
    %97 = vector.load %arg3[%c0_114, %c0_115] : memref<1152x128xbf16, #tpu.memory_space<vmem>>, vector<1152x128xbf16>
    %cst_116 = arith.constant dense<0.000000e+00> : vector<256x128xf32>
    %98 = tpu.matmul %96, %97, %cst_116 {dimension_numbers = #tpu.dot_dimension_numbers<[1], [0], [0], [1], [0, 0, 1, 1], [], []>} : vector<256x1152xbf16>, vector<1152x128xbf16>, vector<256x128xf32> -> vector<256x128xf32>
    %c0_117 = arith.constant 0 : index
    %c0_118 = arith.constant 0 : index
    %99 = vector.load %arg9[%c0_117, %c0_118] : memref<256x128xf32, #tpu.memory_space<vmem>>, vector<256x128xf32>
    tpu.vector_store %arg9[%c0_117, %c0_118], %98 {strides = array<i32>} : memref<256x128xf32, #tpu.memory_space<vmem>>, vector<256x128xf32>,
    %c0_119 = arith.constant 0 : index
    %c0_120 = arith.constant 0 : index
    %100 = vector.load %arg9[%c0_119, %c0_120] : memref<256x128xf32, #tpu.memory_space<vmem>>, vector<256x128xf32>
    %c0_121 = arith.constant 0 : index
    %c0_122 = arith.constant 0 : index
    %101 = vector.load %arg5[%c0_121, %c0_122] : memref<1x128xf32, #tpu.memory_space<vmem>>, vector<1x128xf32>
    %102 = vector.shape_cast %101 : vector<1x128xf32> to vector<128xf32>
    %103 = vector.shape_cast %102 : vector<128xf32> to vector<1x128xf32>
    %104 = vector.broadcast %103 : vector<1x128xf32> to vector<256x128xf32>
    %105 = arith.addf %100, %104 : vector<256x128xf32>
    %c0_123 = arith.constant 0 : index
    %c0_124 = arith.constant 0 : index
    %c0_125 = arith.constant 0 : index
    %106 = vector.load %arg1[%c0_123, %c0_124, %c0_125] : memref<1x256x128xf32, #tpu.memory_space<vmem>>, vector<1x256x128xf32>
    %107 = vector.shape_cast %106 : vector<1x256x128xf32> to vector<256x128xf32>
    %108 = arith.addf %105, %107 : vector<256x128xf32>
    %cst_126 = arith.constant 0.000000e+00 : f32
    %109 = vector.broadcast %cst_126 : f32 to vector<256x128xf32>
    %110 = arith.maximumf %108, %109 : vector<256x128xf32>
    %c0_127 = arith.constant 0 : index
    %c0_128 = arith.constant 0 : index
    %c0_129 = arith.constant 0 : index
    %111 = vector.load %arg6[%c0_127, %c0_128, %c0_129] : memref<1x256x128xf32, #tpu.memory_space<vmem>>, vector<1x256x128xf32>
    %112 = vector.shape_cast %111 : vector<1x256x128xf32> to vector<256x128xf32>
    %113 = vector.shape_cast %110 : vector<256x128xf32> to vector<1x256x128xf32>
    tpu.vector_store %arg6[%c0_127, %c0_128, %c0_129], %113 {strides = array<i32>} : memref<1x256x128xf32, #tpu.memory_space<vmem>>, vector<1x256x128xf32>,
    return
  }
  func.func @transform_0(%arg0: i32) -> (i32, i32, i32) {
    %c0_i32 = arith.constant 0 : i32
    %c0_i32_0 = arith.constant 0 : i32
    %c0_i32_1 = arith.constant 0 : i32
    return %arg0, %c0_i32, %c0_i32_0 : i32, i32, i32
  }
  func.func @transform_1(%arg0: i32) -> (i32, i32) {
    %c0_i32 = arith.constant 0 : i32
    %c0_i32_0 = arith.constant 0 : i32
    %c0_i32_1 = arith.constant 0 : i32
    return %c0_i32, %c0_i32_0 : i32, i32
  }
  func.func @transform_2(%arg0: i32) -> (i32, i32) {
    %c0_i32 = arith.constant 0 : i32
    %c0_i32_0 = arith.constant 0 : i32
    %c0_i32_1 = arith.constant 0 : i32
    return %c0_i32, %c0_i32_0 : i32, i32
  }
  func.func @transform_3(%arg0: i32) -> (i32, i32) {
    %c0_i32 = arith.constant 0 : i32
    %c0_i32_0 = arith.constant 0 : i32
    %c0_i32_1 = arith.constant 0 : i32
    return %c0_i32, %c0_i32_0 : i32, i32
  }
  func.func @transform_4(%arg0: i32) -> (i32, i32) {
    %c0_i32 = arith.constant 0 : i32
    %c0_i32_0 = arith.constant 0 : i32
    %c0_i32_1 = arith.constant 0 : i32
    return %c0_i32, %c0_i32_0 : i32, i32
  }
  func.func @transform_5(%arg0: i32) -> (i32, i32, i32) {
    %c0_i32 = arith.constant 0 : i32
    %c0_i32_0 = arith.constant 0 : i32
    %c0_i32_1 = arith.constant 0 : i32
    return %arg0, %c0_i32, %c0_i32_0 : i32, i32, i32
  }
}

</mosaic_0001>

<llo_original>
// kernel: tpu_custom_call.1
$region0: #{tpu_custom_call.1}
  #allocation0 [shape = 'u32[]', space=smem, size = 0x4, offset = 0x4, fixed_abs, tag = 'smem constant byte address 0x4 - core index']
  #allocation1 [shape = 'u32[144,128]{1,0:T(1,128)}', space=vmem, size = 0x12000, scoped, tag = 'internal scratch']
  #allocation2 [shape = 'f32[18,18,128]{2,1,0:T(8,128)}', space=vmem, size = 0x36000, scoped, tag = 'scratch operand']
  #allocation3 [shape = 'bf16[256,1152]{1,0:T(8,128)(2,1)}', space=vmem, size = 0x90000, scoped, tag = 'scratch operand']
  #allocation4 [shape = 'f32[256,128]{1,0:T(8,128)}', space=vmem, size = 0x20000, scoped, tag = 'scratch operand']
  %s0 = inlined_call_operand.hbm [shape: f32[2,256,128], index: 0, kind: input, shape index: {}]
  %s1 = inlined_call_operand.hbm [shape: bf16[1152,128], index: 1, kind: input, shape index: {}]
  %s2 = inlined_call_operand.hbm [shape: bf16[1152,128], index: 2, kind: input, shape index: {}]
  %s3 = inlined_call_operand.vmem [shape: f32[1,128], index: 3, kind: input, shape index: {}]
  %s4 = inlined_call_operand.vmem [shape: f32[1,128], index: 4, kind: input, shape index: {}]
  %s5 = inlined_call_operand.hbm [shape: f32[2,256,128], index: 5, kind: output, shape index: {}]
  %s6 = sld [smem:[#allocation0]]
  $region65: #{tpu_custom_call.1} parent=0
    _
  %s8 = ssub.s32 1, %s6
  %s9 = scalar_select 0, %s8, %s6
  $region1: #{tpu_custom_call.1} parent=0
    #allocation5 [shape = 'u8[262144]{0}', space=vmem, size = 0x40000, scoped, tag = 'input window, operand 0']
    #allocation6 [shape = 's32[2]{0}', space=sflag, size = 0x8, scoped, tag = 'scoped memory for tpu_custom_call.1']
    #allocation7 [shape = 's32[2]{0}', space=sflag, size = 0x8, scoped, tag = 'scoped memory for tpu_custom_call.1']
    #allocation8 [shape = 'u8[294912]{0}', space=vmem, size = 0x48000, scoped, tag = 'input window, operand 1, single buffered']
    #allocation9 [shape = 's32[1]{0}', space=sflag, size = 0x4, scoped, tag = 'scoped memory for tpu_custom_call.1']
    #allocation10 [shape = 'u8[294912]{0}', space=vmem, size = 0x48000, scoped, tag = 'input window, operand 2, single buffered']
    #allocation11 [shape = 'u8[262144]{0}', space=vmem, size = 0x40000, scoped, tag = 'output window, operand 0']
    %10 = vsyncpa [#allocation6], 0
    %s11 = scalar_lea.sflag [#allocation6], 1
    %12 = vsyncpa %s11, 0
    %13 = vsyncpa [#allocation9], 0
    %14 = vsyncpa [#allocation7], 0
    %s15 = scalar_lea.sflag [#allocation7], 1
    %16 = vsyncpa %s15, 0
    loop: start=0, step=1, limit=4
    $region2: #{tpu_custom_call.1} parent=1 // loop_pre_header
      _
    $region3: #{tpu_custom_call.1} parent=1 // loop_header
      %s18 = sphi 0, %s22
      %p19 = scmp.ge.s32.totalorder %s18, 4
      %s28 = sphi 0, %s30
      %s31 = sphi 0, %s28
      %s32 = sphi 0, %s31
      %s48 = sphi 0, %s32
      %s52 = sphi 0, %s52
      %s54 = sphi 0, %s52
      %s55 = sphi 0, %s54
      %s69 = sphi 0, %s55
      %s73 = sphi 0, %s73
      %s75 = sphi 0, %s73
      %s76 = sphi 0, %s75
      %s90 = sphi 0, %s76
      %s94 = sphi 0, %s94
      %s96 = sphi 0, %s94
      %s97 = sphi 0, %s96
      %s111 = sphi 0, %s97
      %s115 = sphi 0, %s115
      %s117 = sphi 0, %s115
      %s118 = sphi 0, %s117
      %s132 = sphi 0, %s118
      %s138 = sphi 0, %s140
      %s141 = sphi 0, %s138
      %s142 = sphi 0, %s141
      %s158 = sphi 0, %s142
    $region4: #{tpu_custom_call.1} parent=1 // loop_header_branch
      %21 = sbr.rel (%p19) target = $region8
    $region5: #{tpu_custom_call.1} parent=1 // loop_body
      %s23 = ssub.s32 %s18, 1
      %s24 = ssub.s32 %s18, 2
      %s25 = sadd.s32 %s18, 1
      %s26 = ssub.s32 %s18, %s25
      %p27 = scmp.eq.s32.totalorder %s26, 0
      %s29 = sadd.s32 %s28, 1
      %s30 = scalar_select %p27, %s28, %s29
      %p33 = pneg %p27
      %p34 = scmp.eq.s32.totalorder %s18, 1
      %p35 = por %p33, %p34
      %p36 = scmp.ne.s32.totalorder %s28, %s31
      %p37 = scmp.eq.s32.totalorder %s18, 0
      %p38 = por %p36, %p37
      %p39 = scmp.ne.s32.totalorder %s28, %s31
      %p40 = scmp.eq.s32.totalorder %s23, 1
      %p41 = por %p39, %p40
      %p42 = scmp.ne.s32.totalorder %s31, %s32
      %p43 = scmp.eq.s32.totalorder %s23, 0
      %p44 = por %p42, %p43
      %p45 = scmp.ne.s32.totalorder %s31, %s32
      %p46 = scmp.eq.s32.totalorder %s24, 1
      %p47 = por %p45, %p46
      %p49 = scmp.ne.s32.totalorder %s32, %s48
      %p50 = scmp.eq.s32.totalorder %s24, 0
      %p51 = por %p49, %p50
      %s53 = sadd.s32 %s52, 1
      %p56 = scmp.eq.s32.totalorder %s18, 1
      %p57 = scmp.ne.s32.totalorder %s52, %s54
      %p58 = scmp.eq.s32.totalorder %s18, 0
      %p59 = por %p57, %p58
      %p60 = scmp.ne.s32.totalorder %s52, %s54
      %p61 = scmp.eq.s32.totalorder %s23, 1
      %p62 = por %p60, %p61
      %p63 = scmp.ne.s32.totalorder %s54, %s55
      %p64 = scmp.eq.s32.totalorder %s23, 0
      %p65 = por %p63, %p64
      %p66 = scmp.ne.s32.totalorder %s54, %s55
      %p67 = scmp.eq.s32.totalorder %s24, 1
      %p68 = por %p66, %p67
      %p70 = scmp.ne.s32.totalorder %s55, %s69
      %p71 = scmp.eq.s32.totalorder %s24, 0
      %p72 = por %p70, %p71
      %s74 = sadd.s32 %s73, 1
      %p77 = scmp.eq.s32.totalorder %s18, 1
      %p78 = scmp.ne.s32.totalorder %s73, %s75
      %p79 = scmp.eq.s32.totalorder %s18, 0
      %p80 = por %p78, %p79
      %p81 = scmp.ne.s32.totalorder %s73, %s75
      %p82 = scmp.eq.s32.totalorder %s23, 1
      %p83 = por %p81, %p82
      %p84 = scmp.ne.s32.totalorder %s75, %s76
      %p85 = scmp.eq.s32.totalorder %s23, 0
      %p86 = por %p84, %p85
      %p87 = scmp.ne.s32.totalorder %s75, %s76
      %p88 = scmp.eq.s32.totalorder %s24, 1
      %p89 = por %p87, %p88
      %p91 = scmp.ne.s32.totalorder %s76, %s90
      %p92 = scmp.eq.s32.totalorder %s24, 0
      %p93 = por %p91, %p92
      %s95 = sadd.s32 %s94, 1
      %p98 = scmp.eq.s32.totalorder %s18, 1
      %p99 = scmp.ne.s32.totalorder %s94, %s96
      %p100 = scmp.eq.s32.totalorder %s18, 0
      %p101 = por %p99, %p100
      %p102 = scmp.ne.s32.totalorder %s94, %s96
      %p103 = scmp.eq.s32.totalorder %s23, 1
      %p104 = por %p102, %p103
      %p105 = scmp.ne.s32.totalorder %s96, %s97
      %p106 = scmp.eq.s32.totalorder %s23, 0
      %p107 = por %p105, %p106
      %p108 = scmp.ne.s32.totalorder %s96, %s97
      %p109 = scmp.eq.s32.totalorder %s24, 1
      %p110 = por %p108, %p109
      %p112 = scmp.ne.s32.totalorder %s97, %s111
      %p113 = scmp.eq.s32.totalorder %s24, 0
      %p114 = por %p112, %p113
      %s116 = sadd.s32 %s115, 1
      %p119 = scmp.eq.s32.totalorder %s18, 1
      %p120 = scmp.ne.s32.totalorder %s115, %s117
      %p121 = scmp.eq.s32.totalorder %s18, 0
      %p122 = por %p120, %p121
      %p123 = scmp.ne.s32.totalorder %s115, %s117
      %p124 = scmp.eq.s32.totalorder %s23, 1
      %p125 = por %p123, %p124
      %p126 = scmp.ne.s32.totalorder %s117, %s118
      %p127 = scmp.eq.s32.totalorder %s23, 0
      %p128 = por %p126, %p127
      %p129 = scmp.ne.s32.totalorder %s117, %s118
      %p130 = scmp.eq.s32.totalorder %s24, 1
      %p131 = por %p129, %p130
      %p133 = scmp.ne.s32.totalorder %s118, %s132
      %p134 = scmp.eq.s32.totalorder %s24, 0
      %p135 = por %p133, %p134
      %s136 = ssub.s32 %s18, %s25
      %p137 = scmp.eq.s32.totalorder %s136, 0
      %s139 = sadd.s32 %s138, 1
      %s140 = scalar_select %p137, %s138, %s139
      %p143 = pneg %p137
      %p144 = scmp.eq.s32.totalorder %s18, 1
      %p145 = por %p143, %p144
      %p146 = scmp.ne.s32.totalorder %s138, %s141
      %p147 = scmp.eq.s32.totalorder %s18, 0
      %p148 = por %p146, %p147
      %p149 = scmp.ne.s32.totalorder %s138, %s141
      %p150 = scmp.eq.s32.totalorder %s23, 1
      %p151 = por %p149, %p150
      %p152 = scmp.ne.s32.totalorder %s141, %s142
      %p153 = scmp.eq.s32.totalorder %s23, 0
      %p154 = por %p152, %p153
      %p155 = scmp.ne.s32.totalorder %s141, %s142
      %p156 = scmp.eq.s32.totalorder %s24, 1
      %p157 = por %p155, %p156
      %p159 = scmp.ne.s32.totalorder %s142, %s158
      %p160 = scmp.eq.s32.totalorder %s24, 0
      %p161 = por %p159, %p160
      %p162 = scmp.le.s32.totalorder 1, %s18
      %p163 = scmp.lt.s32.totalorder %s18, 3
      %p164 = pnand %p162, %p163
      %p165 = pneg %p164
      // Predicated region
      $region9: #{tpu_custom_call.1} parent=5 // pred_check
        _
      $region10: #{tpu_custom_call.1} parent=5 // pred_check_branch
        %167 = sbr.rel (%p164) target = $region12
      $region11: #{tpu_custom_call.1} parent=5 // pred_region
        %s168 = ssub.s32 %s18, 1
        // Predicated region
        $region13: #{tpu_custom_call.1} parent=11 // pred_check
          %p169 = pneg %p65
        $region14: #{tpu_custom_call.1} parent=11 // pred_check_branch
          %171 = sbr.rel (%p169) target = $region16
        $region15: #{tpu_custom_call.1} parent=11 // pred_region
          %s173 = ssub.s32 9216, 9216
          %174 = vsyncadd [#allocation9], %s173
          %s175 = sshll.u32 [#allocation8], 4
          %s176 = int_to_ptr.vmem [resolvable:$true] %s175
          %181 = dma.hbm_to_vmem [thread:$0]  %s1, 9216, %s176, [#allocation9], 64, 64, 4
        $region16: #{tpu_custom_call.1} parent=11 // pred_fallthru
          _
        // Predicated region
        $region17: #{tpu_custom_call.1} parent=11 // pred_check
          %p182 = pneg %p86
        $region18: #{tpu_custom_call.1} parent=11 // pred_check_branch
          %184 = sbr.rel (%p182) target = $region20
        $region19: #{tpu_custom_call.1} parent=11 // pred_region
          %s186 = ssub.s32 9216, 9216
          %187 = vsyncadd [#allocation9], %s186
          %s188 = sshll.u32 [#allocation10], 4
          %s189 = int_to_ptr.vmem [resolvable:$true] %s188
          %194 = dma.hbm_to_vmem [thread:$0]  %s2, 9216, %s189, [#allocation9], 64, 64, 4
        $region20: #{tpu_custom_call.1} parent=11 // pred_fallthru
          _
        // Predicated region
        $region21: #{tpu_custom_call.1} parent=11 // pred_check
          %p195 = pneg %p107
        $region22: #{tpu_custom_call.1} parent=11 // pred_check_branch
          %197 = sbr.rel (%p195) target = $region24
        $region23: #{tpu_custom_call.1} parent=11 // pred_region
          _
        $region24: #{tpu_custom_call.1} parent=11 // pred_fallthru
          _
        // Predicated region
        $region25: #{tpu_custom_call.1} parent=11 // pred_check
          %p198 = pneg %p128
        $region26: #{tpu_custom_call.1} parent=11 // pred_check_branch
          %200 = sbr.rel (%p198) target = $region28
        $region27: #{tpu_custom_call.1} parent=11 // pred_region
          _
        $region28: #{tpu_custom_call.1} parent=11 // pred_fallthru
          _
      $region12: #{tpu_custom_call.1} parent=5 // pred_fallthru
        _
      %p201 = scmp.lt.s32.totalorder %s18, 2
      // Predicated region
      $region29: #{tpu_custom_call.1} parent=5 // pred_check
        %p202 = pneg %p201
      $region30: #{tpu_custom_call.1} parent=5 // pred_check_branch
        %204 = sbr.rel (%p202) target = $region32
      $region31: #{tpu_custom_call.1} parent=5 // pred_region
        // Predicated region
        $region33: #{tpu_custom_call.1} parent=31 // pred_check
          %p205 = pneg %p38
        $region34: #{tpu_custom_call.1} parent=31 // pred_check_branch
          %207 = sbr.rel (%p205) target = $region36
        $region35: #{tpu_custom_call.1} parent=31 // pred_region
          %s208 = sand.u32 %s28, 1
          %s209 = scalar_lea.sflag [#allocation6], %s208
          %s210 = sand.u32 %s28, 1
          %s211 = smul.addr %s210, 256
          %s212 = scalar_lea.vmem [#allocation5], %s211
          %s214 = ssub.s32 4096, 4096
          %215 = vsyncadd %s209, %s214
          %s216 = smul.addr %s18, 32
          %s217 = smul.addr %s216, 128
          %s218 = scalar_lea.hbm %s0, %s217
          %s219 = sshll.u32 %s212, 4
          %s220 = int_to_ptr.vmem [resolvable:$true] %s219
          %225 = dma.hbm_to_vmem [thread:$0]  %s218, 4096, %s220, %s209, 128, 128, 8
        $region36: #{tpu_custom_call.1} parent=31 // pred_fallthru
          _
      $region32: #{tpu_custom_call.1} parent=5 // pred_fallthru
        _
      %p226 = scmp.le.s32.totalorder 1, %s18
      %p227 = scmp.lt.s32.totalorder %s18, 3
      %p228 = pnand %p226, %p227
      %p229 = pneg %p228
      // Predicated region
      $region37: #{tpu_custom_call.1} parent=5 // pred_check
        _
      $region38: #{tpu_custom_call.1} parent=5 // pred_check_branch
        %231 = sbr.rel (%p228) target = $region40
      $region39: #{tpu_custom_call.1} parent=5 // pred_region
        %s232 = ssub.s32 %s18, 1
        %s233 = sand.u32 %s31, 1
        %s234 = scalar_lea.sflag [#allocation6], %s233
        %s235 = sand.u32 %s31, 1
        %s236 = smul.addr %s235, 256
        %s237 = scalar_lea.vmem [#allocation5], %s236
        // Predicated region
        $region41: #{tpu_custom_call.1} parent=39 // pred_check
          %p238 = pneg %p44
        $region42: #{tpu_custom_call.1} parent=39 // pred_check_branch
          %240 = sbr.rel (%p238) target = $region44
        $region43: #{tpu_custom_call.1} parent=39 // pred_region
          %241 = dma.done %s234, 4096
        $region44: #{tpu_custom_call.1} parent=39 // pred_fallthru
          _
        // Predicated region
        $region45: #{tpu_custom_call.1} parent=39 // pred_check
          %p242 = pneg %p65
        $region46: #{tpu_custom_call.1} parent=39 // pred_check_branch
          %244 = sbr.rel (%p242) target = $region48
        $region47: #{tpu_custom_call.1} parent=39 // pred_region
          %245 = dma.done [#allocation9], 9216
        $region48: #{tpu_custom_call.1} parent=39 // pred_fallthru
          _
        // Predicated region
        $region49: #{tpu_custom_call.1} parent=39 // pred_check
          %p246 = pneg %p86
        $region50: #{tpu_custom_call.1} parent=39 // pred_check_branch
          %248 = sbr.rel (%p246) target = $region52
        $region51: #{tpu_custom_call.1} parent=39 // pred_region
          %249 = dma.done [#allocation9], 9216
        $region52: #{tpu_custom_call.1} parent=39 // pred_fallthru
          _
        %s250 = sand.u32 %s31, 1
        %s251 = scalar_lea.sflag [#allocation6], %s250
        %s252 = sand.u32 %s31, 1
        %s253 = smul.addr %s252, 256
        %s254 = scalar_lea.vmem [#allocation5], %s253
        %p255 = pneg %p44
        %p256 = pneg %p41
        %p257 = pneg %p65
        %p258 = pneg %p62
        %p259 = pneg %p86
        %p260 = pneg %p83
        %p261 = pneg %p107
        %p262 = pneg %p104
        %p263 = pneg %p128
        %p264 = pneg %p125
        %p265 = pneg %p154
        %p266 = pneg %p151
        %s267 = sand.u32 %s141, 1
        %s268 = scalar_lea.sflag [#allocation7], %s267
        %s269 = sand.u32 %s141, 1
        %s270 = smul.addr %s269, 256
        %s271 = scalar_lea.vmem [#allocation11], %s270
        %273 = vst [vmem:[#allocation2] sm:$0xff] 0.0
        %274 = vst [vmem:[#allocation2 + $0x8] sm:$0xff] 0.0
        %275 = vst [vmem:[#allocation2 + $0x10] sm:$0x3] 0.0
        %s276 = scalar_lea.vmem [#allocation2], 408
        %277 = vst [vmem:[%s276] sm:$0xff] 0.0
        %278 = vst [vmem:[%s276 + $0x8] sm:$0xff] 0.0
        %279 = vst [vmem:[%s276 + $0x10] sm:$0x3] 0.0
        %280 = vst [vmem:[#allocation2] sm:$0x1] 0.0
        %281 = vst [vmem:[#allocation2 + $0x18] sm:$0x1] 0.0
        %282 = vst [vmem:[#allocation2 + $0x30] sm:$0x1] 0.0
        %283 = vst [vmem:[#allocation2 + $0x48] sm:$0x1] 0.0
        %284 = vst [vmem:[#allocation2 + $0x60] sm:$0x1] 0.0
        %285 = vst [vmem:[#allocation2 + $0x78] sm:$0x1] 0.0
        %286 = vst [vmem:[#allocation2 + $0x90] sm:$0x1] 0.0
        %287 = vst [vmem:[#allocation2 + $0xa8] sm:$0x1] 0.0
        %288 = vst [vmem:[#allocation2 + $0xc0] sm:$0x1] 0.0
        %289 = vst [vmem:[#allocation2 + $0xd8] sm:$0x1] 0.0
        %290 = vst [vmem:[#allocation2 + $0xf0] sm:$0x1] 0.0
        %291 = vst [vmem:[#allocation2 + $0x108] sm:$0x1] 0.0
        %292 = vst [vmem:[#allocation2 + $0x120] sm:$0x1] 0.0
        %293 = vst [vmem:[#allocation2 + $0x138] sm:$0x1] 0.0
        %294 = vst [vmem:[#allocation2 + $0x150] sm:$0x1] 0.0
        %295 = vst [vmem:[#allocation2 + $0x168] sm:$0x1] 0.0
        %296 = vst [vmem:[#allocation2 + $0x180] sm:$0x1] 0.0
        %297 = vst [vmem:[#allocation2 + $0x198] sm:$0x1] 0.0
        %298 = vst [vmem:[#allocation2 + $0x11] sm:$0x1] 0.0
        %299 = vst [vmem:[#allocation2 + $0x29] sm:$0x1] 0.0
        %300 = vst [vmem:[#allocation2 + $0x41] sm:$0x1] 0.0
        %301 = vst [vmem:[#allocation2 + $0x59] sm:$0x1] 0.0
        %302 = vst [vmem:[#allocation2 + $0x71] sm:$0x1] 0.0
        %303 = vst [vmem:[#allocation2 + $0x89] sm:$0x1] 0.0
        %304 = vst [vmem:[#allocation2 + $0xa1] sm:$0x1] 0.0
        %305 = vst [vmem:[#allocation2 + $0xb9] sm:$0x1] 0.0
        %306 = vst [vmem:[#allocation2 + $0xd1] sm:$0x1] 0.0
        %307 = vst [vmem:[#allocation2 + $0xe9] sm:$0x1] 0.0
        %308 = vst [vmem:[#allocation2 + $0x101] sm:$0x1] 0.0
        %309 = vst [vmem:[#allocation2 + $0x119] sm:$0x1] 0.0
        %310 = vst [vmem:[#allocation2 + $0x131] sm:$0x1] 0.0
        %311 = vst [vmem:[#allocation2 + $0x149] sm:$0x1] 0.0
        %312 = vst [vmem:[#allocation2 + $0x161] sm:$0x1] 0.0
        %313 = vst [vmem:[#allocation2 + $0x179] sm:$0x1] 0.0
        %314 = vst [vmem:[#allocation2 + $0x191] sm:$0x1] 0.0
        %315 = vst [vmem:[#allocation2 + $0x1a9] sm:$0x1] 0.0
        %v316 = vld [vmem:[%s237] sm:$0xff]
        %v317 = vld [vmem:[%s237 + $0x8] sm:$0xff]
        %v318 = vld [vmem:[%s237 + $0x10] sm:$0xff]
        %v319 = vld [vmem:[%s237 + $0x18] sm:$0xff]
        %v320 = vld [vmem:[%s237 + $0x20] sm:$0xff]
        %v321 = vld [vmem:[%s237 + $0x28] sm:$0xff]
        %v322 = vld [vmem:[%s237 + $0x30] sm:$0xff]
        %v323 = vld [vmem:[%s237 + $0x38] sm:$0xff]
        %v324 = vld [vmem:[%s237 + $0x40] sm:$0xff]
        %v325 = vld [vmem:[%s237 + $0x48] sm:$0xff]
        %v326 = vld [vmem:[%s237 + $0x50] sm:$0xff]
        %v327 = vld [vmem:[%s237 + $0x58] sm:$0xff]
        %v328 = vld [vmem:[%s237 + $0x60] sm:$0xff]
        %v329 = vld [vmem:[%s237 + $0x68] sm:$0xff]
        %v330 = vld [vmem:[%s237 + $0x70] sm:$0xff]
        %v331 = vld [vmem:[%s237 + $0x78] sm:$0xff]
        %v332 = vld [vmem:[%s237 + $0x80] sm:$0xff]
        %v333 = vld [vmem:[%s237 + $0x88] sm:$0xff]
        %v334 = vld [vmem:[%s237 + $0x90] sm:$0xff]
        %v335 = vld [vmem:[%s237 + $0x98] sm:$0xff]
        %v336 = vld [vmem:[%s237 + $0xa0] sm:$0xff]
        %v337 = vld [vmem:[%s237 + $0xa8] sm:$0xff]
        %v338 = vld [vmem:[%s237 + $0xb0] sm:$0xff]
        %v339 = vld [vmem:[%s237 + $0xb8] sm:$0xff]
        %v340 = vld [vmem:[%s237 + $0xc0] sm:$0xff]
        %v341 = vld [vmem:[%s237 + $0xc8] sm:$0xff]
        %v342 = vld [vmem:[%s237 + $0xd0] sm:$0xff]
        %v343 = vld [vmem:[%s237 + $0xd8] sm:$0xff]
        %v344 = vld [vmem:[%s237 + $0xe0] sm:$0xff]
        %v345 = vld [vmem:[%s237 + $0xe8] sm:$0xff]
        %v346 = vld [vmem:[%s237 + $0xf0] sm:$0xff]
        %v347 = vld [vmem:[%s237 + $0xf8] sm:$0xff]
        %s348 = scalar_lea.vmem [#allocation2], 24
        %349 = vst [vmem:[%s348 + $0x1] sm:$0xff] %v316
        %350 = vst [vmem:[%s348 + $0x9] sm:$0xff] %v317
        %351 = vst [vmem:[%s348 + $0x19] sm:$0xff] %v318
        %352 = vst [vmem:[%s348 + $0x21] sm:$0xff] %v319
        %353 = vst [vmem:[%s348 + $0x31] sm:$0xff] %v320
        %354 = vst [vmem:[%s348 + $0x39] sm:$0xff] %v321
        %355 = vst [vmem:[%s348 + $0x49] sm:$0xff] %v322
        %356 = vst [vmem:[%s348 + $0x51] sm:$0xff] %v323
        %357 = vst [vmem:[%s348 + $0x61] sm:$0xff] %v324
        %358 = vst [vmem:[%s348 + $0x69] sm:$0xff] %v325
        %359 = vst [vmem:[%s348 + $0x79] sm:$0xff] %v326
        %360 = vst [vmem:[%s348 + $0x81] sm:$0xff] %v327
        %361 = vst [vmem:[%s348 + $0x91] sm:$0xff] %v328
        %362 = vst [vmem:[%s348 + $0x99] sm:$0xff] %v329
        %363 = vst [vmem:[%s348 + $0xa9] sm:$0xff] %v330
        %364 = vst [vmem:[%s348 + $0xb1] sm:$0xff] %v331
        %365 = vst [vmem:[%s348 + $0xc1] sm:$0xff] %v332
        %366 = vst [vmem:[%s348 + $0xc9] sm:$0xff] %v333
        %367 = vst [vmem:[%s348 + $0xd9] sm:$0xff] %v334
        %368 = vst [vmem:[%s348 + $0xe1] sm:$0xff] %v335
        %369 = vst [vmem:[%s348 + $0xf1] sm:$0xff] %v336
        %370 = vst [vmem:[%s348 + $0xf9] sm:$0xff] %v337
        %371 = vst [vmem:[%s348 + $0x109] sm:$0xff] %v338
        %372 = vst [vmem:[%s348 + $0x111] sm:$0xff] %v339
        %373 = vst [vmem:[%s348 + $0x121] sm:$0xff] %v340
        %374 = vst [vmem:[%s348 + $0x129] sm:$0xff] %v341
        %375 = vst [vmem:[%s348 + $0x139] sm:$0xff] %v342
        %376 = vst [vmem:[%s348 + $0x141] sm:$0xff] %v343
        %377 = vst [vmem:[%s348 + $0x151] sm:$0xff] %v344
        %378 = vst [vmem:[%s348 + $0x159] sm:$0xff] %v345
        %379 = vst [vmem:[%s348 + $0x169] sm:$0xff] %v346
        %380 = vst [vmem:[%s348 + $0x171] sm:$0xff] %v347
        %v381 = vld [vmem:[#allocation2] sm:$0xff]
        %v382 = vld [vmem:[#allocation2 + $0x8] sm:$0xff]
        %v383 = vld [vmem:[#allocation2 + $0x18] sm:$0xff]
        %v384 = vld [vmem:[#allocation2 + $0x20] sm:$0xff]
        %v385 = vld [vmem:[#allocation2 + $0x30] sm:$0xff]
        %v386 = vld [vmem:[#allocation2 + $0x38] sm:$0xff]
        %v387 = vld [vmem:[#allocation2 + $0x48] sm:$0xff]
        %v388 = vld [vmem:[#allocation2 + $0x50] sm:$0xff]
        %v389 = vld [vmem:[#allocation2 + $0x60] sm:$0xff]
        %v390 = vld [vmem:[#allocation2 + $0x68] sm:$0xff]
        %v391 = vld [vmem:[#allocation2 + $0x78] sm:$0xff]
        %v392 = vld [vmem:[#allocation2 + $0x80] sm:$0xff]
        %v393 = vld [vmem:[#allocation2 + $0x90] sm:$0xff]
        %v394 = vld [vmem:[#allocation2 + $0x98] sm:$0xff]
        %v395 = vld [vmem:[#allocation2 + $0xa8] sm:$0xff]
        %v396 = vld [vmem:[#allocation2 + $0xb0] sm:$0xff]
        %v397 = vld [vmem:[#allocation2 + $0xc0] sm:$0xff]
        %v398 = vld [vmem:[#allocation2 + $0xc8] sm:$0xff]
        %v399 = vld [vmem:[#allocation2 + $0xd8] sm:$0xff]
        %v400 = vld [vmem:[#allocation2 + $0xe0] sm:$0xff]
        %v401 = vld [vmem:[#allocation2 + $0xf0] sm:$0xff]
        %v402 = vld [vmem:[#allocation2 + $0xf8] sm:$0xff]
        %v403 = vld [vmem:[#allocation2 + $0x108] sm:$0xff]
        %v404 = vld [vmem:[#allocation2 + $0x110] sm:$0xff]
        %v405 = vld [vmem:[#allocation2 + $0x120] sm:$0xff]
        %v406 = vld [vmem:[#allocation2 + $0x128] sm:$0xff]
        %v407 = vld [vmem:[#allocation2 + $0x138] sm:$0xff]
        %v408 = vld [vmem:[#allocation2 + $0x140] sm:$0xff]
        %v409 = vld [vmem:[#allocation2 + $0x150] sm:$0xff]
        %v410 = vld [vmem:[#allocation2 + $0x158] sm:$0xff]
        %v411 = vld [vmem:[#allocation2 + $0x168] sm:$0xff]
        %v412 = vld [vmem:[#allocation2 + $0x170] sm:$0xff]
        %v413 = vpack.c.bf16 %v382, %v381
        %v414 = vpack.c.bf16 %v384, %v383
        %v415 = vpack.c.bf16 %v386, %v385
        %v416 = vpack.c.bf16 %v388, %v387
        %v417 = vpack.c.bf16 %v390, %v389
        %v418 = vpack.c.bf16 %v392, %v391
        %v419 = vpack.c.bf16 %v394, %v393
        %v420 = vpack.c.bf16 %v396, %v395
        %v421 = vpack.c.bf16 %v398, %v397
        %v422 = vpack.c.bf16 %v400, %v399
        %v423 = vpack.c.bf16 %v402, %v401
        %v424 = vpack.c.bf16 %v404, %v403
        %v425 = vpack.c.bf16 %v406, %v405
        %v426 = vpack.c.bf16 %v408, %v407
        %v427 = vpack.c.bf16 %v410, %v409
        %v428 = vpack.c.bf16 %v412, %v411
        %v445 = vunpack.c.l.b16 %v413
        %v446 = vunpack.c.h.b16 %v413
        %v447 = vunpack.c.l.b16 %v414
        %v448 = vunpack.c.h.b16 %v414
        %v449 = vunpack.c.l.b16 %v415
        %v450 = vunpack.c.h.b16 %v415
        %v451 = vunpack.c.l.b16 %v416
        %v452 = vunpack.c.h.b16 %v416
        %v453 = vunpack.c.l.b16 %v417
        %v454 = vunpack.c.h.b16 %v417
        %v455 = vunpack.c.l.b16 %v418
        %v456 = vunpack.c.h.b16 %v418
        %v457 = vunpack.c.l.b16 %v419
        %v458 = vunpack.c.h.b16 %v419
        %v459 = vunpack.c.l.b16 %v420
        %v460 = vunpack.c.h.b16 %v420
        %v461 = vunpack.c.l.b16 %v421
        %v462 = vunpack.c.h.b16 %v421
        %v463 = vunpack.c.l.b16 %v422
        %v464 = vunpack.c.h.b16 %v422
        %v465 = vunpack.c.l.b16 %v423
        %v466 = vunpack.c.h.b16 %v423
        %v467 = vunpack.c.l.b16 %v424
        %v468 = vunpack.c.h.b16 %v424
        %v469 = vunpack.c.l.b16 %v425
        %v470 = vunpack.c.h.b16 %v425
        %v471 = vunpack.c.l.b16 %v426
        %v472 = vunpack.c.h.b16 %v426
        %v473 = vunpack.c.l.b16 %v427
        %v474 = vunpack.c.h.b16 %v427
        %v475 = vunpack.c.l.b16 %v428
        %v476 = vunpack.c.h.b16 %v428
        %v477 = vpack.c.b16 %v445, %v445
        %v478 = vpack.c.b16 %v446, %v446
        %v479 = vpack.c.b16 %v447, %v447
        %v480 = vpack.c.b16 %v448, %v448
        %v481 = vpack.c.b16 %v449, %v449
        %v482 = vpack.c.b16 %v450, %v450
        %v483 = vpack.c.b16 %v451, %v451
        %v484 = vpack.c.b16 %v452, %v452
        %v485 = vpack.c.b16 %v453, %v453
        %v486 = vpack.c.b16 %v454, %v454
        %v487 = vpack.c.b16 %v455, %v455
        %v488 = vpack.c.b16 %v456, %v456
        %v489 = vpack.c.b16 %v457, %v457
        %v490 = vpack.c.b16 %v458, %v458
        %v491 = vpack.c.b16 %v459, %v459
        %v492 = vpack.c.b16 %v460, %v460
        %v493 = vpack.c.b16 %v461, %v461
        %v494 = vpack.c.b16 %v462, %v462
        %v495 = vpack.c.b16 %v463, %v463
        %v496 = vpack.c.b16 %v464, %v464
        %v497 = vpack.c.b16 %v465, %v465
        %v498 = vpack.c.b16 %v466, %v466
        %v499 = vpack.c.b16 %v467, %v467
        %v500 = vpack.c.b16 %v468, %v468
        %v501 = vpack.c.b16 %v469, %v469
        %v502 = vpack.c.b16 %v470, %v470
        %v503 = vpack.c.b16 %v471, %v471
        %v504 = vpack.c.b16 %v472, %v472
        %v505 = vpack.c.b16 %v473, %v473
        %v506 = vpack.c.b16 %v474, %v474
        %v507 = vpack.c.b16 %v475, %v475
        %v508 = vpack.c.b16 %v476, %v476
        %541 = vst [vmem:[#allocation3] sm:$0xf] %v477
        %542 = vst [vmem:[#allocation3 + $0x24] sm:$0xf] %v478
        %543 = vst [vmem:[#allocation3 + $0x48] sm:$0xf] %v479
        %544 = vst [vmem:[#allocation3 + $0x6c] sm:$0xf] %v480
        %545 = vst [vmem:[#allocation3 + $0x90] sm:$0xf] %v481
        %546 = vst [vmem:[#allocation3 + $0xb4] sm:$0xf] %v482
        %547 = vst [vmem:[#allocation3 + $0xd8] sm:$0xf] %v483
        %548 = vst [vmem:[#allocation3 + $0xfc] sm:$0xf] %v484
        %549 = vst [vmem:[#allocation3 + $0x120] sm:$0xf] %v485
        %550 = vst [vmem:[#allocation3 + $0x144] sm:$0xf] %v486
        %551 = vst [vmem:[#allocation3 + $0x168] sm:$0xf] %v487
        %552 = vst [vmem:[#allocation3 + $0x18c] sm:$0xf] %v488
        %553 = vst [vmem:[#allocation3 + $0x1b0] sm:$0xf] %v489
        %554 = vst [vmem:[#allocation3 + $0x1d4] sm:$0xf] %v490
        %555 = vst [vmem:[#allocation3 + $0x1f8] sm:$0xf] %v491
        %556 = vst [vmem:[#allocation3 + $0x21c] sm:$0xf] %v492
        %557 = vst [vmem:[#allocation3 + $0x240] sm:$0xf] %v493
        %558 = vst [vmem:[#allocation3 + $0x264] sm:$0xf] %v494
        %559 = vst [vmem:[#allocation3 + $0x288] sm:$0xf] %v495
        %560 = vst [vmem:[#allocation3 + $0x2ac] sm:$0xf] %v496
        %561 = vst [vmem:[#allocation3 + $0x2d0] sm:$0xf] %v497
        %562 = vst [vmem:[#allocation3 + $0x2f4] sm:$0xf] %v498
        %563 = vst [vmem:[#allocation3 + $0x318] sm:$0xf] %v499
        %564 = vst [vmem:[#allocation3 + $0x33c] sm:$0xf] %v500
        %565 = vst [vmem:[#allocation3 + $0x360] sm:$0xf] %v501
        %566 = vst [vmem:[#allocation3 + $0x384] sm:$0xf] %v502
        %567 = vst [vmem:[#allocation3 + $0x3a8] sm:$0xf] %v503
        %568 = vst [vmem:[#allocation3 + $0x3cc] sm:$0xf] %v504
        %569 = vst [vmem:[#allocation3 + $0x3f0] sm:$0xf] %v505
        %570 = vst [vmem:[#allocation3 + $0x414] sm:$0xf] %v506
        %571 = vst [vmem:[#allocation3 + $0x438] sm:$0xf] %v507
        %572 = vst [vmem:[#allocation3 + $0x45c] sm:$0xf] %v508
        %v573 = vld [vmem:[#allocation2 + $0x1] sm:$0xff]
        %v574 = vld [vmem:[#allocation2 + $0x9] sm:$0xff]
        %v575 = vld [vmem:[#allocation2 + $0x19] sm:$0xff]
        %v576 = vld [vmem:[#allocation2 + $0x21] sm:$0xff]
        %v577 = vld [vmem:[#allocation2 + $0x31] sm:$0xff]
        %v578 = vld [vmem:[#allocation2 + $0x39] sm:$0xff]
        %v579 = vld [vmem:[#allocation2 + $0x49] sm:$0xff]
        %v580 = vld [vmem:[#allocation2 + $0x51] sm:$0xff]
        %v581 = vld [vmem:[#allocation2 + $0x61] sm:$0xff]
        %v582 = vld [vmem:[#allocation2 + $0x69] sm:$0xff]
        %v583 = vld [vmem:[#allocation2 + $0x79] sm:$0xff]
        %v584 = vld [vmem:[#allocation2 + $0x81] sm:$0xff]
        %v585 = vld [vmem:[#allocation2 + $0x91] sm:$0xff]
        %v586 = vld [vmem:[#allocation2 + $0x99] sm:$0xff]
        %v587 = vld [vmem:[#allocation2 + $0xa9] sm:$0xff]
        %v588 = vld [vmem:[#allocation2 + $0xb1] sm:$0xff]
        %v589 = vld [vmem:[#allocation2 + $0xc1] sm:$0xff]
        %v590 = vld [vmem:[#allocation2 + $0xc9] sm:$0xff]
        %v591 = vld [vmem:[#allocation2 + $0xd9] sm:$0xff]
        %v592 = vld [vmem:[#allocation2 + $0xe1] sm:$0xff]
        %v593 = vld [vmem:[#allocation2 + $0xf1] sm:$0xff]
        %v594 = vld [vmem:[#allocation2 + $0xf9] sm:$0xff]
        %v595 = vld [vmem:[#allocation2 + $0x109] sm:$0xff]
        %v596 = vld [vmem:[#allocation2 + $0x111] sm:$0xff]
        %v597 = vld [vmem:[#allocation2 + $0x121] sm:$0xff]
        %v598 = vld [vmem:[#allocation2 + $0x129] sm:$0xff]
        %v599 = vld [vmem:[#allocation2 + $0x139] sm:$0xff]
        %v600 = vld [vmem:[#allocation2 + $0x141] sm:$0xff]
        %v601 = vld [vmem:[#allocation2 + $0x151] sm:$0xff]
        %v602 = vld [vmem:[#allocation2 + $0x159] sm:$0xff]
        %v603 = vld [vmem:[#allocation2 + $0x169] sm:$0xff]
        %v604 = vld [vmem:[#allocation2 + $0x171] sm:$0xff]
        %v605 = vpack.c.bf16 %v574, %v573
        %v606 = vpack.c.bf16 %v576, %v575
        %v607 = vpack.c.bf16 %v578, %v577
        %v608 = vpack.c.bf16 %v580, %v579
        %v609 = vpack.c.bf16 %v582, %v581
        %v610 = vpack.c.bf16 %v584, %v583
        %v611 = vpack.c.bf16 %v586, %v585
        %v612 = vpack.c.bf16 %v588, %v587
        %v613 = vpack.c.bf16 %v590, %v589
        %v614 = vpack.c.bf16 %v592, %v591
        %v615 = vpack.c.bf16 %v594, %v593
        %v616 = vpack.c.bf16 %v596, %v595
        %v617 = vpack.c.bf16 %v598, %v597
        %v618 = vpack.c.bf16 %v600, %v599
        %v619 = vpack.c.bf16 %v602, %v601
        %v620 = vpack.c.bf16 %v604, %v603
        %v637 = vunpack.c.l.b16 %v605
        %v638 = vunpack.c.h.b16 %v605
        %v639 = vunpack.c.l.b16 %v606
        %v640 = vunpack.c.h.b16 %v606
        %v641 = vunpack.c.l.b16 %v607
        %v642 = vunpack.c.h.b16 %v607
        %v643 = vunpack.c.l.b16 %v608
        %v644 = vunpack.c.h.b16 %v608
        %v645 = vunpack.c.l.b16 %v609
        %v646 = vunpack.c.h.b16 %v609
        %v647 = vunpack.c.l.b16 %v610
        %v648 = vunpack.c.h.b16 %v610
        %v649 = vunpack.c.l.b16 %v611
        %v650 = vunpack.c.h.b16 %v611
        %v651 = vunpack.c.l.b16 %v612
        %v652 = vunpack.c.h.b16 %v612
        %v653 = vunpack.c.l.b16 %v613
        %v654 = vunpack.c.h.b16 %v613
        %v655 = vunpack.c.l.b16 %v614
        %v656 = vunpack.c.h.b16 %v614
        %v657 = vunpack.c.l.b16 %v615
        %v658 = vunpack.c.h.b16 %v615
        %v659 = vunpack.c.l.b16 %v616
        %v660 = vunpack.c.h.b16 %v616
        %v661 = vunpack.c.l.b16 %v617
        %v662 = vunpack.c.h.b16 %v617
        %v663 = vunpack.c.l.b16 %v618
        %v664 = vunpack.c.h.b16 %v618
        %v665 = vunpack.c.l.b16 %v619
        %v666 = vunpack.c.h.b16 %v619
        %v667 = vunpack.c.l.b16 %v620
        %v668 = vunpack.c.h.b16 %v620
        %v669 = vpack.c.b16 %v637, %v637
        %v670 = vpack.c.b16 %v638, %v638
        %v671 = vpack.c.b16 %v639, %v639
        %v672 = vpack.c.b16 %v640, %v640
        %v673 = vpack.c.b16 %v641, %v641
        %v674 = vpack.c.b16 %v642, %v642
        %v675 = vpack.c.b16 %v643, %v643
        %v676 = vpack.c.b16 %v644, %v644
        %v677 = vpack.c.b16 %v645, %v645
        %v678 = vpack.c.b16 %v646, %v646
        %v679 = vpack.c.b16 %v647, %v647
        %v680 = vpack.c.b16 %v648, %v648
        %v681 = vpack.c.b16 %v649, %v649
        %v682 = vpack.c.b16 %v650, %v650
        %v683 = vpack.c.b16 %v651, %v651
        %v684 = vpack.c.b16 %v652, %v652
        %v685 = vpack.c.b16 %v653, %v653
        %v686 = vpack.c.b16 %v654, %v654
        %v687 = vpack.c.b16 %v655, %v655
        %v688 = vpack.c.b16 %v656, %v656
        %v689 = vpack.c.b16 %v657, %v657
        %v690 = vpack.c.b16 %v658, %v658
        %v691 = vpack.c.b16 %v659, %v659
        %v692 = vpack.c.b16 %v660, %v660
        %v693 = vpack.c.b16 %v661, %v661
        %v694 = vpack.c.b16 %v662, %v662
        %v695 = vpack.c.b16 %v663, %v663
        %v696 = vpack.c.b16 %v664, %v664
        %v697 = vpack.c.b16 %v665, %v665
        %v698 = vpack.c.b16 %v666, %v666
        %v699 = vpack.c.b16 %v667, %v667
        %v700 = vpack.c.b16 %v668, %v668
        %733 = vst [vmem:[#allocation3 + $0x4] sm:$0xf] %v669
        %734 = vst [vmem:[#allocation3 + $0x28] sm:$0xf] %v670
        %735 = vst [vmem:[#allocation3 + $0x4c] sm:$0xf] %v671
        %736 = vst [vmem:[#allocation3 + $0x70] sm:$0xf] %v672
        %737 = vst [vmem:[#allocation3 + $0x94] sm:$0xf] %v673
        %738 = vst [vmem:[#allocation3 + $0xb8] sm:$0xf] %v674
        %739 = vst [vmem:[#allocation3 + $0xdc] sm:$0xf] %v675
        %740 = vst [vmem:[#allocation3 + $0x100] sm:$0xf] %v676
        %741 = vst [vmem:[#allocation3 + $0x124] sm:$0xf] %v677
        %742 = vst [vmem:[#allocation3 + $0x148] sm:$0xf] %v678
        %743 = vst [vmem:[#allocation3 + $0x16c] sm:$0xf] %v679
        %744 = vst [vmem:[#allocation3 + $0x190] sm:$0xf] %v680
        %745 = vst [vmem:[#allocation3 + $0x1b4] sm:$0xf] %v681
        %746 = vst [vmem:[#allocation3 + $0x1d8] sm:$0xf] %v682
        %747 = vst [vmem:[#allocation3 + $0x1fc] sm:$0xf] %v683
        %748 = vst [vmem:[#allocation3 + $0x220] sm:$0xf] %v684
        %749 = vst [vmem:[#allocation3 + $0x244] sm:$0xf] %v685
        %750 = vst [vmem:[#allocation3 + $0x268] sm:$0xf] %v686
        %751 = vst [vmem:[#allocation3 + $0x28c] sm:$0xf] %v687
        %752 = vst [vmem:[#allocation3 + $0x2b0] sm:$0xf] %v688
        %753 = vst [vmem:[#allocation3 + $0x2d4] sm:$0xf] %v689
        %754 = vst [vmem:[#allocation3 + $0x2f8] sm:$0xf] %v690
        %755 = vst [vmem:[#allocation3 + $0x31c] sm:$0xf] %v691
        %756 = vst [vmem:[#allocation3 + $0x340] sm:$0xf] %v692
        %757 = vst [vmem:[#allocation3 + $0x364] sm:$0xf] %v693
        %758 = vst [vmem:[#allocation3 + $0x388] sm:$0xf] %v694
        %759 = vst [vmem:[#allocation3 + $0x3ac] sm:$0xf] %v695
        %760 = vst [vmem:[#allocation3 + $0x3d0] sm:$0xf] %v696
        %761 = vst [vmem:[#allocation3 + $0x3f4] sm:$0xf] %v697
        %762 = vst [vmem:[#allocation3 + $0x418] sm:$0xf] %v698
        %763 = vst [vmem:[#allocation3 + $0x43c] sm:$0xf] %v699
        %764 = vst [vmem:[#allocation3 + $0x460] sm:$0xf] %v700
        %v765 = vld [vmem:[#allocation2 + $0x2] sm:$0xff]
        %v766 = vld [vmem:[#allocation2 + $0xa] sm:$0xff]
        %v767 = vld [vmem:[#allocation2 + $0x1a] sm:$0xff]
        %v768 = vld [vmem:[#allocation2 + $0x22] sm:$0xff]
        %v769 = vld [vmem:[#allocation2 + $0x32] sm:$0xff]
        %v770 = vld [vmem:[#allocation2 + $0x3a] sm:$0xff]
        %v771 = vld [vmem:[#allocation2 + $0x4a] sm:$0xff]
        %v772 = vld [vmem:[#allocation2 + $0x52] sm:$0xff]
        %v773 = vld [vmem:[#allocation2 + $0x62] sm:$0xff]
        %v774 = vld [vmem:[#allocation2 + $0x6a] sm:$0xff]
        %v775 = vld [vmem:[#allocation2 + $0x7a] sm:$0xff]
        %v776 = vld [vmem:[#allocation2 + $0x82] sm:$0xff]
        %v777 = vld [vmem:[#allocation2 + $0x92] sm:$0xff]
        %v778 = vld [vmem:[#allocation2 + $0x9a] sm:$0xff]
        %v779 = vld [vmem:[#allocation2 + $0xaa] sm:$0xff]
        %v780 = vld [vmem:[#allocation2 + $0xb2] sm:$0xff]
        %v781 = vld [vmem:[#allocation2 + $0xc2] sm:$0xff]
        %v782 = vld [vmem:[#allocation2 + $0xca] sm:$0xff]
        %v783 = vld [vmem:[#allocation2 + $0xda] sm:$0xff]
        %v784 = vld [vmem:[#allocation2 + $0xe2] sm:$0xff]
        %v785 = vld [vmem:[#allocation2 + $0xf2] sm:$0xff]
        %v786 = vld [vmem:[#allocation2 + $0xfa] sm:$0xff]
        %v787 = vld [vmem:[#allocation2 + $0x10a] sm:$0xff]
        %v788 = vld [vmem:[#allocation2 + $0x112] sm:$0xff]
        %v789 = vld [vmem:[#allocation2 + $0x122] sm:$0xff]
        %v790 = vld [vmem:[#allocation2 + $0x12a] sm:$0xff]
        %v791 = vld [vmem:[#allocation2 + $0x13a] sm:$0xff]
        %v792 = vld [vmem:[#allocation2 + $0x142] sm:$0xff]
        %v793 = vld [vmem:[#allocation2 + $0x152] sm:$0xff]
        %v794 = vld [vmem:[#allocation2 + $0x15a] sm:$0xff]
        %v795 = vld [vmem:[#allocation2 + $0x16a] sm:$0xff]
        %v796 = vld [vmem:[#allocation2 + $0x172] sm:$0xff]
        %v797 = vpack.c.bf16 %v766, %v765
        %v798 = vpack.c.bf16 %v768, %v767
        %v799 = vpack.c.bf16 %v770, %v769
        %v800 = vpack.c.bf16 %v772, %v771
        %v801 = vpack.c.bf16 %v774, %v773
        %v802 = vpack.c.bf16 %v776, %v775
        %v803 = vpack.c.bf16 %v778, %v777
        %v804 = vpack.c.bf16 %v780, %v779
        %v805 = vpack.c.bf16 %v782, %v781
        %v806 = vpack.c.bf16 %v784, %v783
        %v807 = vpack.c.bf16 %v786, %v785
        %v808 = vpack.c.bf16 %v788, %v787
        %v809 = vpack.c.bf16 %v790, %v789
        %v810 = vpack.c.bf16 %v792, %v791
        %v811 = vpack.c.bf16 %v794, %v793
        %v812 = vpack.c.bf16 %v796, %v795
        %v829 = vunpack.c.l.b16 %v797
        %v830 = vunpack.c.h.b16 %v797
        %v831 = vunpack.c.l.b16 %v798
        %v832 = vunpack.c.h.b16 %v798
        %v833 = vunpack.c.l.b16 %v799
        %v834 = vunpack.c.h.b16 %v799
        %v835 = vunpack.c.l.b16 %v800
        %v836 = vunpack.c.h.b16 %v800
        %v837 = vunpack.c.l.b16 %v801
        %v838 = vunpack.c.h.b16 %v801
        %v839 = vunpack.c.l.b16 %v802
        %v840 = vunpack.c.h.b16 %v802
        %v841 = vunpack.c.l.b16 %v803
        %v842 = vunpack.c.h.b16 %v803
        %v843 = vunpack.c.l.b16 %v804
        %v844 = vunpack.c.h.b16 %v804
        %v845 = vunpack.c.l.b16 %v805
        %v846 = vunpack.c.h.b16 %v805
        %v847 = vunpack.c.l.b16 %v806
        %v848 = vunpack.c.h.b16 %v806
        %v849 = vunpack.c.l.b16 %v807
        %v850 = vunpack.c.h.b16 %v807
        %v851 = vunpack.c.l.b16 %v808
        %v852 = vunpack.c.h.b16 %v808
        %v853 = vunpack.c.l.b16 %v809
        %v854 = vunpack.c.h.b16 %v809
        %v855 = vunpack.c.l.b16 %v810
        %v856 = vunpack.c.h.b16 %v810
        %v857 = vunpack.c.l.b16 %v811
        %v858 = vunpack.c.h.b16 %v811
        %v859 = vunpack.c.l.b16 %v812
        %v860 = vunpack.c.h.b16 %v812
        %v861 = vpack.c.b16 %v829, %v829
        %v862 = vpack.c.b16 %v830, %v830
        %v863 = vpack.c.b16 %v831, %v831
        %v864 = vpack.c.b16 %v832, %v832
        %v865 = vpack.c.b16 %v833, %v833
        %v866 = vpack.c.b16 %v834, %v834
        %v867 = vpack.c.b16 %v835, %v835
        %v868 = vpack.c.b16 %v836, %v836
        %v869 = vpack.c.b16 %v837, %v837
        %v870 = vpack.c.b16 %v838, %v838
        %v871 = vpack.c.b16 %v839, %v839
        %v872 = vpack.c.b16 %v840, %v840
        %v873 = vpack.c.b16 %v841, %v841
        %v874 = vpack.c.b16 %v842, %v842
        %v875 = vpack.c.b16 %v843, %v843
        %v876 = vpack.c.b16 %v844, %v844
        %v877 = vpack.c.b16 %v845, %v845
        %v878 = vpack.c.b16 %v846, %v846
        %v879 = vpack.c.b16 %v847, %v847
        %v880 = vpack.c.b16 %v848, %v848
        %v881 = vpack.c.b16 %v849, %v849
        %v882 = vpack.c.b16 %v850, %v850
        %v883 = vpack.c.b16 %v851, %v851
        %v884 = vpack.c.b16 %v852, %v852
        %v885 = vpack.c.b16 %v853, %v853
        %v886 = vpack.c.b16 %v854, %v854
        %v887 = vpack.c.b16 %v855, %v855
        %v888 = vpack.c.b16 %v856, %v856
        %v889 = vpack.c.b16 %v857, %v857
        %v890 = vpack.c.b16 %v858, %v858
        %v891 = vpack.c.b16 %v859, %v859
        %v892 = vpack.c.b16 %v860, %v860
        %925 = vst [vmem:[#allocation3 + $0x8] sm:$0xf] %v861
        %926 = vst [vmem:[#allocation3 + $0x2c] sm:$0xf] %v862
        %927 = vst [vmem:[#allocation3 + $0x50] sm:$0xf] %v863
        %928 = vst [vmem:[#allocation3 + $0x74] sm:$0xf] %v864
        %929 = vst [vmem:[#allocation3 + $0x98] sm:$0xf] %v865
        %930 = vst [vmem:[#allocation3 + $0xbc] sm:$0xf] %v866
        %931 = vst [vmem:[#allocation3 + $0xe0] sm:$0xf] %v867
        %932 = vst [vmem:[#allocation3 + $0x104] sm:$0xf] %v868
        %933 = vst [vmem:[#allocation3 + $0x128] sm:$0xf] %v869
        %934 = vst [vmem:[#allocation3 + $0x14c] sm:$0xf] %v870
        %935 = vst [vmem:[#allocation3 + $0x170] sm:$0xf] %v871
        %936 = vst [vmem:[#allocation3 + $0x194] sm:$0xf] %v872
        %937 = vst [vmem:[#allocation3 + $0x1b8] sm:$0xf] %v873
        %938 = vst [vmem:[#allocation3 + $0x1dc] sm:$0xf] %v874
        %939 = vst [vmem:[#allocation3 + $0x200] sm:$0xf] %v875
        %940 = vst [vmem:[#allocation3 + $0x224] sm:$0xf] %v876
        %941 = vst [vmem:[#allocation3 + $0x248] sm:$0xf] %v877
        %942 = vst [vmem:[#allocation3 + $0x26c] sm:$0xf] %v878
        %943 = vst [vmem:[#allocation3 + $0x290] sm:$0xf] %v879
        %944 = vst [vmem:[#allocation3 + $0x2b4] sm:$0xf] %v880
        %945 = vst [vmem:[#allocation3 + $0x2d8] sm:$0xf] %v881
        %946 = vst [vmem:[#allocation3 + $0x2fc] sm:$0xf] %v882
        %947 = vst [vmem:[#allocation3 + $0x320] sm:$0xf] %v883
        %948 = vst [vmem:[#allocation3 + $0x344] sm:$0xf] %v884
        %949 = vst [vmem:[#allocation3 + $0x368] sm:$0xf] %v885
        %950 = vst [vmem:[#allocation3 + $0x38c] sm:$0xf] %v886
        %951 = vst [vmem:[#allocation3 + $0x3b0] sm:$0xf] %v887
        %952 = vst [vmem:[#allocation3 + $0x3d4] sm:$0xf] %v888
        %953 = vst [vmem:[#allocation3 + $0x3f8] sm:$0xf] %v889
        %954 = vst [vmem:[#allocation3 + $0x41c] sm:$0xf] %v890
        %955 = vst [vmem:[#allocation3 + $0x440] sm:$0xf] %v891
        %956 = vst [vmem:[#allocation3 + $0x464] sm:$0xf] %v892
        %v957 = vld [vmem:[%s348] sm:$0xff]
        %v958 = vld [vmem:[%s348 + $0x8] sm:$0xff]
        %v959 = vld [vmem:[%s348 + $0x18] sm:$0xff]
        %v960 = vld [vmem:[%s348 + $0x20] sm:$0xff]
        %v961 = vld [vmem:[%s348 + $0x30] sm:$0xff]
        %v962 = vld [vmem:[%s348 + $0x38] sm:$0xff]
        %v963 = vld [vmem:[%s348 + $0x48] sm:$0xff]
        %v964 = vld [vmem:[%s348 + $0x50] sm:$0xff]
        %v965 = vld [vmem:[%s348 + $0x60] sm:$0xff]
        %v966 = vld [vmem:[%s348 + $0x68] sm:$0xff]
        %v967 = vld [vmem:[%s348 + $0x78] sm:$0xff]
        %v968 = vld [vmem:[%s348 + $0x80] sm:$0xff]
        %v969 = vld [vmem:[%s348 + $0x90] sm:$0xff]
        %v970 = vld [vmem:[%s348 + $0x98] sm:$0xff]
        %v971 = vld [vmem:[%s348 + $0xa8] sm:$0xff]
        %v972 = vld [vmem:[%s348 + $0xb0] sm:$0xff]
        %v973 = vld [vmem:[%s348 + $0xc0] sm:$0xff]
        %v974 = vld [vmem:[%s348 + $0xc8] sm:$0xff]
        %v975 = vld [vmem:[%s348 + $0xd8] sm:$0xff]
        %v976 = vld [vmem:[%s348 + $0xe0] sm:$0xff]
        %v977 = vld [vmem:[%s348 + $0xf0] sm:$0xff]
        %v978 = vld [vmem:[%s348 + $0xf8] sm:$0xff]
        %v979 = vld [vmem:[%s348 + $0x108] sm:$0xff]
        %v980 = vld [vmem:[%s348 + $0x110] sm:$0xff]
        %v981 = vld [vmem:[%s348 + $0x120] sm:$0xff]
        %v982 = vld [vmem:[%s348 + $0x128] sm:$0xff]
        %v983 = vld [vmem:[%s348 + $0x138] sm:$0xff]
        %v984 = vld [vmem:[%s348 + $0x140] sm:$0xff]
        %v985 = vld [vmem:[%s348 + $0x150] sm:$0xff]
        %v986 = vld [vmem:[%s348 + $0x158] sm:$0xff]
        %v987 = vld [vmem:[%s348 + $0x168] sm:$0xff]
        %v988 = vld [vmem:[%s348 + $0x170] sm:$0xff]
        %v989 = vpack.c.bf16 %v958, %v957
        %v990 = vpack.c.bf16 %v960, %v959
        %v991 = vpack.c.bf16 %v962, %v961
        %v992 = vpack.c.bf16 %v964, %v963
        %v993 = vpack.c.bf16 %v966, %v965
        %v994 = vpack.c.bf16 %v968, %v967
        %v995 = vpack.c.bf16 %v970, %v969
        %v996 = vpack.c.bf16 %v972, %v971
        %v997 = vpack.c.bf16 %v974, %v973
        %v998 = vpack.c.bf16 %v976, %v975
        %v999 = vpack.c.bf16 %v978, %v977
        %v1000 = vpack.c.bf16 %v980, %v979
        %v1001 = vpack.c.bf16 %v982, %v981
        %v1002 = vpack.c.bf16 %v984, %v983
        %v1003 = vpack.c.bf16 %v986, %v985
        %v1004 = vpack.c.bf16 %v988, %v987
        %v1021 = vunpack.c.l.b16 %v989
        %v1022 = vunpack.c.h.b16 %v989
        %v1023 = vunpack.c.l.b16 %v990
        %v1024 = vunpack.c.h.b16 %v990
        %v1025 = vunpack.c.l.b16 %v991
        %v1026 = vunpack.c.h.b16 %v991
        %v1027 = vunpack.c.l.b16 %v992
        %v1028 = vunpack.c.h.b16 %v992
        %v1029 = vunpack.c.l.b16 %v993
        %v1030 = vunpack.c.h.b16 %v993
        %v1031 = vunpack.c.l.b16 %v994
        %v1032 = vunpack.c.h.b16 %v994
        %v1033 = vunpack.c.l.b16 %v995
        %v1034 = vunpack.c.h.b16 %v995
        %v1035 = vunpack.c.l.b16 %v996
        %v1036 = vunpack.c.h.b16 %v996
        %v1037 = vunpack.c.l.b16 %v997
        %v1038 = vunpack.c.h.b16 %v997
        %v1039 = vunpack.c.l.b16 %v998
        %v1040 = vunpack.c.h.b16 %v998
        %v1041 = vunpack.c.l.b16 %v999
        %v1042 = vunpack.c.h.b16 %v999
        %v1043 = vunpack.c.l.b16 %v1000
        %v1044 = vunpack.c.h.b16 %v1000
        %v1045 = vunpack.c.l.b16 %v1001
        %v1046 = vunpack.c.h.b16 %v1001
        %v1047 = vunpack.c.l.b16 %v1002
        %v1048 = vunpack.c.h.b16 %v1002
        %v1049 = vunpack.c.l.b16 %v1003
        %v1050 = vunpack.c.h.b16 %v1003
        %v1051 = vunpack.c.l.b16 %v1004
        %v1052 = vunpack.c.h.b16 %v1004
        %v1053 = vpack.c.b16 %v1021, %v1021
        %v1054 = vpack.c.b16 %v1022, %v1022
        %v1055 = vpack.c.b16 %v1023, %v1023
        %v1056 = vpack.c.b16 %v1024, %v1024
        %v1057 = vpack.c.b16 %v1025, %v1025
        %v1058 = vpack.c.b16 %v1026, %v1026
        %v1059 = vpack.c.b16 %v1027, %v1027
        %v1060 = vpack.c.b16 %v1028, %v1028
        %v1061 = vpack.c.b16 %v1029, %v1029
        %v1062 = vpack.c.b16 %v1030, %v1030
        %v1063 = vpack.c.b16 %v1031, %v1031
        %v1064 = vpack.c.b16 %v1032, %v1032
        %v1065 = vpack.c.b16 %v1033, %v1033
        %v1066 = vpack.c.b16 %v1034, %v1034
        %v1067 = vpack.c.b16 %v1035, %v1035
        %v1068 = vpack.c.b16 %v1036, %v1036
        %v1069 = vpack.c.b16 %v1037, %v1037
        %v1070 = vpack.c.b16 %v1038, %v1038
        %v1071 = vpack.c.b16 %v1039, %v1039
        %v1072 = vpack.c.b16 %v1040, %v1040
        %v1073 = vpack.c.b16 %v1041, %v1041
        %v1074 = vpack.c.b16 %v1042, %v1042
        %v1075 = vpack.c.b16 %v1043, %v1043
        %v1076 = vpack.c.b16 %v1044, %v1044
        %v1077 = vpack.c.b16 %v1045, %v1045
        %v1078 = vpack.c.b16 %v1046, %v1046
        %v1079 = vpack.c.b16 %v1047, %v1047
        %v1080 = vpack.c.b16 %v1048, %v1048
        %v1081 = vpack.c.b16 %v1049, %v1049
        %v1082 = vpack.c.b16 %v1050, %v1050
        %v1083 = vpack.c.b16 %v1051, %v1051
        %v1084 = vpack.c.b16 %v1052, %v1052
        %1117 = vst [vmem:[#allocation3 + $0xc] sm:$0xf] %v1053
        %1118 = vst [vmem:[#allocation3 + $0x30] sm:$0xf] %v1054
        %1119 = vst [vmem:[#allocation3 + $0x54] sm:$0xf] %v1055
        %1120 = vst [vmem:[#allocation3 + $0x78] sm:$0xf] %v1056
        %1121 = vst [vmem:[#allocation3 + $0x9c] sm:$0xf] %v1057
        %1122 = vst [vmem:[#allocation3 + $0xc0] sm:$0xf] %v1058
        %1123 = vst [vmem:[#allocation3 + $0xe4] sm:$0xf] %v1059
        %1124 = vst [vmem:[#allocation3 + $0x108] sm:$0xf] %v1060
        %1125 = vst [vmem:[#allocation3 + $0x12c] sm:$0xf] %v1061
        %1126 = vst [vmem:[#allocation3 + $0x150] sm:$0xf] %v1062
        %1127 = vst [vmem:[#allocation3 + $0x174] sm:$0xf] %v1063
        %1128 = vst [vmem:[#allocation3 + $0x198] sm:$0xf] %v1064
        %1129 = vst [vmem:[#allocation3 + $0x1bc] sm:$0xf] %v1065
        %1130 = vst [vmem:[#allocation3 + $0x1e0] sm:$0xf] %v1066
        %1131 = vst [vmem:[#allocation3 + $0x204] sm:$0xf] %v1067
        %1132 = vst [vmem:[#allocation3 + $0x228] sm:$0xf] %v1068
        %1133 = vst [vmem:[#allocation3 + $0x24c] sm:$0xf] %v1069
        %1134 = vst [vmem:[#allocation3 + $0x270] sm:$0xf] %v1070
        %1135 = vst [vmem:[#allocation3 + $0x294] sm:$0xf] %v1071
        %1136 = vst [vmem:[#allocation3 + $0x2b8] sm:$0xf] %v1072
        %1137 = vst [vmem:[#allocation3 + $0x2dc] sm:$0xf] %v1073
        %1138 = vst [vmem:[#allocation3 + $0x300] sm:$0xf] %v1074
        %1139 = vst [vmem:[#allocation3 + $0x324] sm:$0xf] %v1075
        %1140 = vst [vmem:[#allocation3 + $0x348] sm:$0xf] %v1076
        %1141 = vst [vmem:[#allocation3 + $0x36c] sm:$0xf] %v1077
        %1142 = vst [vmem:[#allocation3 + $0x390] sm:$0xf] %v1078
        %1143 = vst [vmem:[#allocation3 + $0x3b4] sm:$0xf] %v1079
        %1144 = vst [vmem:[#allocation3 + $0x3d8] sm:$0xf] %v1080
        %1145 = vst [vmem:[#allocation3 + $0x3fc] sm:$0xf] %v1081
        %1146 = vst [vmem:[#allocation3 + $0x420] sm:$0xf] %v1082
        %1147 = vst [vmem:[#allocation3 + $0x444] sm:$0xf] %v1083
        %1148 = vst [vmem:[#allocation3 + $0x468] sm:$0xf] %v1084
        %v1149 = vld [vmem:[%s348 + $0x1] sm:$0xff]
        %v1150 = vld [vmem:[%s348 + $0x9] sm:$0xff]
        %v1151 = vld [vmem:[%s348 + $0x19] sm:$0xff]
        %v1152 = vld [vmem:[%s348 + $0x21] sm:$0xff]
        %v1153 = vld [vmem:[%s348 + $0x31] sm:$0xff]
        %v1154 = vld [vmem:[%s348 + $0x39] sm:$0xff]
        %v1155 = vld [vmem:[%s348 + $0x49] sm:$0xff]
        %v1156 = vld [vmem:[%s348 + $0x51] sm:$0xff]
        %v1157 = vld [vmem:[%s348 + $0x61] sm:$0xff]
        %v1158 = vld [vmem:[%s348 + $0x69] sm:$0xff]
        %v1159 = vld [vmem:[%s348 + $0x79] sm:$0xff]
        %v1160 = vld [vmem:[%s348 + $0x81] sm:$0xff]
        %v1161 = vld [vmem:[%s348 + $0x91] sm:$0xff]
        %v1162 = vld [vmem:[%s348 + $0x99] sm:$0xff]
        %v1163 = vld [vmem:[%s348 + $0xa9] sm:$0xff]
        %v1164 = vld [vmem:[%s348 + $0xb1] sm:$0xff]
        %v1165 = vld [vmem:[%s348 + $0xc1] sm:$0xff]
        %v1166 = vld [vmem:[%s348 + $0xc9] sm:$0xff]
        %v1167 = vld [vmem:[%s348 + $0xd9] sm:$0xff]
        %v1168 = vld [vmem:[%s348 + $0xe1] sm:$0xff]
        %v1169 = vld [vmem:[%s348 + $0xf1] sm:$0xff]
        %v1170 = vld [vmem:[%s348 + $0xf9] sm:$0xff]
        %v1171 = vld [vmem:[%s348 + $0x109] sm:$0xff]
        %v1172 = vld [vmem:[%s348 + $0x111] sm:$0xff]
        %v1173 = vld [vmem:[%s348 + $0x121] sm:$0xff]
        %v1174 = vld [vmem:[%s348 + $0x129] sm:$0xff]
        %v1175 = vld [vmem:[%s348 + $0x139] sm:$0xff]
        %v1176 = vld [vmem:[%s348 + $0x141] sm:$0xff]
        %v1177 = vld [vmem:[%s348 + $0x151] sm:$0xff]
        %v1178 = vld [vmem:[%s348 + $0x159] sm:$0xff]
        %v1179 = vld [vmem:[%s348 + $0x169] sm:$0xff]
        %v1180 = vld [vmem:[%s348 + $0x171] sm:$0xff]
        %v1181 = vpack.c.bf16 %v1150, %v1149
        %v1182 = vpack.c.bf16 %v1152, %v1151
        %v1183 = vpack.c.bf16 %v1154, %v1153
        %v1184 = vpack.c.bf16 %v1156, %v1155
        %v1185 = vpack.c.bf16 %v1158, %v1157
        %v1186 = vpack.c.bf16 %v1160, %v1159
        %v1187 = vpack.c.bf16 %v1162, %v1161
        %v1188 = vpack.c.bf16 %v1164, %v1163
        %v1189 = vpack.c.bf16 %v1166, %v1165
        %v1190 = vpack.c.bf16 %v1168, %v1167
        %v1191 = vpack.c.bf16 %v1170, %v1169
        %v1192 = vpack.c.bf16 %v1172, %v1171
        %v1193 = vpack.c.bf16 %v1174, %v1173
        %v1194 = vpack.c.bf16 %v1176, %v1175
        %v1195 = vpack.c.bf16 %v1178, %v1177
        %v1196 = vpack.c.bf16 %v1180, %v1179
        %v1213 = vunpack.c.l.b16 %v1181
        %v1214 = vunpack.c.h.b16 %v1181
        %v1215 = vunpack.c.l.b16 %v1182
        %v1216 = vunpack.c.h.b16 %v1182
        %v1217 = vunpack.c.l.b16 %v1183
        %v1218 = vunpack.c.h.b16 %v1183
        %v1219 = vunpack.c.l.b16 %v1184
        %v1220 = vunpack.c.h.b16 %v1184
        %v1221 = vunpack.c.l.b16 %v1185
        %v1222 = vunpack.c.h.b16 %v1185
        %v1223 = vunpack.c.l.b16 %v1186
        %v1224 = vunpack.c.h.b16 %v1186
        %v1225 = vunpack.c.l.b16 %v1187
        %v1226 = vunpack.c.h.b16 %v1187
        %v1227 = vunpack.c.l.b16 %v1188
        %v1228 = vunpack.c.h.b16 %v1188
        %v1229 = vunpack.c.l.b16 %v1189
        %v1230 = vunpack.c.h.b16 %v1189
        %v1231 = vunpack.c.l.b16 %v1190
        %v1232 = vunpack.c.h.b16 %v1190
        %v1233 = vunpack.c.l.b16 %v1191
        %v1234 = vunpack.c.h.b16 %v1191
        %v1235 = vunpack.c.l.b16 %v1192
        %v1236 = vunpack.c.h.b16 %v1192
        %v1237 = vunpack.c.l.b16 %v1193
        %v1238 = vunpack.c.h.b16 %v1193
        %v1239 = vunpack.c.l.b16 %v1194
        %v1240 = vunpack.c.h.b16 %v1194
        %v1241 = vunpack.c.l.b16 %v1195
        %v1242 = vunpack.c.h.b16 %v1195
        %v1243 = vunpack.c.l.b16 %v1196
        %v1244 = vunpack.c.h.b16 %v1196
        %v1245 = vpack.c.b16 %v1213, %v1213
        %v1246 = vpack.c.b16 %v1214, %v1214
        %v1247 = vpack.c.b16 %v1215, %v1215
        %v1248 = vpack.c.b16 %v1216, %v1216
        %v1249 = vpack.c.b16 %v1217, %v1217
        %v1250 = vpack.c.b16 %v1218, %v1218
        %v1251 = vpack.c.b16 %v1219, %v1219
        %v1252 = vpack.c.b16 %v1220, %v1220
        %v1253 = vpack.c.b16 %v1221, %v1221
        %v1254 = vpack.c.b16 %v1222, %v1222
        %v1255 = vpack.c.b16 %v1223, %v1223
        %v1256 = vpack.c.b16 %v1224, %v1224
        %v1257 = vpack.c.b16 %v1225, %v1225
        %v1258 = vpack.c.b16 %v1226, %v1226
        %v1259 = vpack.c.b16 %v1227, %v1227
        %v1260 = vpack.c.b16 %v1228, %v1228
        %v1261 = vpack.c.b16 %v1229, %v1229
        %v1262 = vpack.c.b16 %v1230, %v1230
        %v1263 = vpack.c.b16 %v1231, %v1231
        %v1264 = vpack.c.b16 %v1232, %v1232
        %v1265 = vpack.c.b16 %v1233, %v1233
        %v1266 = vpack.c.b16 %v1234, %v1234
        %v1267 = vpack.c.b16 %v1235, %v1235
        %v1268 = vpack.c.b16 %v1236, %v1236
        %v1269 = vpack.c.b16 %v1237, %v1237
        %v1270 = vpack.c.b16 %v1238, %v1238
        %v1271 = vpack.c.b16 %v1239, %v1239
        %v1272 = vpack.c.b16 %v1240, %v1240
        %v1273 = vpack.c.b16 %v1241, %v1241
        %v1274 = vpack.c.b16 %v1242, %v1242
        %v1275 = vpack.c.b16 %v1243, %v1243
        %v1276 = vpack.c.b16 %v1244, %v1244
        %1309 = vst [vmem:[#allocation3 + $0x10] sm:$0xf] %v1245
        %1310 = vst [vmem:[#allocation3 + $0x34] sm:$0xf] %v1246
        %1311 = vst [vmem:[#allocation3 + $0x58] sm:$0xf] %v1247
        %1312 = vst [vmem:[#allocation3 + $0x7c] sm:$0xf] %v1248
        %1313 = vst [vmem:[#allocation3 + $0xa0] sm:$0xf] %v1249
        %1314 = vst [vmem:[#allocation3 + $0xc4] sm:$0xf] %v1250
        %1315 = vst [vmem:[#allocation3 + $0xe8] sm:$0xf] %v1251
        %1316 = vst [vmem:[#allocation3 + $0x10c] sm:$0xf] %v1252
        %1317 = vst [vmem:[#allocation3 + $0x130] sm:$0xf] %v1253
        %1318 = vst [vmem:[#allocation3 + $0x154] sm:$0xf] %v1254
        %1319 = vst [vmem:[#allocation3 + $0x178] sm:$0xf] %v1255
        %1320 = vst [vmem:[#allocation3 + $0x19c] sm:$0xf] %v1256
        %1321 = vst [vmem:[#allocation3 + $0x1c0] sm:$0xf] %v1257
        %1322 = vst [vmem:[#allocation3 + $0x1e4] sm:$0xf] %v1258
        %1323 = vst [vmem:[#allocation3 + $0x208] sm:$0xf] %v1259
        %1324 = vst [vmem:[#allocation3 + $0x22c] sm:$0xf] %v1260
        %1325 = vst [vmem:[#allocation3 + $0x250] sm:$0xf] %v1261
        %1326 = vst [vmem:[#allocation3 + $0x274] sm:$0xf] %v1262
        %1327 = vst [vmem:[#allocation3 + $0x298] sm:$0xf] %v1263
        %1328 = vst [vmem:[#allocation3 + $0x2bc] sm:$0xf] %v1264
        %1329 = vst [vmem:[#allocation3 + $0x2e0] sm:$0xf] %v1265
        %1330 = vst [vmem:[#allocation3 + $0x304] sm:$0xf] %v1266
        %1331 = vst [vmem:[#allocation3 + $0x328] sm:$0xf] %v1267
        %1332 = vst [vmem:[#allocation3 + $0x34c] sm:$0xf] %v1268
        %1333 = vst [vmem:[#allocation3 + $0x370] sm:$0xf] %v1269
        %1334 = vst [vmem:[#allocation3 + $0x394] sm:$0xf] %v1270
        %1335 = vst [vmem:[#allocation3 + $0x3b8] sm:$0xf] %v1271
        %1336 = vst [vmem:[#allocation3 + $0x3dc] sm:$0xf] %v1272
        %1337 = vst [vmem:[#allocation3 + $0x400] sm:$0xf] %v1273
        %1338 = vst [vmem:[#allocation3 + $0x424] sm:$0xf] %v1274
        %1339 = vst [vmem:[#allocation3 + $0x448] sm:$0xf] %v1275
        %1340 = vst [vmem:[#allocation3 + $0x46c] sm:$0xf] %v1276
        %v1341 = vld [vmem:[%s348 + $0x2] sm:$0xff]
        %v1342 = vld [vmem:[%s348 + $0xa] sm:$0xff]
        %v1343 = vld [vmem:[%s348 + $0x1a] sm:$0xff]
        %v1344 = vld [vmem:[%s348 + $0x22] sm:$0xff]
        %v1345 = vld [vmem:[%s348 + $0x32] sm:$0xff]
        %v1346 = vld [vmem:[%s348 + $0x3a] sm:$0xff]
        %v1347 = vld [vmem:[%s348 + $0x4a] sm:$0xff]
        %v1348 = vld [vmem:[%s348 + $0x52] sm:$0xff]
        %v1349 = vld [vmem:[%s348 + $0x62] sm:$0xff]
        %v1350 = vld [vmem:[%s348 + $0x6a] sm:$0xff]
        %v1351 = vld [vmem:[%s348 + $0x7a] sm:$0xff]
        %v1352 = vld [vmem:[%s348 + $0x82] sm:$0xff]
        %v1353 = vld [vmem:[%s348 + $0x92] sm:$0xff]
        %v1354 = vld [vmem:[%s348 + $0x9a] sm:$0xff]
        %v1355 = vld [vmem:[%s348 + $0xaa] sm:$0xff]
        %v1356 = vld [vmem:[%s348 + $0xb2] sm:$0xff]
        %v1357 = vld [vmem:[%s348 + $0xc2] sm:$0xff]
        %v1358 = vld [vmem:[%s348 + $0xca] sm:$0xff]
        %v1359 = vld [vmem:[%s348 + $0xda] sm:$0xff]
        %v1360 = vld [vmem:[%s348 + $0xe2] sm:$0xff]
        %v1361 = vld [vmem:[%s348 + $0xf2] sm:$0xff]
        %v1362 = vld [vmem:[%s348 + $0xfa] sm:$0xff]
        %v1363 = vld [vmem:[%s348 + $0x10a] sm:$0xff]
        %v1364 = vld [vmem:[%s348 + $0x112] sm:$0xff]
        %v1365 = vld [vmem:[%s348 + $0x122] sm:$0xff]
        %v1366 = vld [vmem:[%s348 + $0x12a] sm:$0xff]
        %v1367 = vld [vmem:[%s348 + $0x13a] sm:$0xff]
        %v1368 = vld [vmem:[%s348 + $0x142] sm:$0xff]
        %v1369 = vld [vmem:[%s348 + $0x152] sm:$0xff]
        %v1370 = vld [vmem:[%s348 + $0x15a] sm:$0xff]
        %v1371 = vld [vmem:[%s348 + $0x16a] sm:$0xff]
        %v1372 = vld [vmem:[%s348 + $0x172] sm:$0xff]
        %v1373 = vpack.c.bf16 %v1342, %v1341
        %v1374 = vpack.c.bf16 %v1344, %v1343
        %v1375 = vpack.c.bf16 %v1346, %v1345
        %v1376 = vpack.c.bf16 %v1348, %v1347
        %v1377 = vpack.c.bf16 %v1350, %v1349
        %v1378 = vpack.c.bf16 %v1352, %v1351
        %v1379 = vpack.c.bf16 %v1354, %v1353
        %v1380 = vpack.c.bf16 %v1356, %v1355
        %v1381 = vpack.c.bf16 %v1358, %v1357
        %v1382 = vpack.c.bf16 %v1360, %v1359
        %v1383 = vpack.c.bf16 %v1362, %v1361
        %v1384 = vpack.c.bf16 %v1364, %v1363
        %v1385 = vpack.c.bf16 %v1366, %v1365
        %v1386 = vpack.c.bf16 %v1368, %v1367
        %v1387 = vpack.c.bf16 %v1370, %v1369
        %v1388 = vpack.c.bf16 %v1372, %v1371
        %v1405 = vunpack.c.l.b16 %v1373
        %v1406 = vunpack.c.h.b16 %v1373
        %v1407 = vunpack.c.l.b16 %v1374
        %v1408 = vunpack.c.h.b16 %v1374
        %v1409 = vunpack.c.l.b16 %v1375
        %v1410 = vunpack.c.h.b16 %v1375
        %v1411 = vunpack.c.l.b16 %v1376
        %v1412 = vunpack.c.h.b16 %v1376
        %v1413 = vunpack.c.l.b16 %v1377
        %v1414 = vunpack.c.h.b16 %v1377
        %v1415 = vunpack.c.l.b16 %v1378
        %v1416 = vunpack.c.h.b16 %v1378
        %v1417 = vunpack.c.l.b16 %v1379
        %v1418 = vunpack.c.h.b16 %v1379
        %v1419 = vunpack.c.l.b16 %v1380
        %v1420 = vunpack.c.h.b16 %v1380
        %v1421 = vunpack.c.l.b16 %v1381
        %v1422 = vunpack.c.h.b16 %v1381
        %v1423 = vunpack.c.l.b16 %v1382
        %v1424 = vunpack.c.h.b16 %v1382
        %v1425 = vunpack.c.l.b16 %v1383
        %v1426 = vunpack.c.h.b16 %v1383
        %v1427 = vunpack.c.l.b16 %v1384
        %v1428 = vunpack.c.h.b16 %v1384
        %v1429 = vunpack.c.l.b16 %v1385
        %v1430 = vunpack.c.h.b16 %v1385
        %v1431 = vunpack.c.l.b16 %v1386
        %v1432 = vunpack.c.h.b16 %v1386
        %v1433 = vunpack.c.l.b16 %v1387
        %v1434 = vunpack.c.h.b16 %v1387
        %v1435 = vunpack.c.l.b16 %v1388
        %v1436 = vunpack.c.h.b16 %v1388
        %v1437 = vpack.c.b16 %v1405, %v1405
        %v1438 = vpack.c.b16 %v1406, %v1406
        %v1439 = vpack.c.b16 %v1407, %v1407
        %v1440 = vpack.c.b16 %v1408, %v1408
        %v1441 = vpack.c.b16 %v1409, %v1409
        %v1442 = vpack.c.b16 %v1410, %v1410
        %v1443 = vpack.c.b16 %v1411, %v1411
        %v1444 = vpack.c.b16 %v1412, %v1412
        %v1445 = vpack.c.b16 %v1413, %v1413
        %v1446 = vpack.c.b16 %v1414, %v1414
        %v1447 = vpack.c.b16 %v1415, %v1415
        %v1448 = vpack.c.b16 %v1416, %v1416
        %v1449 = vpack.c.b16 %v1417, %v1417
        %v1450 = vpack.c.b16 %v1418, %v1418
        %v1451 = vpack.c.b16 %v1419, %v1419
        %v1452 = vpack.c.b16 %v1420, %v1420
        %v1453 = vpack.c.b16 %v1421, %v1421
        %v1454 = vpack.c.b16 %v1422, %v1422
        %v1455 = vpack.c.b16 %v1423, %v1423
        %v1456 = vpack.c.b16 %v1424, %v1424
        %v1457 = vpack.c.b16 %v1425, %v1425
        %v1458 = vpack.c.b16 %v1426, %v1426
        %v1459 = vpack.c.b16 %v1427, %v1427
        %v1460 = vpack.c.b16 %v1428, %v1428
        %v1461 = vpack.c.b16 %v1429, %v1429
        %v1462 = vpack.c.b16 %v1430, %v1430
        %v1463 = vpack.c.b16 %v1431, %v1431
        %v1464 = vpack.c.b16 %v1432, %v1432
        %v1465 = vpack.c.b16 %v1433, %v1433
        %v1466 = vpack.c.b16 %v1434, %v1434
        %v1467 = vpack.c.b16 %v1435, %v1435
        %v1468 = vpack.c.b16 %v1436, %v1436
        %1501 = vst [vmem:[#allocation3 + $0x14] sm:$0xf] %v1437
        %1502 = vst [vmem:[#allocation3 + $0x38] sm:$0xf] %v1438
        %1503 = vst [vmem:[#allocation3 + $0x5c] sm:$0xf] %v1439
        %1504 = vst [vmem:[#allocation3 + $0x80] sm:$0xf] %v1440
        %1505 = vst [vmem:[#allocation3 + $0xa4] sm:$0xf] %v1441
        %1506 = vst [vmem:[#allocation3 + $0xc8] sm:$0xf] %v1442
        %1507 = vst [vmem:[#allocation3 + $0xec] sm:$0xf] %v1443
        %1508 = vst [vmem:[#allocation3 + $0x110] sm:$0xf] %v1444
        %1509 = vst [vmem:[#allocation3 + $0x134] sm:$0xf] %v1445
        %1510 = vst [vmem:[#allocation3 + $0x158] sm:$0xf] %v1446
        %1511 = vst [vmem:[#allocation3 + $0x17c] sm:$0xf] %v1447
        %1512 = vst [vmem:[#allocation3 + $0x1a0] sm:$0xf] %v1448
        %1513 = vst [vmem:[#allocation3 + $0x1c4] sm:$0xf] %v1449
        %1514 = vst [vmem:[#allocation3 + $0x1e8] sm:$0xf] %v1450
        %1515 = vst [vmem:[#allocation3 + $0x20c] sm:$0xf] %v1451
        %1516 = vst [vmem:[#allocation3 + $0x230] sm:$0xf] %v1452
        %1517 = vst [vmem:[#allocation3 + $0x254] sm:$0xf] %v1453
        %1518 = vst [vmem:[#allocation3 + $0x278] sm:$0xf] %v1454
        %1519 = vst [vmem:[#allocation3 + $0x29c] sm:$0xf] %v1455
        %1520 = vst [vmem:[#allocation3 + $0x2c0] sm:$0xf] %v1456
        %1521 = vst [vmem:[#allocation3 + $0x2e4] sm:$0xf] %v1457
        %1522 = vst [vmem:[#allocation3 + $0x308] sm:$0xf] %v1458
        %1523 = vst [vmem:[#allocation3 + $0x32c] sm:$0xf] %v1459
        %1524 = vst [vmem:[#allocation3 + $0x350] sm:$0xf] %v1460
        %1525 = vst [vmem:[#allocation3 + $0x374] sm:$0xf] %v1461
        %1526 = vst [vmem:[#allocation3 + $0x398] sm:$0xf] %v1462
        %1527 = vst [vmem:[#allocation3 + $0x3bc] sm:$0xf] %v1463
        %1528 = vst [vmem:[#allocation3 + $0x3e0] sm:$0xf] %v1464
        %1529 = vst [vmem:[#allocation3 + $0x404] sm:$0xf] %v1465
        %1530 = vst [vmem:[#allocation3 + $0x428] sm:$0xf] %v1466
        %1531 = vst [vmem:[#allocation3 + $0x44c] sm:$0xf] %v1467
        %1532 = vst [vmem:[#allocation3 + $0x470] sm:$0xf] %v1468
        %s1533 = scalar_lea.vmem [#allocation2], 48
        %v1534 = vld [vmem:[%s1533] sm:$0xff]
        %v1535 = vld [vmem:[%s1533 + $0x8] sm:$0xff]
        %v1536 = vld [vmem:[%s1533 + $0x18] sm:$0xff]
        %v1537 = vld [vmem:[%s1533 + $0x20] sm:$0xff]
        %v1538 = vld [vmem:[%s1533 + $0x30] sm:$0xff]
        %v1539 = vld [vmem:[%s1533 + $0x38] sm:$0xff]
        %v1540 = vld [vmem:[%s1533 + $0x48] sm:$0xff]
        %v1541 = vld [vmem:[%s1533 + $0x50] sm:$0xff]
        %v1542 = vld [vmem:[%s1533 + $0x60] sm:$0xff]
        %v1543 = vld [vmem:[%s1533 + $0x68] sm:$0xff]
        %v1544 = vld [vmem:[%s1533 + $0x78] sm:$0xff]
        %v1545 = vld [vmem:[%s1533 + $0x80] sm:$0xff]
        %v1546 = vld [vmem:[%s1533 + $0x90] sm:$0xff]
        %v1547 = vld [vmem:[%s1533 + $0x98] sm:$0xff]
        %v1548 = vld [vmem:[%s1533 + $0xa8] sm:$0xff]
        %v1549 = vld [vmem:[%s1533 + $0xb0] sm:$0xff]
        %v1550 = vld [vmem:[%s1533 + $0xc0] sm:$0xff]
        %v1551 = vld [vmem:[%s1533 + $0xc8] sm:$0xff]
        %v1552 = vld [vmem:[%s1533 + $0xd8] sm:$0xff]
        %v1553 = vld [vmem:[%s1533 + $0xe0] sm:$0xff]
        %v1554 = vld [vmem:[%s1533 + $0xf0] sm:$0xff]
        %v1555 = vld [vmem:[%s1533 + $0xf8] sm:$0xff]
        %v1556 = vld [vmem:[%s1533 + $0x108] sm:$0xff]
        %v1557 = vld [vmem:[%s1533 + $0x110] sm:$0xff]
        %v1558 = vld [vmem:[%s1533 + $0x120] sm:$0xff]
        %v1559 = vld [vmem:[%s1533 + $0x128] sm:$0xff]
        %v1560 = vld [vmem:[%s1533 + $0x138] sm:$0xff]
        %v1561 = vld [vmem:[%s1533 + $0x140] sm:$0xff]
        %v1562 = vld [vmem:[%s1533 + $0x150] sm:$0xff]
        %v1563 = vld [vmem:[%s1533 + $0x158] sm:$0xff]
        %v1564 = vld [vmem:[%s1533 + $0x168] sm:$0xff]
        %v1565 = vld [vmem:[%s1533 + $0x170] sm:$0xff]
        %v1566 = vpack.c.bf16 %v1535, %v1534
        %v1567 = vpack.c.bf16 %v1537, %v1536
        %v1568 = vpack.c.bf16 %v1539, %v1538
        %v1569 = vpack.c.bf16 %v1541, %v1540
        %v1570 = vpack.c.bf16 %v1543, %v1542
        %v1571 = vpack.c.bf16 %v1545, %v1544
        %v1572 = vpack.c.bf16 %v1547, %v1546
        %v1573 = vpack.c.bf16 %v1549, %v1548
        %v1574 = vpack.c.bf16 %v1551, %v1550
        %v1575 = vpack.c.bf16 %v1553, %v1552
        %v1576 = vpack.c.bf16 %v1555, %v1554
        %v1577 = vpack.c.bf16 %v1557, %v1556
        %v1578 = vpack.c.bf16 %v1559, %v1558
        %v1579 = vpack.c.bf16 %v1561, %v1560
        %v1580 = vpack.c.bf16 %v1563, %v1562
        %v1581 = vpack.c.bf16 %v1565, %v1564
        %v1598 = vunpack.c.l.b16 %v1566
        %v1599 = vunpack.c.h.b16 %v1566
        %v1600 = vunpack.c.l.b16 %v1567
        %v1601 = vunpack.c.h.b16 %v1567
        %v1602 = vunpack.c.l.b16 %v1568
        %v1603 = vunpack.c.h.b16 %v1568
        %v1604 = vunpack.c.l.b16 %v1569
        %v1605 = vunpack.c.h.b16 %v1569
        %v1606 = vunpack.c.l.b16 %v1570
        %v1607 = vunpack.c.h.b16 %v1570
        %v1608 = vunpack.c.l.b16 %v1571
        %v1609 = vunpack.c.h.b16 %v1571
        %v1610 = vunpack.c.l.b16 %v1572
        %v1611 = vunpack.c.h.b16 %v1572
        %v1612 = vunpack.c.l.b16 %v1573
        %v1613 = vunpack.c.h.b16 %v1573
        %v1614 = vunpack.c.l.b16 %v1574
        %v1615 = vunpack.c.h.b16 %v1574
        %v1616 = vunpack.c.l.b16 %v1575
        %v1617 = vunpack.c.h.b16 %v1575
        %v1618 = vunpack.c.l.b16 %v1576
        %v1619 = vunpack.c.h.b16 %v1576
        %v1620 = vunpack.c.l.b16 %v1577
        %v1621 = vunpack.c.h.b16 %v1577
        %v1622 = vunpack.c.l.b16 %v1578
        %v1623 = vunpack.c.h.b16 %v1578
        %v1624 = vunpack.c.l.b16 %v1579
        %v1625 = vunpack.c.h.b16 %v1579
        %v1626 = vunpack.c.l.b16 %v1580
        %v1627 = vunpack.c.h.b16 %v1580
        %v1628 = vunpack.c.l.b16 %v1581
        %v1629 = vunpack.c.h.b16 %v1581
        %v1630 = vpack.c.b16 %v1598, %v1598
        %v1631 = vpack.c.b16 %v1599, %v1599
        %v1632 = vpack.c.b16 %v1600, %v1600
        %v1633 = vpack.c.b16 %v1601, %v1601
        %v1634 = vpack.c.b16 %v1602, %v1602
        %v1635 = vpack.c.b16 %v1603, %v1603
        %v1636 = vpack.c.b16 %v1604, %v1604
        %v1637 = vpack.c.b16 %v1605, %v1605
        %v1638 = vpack.c.b16 %v1606, %v1606
        %v1639 = vpack.c.b16 %v1607, %v1607
        %v1640 = vpack.c.b16 %v1608, %v1608
        %v1641 = vpack.c.b16 %v1609, %v1609
        %v1642 = vpack.c.b16 %v1610, %v1610
        %v1643 = vpack.c.b16 %v1611, %v1611
        %v1644 = vpack.c.b16 %v1612, %v1612
        %v1645 = vpack.c.b16 %v1613, %v1613
        %v1646 = vpack.c.b16 %v1614, %v1614
        %v1647 = vpack.c.b16 %v1615, %v1615
        %v1648 = vpack.c.b16 %v1616, %v1616
        %v1649 = vpack.c.b16 %v1617, %v1617
        %v1650 = vpack.c.b16 %v1618, %v1618
        %v1651 = vpack.c.b16 %v1619, %v1619
        %v1652 = vpack.c.b16 %v1620, %v1620
        %v1653 = vpack.c.b16 %v1621, %v1621
        %v1654 = vpack.c.b16 %v1622, %v1622
        %v1655 = vpack.c.b16 %v1623, %v1623
        %v1656 = vpack.c.b16 %v1624, %v1624
        %v1657 = vpack.c.b16 %v1625, %v1625
        %v1658 = vpack.c.b16 %v1626, %v1626
        %v1659 = vpack.c.b16 %v1627, %v1627
        %v1660 = vpack.c.b16 %v1628, %v1628
        %v1661 = vpack.c.b16 %v1629, %v1629
        %1694 = vst [vmem:[#allocation3 + $0x18] sm:$0xf] %v1630
        %1695 = vst [vmem:[#allocation3 + $0x3c] sm:$0xf] %v1631
        %1696 = vst [vmem:[#allocation3 + $0x60] sm:$0xf] %v1632
        %1697 = vst [vmem:[#allocation3 + $0x84] sm:$0xf] %v1633
        %1698 = vst [vmem:[#allocation3 + $0xa8] sm:$0xf] %v1634
        %1699 = vst [vmem:[#allocation3 + $0xcc] sm:$0xf] %v1635
        %1700 = vst [vmem:[#allocation3 + $0xf0] sm:$0xf] %v1636
        %1701 = vst [vmem:[#allocation3 + $0x114] sm:$0xf] %v1637
        %1702 = vst [vmem:[#allocation3 + $0x138] sm:$0xf] %v1638
        %1703 = vst [vmem:[#allocation3 + $0x15c] sm:$0xf] %v1639
        %1704 = vst [vmem:[#allocation3 + $0x180] sm:$0xf] %v1640
        %1705 = vst [vmem:[#allocation3 + $0x1a4] sm:$0xf] %v1641
        %1706 = vst [vmem:[#allocation3 + $0x1c8] sm:$0xf] %v1642
        %1707 = vst [vmem:[#allocation3 + $0x1ec] sm:$0xf] %v1643
        %1708 = vst [vmem:[#allocation3 + $0x210] sm:$0xf] %v1644
        %1709 = vst [vmem:[#allocation3 + $0x234] sm:$0xf] %v1645
        %1710 = vst [vmem:[#allocation3 + $0x258] sm:$0xf] %v1646
        %1711 = vst [vmem:[#allocation3 + $0x27c] sm:$0xf] %v1647
        %1712 = vst [vmem:[#allocation3 + $0x2a0] sm:$0xf] %v1648
        %1713 = vst [vmem:[#allocation3 + $0x2c4] sm:$0xf] %v1649
        %1714 = vst [vmem:[#allocation3 + $0x2e8] sm:$0xf] %v1650
        %1715 = vst [vmem:[#allocation3 + $0x30c] sm:$0xf] %v1651
        %1716 = vst [vmem:[#allocation3 + $0x330] sm:$0xf] %v1652
        %1717 = vst [vmem:[#allocation3 + $0x354] sm:$0xf] %v1653
        %1718 = vst [vmem:[#allocation3 + $0x378] sm:$0xf] %v1654
        %1719 = vst [vmem:[#allocation3 + $0x39c] sm:$0xf] %v1655
        %1720 = vst [vmem:[#allocation3 + $0x3c0] sm:$0xf] %v1656
        %1721 = vst [vmem:[#allocation3 + $0x3e4] sm:$0xf] %v1657
        %1722 = vst [vmem:[#allocation3 + $0x408] sm:$0xf] %v1658
        %1723 = vst [vmem:[#allocation3 + $0x42c] sm:$0xf] %v1659
        %1724 = vst [vmem:[#allocation3 + $0x450] sm:$0xf] %v1660
        %1725 = vst [vmem:[#allocation3 + $0x474] sm:$0xf] %v1661
        %v1726 = vld [vmem:[%s1533 + $0x1] sm:$0xff]
        %v1727 = vld [vmem:[%s1533 + $0x9] sm:$0xff]
        %v1728 = vld [vmem:[%s1533 + $0x19] sm:$0xff]
        %v1729 = vld [vmem:[%s1533 + $0x21] sm:$0xff]
        %v1730 = vld [vmem:[%s1533 + $0x31] sm:$0xff]
        %v1731 = vld [vmem:[%s1533 + $0x39] sm:$0xff]
        %v1732 = vld [vmem:[%s1533 + $0x49] sm:$0xff]
        %v1733 = vld [vmem:[%s1533 + $0x51] sm:$0xff]
        %v1734 = vld [vmem:[%s1533 + $0x61] sm:$0xff]
        %v1735 = vld [vmem:[%s1533 + $0x69] sm:$0xff]
        %v1736 = vld [vmem:[%s1533 + $0x79] sm:$0xff]
        %v1737 = vld [vmem:[%s1533 + $0x81] sm:$0xff]
        %v1738 = vld [vmem:[%s1533 + $0x91] sm:$0xff]
        %v1739 = vld [vmem:[%s1533 + $0x99] sm:$0xff]
        %v1740 = vld [vmem:[%s1533 + $0xa9] sm:$0xff]
        %v1741 = vld [vmem:[%s1533 + $0xb1] sm:$0xff]
        %v1742 = vld [vmem:[%s1533 + $0xc1] sm:$0xff]
        %v1743 = vld [vmem:[%s1533 + $0xc9] sm:$0xff]
        %v1744 = vld [vmem:[%s1533 + $0xd9] sm:$0xff]
        %v1745 = vld [vmem:[%s1533 + $0xe1] sm:$0xff]
        %v1746 = vld [vmem:[%s1533 + $0xf1] sm:$0xff]
        %v1747 = vld [vmem:[%s1533 + $0xf9] sm:$0xff]
        %v1748 = vld [vmem:[%s1533 + $0x109] sm:$0xff]
        %v1749 = vld [vmem:[%s1533 + $0x111] sm:$0xff]
        %v1750 = vld [vmem:[%s1533 + $0x121] sm:$0xff]
        %v1751 = vld [vmem:[%s1533 + $0x129] sm:$0xff]
        %v1752 = vld [vmem:[%s1533 + $0x139] sm:$0xff]
        %v1753 = vld [vmem:[%s1533 + $0x141] sm:$0xff]
        %v1754 = vld [vmem:[%s1533 + $0x151] sm:$0xff]
        %v1755 = vld [vmem:[%s1533 + $0x159] sm:$0xff]
        %v1756 = vld [vmem:[%s1533 + $0x169] sm:$0xff]
        %v1757 = vld [vmem:[%s1533 + $0x171] sm:$0xff]
        %v1758 = vpack.c.bf16 %v1727, %v1726
        %v1759 = vpack.c.bf16 %v1729, %v1728
        %v1760 = vpack.c.bf16 %v1731, %v1730
        %v1761 = vpack.c.bf16 %v1733, %v1732
        %v1762 = vpack.c.bf16 %v1735, %v1734
        %v1763 = vpack.c.bf16 %v1737, %v1736
        %v1764 = vpack.c.bf16 %v1739, %v1738
        %v1765 = vpack.c.bf16 %v1741, %v1740
        %v1766 = vpack.c.bf16 %v1743, %v1742
        %v1767 = vpack.c.bf16 %v1745, %v1744
        %v1768 = vpack.c.bf16 %v1747, %v1746
        %v1769 = vpack.c.bf16 %v1749, %v1748
        %v1770 = vpack.c.bf16 %v1751, %v1750
        %v1771 = vpack.c.bf16 %v1753, %v1752
        %v1772 = vpack.c.bf16 %v1755, %v1754
        %v1773 = vpack.c.bf16 %v1757, %v1756
        %v1790 = vunpack.c.l.b16 %v1758
        %v1791 = vunpack.c.h.b16 %v1758
        %v1792 = vunpack.c.l.b16 %v1759
        %v1793 = vunpack.c.h.b16 %v1759
        %v1794 = vunpack.c.l.b16 %v1760
        %v1795 = vunpack.c.h.b16 %v1760
        %v1796 = vunpack.c.l.b16 %v1761
        %v1797 = vunpack.c.h.b16 %v1761
        %v1798 = vunpack.c.l.b16 %v1762
        %v1799 = vunpack.c.h.b16 %v1762
        %v1800 = vunpack.c.l.b16 %v1763
        %v1801 = vunpack.c.h.b16 %v1763
        %v1802 = vunpack.c.l.b16 %v1764
        %v1803 = vunpack.c.h.b16 %v1764
        %v1804 = vunpack.c.l.b16 %v1765
        %v1805 = vunpack.c.h.b16 %v1765
        %v1806 = vunpack.c.l.b16 %v1766
        %v1807 = vunpack.c.h.b16 %v1766
        %v1808 = vunpack.c.l.b16 %v1767
        %v1809 = vunpack.c.h.b16 %v1767
        %v1810 = vunpack.c.l.b16 %v1768
        %v1811 = vunpack.c.h.b16 %v1768
        %v1812 = vunpack.c.l.b16 %v1769
        %v1813 = vunpack.c.h.b16 %v1769
        %v1814 = vunpack.c.l.b16 %v1770
        %v1815 = vunpack.c.h.b16 %v1770
        %v1816 = vunpack.c.l.b16 %v1771
        %v1817 = vunpack.c.h.b16 %v1771
        %v1818 = vunpack.c.l.b16 %v1772
        %v1819 = vunpack.c.h.b16 %v1772
        %v1820 = vunpack.c.l.b16 %v1773
        %v1821 = vunpack.c.h.b16 %v1773
        %v1822 = vpack.c.b16 %v1790, %v1790
        %v1823 = vpack.c.b16 %v1791, %v1791
        %v1824 = vpack.c.b16 %v1792, %v1792
        %v1825 = vpack.c.b16 %v1793, %v1793
        %v1826 = vpack.c.b16 %v1794, %v1794
        %v1827 = vpack.c.b16 %v1795, %v1795
        %v1828 = vpack.c.b16 %v1796, %v1796
        %v1829 = vpack.c.b16 %v1797, %v1797
        %v1830 = vpack.c.b16 %v1798, %v1798
        %v1831 = vpack.c.b16 %v1799, %v1799
        %v1832 = vpack.c.b16 %v1800, %v1800
        %v1833 = vpack.c.b16 %v1801, %v1801
        %v1834 = vpack.c.b16 %v1802, %v1802
        %v1835 = vpack.c.b16 %v1803, %v1803
        %v1836 = vpack.c.b16 %v1804, %v1804
        %v1837 = vpack.c.b16 %v1805, %v1805
        %v1838 = vpack.c.b16 %v1806, %v1806
        %v1839 = vpack.c.b16 %v1807, %v1807
        %v1840 = vpack.c.b16 %v1808, %v1808
        %v1841 = vpack.c.b16 %v1809, %v1809
        %v1842 = vpack.c.b16 %v1810, %v1810
        %v1843 = vpack.c.b16 %v1811, %v1811
        %v1844 = vpack.c.b16 %v1812, %v1812
        %v1845 = vpack.c.b16 %v1813, %v1813
        %v1846 = vpack.c.b16 %v1814, %v1814
        %v1847 = vpack.c.b16 %v1815, %v1815
        %v1848 = vpack.c.b16 %v1816, %v1816
        %v1849 = vpack.c.b16 %v1817, %v1817
        %v1850 = vpack.c.b16 %v1818, %v1818
        %v1851 = vpack.c.b16 %v1819, %v1819
        %v1852 = vpack.c.b16 %v1820, %v1820
        %v1853 = vpack.c.b16 %v1821, %v1821
        %1886 = vst [vmem:[#allocation3 + $0x1c] sm:$0xf] %v1822
        %1887 = vst [vmem:[#allocation3 + $0x40] sm:$0xf] %v1823
        %1888 = vst [vmem:[#allocation3 + $0x64] sm:$0xf] %v1824
        %1889 = vst [vmem:[#allocation3 + $0x88] sm:$0xf] %v1825
        %1890 = vst [vmem:[#allocation3 + $0xac] sm:$0xf] %v1826
        %1891 = vst [vmem:[#allocation3 + $0xd0] sm:$0xf] %v1827
        %1892 = vst [vmem:[#allocation3 + $0xf4] sm:$0xf] %v1828
        %1893 = vst [vmem:[#allocation3 + $0x118] sm:$0xf] %v1829
        %1894 = vst [vmem:[#allocation3 + $0x13c] sm:$0xf] %v1830
        %1895 = vst [vmem:[#allocation3 + $0x160] sm:$0xf] %v1831
        %1896 = vst [vmem:[#allocation3 + $0x184] sm:$0xf] %v1832
        %1897 = vst [vmem:[#allocation3 + $0x1a8] sm:$0xf] %v1833
        %1898 = vst [vmem:[#allocation3 + $0x1cc] sm:$0xf] %v1834
        %1899 = vst [vmem:[#allocation3 + $0x1f0] sm:$0xf] %v1835
        %1900 = vst [vmem:[#allocation3 + $0x214] sm:$0xf] %v1836
        %1901 = vst [vmem:[#allocation3 + $0x238] sm:$0xf] %v1837
        %1902 = vst [vmem:[#allocation3 + $0x25c] sm:$0xf] %v1838
        %1903 = vst [vmem:[#allocation3 + $0x280] sm:$0xf] %v1839
        %1904 = vst [vmem:[#allocation3 + $0x2a4] sm:$0xf] %v1840
        %1905 = vst [vmem:[#allocation3 + $0x2c8] sm:$0xf] %v1841
        %1906 = vst [vmem:[#allocation3 + $0x2ec] sm:$0xf] %v1842
        %1907 = vst [vmem:[#allocation3 + $0x310] sm:$0xf] %v1843
        %1908 = vst [vmem:[#allocation3 + $0x334] sm:$0xf] %v1844
        %1909 = vst [vmem:[#allocation3 + $0x358] sm:$0xf] %v1845
        %1910 = vst [vmem:[#allocation3 + $0x37c] sm:$0xf] %v1846
        %1911 = vst [vmem:[#allocation3 + $0x3a0] sm:$0xf] %v1847
        %1912 = vst [vmem:[#allocation3 + $0x3c4] sm:$0xf] %v1848
        %1913 = vst [vmem:[#allocation3 + $0x3e8] sm:$0xf] %v1849
        %1914 = vst [vmem:[#allocation3 + $0x40c] sm:$0xf] %v1850
        %1915 = vst [vmem:[#allocation3 + $0x430] sm:$0xf] %v1851
        %1916 = vst [vmem:[#allocation3 + $0x454] sm:$0xf] %v1852
        %1917 = vst [vmem:[#allocation3 + $0x478] sm:$0xf] %v1853
        %v1918 = vld [vmem:[%s1533 + $0x2] sm:$0xff]
        %v1919 = vld [vmem:[%s1533 + $0xa] sm:$0xff]
        %v1920 = vld [vmem:[%s1533 + $0x1a] sm:$0xff]
        %v1921 = vld [vmem:[%s1533 + $0x22] sm:$0xff]
        %v1922 = vld [vmem:[%s1533 + $0x32] sm:$0xff]
        %v1923 = vld [vmem:[%s1533 + $0x3a] sm:$0xff]
        %v1924 = vld [vmem:[%s1533 + $0x4a] sm:$0xff]
        %v1925 = vld [vmem:[%s1533 + $0x52] sm:$0xff]
        %v1926 = vld [vmem:[%s1533 + $0x62] sm:$0xff]
        %v1927 = vld [vmem:[%s1533 + $0x6a] sm:$0xff]
        %v1928 = vld [vmem:[%s1533 + $0x7a] sm:$0xff]
        %v1929 = vld [vmem:[%s1533 + $0x82] sm:$0xff]
        %v1930 = vld [vmem:[%s1533 + $0x92] sm:$0xff]
        %v1931 = vld [vmem:[%s1533 + $0x9a] sm:$0xff]
        %v1932 = vld [vmem:[%s1533 + $0xaa] sm:$0xff]
        %v1933 = vld [vmem:[%s1533 + $0xb2] sm:$0xff]
        %v1934 = vld [vmem:[%s1533 + $0xc2] sm:$0xff]
        %v1935 = vld [vmem:[%s1533 + $0xca] sm:$0xff]
        %v1936 = vld [vmem:[%s1533 + $0xda] sm:$0xff]
        %v1937 = vld [vmem:[%s1533 + $0xe2] sm:$0xff]
        %v1938 = vld [vmem:[%s1533 + $0xf2] sm:$0xff]
        %v1939 = vld [vmem:[%s1533 + $0xfa] sm:$0xff]
        %v1940 = vld [vmem:[%s1533 + $0x10a] sm:$0xff]
        %v1941 = vld [vmem:[%s1533 + $0x112] sm:$0xff]
        %v1942 = vld [vmem:[%s1533 + $0x122] sm:$0xff]
        %v1943 = vld [vmem:[%s1533 + $0x12a] sm:$0xff]
        %v1944 = vld [vmem:[%s1533 + $0x13a] sm:$0xff]
        %v1945 = vld [vmem:[%s1533 + $0x142] sm:$0xff]
        %v1946 = vld [vmem:[%s1533 + $0x152] sm:$0xff]
        %v1947 = vld [vmem:[%s1533 + $0x15a] sm:$0xff]
        %v1948 = vld [vmem:[%s1533 + $0x16a] sm:$0xff]
        %v1949 = vld [vmem:[%s1533 + $0x172] sm:$0xff]
        %v1950 = vpack.c.bf16 %v1919, %v1918
        %v1951 = vpack.c.bf16 %v1921, %v1920
        %v1952 = vpack.c.bf16 %v1923, %v1922
        %v1953 = vpack.c.bf16 %v1925, %v1924
        %v1954 = vpack.c.bf16 %v1927, %v1926
        %v1955 = vpack.c.bf16 %v1929, %v1928
        %v1956 = vpack.c.bf16 %v1931, %v1930
        %v1957 = vpack.c.bf16 %v1933, %v1932
        %v1958 = vpack.c.bf16 %v1935, %v1934
        %v1959 = vpack.c.bf16 %v1937, %v1936
        %v1960 = vpack.c.bf16 %v1939, %v1938
        %v1961 = vpack.c.bf16 %v1941, %v1940
        %v1962 = vpack.c.bf16 %v1943, %v1942
        %v1963 = vpack.c.bf16 %v1945, %v1944
        %v1964 = vpack.c.bf16 %v1947, %v1946
        %v1965 = vpack.c.bf16 %v1949, %v1948
        %v1982 = vunpack.c.l.b16 %v1950
        %v1983 = vunpack.c.h.b16 %v1950
        %v1984 = vunpack.c.l.b16 %v1951
        %v1985 = vunpack.c.h.b16 %v1951
        %v1986 = vunpack.c.l.b16 %v1952
        %v1987 = vunpack.c.h.b16 %v1952
        %v1988 = vunpack.c.l.b16 %v1953
        %v1989 = vunpack.c.h.b16 %v1953
        %v1990 = vunpack.c.l.b16 %v1954
        %v1991 = vunpack.c.h.b16 %v1954
        %v1992 = vunpack.c.l.b16 %v1955
        %v1993 = vunpack.c.h.b16 %v1955
        %v1994 = vunpack.c.l.b16 %v1956
        %v1995 = vunpack.c.h.b16 %v1956
        %v1996 = vunpack.c.l.b16 %v1957
        %v1997 = vunpack.c.h.b16 %v1957
        %v1998 = vunpack.c.l.b16 %v1958
        %v1999 = vunpack.c.h.b16 %v1958
        %v2000 = vunpack.c.l.b16 %v1959
        %v2001 = vunpack.c.h.b16 %v1959
        %v2002 = vunpack.c.l.b16 %v1960
        %v2003 = vunpack.c.h.b16 %v1960
        %v2004 = vunpack.c.l.b16 %v1961
        %v2005 = vunpack.c.h.b16 %v1961
        %v2006 = vunpack.c.l.b16 %v1962
        %v2007 = vunpack.c.h.b16 %v1962
        %v2008 = vunpack.c.l.b16 %v1963
        %v2009 = vunpack.c.h.b16 %v1963
        %v2010 = vunpack.c.l.b16 %v1964
        %v2011 = vunpack.c.h.b16 %v1964
        %v2012 = vunpack.c.l.b16 %v1965
        %v2013 = vunpack.c.h.b16 %v1965
        %v2014 = vpack.c.b16 %v1982, %v1982
        %v2015 = vpack.c.b16 %v1983, %v1983
        %v2016 = vpack.c.b16 %v1984, %v1984
        %v2017 = vpack.c.b16 %v1985, %v1985
        %v2018 = vpack.c.b16 %v1986, %v1986
        %v2019 = vpack.c.b16 %v1987, %v1987
        %v2020 = vpack.c.b16 %v1988, %v1988
        %v2021 = vpack.c.b16 %v1989, %v1989
        %v2022 = vpack.c.b16 %v1990, %v1990
        %v2023 = vpack.c.b16 %v1991, %v1991
        %v2024 = vpack.c.b16 %v1992, %v1992
        %v2025 = vpack.c.b16 %v1993, %v1993
        %v2026 = vpack.c.b16 %v1994, %v1994
        %v2027 = vpack.c.b16 %v1995, %v1995
        %v2028 = vpack.c.b16 %v1996, %v1996
        %v2029 = vpack.c.b16 %v1997, %v1997
        %v2030 = vpack.c.b16 %v1998, %v1998
        %v2031 = vpack.c.b16 %v1999, %v1999
        %v2032 = vpack.c.b16 %v2000, %v2000
        %v2033 = vpack.c.b16 %v2001, %v2001
        %v2034 = vpack.c.b16 %v2002, %v2002
        %v2035 = vpack.c.b16 %v2003, %v2003
        %v2036 = vpack.c.b16 %v2004, %v2004
        %v2037 = vpack.c.b16 %v2005, %v2005
        %v2038 = vpack.c.b16 %v2006, %v2006
        %v2039 = vpack.c.b16 %v2007, %v2007
        %v2040 = vpack.c.b16 %v2008, %v2008
        %v2041 = vpack.c.b16 %v2009, %v2009
        %v2042 = vpack.c.b16 %v2010, %v2010
        %v2043 = vpack.c.b16 %v2011, %v2011
        %v2044 = vpack.c.b16 %v2012, %v2012
        %v2045 = vpack.c.b16 %v2013, %v2013
        %2078 = vst [vmem:[#allocation3 + $0x20] sm:$0xf] %v2014
        %2079 = vst [vmem:[#allocation3 + $0x44] sm:$0xf] %v2015
        %2080 = vst [vmem:[#allocation3 + $0x68] sm:$0xf] %v2016
        %2081 = vst [vmem:[#allocation3 + $0x8c] sm:$0xf] %v2017
        %2082 = vst [vmem:[#allocation3 + $0xb0] sm:$0xf] %v2018
        %2083 = vst [vmem:[#allocation3 + $0xd4] sm:$0xf] %v2019
        %2084 = vst [vmem:[#allocation3 + $0xf8] sm:$0xf] %v2020
        %2085 = vst [vmem:[#allocation3 + $0x11c] sm:$0xf] %v2021
        %2086 = vst [vmem:[#allocation3 + $0x140] sm:$0xf] %v2022
        %2087 = vst [vmem:[#allocation3 + $0x164] sm:$0xf] %v2023
        %2088 = vst [vmem:[#allocation3 + $0x188] sm:$0xf] %v2024
        %2089 = vst [vmem:[#allocation3 + $0x1ac] sm:$0xf] %v2025
        %2090 = vst [vmem:[#allocation3 + $0x1d0] sm:$0xf] %v2026
        %2091 = vst [vmem:[#allocation3 + $0x1f4] sm:$0xf] %v2027
        %2092 = vst [vmem:[#allocation3 + $0x218] sm:$0xf] %v2028
        %2093 = vst [vmem:[#allocation3 + $0x23c] sm:$0xf] %v2029
        %2094 = vst [vmem:[#allocation3 + $0x260] sm:$0xf] %v2030
        %2095 = vst [vmem:[#allocation3 + $0x284] sm:$0xf] %v2031
        %2096 = vst [vmem:[#allocation3 + $0x2a8] sm:$0xf] %v2032
        %2097 = vst [vmem:[#allocation3 + $0x2cc] sm:$0xf] %v2033
        %2098 = vst [vmem:[#allocation3 + $0x2f0] sm:$0xf] %v2034
        %2099 = vst [vmem:[#allocation3 + $0x314] sm:$0xf] %v2035
        %2100 = vst [vmem:[#allocation3 + $0x338] sm:$0xf] %v2036
        %2101 = vst [vmem:[#allocation3 + $0x35c] sm:$0xf] %v2037
        %2102 = vst [vmem:[#allocation3 + $0x380] sm:$0xf] %v2038
        %2103 = vst [vmem:[#allocation3 + $0x3a4] sm:$0xf] %v2039
        %2104 = vst [vmem:[#allocation3 + $0x3c8] sm:$0xf] %v2040
        %2105 = vst [vmem:[#allocation3 + $0x3ec] sm:$0xf] %v2041
        %2106 = vst [vmem:[#allocation3 + $0x410] sm:$0xf] %v2042
        %2107 = vst [vmem:[#allocation3 + $0x434] sm:$0xf] %v2043
        %2108 = vst [vmem:[#allocation3 + $0x458] sm:$0xf] %v2044
        %2109 = vst [vmem:[#allocation3 + $0x47c] sm:$0xf] %v2045
        %v2110 = vld [vmem:[#allocation3] sm:$0xff]
        %v2111 = vld [vmem:[#allocation3 + $0x8] sm:$0xff]
        %v2112 = vld [vmem:[#allocation3 + $0x10] sm:$0xff]
        %v2113 = vld [vmem:[#allocation3 + $0x18] sm:$0xff]
        %v2114 = vld [vmem:[#allocation3 + $0x20] sm:$0xf]
        %v2115 = vld [vmem:[#allocation3 + $0x24] sm:$0xff]
        %v2116 = vld [vmem:[#allocation3 + $0x2c] sm:$0xff]
        %v2117 = vld [vmem:[#allocation3 + $0x34] sm:$0xff]
        %v2118 = vld [vmem:[#allocation3 + $0x3c] sm:$0xff]
        %v2119 = vld [vmem:[#allocation3 + $0x44] sm:$0xf]
        %v2120 = vld [vmem:[#allocation3 + $0x48] sm:$0xff]
        %v2121 = vld [vmem:[#allocation3 + $0x50] sm:$0xff]
        %v2122 = vld [vmem:[#allocation3 + $0x58] sm:$0xff]
        %v2123 = vld [vmem:[#allocation3 + $0x60] sm:$0xff]
        %v2124 = vld [vmem:[#allocation3 + $0x68] sm:$0xf]
        %v2125 = vld [vmem:[#allocation3 + $0x6c] sm:$0xff]
        %v2126 = vld [vmem:[#allocation3 + $0x74] sm:$0xff]
        %v2127 = vld [vmem:[#allocation3 + $0x7c] sm:$0xff]
        %v2128 = vld [vmem:[#allocation3 + $0x84] sm:$0xff]
        %v2129 = vld [vmem:[#allocation3 + $0x8c] sm:$0xf]
        %v2130 = vld [vmem:[#allocation3 + $0x90] sm:$0xff]
        %v2131 = vld [vmem:[#allocation3 + $0x98] sm:$0xff]
        %v2132 = vld [vmem:[#allocation3 + $0xa0] sm:$0xff]
        %v2133 = vld [vmem:[#allocation3 + $0xa8] sm:$0xff]
        %v2134 = vld [vmem:[#allocation3 + $0xb0] sm:$0xf]
        %v2135 = vld [vmem:[#allocation3 + $0xb4] sm:$0xff]
        %v2136 = vld [vmem:[#allocation3 + $0xbc] sm:$0xff]
        %v2137 = vld [vmem:[#allocation3 + $0xc4] sm:$0xff]
        %v2138 = vld [vmem:[#allocation3 + $0xcc] sm:$0xff]
        %v2139 = vld [vmem:[#allocation3 + $0xd4] sm:$0xf]
        %v2140 = vld [vmem:[#allocation3 + $0xd8] sm:$0xff]
        %v2141 = vld [vmem:[#allocation3 + $0xe0] sm:$0xff]
        %v2142 = vld [vmem:[#allocation3 + $0xe8] sm:$0xff]
        %v2143 = vld [vmem:[#allocation3 + $0xf0] sm:$0xff]
        %v2144 = vld [vmem:[#allocation3 + $0xf8] sm:$0xf]
        %v2145 = vld [vmem:[#allocation3 + $0xfc] sm:$0xff]
        %v2146 = vld [vmem:[#allocation3 + $0x104] sm:$0xff]
        %v2147 = vld [vmem:[#allocation3 + $0x10c] sm:$0xff]
        %v2148 = vld [vmem:[#allocation3 + $0x114] sm:$0xff]
        %v2149 = vld [vmem:[#allocation3 + $0x11c] sm:$0xf]
        %v2150 = vld [vmem:[#allocation3 + $0x120] sm:$0xff]
        %v2151 = vld [vmem:[#allocation3 + $0x128] sm:$0xff]
        %v2152 = vld [vmem:[#allocation3 + $0x130] sm:$0xff]
        %v2153 = vld [vmem:[#allocation3 + $0x138] sm:$0xff]
        %v2154 = vld [vmem:[#allocation3 + $0x140] sm:$0xf]
        %v2155 = vld [vmem:[#allocation3 + $0x144] sm:$0xff]
        %v2156 = vld [vmem:[#allocation3 + $0x14c] sm:$0xff]
        %v2157 = vld [vmem:[#allocation3 + $0x154] sm:$0xff]
        %v2158 = vld [vmem:[#allocation3 + $0x15c] sm:$0xff]
        %v2159 = vld [vmem:[#allocation3 + $0x164] sm:$0xf]
        %v2160 = vld [vmem:[#allocation3 + $0x168] sm:$0xff]
        %v2161 = vld [vmem:[#allocation3 + $0x170] sm:$0xff]
        %v2162 = vld [vmem:[#allocation3 + $0x178] sm:$0xff]
        %v2163 = vld [vmem:[#allocation3 + $0x180] sm:$0xff]
        %v2164 = vld [vmem:[#allocation3 + $0x188] sm:$0xf]
        %v2165 = vld [vmem:[#allocation3 + $0x18c] sm:$0xff]
        %v2166 = vld [vmem:[#allocation3 + $0x194] sm:$0xff]
        %v2167 = vld [vmem:[#allocation3 + $0x19c] sm:$0xff]
        %v2168 = vld [vmem:[#allocation3 + $0x1a4] sm:$0xff]
        %v2169 = vld [vmem:[#allocation3 + $0x1ac] sm:$0xf]
        %v2170 = vld [vmem:[#allocation3 + $0x1b0] sm:$0xff]
        %v2171 = vld [vmem:[#allocation3 + $0x1b8] sm:$0xff]
        %v2172 = vld [vmem:[#allocation3 + $0x1c0] sm:$0xff]
        %v2173 = vld [vmem:[#allocation3 + $0x1c8] sm:$0xff]
        %v2174 = vld [vmem:[#allocation3 + $0x1d0] sm:$0xf]
        %v2175 = vld [vmem:[#allocation3 + $0x1d4] sm:$0xff]
        %v2176 = vld [vmem:[#allocation3 + $0x1dc] sm:$0xff]
        %v2177 = vld [vmem:[#allocation3 + $0x1e4] sm:$0xff]
        %v2178 = vld [vmem:[#allocation3 + $0x1ec] sm:$0xff]
        %v2179 = vld [vmem:[#allocation3 + $0x1f4] sm:$0xf]
        %v2180 = vld [vmem:[#allocation3 + $0x1f8] sm:$0xff]
        %v2181 = vld [vmem:[#allocation3 + $0x200] sm:$0xff]
        %v2182 = vld [vmem:[#allocation3 + $0x208] sm:$0xff]
        %v2183 = vld [vmem:[#allocation3 + $0x210] sm:$0xff]
        %v2184 = vld [vmem:[#allocation3 + $0x218] sm:$0xf]
        %v2185 = vld [vmem:[#allocation3 + $0x21c] sm:$0xff]
        %v2186 = vld [vmem:[#allocation3 + $0x224] sm:$0xff]
        %v2187 = vld [vmem:[#allocation3 + $0x22c] sm:$0xff]
        %v2188 = vld [vmem:[#allocation3 + $0x234] sm:$0xff]
        %v2189 = vld [vmem:[#allocation3 + $0x23c] sm:$0xf]
        %v2190 = vld [vmem:[#allocation3 + $0x240] sm:$0xff]
        %v2191 = vld [vmem:[#allocation3 + $0x248] sm:$0xff]
        %v2192 = vld [vmem:[#allocation3 + $0x250] sm:$0xff]
        %v2193 = vld [vmem:[#allocation3 + $0x258] sm:$0xff]
        %v2194 = vld [vmem:[#allocation3 + $0x260] sm:$0xf]
        %v2195 = vld [vmem:[#allocation3 + $0x264] sm:$0xff]
        %v2196 = vld [vmem:[#allocation3 + $0x26c] sm:$0xff]
        %v2197 = vld [vmem:[#allocation3 + $0x274] sm:$0xff]
        %v2198 = vld [vmem:[#allocation3 + $0x27c] sm:$0xff]
        %v2199 = vld [vmem:[#allocation3 + $0x284] sm:$0xf]
        %v2200 = vld [vmem:[#allocation3 + $0x288] sm:$0xff]
        %v2201 = vld [vmem:[#allocation3 + $0x290] sm:$0xff]
        %v2202 = vld [vmem:[#allocation3 + $0x298] sm:$0xff]
        %v2203 = vld [vmem:[#allocation3 + $0x2a0] sm:$0xff]
        %v2204 = vld [vmem:[#allocation3 + $0x2a8] sm:$0xf]
        %v2205 = vld [vmem:[#allocation3 + $0x2ac] sm:$0xff]
        %v2206 = vld [vmem:[#allocation3 + $0x2b4] sm:$0xff]
        %v2207 = vld [vmem:[#allocation3 + $0x2bc] sm:$0xff]
        %v2208 = vld [vmem:[#allocation3 + $0x2c4] sm:$0xff]
        %v2209 = vld [vmem:[#allocation3 + $0x2cc] sm:$0xf]
        %v2210 = vld [vmem:[#allocation3 + $0x2d0] sm:$0xff]
        %v2211 = vld [vmem:[#allocation3 + $0x2d8] sm:$0xff]
        %v2212 = vld [vmem:[#allocation3 + $0x2e0] sm:$0xff]
        %v2213 = vld [vmem:[#allocation3 + $0x2e8] sm:$0xff]
        %v2214 = vld [vmem:[#allocation3 + $0x2f0] sm:$0xf]
        %v2215 = vld [vmem:[#allocation3 + $0x2f4] sm:$0xff]
        %v2216 = vld [vmem:[#allocation3 + $0x2fc] sm:$0xff]
        %v2217 = vld [vmem:[#allocation3 + $0x304] sm:$0xff]
        %v2218 = vld [vmem:[#allocation3 + $0x30c] sm:$0xff]
        %v2219 = vld [vmem:[#allocation3 + $0x314] sm:$0xf]
        %v2220 = vld [vmem:[#allocation3 + $0x318] sm:$0xff]
        %v2221 = vld [vmem:[#allocation3 + $0x320] sm:$0xff]
        %v2222 = vld [vmem:[#allocation3 + $0x328] sm:$0xff]
        %v2223 = vld [vmem:[#allocation3 + $0x330] sm:$0xff]
        %v2224 = vld [vmem:[#allocation3 + $0x338] sm:$0xf]
        %v2225 = vld [vmem:[#allocation3 + $0x33c] sm:$0xff]
        %v2226 = vld [vmem:[#allocation3 + $0x344] sm:$0xff]
        %v2227 = vld [vmem:[#allocation3 + $0x34c] sm:$0xff]
        %v2228 = vld [vmem:[#allocation3 + $0x354] sm:$0xff]
        %v2229 = vld [vmem:[#allocation3 + $0x35c] sm:$0xf]
        %v2230 = vld [vmem:[#allocation3 + $0x360] sm:$0xff]
        %v2231 = vld [vmem:[#allocation3 + $0x368] sm:$0xff]
        %v2232 = vld [vmem:[#allocation3 + $0x370] sm:$0xff]
        %v2233 = vld [vmem:[#allocation3 + $0x378] sm:$0xff]
        %v2234 = vld [vmem:[#allocation3 + $0x380] sm:$0xf]
        %v2235 = vld [vmem:[#allocation3 + $0x384] sm:$0xff]
        %v2236 = vld [vmem:[#allocation3 + $0x38c] sm:$0xff]
        %v2237 = vld [vmem:[#allocation3 + $0x394] sm:$0xff]
        %v2238 = vld [vmem:[#allocation3 + $0x39c] sm:$0xff]
        %v2239 = vld [vmem:[#allocation3 + $0x3a4] sm:$0xf]
        %v2240 = vld [vmem:[#allocation3 + $0x3a8] sm:$0xff]
        %v2241 = vld [vmem:[#allocation3 + $0x3b0] sm:$0xff]
        %v2242 = vld [vmem:[#allocation3 + $0x3b8] sm:$0xff]
        %v2243 = vld [vmem:[#allocation3 + $0x3c0] sm:$0xff]
        %v2244 = vld [vmem:[#allocation3 + $0x3c8] sm:$0xf]
        %v2245 = vld [vmem:[#allocation3 + $0x3cc] sm:$0xff]
        %v2246 = vld [vmem:[#allocation3 + $0x3d4] sm:$0xff]
        %v2247 = vld [vmem:[#allocation3 + $0x3dc] sm:$0xff]
        %v2248 = vld [vmem:[#allocation3 + $0x3e4] sm:$0xff]
        %v2249 = vld [vmem:[#allocation3 + $0x3ec] sm:$0xf]
        %v2250 = vld [vmem:[#allocation3 + $0x3f0] sm:$0xff]
        %v2251 = vld [vmem:[#allocation3 + $0x3f8] sm:$0xff]
        %v2252 = vld [vmem:[#allocation3 + $0x400] sm:$0xff]
        %v2253 = vld [vmem:[#allocation3 + $0x408] sm:$0xff]
        %v2254 = vld [vmem:[#allocation3 + $0x410] sm:$0xf]
        %v2255 = vld [vmem:[#allocation3 + $0x414] sm:$0xff]
        %v2256 = vld [vmem:[#allocation3 + $0x41c] sm:$0xff]
        %v2257 = vld [vmem:[#allocation3 + $0x424] sm:$0xff]
        %v2258 = vld [vmem:[#allocation3 + $0x42c] sm:$0xff]
        %v2259 = vld [vmem:[#allocation3 + $0x434] sm:$0xf]
        %v2260 = vld [vmem:[#allocation3 + $0x438] sm:$0xff]
        %v2261 = vld [vmem:[#allocation3 + $0x440] sm:$0xff]
        %v2262 = vld [vmem:[#allocation3 + $0x448] sm:$0xff]
        %v2263 = vld [vmem:[#allocation3 + $0x450] sm:$0xff]
        %v2264 = vld [vmem:[#allocation3 + $0x458] sm:$0xf]
        %v2265 = vld [vmem:[#allocation3 + $0x45c] sm:$0xff]
        %v2266 = vld [vmem:[#allocation3 + $0x464] sm:$0xff]
        %v2267 = vld [vmem:[#allocation3 + $0x46c] sm:$0xff]
        %v2268 = vld [vmem:[#allocation3 + $0x474] sm:$0xff]
        %v2269 = vld [vmem:[#allocation3 + $0x47c] sm:$0xf]
        %v2270 = vld [vmem:[#allocation8] sm:$0xf]
        %v2271 = vld [vmem:[#allocation8 + $0x4] sm:$0xf]
        %v2272 = vld [vmem:[#allocation8 + $0x8] sm:$0xf]
        %v2273 = vld [vmem:[#allocation8 + $0xc] sm:$0xf]
        %v2274 = vld [vmem:[#allocation8 + $0x10] sm:$0xf]
        %v2275 = vld [vmem:[#allocation8 + $0x14] sm:$0xf]
        %v2276 = vld [vmem:[#allocation8 + $0x18] sm:$0xf]
        %v2277 = vld [vmem:[#allocation8 + $0x1c] sm:$0xf]
        %v2278 = vld [vmem:[#allocation8 + $0x20] sm:$0xf]
        %v2279 = vld [vmem:[#allocation8 + $0x24] sm:$0xf]
        %v2280 = vld [vmem:[#allocation8 + $0x28] sm:$0xf]
        %v2281 = vld [vmem:[#allocation8 + $0x2c] sm:$0xf]
        %v2282 = vld [vmem:[#allocation8 + $0x30] sm:$0xf]
        %v2283 = vld [vmem:[#allocation8 + $0x34] sm:$0xf]
        %v2284 = vld [vmem:[#allocation8 + $0x38] sm:$0xf]
        %v2285 = vld [vmem:[#allocation8 + $0x3c] sm:$0xf]
        %v2286 = vld [vmem:[#allocation8 + $0x40] sm:$0xf]
        %v2287 = vld [vmem:[#allocation8 + $0x44] sm:$0xf]
        %v2288 = vld [vmem:[#allocation8 + $0x48] sm:$0xf]
        %v2289 = vld [vmem:[#allocation8 + $0x4c] sm:$0xf]
        %v2290 = vld [vmem:[#allocation8 + $0x50] sm:$0xf]
        %v2291 = vld [vmem:[#allocation8 + $0x54] sm:$0xf]
        %v2292 = vld [vmem:[#allocation8 + $0x58] sm:$0xf]
        %v2293 = vld [vmem:[#allocation8 + $0x5c] sm:$0xf]
        %v2294 = vld [vmem:[#allocation8 + $0x60] sm:$0xf]
        %v2295 = vld [vmem:[#allocation8 + $0x64] sm:$0xf]
        %v2296 = vld [vmem:[#allocation8 + $0x68] sm:$0xf]
        %v2297 = vld [vmem:[#allocation8 + $0x6c] sm:$0xf]
        %v2298 = vld [vmem:[#allocation8 + $0x70] sm:$0xf]
        %v2299 = vld [vmem:[#allocation8 + $0x74] sm:$0xf]
        %v2300 = vld [vmem:[#allocation8 + $0x78] sm:$0xf]
        %v2301 = vld [vmem:[#allocation8 + $0x7c] sm:$0xf]
        %v2302 = vld [vmem:[#allocation8 + $0x80] sm:$0xf]
        %v2303 = vld [vmem:[#allocation8 + $0x84] sm:$0xf]
        %v2304 = vld [vmem:[#allocation8 + $0x88] sm:$0xf]
        %v2305 = vld [vmem:[#allocation8 + $0x8c] sm:$0xf]
        %v2306 = vld [vmem:[#allocation8 + $0x90] sm:$0xf]
        %v2307 = vld [vmem:[#allocation8 + $0x94] sm:$0xf]
        %v2308 = vld [vmem:[#allocation8 + $0x98] sm:$0xf]
        %v2309 = vld [vmem:[#allocation8 + $0x9c] sm:$0xf]
        %v2310 = vld [vmem:[#allocation8 + $0xa0] sm:$0xf]
        %v2311 = vld [vmem:[#allocation8 + $0xa4] sm:$0xf]
        %v2312 = vld [vmem:[#allocation8 + $0xa8] sm:$0xf]
        %v2313 = vld [vmem:[#allocation8 + $0xac] sm:$0xf]
        %v2314 = vld [vmem:[#allocation8 + $0xb0] sm:$0xf]
        %v2315 = vld [vmem:[#allocation8 + $0xb4] sm:$0xf]
        %v2316 = vld [vmem:[#allocation8 + $0xb8] sm:$0xf]
        %v2317 = vld [vmem:[#allocation8 + $0xbc] sm:$0xf]
        %v2318 = vld [vmem:[#allocation8 + $0xc0] sm:$0xf]
        %v2319 = vld [vmem:[#allocation8 + $0xc4] sm:$0xf]
        %v2320 = vld [vmem:[#allocation8 + $0xc8] sm:$0xf]
        %v2321 = vld [vmem:[#allocation8 + $0xcc] sm:$0xf]
        %v2322 = vld [vmem:[#allocation8 + $0xd0] sm:$0xf]
        %v2323 = vld [vmem:[#allocation8 + $0xd4] sm:$0xf]
        %v2324 = vld [vmem:[#allocation8 + $0xd8] sm:$0xf]
        %v2325 = vld [vmem:[#allocation8 + $0xdc] sm:$0xf]
        %v2326 = vld [vmem:[#allocation8 + $0xe0] sm:$0xf]
        %v2327 = vld [vmem:[#allocation8 + $0xe4] sm:$0xf]
        %v2328 = vld [vmem:[#allocation8 + $0xe8] sm:$0xf]
        %v2329 = vld [vmem:[#allocation8 + $0xec] sm:$0xf]
        %v2330 = vld [vmem:[#allocation8 + $0xf0] sm:$0xf]
        %v2331 = vld [vmem:[#allocation8 + $0xf4] sm:$0xf]
        %v2332 = vld [vmem:[#allocation8 + $0xf8] sm:$0xf]
        %v2333 = vld [vmem:[#allocation8 + $0xfc] sm:$0xf]
        %v2334 = vld [vmem:[#allocation8 + $0x100] sm:$0xf]
        %v2335 = vld [vmem:[#allocation8 + $0x104] sm:$0xf]
        %v2336 = vld [vmem:[#allocation8 + $0x108] sm:$0xf]
        %v2337 = vld [vmem:[#allocation8 + $0x10c] sm:$0xf]
        %v2338 = vld [vmem:[#allocation8 + $0x110] sm:$0xf]
        %v2339 = vld [vmem:[#allocation8 + $0x114] sm:$0xf]
        %v2340 = vld [vmem:[#allocation8 + $0x118] sm:$0xf]
        %v2341 = vld [vmem:[#allocation8 + $0x11c] sm:$0xf]
        %v2342 = vld [vmem:[#allocation8 + $0x120] sm:$0xf]
        %v2343 = vld [vmem:[#allocation8 + $0x124] sm:$0xf]
        %v2344 = vld [vmem:[#allocation8 + $0x128] sm:$0xf]
        %v2345 = vld [vmem:[#allocation8 + $0x12c] sm:$0xf]
        %v2346 = vld [vmem:[#allocation8 + $0x130] sm:$0xf]
        %v2347 = vld [vmem:[#allocation8 + $0x134] sm:$0xf]
        %v2348 = vld [vmem:[#allocation8 + $0x138] sm:$0xf]
        %v2349 = vld [vmem:[#allocation8 + $0x13c] sm:$0xf]
        %v2350 = vld [vmem:[#allocation8 + $0x140] sm:$0xf]
        %v2351 = vld [vmem:[#allocation8 + $0x144] sm:$0xf]
        %v2352 = vld [vmem:[#allocation8 + $0x148] sm:$0xf]
        %v2353 = vld [vmem:[#allocation8 + $0x14c] sm:$0xf]
        %v2354 = vld [vmem:[#allocation8 + $0x150] sm:$0xf]
        %v2355 = vld [vmem:[#allocation8 + $0x154] sm:$0xf]
        %v2356 = vld [vmem:[#allocation8 + $0x158] sm:$0xf]
        %v2357 = vld [vmem:[#allocation8 + $0x15c] sm:$0xf]
        %v2358 = vld [vmem:[#allocation8 + $0x160] sm:$0xf]
        %v2359 = vld [vmem:[#allocation8 + $0x164] sm:$0xf]
        %v2360 = vld [vmem:[#allocation8 + $0x168] sm:$0xf]
        %v2361 = vld [vmem:[#allocation8 + $0x16c] sm:$0xf]
        %v2362 = vld [vmem:[#allocation8 + $0x170] sm:$0xf]
        %v2363 = vld [vmem:[#allocation8 + $0x174] sm:$0xf]
        %v2364 = vld [vmem:[#allocation8 + $0x178] sm:$0xf]
        %v2365 = vld [vmem:[#allocation8 + $0x17c] sm:$0xf]
        %v2366 = vld [vmem:[#allocation8 + $0x180] sm:$0xf]
        %v2367 = vld [vmem:[#allocation8 + $0x184] sm:$0xf]
        %v2368 = vld [vmem:[#allocation8 + $0x188] sm:$0xf]
        %v2369 = vld [vmem:[#allocation8 + $0x18c] sm:$0xf]
        %v2370 = vld [vmem:[#allocation8 + $0x190] sm:$0xf]
        %v2371 = vld [vmem:[#allocation8 + $0x194] sm:$0xf]
        %v2372 = vld [vmem:[#allocation8 + $0x198] sm:$0xf]
        %v2373 = vld [vmem:[#allocation8 + $0x19c] sm:$0xf]
        %v2374 = vld [vmem:[#allocation8 + $0x1a0] sm:$0xf]
        %v2375 = vld [vmem:[#allocation8 + $0x1a4] sm:$0xf]
        %v2376 = vld [vmem:[#allocation8 + $0x1a8] sm:$0xf]
        %v2377 = vld [vmem:[#allocation8 + $0x1ac] sm:$0xf]
        %v2378 = vld [vmem:[#allocation8 + $0x1b0] sm:$0xf]
        %v2379 = vld [vmem:[#allocation8 + $0x1b4] sm:$0xf]
        %v2380 = vld [vmem:[#allocation8 + $0x1b8] sm:$0xf]
        %v2381 = vld [vmem:[#allocation8 + $0x1bc] sm:$0xf]
        %v2382 = vld [vmem:[#allocation8 + $0x1c0] sm:$0xf]
        %v2383 = vld [vmem:[#allocation8 + $0x1c4] sm:$0xf]
        %v2384 = vld [vmem:[#allocation8 + $0x1c8] sm:$0xf]
        %v2385 = vld [vmem:[#allocation8 + $0x1cc] sm:$0xf]
        %v2386 = vld [vmem:[#allocation8 + $0x1d0] sm:$0xf]
        %v2387 = vld [vmem:[#allocation8 + $0x1d4] sm:$0xf]
        %v2388 = vld [vmem:[#allocation8 + $0x1d8] sm:$0xf]
        %v2389 = vld [vmem:[#allocation8 + $0x1dc] sm:$0xf]
        %v2390 = vld [vmem:[#allocation8 + $0x1e0] sm:$0xf]
        %v2391 = vld [vmem:[#allocation8 + $0x1e4] sm:$0xf]
        %v2392 = vld [vmem:[#allocation8 + $0x1e8] sm:$0xf]
        %v2393 = vld [vmem:[#allocation8 + $0x1ec] sm:$0xf]
        %v2394 = vld [vmem:[#allocation8 + $0x1f0] sm:$0xf]
        %v2395 = vld [vmem:[#allocation8 + $0x1f4] sm:$0xf]
        %v2396 = vld [vmem:[#allocation8 + $0x1f8] sm:$0xf]
        %v2397 = vld [vmem:[#allocation8 + $0x1fc] sm:$0xf]
        %v2398 = vld [vmem:[#allocation8 + $0x200] sm:$0xf]
        %v2399 = vld [vmem:[#allocation8 + $0x204] sm:$0xf]
        %v2400 = vld [vmem:[#allocation8 + $0x208] sm:$0xf]
        %v2401 = vld [vmem:[#allocation8 + $0x20c] sm:$0xf]
        %v2402 = vld [vmem:[#allocation8 + $0x210] sm:$0xf]
        %v2403 = vld [vmem:[#allocation8 + $0x214] sm:$0xf]
        %v2404 = vld [vmem:[#allocation8 + $0x218] sm:$0xf]
        %v2405 = vld [vmem:[#allocation8 + $0x21c] sm:$0xf]
        %v2406 = vld [vmem:[#allocation8 + $0x220] sm:$0xf]
        %v2407 = vld [vmem:[#allocation8 + $0x224] sm:$0xf]
        %v2408 = vld [vmem:[#allocation8 + $0x228] sm:$0xf]
        %v2409 = vld [vmem:[#allocation8 + $0x22c] sm:$0xf]
        %v2410 = vld [vmem:[#allocation8 + $0x230] sm:$0xf]
        %v2411 = vld [vmem:[#allocation8 + $0x234] sm:$0xf]
        %v2412 = vld [vmem:[#allocation8 + $0x238] sm:$0xf]
        %v2413 = vld [vmem:[#allocation8 + $0x23c] sm:$0xf]
        %v2574 = vunpack.c.l.b16 %v2110
        %v2575 = vunpack.c.h.b16 %v2110
        %v2576 = vunpack.c.l.b16 %v2111
        %v2577 = vunpack.c.h.b16 %v2111
        %v2578 = vunpack.c.l.b16 %v2112
        %v2579 = vunpack.c.h.b16 %v2112
        %v2580 = vunpack.c.l.b16 %v2113
        %v2581 = vunpack.c.h.b16 %v2113
        %v2582 = vunpack.c.l.b16 %v2114
        %v2583 = vunpack.c.l.b16 %v2115
        %v2584 = vunpack.c.h.b16 %v2115
        %v2585 = vunpack.c.l.b16 %v2116
        %v2586 = vunpack.c.h.b16 %v2116
        %v2587 = vunpack.c.l.b16 %v2117
        %v2588 = vunpack.c.h.b16 %v2117
        %v2589 = vunpack.c.l.b16 %v2118
        %v2590 = vunpack.c.h.b16 %v2118
        %v2591 = vunpack.c.l.b16 %v2119
        %v2592 = vunpack.c.l.b16 %v2120
        %v2593 = vunpack.c.h.b16 %v2120
        %v2594 = vunpack.c.l.b16 %v2121
        %v2595 = vunpack.c.h.b16 %v2121
        %v2596 = vunpack.c.l.b16 %v2122
        %v2597 = vunpack.c.h.b16 %v2122
        %v2598 = vunpack.c.l.b16 %v2123
        %v2599 = vunpack.c.h.b16 %v2123
        %v2600 = vunpack.c.l.b16 %v2124
        %v2601 = vunpack.c.l.b16 %v2125
        %v2602 = vunpack.c.h.b16 %v2125
        %v2603 = vunpack.c.l.b16 %v2126
        %v2604 = vunpack.c.h.b16 %v2126
        %v2605 = vunpack.c.l.b16 %v2127
        %v2606 = vunpack.c.h.b16 %v2127
        %v2607 = vunpack.c.l.b16 %v2128
        %v2608 = vunpack.c.h.b16 %v2128
        %v2609 = vunpack.c.l.b16 %v2129
        %v2610 = vunpack.c.l.b16 %v2130
        %v2611 = vunpack.c.h.b16 %v2130
        %v2612 = vunpack.c.l.b16 %v2131
        %v2613 = vunpack.c.h.b16 %v2131
        %v2614 = vunpack.c.l.b16 %v2132
        %v2615 = vunpack.c.h.b16 %v2132
        %v2616 = vunpack.c.l.b16 %v2133
        %v2617 = vunpack.c.h.b16 %v2133
        %v2618 = vunpack.c.l.b16 %v2134
        %v2619 = vunpack.c.l.b16 %v2135
        %v2620 = vunpack.c.h.b16 %v2135
        %v2621 = vunpack.c.l.b16 %v2136
        %v2622 = vunpack.c.h.b16 %v2136
        %v2623 = vunpack.c.l.b16 %v2137
        %v2624 = vunpack.c.h.b16 %v2137
        %v2625 = vunpack.c.l.b16 %v2138
        %v2626 = vunpack.c.h.b16 %v2138
        %v2627 = vunpack.c.l.b16 %v2139
        %v2628 = vunpack.c.l.b16 %v2140
        %v2629 = vunpack.c.h.b16 %v2140
        %v2630 = vunpack.c.l.b16 %v2141
        %v2631 = vunpack.c.h.b16 %v2141
        %v2632 = vunpack.c.l.b16 %v2142
        %v2633 = vunpack.c.h.b16 %v2142
        %v2634 = vunpack.c.l.b16 %v2143
        %v2635 = vunpack.c.h.b16 %v2143
        %v2636 = vunpack.c.l.b16 %v2144
        %v2637 = vunpack.c.l.b16 %v2145
        %v2638 = vunpack.c.h.b16 %v2145
        %v2639 = vunpack.c.l.b16 %v2146
        %v2640 = vunpack.c.h.b16 %v2146
        %v2641 = vunpack.c.l.b16 %v2147
        %v2642 = vunpack.c.h.b16 %v2147
        %v2643 = vunpack.c.l.b16 %v2148
        %v2644 = vunpack.c.h.b16 %v2148
        %v2645 = vunpack.c.l.b16 %v2149
        %v2646 = vunpack.c.l.b16 %v2150
        %v2647 = vunpack.c.h.b16 %v2150
        %v2648 = vunpack.c.l.b16 %v2151
        %v2649 = vunpack.c.h.b16 %v2151
        %v2650 = vunpack.c.l.b16 %v2152
        %v2651 = vunpack.c.h.b16 %v2152
        %v2652 = vunpack.c.l.b16 %v2153
        %v2653 = vunpack.c.h.b16 %v2153
        %v2654 = vunpack.c.l.b16 %v2154
        %v2655 = vunpack.c.l.b16 %v2155
        %v2656 = vunpack.c.h.b16 %v2155
        %v2657 = vunpack.c.l.b16 %v2156
        %v2658 = vunpack.c.h.b16 %v2156
        %v2659 = vunpack.c.l.b16 %v2157
        %v2660 = vunpack.c.h.b16 %v2157
        %v2661 = vunpack.c.l.b16 %v2158
        %v2662 = vunpack.c.h.b16 %v2158
        %v2663 = vunpack.c.l.b16 %v2159
        %v2664 = vunpack.c.l.b16 %v2160
        %v2665 = vunpack.c.h.b16 %v2160
        %v2666 = vunpack.c.l.b16 %v2161
        %v2667 = vunpack.c.h.b16 %v2161
        %v2668 = vunpack.c.l.b16 %v2162
        %v2669 = vunpack.c.h.b16 %v2162
        %v2670 = vunpack.c.l.b16 %v2163
        %v2671 = vunpack.c.h.b16 %v2163
        %v2672 = vunpack.c.l.b16 %v2164
        %v2673 = vunpack.c.l.b16 %v2165
        %v2674 = vunpack.c.h.b16 %v2165
        %v2675 = vunpack.c.l.b16 %v2166
        %v2676 = vunpack.c.h.b16 %v2166
        %v2677 = vunpack.c.l.b16 %v2167
        %v2678 = vunpack.c.h.b16 %v2167
        %v2679 = vunpack.c.l.b16 %v2168
        %v2680 = vunpack.c.h.b16 %v2168
        %v2681 = vunpack.c.l.b16 %v2169
        %v2682 = vunpack.c.l.b16 %v2170
        %v2683 = vunpack.c.h.b16 %v2170
        %v2684 = vunpack.c.l.b16 %v2171
        %v2685 = vunpack.c.h.b16 %v2171
        %v2686 = vunpack.c.l.b16 %v2172
        %v2687 = vunpack.c.h.b16 %v2172
        %v2688 = vunpack.c.l.b16 %v2173
        %v2689 = vunpack.c.h.b16 %v2173
        %v2690 = vunpack.c.l.b16 %v2174
        %v2691 = vunpack.c.l.b16 %v2175
        %v2692 = vunpack.c.h.b16 %v2175
        %v2693 = vunpack.c.l.b16 %v2176
        %v2694 = vunpack.c.h.b16 %v2176
        %v2695 = vunpack.c.l.b16 %v2177
        %v2696 = vunpack.c.h.b16 %v2177
        %v2697 = vunpack.c.l.b16 %v2178
        %v2698 = vunpack.c.h.b16 %v2178
        %v2699 = vunpack.c.l.b16 %v2179
        %v2700 = vunpack.c.l.b16 %v2180
        %v2701 = vunpack.c.h.b16 %v2180
        %v2702 = vunpack.c.l.b16 %v2181
        %v2703 = vunpack.c.h.b16 %v2181
        %v2704 = vunpack.c.l.b16 %v2182
        %v2705 = vunpack.c.h.b16 %v2182
        %v2706 = vunpack.c.l.b16 %v2183
        %v2707 = vunpack.c.h.b16 %v2183
        %v2708 = vunpack.c.l.b16 %v2184
        %v2709 = vunpack.c.l.b16 %v2185
        %v2710 = vunpack.c.h.b16 %v2185
        %v2711 = vunpack.c.l.b16 %v2186
        %v2712 = vunpack.c.h.b16 %v2186
        %v2713 = vunpack.c.l.b16 %v2187
        %v2714 = vunpack.c.h.b16 %v2187
        %v2715 = vunpack.c.l.b16 %v2188
        %v2716 = vunpack.c.h.b16 %v2188
        %v2717 = vunpack.c.l.b16 %v2189
        %v2718 = vunpack.c.l.b16 %v2190
        %v2719 = vunpack.c.h.b16 %v2190
        %v2720 = vunpack.c.l.b16 %v2191
        %v2721 = vunpack.c.h.b16 %v2191
        %v2722 = vunpack.c.l.b16 %v2192
        %v2723 = vunpack.c.h.b16 %v2192
        %v2724 = vunpack.c.l.b16 %v2193
        %v2725 = vunpack.c.h.b16 %v2193
        %v2726 = vunpack.c.l.b16 %v2194
        %v2727 = vunpack.c.l.b16 %v2195
        %v2728 = vunpack.c.h.b16 %v2195
        %v2729 = vunpack.c.l.b16 %v2196
        %v2730 = vunpack.c.h.b16 %v2196
        %v2731 = vunpack.c.l.b16 %v2197
        %v2732 = vunpack.c.h.b16 %v2197
        %v2733 = vunpack.c.l.b16 %v2198
        %v2734 = vunpack.c.h.b16 %v2198
        %v2735 = vunpack.c.l.b16 %v2199
        %v2736 = vunpack.c.l.b16 %v2200
        %v2737 = vunpack.c.h.b16 %v2200
        %v2738 = vunpack.c.l.b16 %v2201
        %v2739 = vunpack.c.h.b16 %v2201
        %v2740 = vunpack.c.l.b16 %v2202
        %v2741 = vunpack.c.h.b16 %v2202
        %v2742 = vunpack.c.l.b16 %v2203
        %v2743 = vunpack.c.h.b16 %v2203
        %v2744 = vunpack.c.l.b16 %v2204
        %v2745 = vunpack.c.l.b16 %v2205
        %v2746 = vunpack.c.h.b16 %v2205
        %v2747 = vunpack.c.l.b16 %v2206
        %v2748 = vunpack.c.h.b16 %v2206
        %v2749 = vunpack.c.l.b16 %v2207
        %v2750 = vunpack.c.h.b16 %v2207
        %v2751 = vunpack.c.l.b16 %v2208
        %v2752 = vunpack.c.h.b16 %v2208
        %v2753 = vunpack.c.l.b16 %v2209
        %v2754 = vunpack.c.l.b16 %v2210
        %v2755 = vunpack.c.h.b16 %v2210
        %v2756 = vunpack.c.l.b16 %v2211
        %v2757 = vunpack.c.h.b16 %v2211
        %v2758 = vunpack.c.l.b16 %v2212
        %v2759 = vunpack.c.h.b16 %v2212
        %v2760 = vunpack.c.l.b16 %v2213
        %v2761 = vunpack.c.h.b16 %v2213
        %v2762 = vunpack.c.l.b16 %v2214
        %v2763 = vunpack.c.l.b16 %v2215
        %v2764 = vunpack.c.h.b16 %v2215
        %v2765 = vunpack.c.l.b16 %v2216
        %v2766 = vunpack.c.h.b16 %v2216
        %v2767 = vunpack.c.l.b16 %v2217
        %v2768 = vunpack.c.h.b16 %v2217
        %v2769 = vunpack.c.l.b16 %v2218
        %v2770 = vunpack.c.h.b16 %v2218
        %v2771 = vunpack.c.l.b16 %v2219
        %v2772 = vunpack.c.l.b16 %v2220
        %v2773 = vunpack.c.h.b16 %v2220
        %v2774 = vunpack.c.l.b16 %v2221
        %v2775 = vunpack.c.h.b16 %v2221
        %v2776 = vunpack.c.l.b16 %v2222
        %v2777 = vunpack.c.h.b16 %v2222
        %v2778 = vunpack.c.l.b16 %v2223
        %v2779 = vunpack.c.h.b16 %v2223
        %v2780 = vunpack.c.l.b16 %v2224
        %v2781 = vunpack.c.l.b16 %v2225
        %v2782 = vunpack.c.h.b16 %v2225
        %v2783 = vunpack.c.l.b16 %v2226
        %v2784 = vunpack.c.h.b16 %v2226
        %v2785 = vunpack.c.l.b16 %v2227
        %v2786 = vunpack.c.h.b16 %v2227
        %v2787 = vunpack.c.l.b16 %v2228
        %v2788 = vunpack.c.h.b16 %v2228
        %v2789 = vunpack.c.l.b16 %v2229
        %v2790 = vunpack.c.l.b16 %v2230
        %v2791 = vunpack.c.h.b16 %v2230
        %v2792 = vunpack.c.l.b16 %v2231
        %v2793 = vunpack.c.h.b16 %v2231
        %v2794 = vunpack.c.l.b16 %v2232
        %v2795 = vunpack.c.h.b16 %v2232
        %v2796 = vunpack.c.l.b16 %v2233
        %v2797 = vunpack.c.h.b16 %v2233
        %v2798 = vunpack.c.l.b16 %v2234
        %v2799 = vunpack.c.l.b16 %v2235
        %v2800 = vunpack.c.h.b16 %v2235
        %v2801 = vunpack.c.l.b16 %v2236
        %v2802 = vunpack.c.h.b16 %v2236
        %v2803 = vunpack.c.l.b16 %v2237
        %v2804 = vunpack.c.h.b16 %v2237
        %v2805 = vunpack.c.l.b16 %v2238
        %v2806 = vunpack.c.h.b16 %v2238
        %v2807 = vunpack.c.l.b16 %v2239
        %v2808 = vunpack.c.l.b16 %v2240
        %v2809 = vunpack.c.h.b16 %v2240
        %v2810 = vunpack.c.l.b16 %v2241
        %v2811 = vunpack.c.h.b16 %v2241
        %v2812 = vunpack.c.l.b16 %v2242
        %v2813 = vunpack.c.h.b16 %v2242
        %v2814 = vunpack.c.l.b16 %v2243
        %v2815 = vunpack.c.h.b16 %v2243
        %v2816 = vunpack.c.l.b16 %v2244
        %v2817 = vunpack.c.l.b16 %v2245
        %v2818 = vunpack.c.h.b16 %v2245
        %v2819 = vunpack.c.l.b16 %v2246
        %v2820 = vunpack.c.h.b16 %v2246
        %v2821 = vunpack.c.l.b16 %v2247
        %v2822 = vunpack.c.h.b16 %v2247
        %v2823 = vunpack.c.l.b16 %v2248
        %v2824 = vunpack.c.h.b16 %v2248
        %v2825 = vunpack.c.l.b16 %v2249
        %v2826 = vunpack.c.l.b16 %v2250
        %v2827 = vunpack.c.h.b16 %v2250
        %v2828 = vunpack.c.l.b16 %v2251
        %v2829 = vunpack.c.h.b16 %v2251
        %v2830 = vunpack.c.l.b16 %v2252
        %v2831 = vunpack.c.h.b16 %v2252
        %v2832 = vunpack.c.l.b16 %v2253
        %v2833 = vunpack.c.h.b16 %v2253
        %v2834 = vunpack.c.l.b16 %v2254
        %v2835 = vunpack.c.l.b16 %v2255
        %v2836 = vunpack.c.h.b16 %v2255
        %v2837 = vunpack.c.l.b16 %v2256
        %v2838 = vunpack.c.h.b16 %v2256
        %v2839 = vunpack.c.l.b16 %v2257
        %v2840 = vunpack.c.h.b16 %v2257
        %v2841 = vunpack.c.l.b16 %v2258
        %v2842 = vunpack.c.h.b16 %v2258
        %v2843 = vunpack.c.l.b16 %v2259
        %v2844 = vunpack.c.l.b16 %v2260
        %v2845 = vunpack.c.h.b16 %v2260
        %v2846 = vunpack.c.l.b16 %v2261
        %v2847 = vunpack.c.h.b16 %v2261
        %v2848 = vunpack.c.l.b16 %v2262
        %v2849 = vunpack.c.h.b16 %v2262
        %v2850 = vunpack.c.l.b16 %v2263
        %v2851 = vunpack.c.h.b16 %v2263
        %v2852 = vunpack.c.l.b16 %v2264
        %v2853 = vunpack.c.l.b16 %v2265
        %v2854 = vunpack.c.h.b16 %v2265
        %v2855 = vunpack.c.l.b16 %v2266
        %v2856 = vunpack.c.h.b16 %v2266
        %v2857 = vunpack.c.l.b16 %v2267
        %v2858 = vunpack.c.h.b16 %v2267
        %v2859 = vunpack.c.l.b16 %v2268
        %v2860 = vunpack.c.h.b16 %v2268
        %v2861 = vunpack.c.l.b16 %v2269
        %v2862 = vpack.c.b16 %v2583, %v2574
        %v2863 = vpack.c.b16 %v2584, %v2575
        %v2864 = vpack.c.b16 %v2585, %v2576
        %v2865 = vpack.c.b16 %v2586, %v2577
        %v2866 = vpack.c.b16 %v2587, %v2578
        %v2867 = vpack.c.b16 %v2588, %v2579
        %v2868 = vpack.c.b16 %v2589, %v2580
        %v2869 = vpack.c.b16 %v2590, %v2581
        %v2870 = vpack.c.b16 %v2591, %v2582
        %v2871 = vpack.c.b16 %v2601, %v2592
        %v2872 = vpack.c.b16 %v2602, %v2593
        %v2873 = vpack.c.b16 %v2603, %v2594
        %v2874 = vpack.c.b16 %v2604, %v2595
        %v2875 = vpack.c.b16 %v2605, %v2596
        %v2876 = vpack.c.b16 %v2606, %v2597
        %v2877 = vpack.c.b16 %v2607, %v2598
        %v2878 = vpack.c.b16 %v2608, %v2599
        %v2879 = vpack.c.b16 %v2609, %v2600
        %v2880 = vpack.c.b16 %v2619, %v2610
        %v2881 = vpack.c.b16 %v2620, %v2611
        %v2882 = vpack.c.b16 %v2621, %v2612
        %v2883 = vpack.c.b16 %v2622, %v2613
        %v2884 = vpack.c.b16 %v2623, %v2614
        %v2885 = vpack.c.b16 %v2624, %v2615
        %v2886 = vpack.c.b16 %v2625, %v2616
        %v2887 = vpack.c.b16 %v2626, %v2617
        %v2888 = vpack.c.b16 %v2627, %v2618
        %v2889 = vpack.c.b16 %v2637, %v2628
        %v2890 = vpack.c.b16 %v2638, %v2629
        %v2891 = vpack.c.b16 %v2639, %v2630
        %v2892 = vpack.c.b16 %v2640, %v2631
        %v2893 = vpack.c.b16 %v2641, %v2632
        %v2894 = vpack.c.b16 %v2642, %v2633
        %v2895 = vpack.c.b16 %v2643, %v2634
        %v2896 = vpack.c.b16 %v2644, %v2635
        %v2897 = vpack.c.b16 %v2645, %v2636
        %v2898 = vpack.c.b16 %v2655, %v2646
        %v2899 = vpack.c.b16 %v2656, %v2647
        %v2900 = vpack.c.b16 %v2657, %v2648
        %v2901 = vpack.c.b16 %v2658, %v2649
        %v2902 = vpack.c.b16 %v2659, %v2650
        %v2903 = vpack.c.b16 %v2660, %v2651
        %v2904 = vpack.c.b16 %v2661, %v2652
        %v2905 = vpack.c.b16 %v2662, %v2653
        %v2906 = vpack.c.b16 %v2663, %v2654
        %v2907 = vpack.c.b16 %v2673, %v2664
        %v2908 = vpack.c.b16 %v2674, %v2665
        %v2909 = vpack.c.b16 %v2675, %v2666
        %v2910 = vpack.c.b16 %v2676, %v2667
        %v2911 = vpack.c.b16 %v2677, %v2668
        %v2912 = vpack.c.b16 %v2678, %v2669
        %v2913 = vpack.c.b16 %v2679, %v2670
        %v2914 = vpack.c.b16 %v2680, %v2671
        %v2915 = vpack.c.b16 %v2681, %v2672
        %v2916 = vpack.c.b16 %v2691, %v2682
        %v2917 = vpack.c.b16 %v2692, %v2683
        %v2918 = vpack.c.b16 %v2693, %v2684
        %v2919 = vpack.c.b16 %v2694, %v2685
        %v2920 = vpack.c.b16 %v2695, %v2686
        %v2921 = vpack.c.b16 %v2696, %v2687
        %v2922 = vpack.c.b16 %v2697, %v2688
        %v2923 = vpack.c.b16 %v2698, %v2689
        %v2924 = vpack.c.b16 %v2699, %v2690
        %v2925 = vpack.c.b16 %v2709, %v2700
        %v2926 = vpack.c.b16 %v2710, %v2701
        %v2927 = vpack.c.b16 %v2711, %v2702
        %v2928 = vpack.c.b16 %v2712, %v2703
        %v2929 = vpack.c.b16 %v2713, %v2704
        %v2930 = vpack.c.b16 %v2714, %v2705
        %v2931 = vpack.c.b16 %v2715, %v2706
        %v2932 = vpack.c.b16 %v2716, %v2707
        %v2933 = vpack.c.b16 %v2717, %v2708
        %v2934 = vpack.c.b16 %v2727, %v2718
        %v2935 = vpack.c.b16 %v2728, %v2719
        %v2936 = vpack.c.b16 %v2729, %v2720
        %v2937 = vpack.c.b16 %v2730, %v2721
        %v2938 = vpack.c.b16 %v2731, %v2722
        %v2939 = vpack.c.b16 %v2732, %v2723
        %v2940 = vpack.c.b16 %v2733, %v2724
        %v2941 = vpack.c.b16 %v2734, %v2725
        %v2942 = vpack.c.b16 %v2735, %v2726
        %v2943 = vpack.c.b16 %v2745, %v2736
        %v2944 = vpack.c.b16 %v2746, %v2737
        %v2945 = vpack.c.b16 %v2747, %v2738
        %v2946 = vpack.c.b16 %v2748, %v2739
        %v2947 = vpack.c.b16 %v2749, %v2740
        %v2948 = vpack.c.b16 %v2750, %v2741
        %v2949 = vpack.c.b16 %v2751, %v2742
        %v2950 = vpack.c.b16 %v2752, %v2743
        %v2951 = vpack.c.b16 %v2753, %v2744
        %v2952 = vpack.c.b16 %v2763, %v2754
        %v2953 = vpack.c.b16 %v2764, %v2755
        %v2954 = vpack.c.b16 %v2765, %v2756
        %v2955 = vpack.c.b16 %v2766, %v2757
        %v2956 = vpack.c.b16 %v2767, %v2758
        %v2957 = vpack.c.b16 %v2768, %v2759
        %v2958 = vpack.c.b16 %v2769, %v2760
        %v2959 = vpack.c.b16 %v2770, %v2761
        %v2960 = vpack.c.b16 %v2771, %v2762
        %v2961 = vpack.c.b16 %v2781, %v2772
        %v2962 = vpack.c.b16 %v2782, %v2773
        %v2963 = vpack.c.b16 %v2783, %v2774
        %v2964 = vpack.c.b16 %v2784, %v2775
        %v2965 = vpack.c.b16 %v2785, %v2776
        %v2966 = vpack.c.b16 %v2786, %v2777
        %v2967 = vpack.c.b16 %v2787, %v2778
        %v2968 = vpack.c.b16 %v2788, %v2779
        %v2969 = vpack.c.b16 %v2789, %v2780
        %v2970 = vpack.c.b16 %v2799, %v2790
        %v2971 = vpack.c.b16 %v2800, %v2791
        %v2972 = vpack.c.b16 %v2801, %v2792
        %v2973 = vpack.c.b16 %v2802, %v2793
        %v2974 = vpack.c.b16 %v2803, %v2794
        %v2975 = vpack.c.b16 %v2804, %v2795
        %v2976 = vpack.c.b16 %v2805, %v2796
        %v2977 = vpack.c.b16 %v2806, %v2797
        %v2978 = vpack.c.b16 %v2807, %v2798
        %v2979 = vpack.c.b16 %v2817, %v2808
        %v2980 = vpack.c.b16 %v2818, %v2809
        %v2981 = vpack.c.b16 %v2819, %v2810
        %v2982 = vpack.c.b16 %v2820, %v2811
        %v2983 = vpack.c.b16 %v2821, %v2812
        %v2984 = vpack.c.b16 %v2822, %v2813
        %v2985 = vpack.c.b16 %v2823, %v2814
        %v2986 = vpack.c.b16 %v2824, %v2815
        %v2987 = vpack.c.b16 %v2825, %v2816
        %v2988 = vpack.c.b16 %v2835, %v2826
        %v2989 = vpack.c.b16 %v2836, %v2827
        %v2990 = vpack.c.b16 %v2837, %v2828
        %v2991 = vpack.c.b16 %v2838, %v2829
        %v2992 = vpack.c.b16 %v2839, %v2830
        %v2993 = vpack.c.b16 %v2840, %v2831
        %v2994 = vpack.c.b16 %v2841, %v2832
        %v2995 = vpack.c.b16 %v2842, %v2833
        %v2996 = vpack.c.b16 %v2843, %v2834
        %v2997 = vpack.c.b16 %v2853, %v2844
        %v2998 = vpack.c.b16 %v2854, %v2845
        %v2999 = vpack.c.b16 %v2855, %v2846
        %v3000 = vpack.c.b16 %v2856, %v2847
        %v3001 = vpack.c.b16 %v2857, %v2848
        %v3002 = vpack.c.b16 %v2858, %v2849
        %v3003 = vpack.c.b16 %v2859, %v2850
        %v3004 = vpack.c.b16 %v2860, %v2851
        %v3005 = vpack.c.b16 %v2861, %v2852
        %v3294 = vunpack.c.l.b16 %v2270
        %v3295 = vunpack.c.l.b16 %v2271
        %v3296 = vunpack.c.l.b16 %v2272
        %v3297 = vunpack.c.l.b16 %v2273
        %v3298 = vunpack.c.l.b16 %v2274
        %v3299 = vunpack.c.l.b16 %v2275
        %v3300 = vunpack.c.l.b16 %v2276
        %v3301 = vunpack.c.l.b16 %v2277
        %v3302 = vunpack.c.l.b16 %v2278
        %v3303 = vunpack.c.l.b16 %v2279
        %v3304 = vunpack.c.l.b16 %v2280
        %v3305 = vunpack.c.l.b16 %v2281
        %v3306 = vunpack.c.l.b16 %v2282
        %v3307 = vunpack.c.l.b16 %v2283
        %v3308 = vunpack.c.l.b16 %v2284
        %v3309 = vunpack.c.l.b16 %v2285
        %v3310 = vunpack.c.l.b16 %v2286
        %v3311 = vunpack.c.l.b16 %v2287
        %v3312 = vunpack.c.l.b16 %v2288
        %v3313 = vunpack.c.l.b16 %v2289
        %v3314 = vunpack.c.l.b16 %v2290
        %v3315 = vunpack.c.l.b16 %v2291
        %v3316 = vunpack.c.l.b16 %v2292
        %v3317 = vunpack.c.l.b16 %v2293
        %v3318 = vunpack.c.l.b16 %v2294
        %v3319 = vunpack.c.l.b16 %v2295
        %v3320 = vunpack.c.l.b16 %v2296
        %v3321 = vunpack.c.l.b16 %v2297
        %v3322 = vunpack.c.l.b16 %v2298
        %v3323 = vunpack.c.l.b16 %v2299
        %v3324 = vunpack.c.l.b16 %v2300
        %v3325 = vunpack.c.l.b16 %v2301
        %v3326 = vunpack.c.l.b16 %v2302
        %v3327 = vunpack.c.l.b16 %v2303
        %v3328 = vunpack.c.l.b16 %v2304
        %v3329 = vunpack.c.l.b16 %v2305
        %v3330 = vunpack.c.l.b16 %v2306
        %v3331 = vunpack.c.l.b16 %v2307
        %v3332 = vunpack.c.l.b16 %v2308
        %v3333 = vunpack.c.l.b16 %v2309
        %v3334 = vunpack.c.l.b16 %v2310
        %v3335 = vunpack.c.l.b16 %v2311
        %v3336 = vunpack.c.l.b16 %v2312
        %v3337 = vunpack.c.l.b16 %v2313
        %v3338 = vunpack.c.l.b16 %v2314
        %v3339 = vunpack.c.l.b16 %v2315
        %v3340 = vunpack.c.l.b16 %v2316
        %v3341 = vunpack.c.l.b16 %v2317
        %v3342 = vunpack.c.l.b16 %v2318
        %v3343 = vunpack.c.l.b16 %v2319
        %v3344 = vunpack.c.l.b16 %v2320
        %v3345 = vunpack.c.l.b16 %v2321
        %v3346 = vunpack.c.l.b16 %v2322
        %v3347 = vunpack.c.l.b16 %v2323
        %v3348 = vunpack.c.l.b16 %v2324
        %v3349 = vunpack.c.l.b16 %v2325
        %v3350 = vunpack.c.l.b16 %v2326
        %v3351 = vunpack.c.l.b16 %v2327
        %v3352 = vunpack.c.l.b16 %v2328
        %v3353 = vunpack.c.l.b16 %v2329
        %v3354 = vunpack.c.l.b16 %v2330
        %v3355 = vunpack.c.l.b16 %v2331
        %v3356 = vunpack.c.l.b16 %v2332
        %v3357 = vunpack.c.l.b16 %v2333
        %v3358 = vunpack.c.l.b16 %v2334
        %v3359 = vunpack.c.l.b16 %v2335
        %v3360 = vunpack.c.l.b16 %v2336
        %v3361 = vunpack.c.l.b16 %v2337
        %v3362 = vunpack.c.l.b16 %v2338
        %v3363 = vunpack.c.l.b16 %v2339
        %v3364 = vunpack.c.l.b16 %v2340
        %v3365 = vunpack.c.l.b16 %v2341
        %v3366 = vunpack.c.l.b16 %v2342
        %v3367 = vunpack.c.l.b16 %v2343
        %v3368 = vunpack.c.l.b16 %v2344
        %v3369 = vunpack.c.l.b16 %v2345
        %v3370 = vunpack.c.l.b16 %v2346
        %v3371 = vunpack.c.l.b16 %v2347
        %v3372 = vunpack.c.l.b16 %v2348
        %v3373 = vunpack.c.l.b16 %v2349
        %v3374 = vunpack.c.l.b16 %v2350
        %v3375 = vunpack.c.l.b16 %v2351
        %v3376 = vunpack.c.l.b16 %v2352
        %v3377 = vunpack.c.l.b16 %v2353
        %v3378 = vunpack.c.l.b16 %v2354
        %v3379 = vunpack.c.l.b16 %v2355
        %v3380 = vunpack.c.l.b16 %v2356
        %v3381 = vunpack.c.l.b16 %v2357
        %v3382 = vunpack.c.l.b16 %v2358
        %v3383 = vunpack.c.l.b16 %v2359
        %v3384 = vunpack.c.l.b16 %v2360
        %v3385 = vunpack.c.l.b16 %v2361
        %v3386 = vunpack.c.l.b16 %v2362
        %v3387 = vunpack.c.l.b16 %v2363
        %v3388 = vunpack.c.l.b16 %v2364
        %v3389 = vunpack.c.l.b16 %v2365
        %v3390 = vunpack.c.l.b16 %v2366
        %v3391 = vunpack.c.l.b16 %v2367
        %v3392 = vunpack.c.l.b16 %v2368
        %v3393 = vunpack.c.l.b16 %v2369
        %v3394 = vunpack.c.l.b16 %v2370
        %v3395 = vunpack.c.l.b16 %v2371
        %v3396 = vunpack.c.l.b16 %v2372
        %v3397 = vunpack.c.l.b16 %v2373
        %v3398 = vunpack.c.l.b16 %v2374
        %v3399 = vunpack.c.l.b16 %v2375
        %v3400 = vunpack.c.l.b16 %v2376
        %v3401 = vunpack.c.l.b16 %v2377
        %v3402 = vunpack.c.l.b16 %v2378
        %v3403 = vunpack.c.l.b16 %v2379
        %v3404 = vunpack.c.l.b16 %v2380
        %v3405 = vunpack.c.l.b16 %v2381
        %v3406 = vunpack.c.l.b16 %v2382
        %v3407 = vunpack.c.l.b16 %v2383
        %v3408 = vunpack.c.l.b16 %v2384
        %v3409 = vunpack.c.l.b16 %v2385
        %v3410 = vunpack.c.l.b16 %v2386
        %v3411 = vunpack.c.l.b16 %v2387
        %v3412 = vunpack.c.l.b16 %v2388
        %v3413 = vunpack.c.l.b16 %v2389
        %v3414 = vunpack.c.l.b16 %v2390
        %v3415 = vunpack.c.l.b16 %v2391
        %v3416 = vunpack.c.l.b16 %v2392
        %v3417 = vunpack.c.l.b16 %v2393
        %v3418 = vunpack.c.l.b16 %v2394
        %v3419 = vunpack.c.l.b16 %v2395
        %v3420 = vunpack.c.l.b16 %v2396
        %v3421 = vunpack.c.l.b16 %v2397
        %v3422 = vunpack.c.l.b16 %v2398
        %v3423 = vunpack.c.l.b16 %v2399
        %v3424 = vunpack.c.l.b16 %v2400
        %v3425 = vunpack.c.l.b16 %v2401
        %v3426 = vunpack.c.l.b16 %v2402
        %v3427 = vunpack.c.l.b16 %v2403
        %v3428 = vunpack.c.l.b16 %v2404
        %v3429 = vunpack.c.l.b16 %v2405
        %v3430 = vunpack.c.l.b16 %v2406
        %v3431 = vunpack.c.l.b16 %v2407
        %v3432 = vunpack.c.l.b16 %v2408
        %v3433 = vunpack.c.l.b16 %v2409
        %v3434 = vunpack.c.l.b16 %v2410
        %v3435 = vunpack.c.l.b16 %v2411
        %v3436 = vunpack.c.l.b16 %v2412
        %v3437 = vunpack.c.l.b16 %v2413
        %v3438 = vpack.c.b16 %v3295, %v3294
        %v3439 = vpack.c.b16 %v3297, %v3296
        %v3440 = vpack.c.b16 %v3299, %v3298
        %v3441 = vpack.c.b16 %v3301, %v3300
        %v3442 = vpack.c.b16 %v3303, %v3302
        %v3443 = vpack.c.b16 %v3305, %v3304
        %v3444 = vpack.c.b16 %v3307, %v3306
        %v3445 = vpack.c.b16 %v3309, %v3308
        %v3446 = vpack.c.b16 %v3311, %v3310
        %v3447 = vpack.c.b16 %v3313, %v3312
        %v3448 = vpack.c.b16 %v3315, %v3314
        %v3449 = vpack.c.b16 %v3317, %v3316
        %v3450 = vpack.c.b16 %v3319, %v3318
        %v3451 = vpack.c.b16 %v3321, %v3320
        %v3452 = vpack.c.b16 %v3323, %v3322
        %v3453 = vpack.c.b16 %v3325, %v3324
        %v3454 = vpack.c.b16 %v3327, %v3326
        %v3455 = vpack.c.b16 %v3329, %v3328
        %v3456 = vpack.c.b16 %v3331, %v3330
        %v3457 = vpack.c.b16 %v3333, %v3332
        %v3458 = vpack.c.b16 %v3335, %v3334
        %v3459 = vpack.c.b16 %v3337, %v3336
        %v3460 = vpack.c.b16 %v3339, %v3338
        %v3461 = vpack.c.b16 %v3341, %v3340
        %v3462 = vpack.c.b16 %v3343, %v3342
        %v3463 = vpack.c.b16 %v3345, %v3344
        %v3464 = vpack.c.b16 %v3347, %v3346
        %v3465 = vpack.c.b16 %v3349, %v3348
        %v3466 = vpack.c.b16 %v3351, %v3350
        %v3467 = vpack.c.b16 %v3353, %v3352
        %v3468 = vpack.c.b16 %v3355, %v3354
        %v3469 = vpack.c.b16 %v3357, %v3356
        %v3470 = vpack.c.b16 %v3359, %v3358
        %v3471 = vpack.c.b16 %v3361, %v3360
        %v3472 = vpack.c.b16 %v3363, %v3362
        %v3473 = vpack.c.b16 %v3365, %v3364
        %v3474 = vpack.c.b16 %v3367, %v3366
        %v3475 = vpack.c.b16 %v3369, %v3368
        %v3476 = vpack.c.b16 %v3371, %v3370
        %v3477 = vpack.c.b16 %v3373, %v3372
        %v3478 = vpack.c.b16 %v3375, %v3374
        %v3479 = vpack.c.b16 %v3377, %v3376
        %v3480 = vpack.c.b16 %v3379, %v3378
        %v3481 = vpack.c.b16 %v3381, %v3380
        %v3482 = vpack.c.b16 %v3383, %v3382
        %v3483 = vpack.c.b16 %v3385, %v3384
        %v3484 = vpack.c.b16 %v3387, %v3386
        %v3485 = vpack.c.b16 %v3389, %v3388
        %v3486 = vpack.c.b16 %v3391, %v3390
        %v3487 = vpack.c.b16 %v3393, %v3392
        %v3488 = vpack.c.b16 %v3395, %v3394
        %v3489 = vpack.c.b16 %v3397, %v3396
        %v3490 = vpack.c.b16 %v3399, %v3398
        %v3491 = vpack.c.b16 %v3401, %v3400
        %v3492 = vpack.c.b16 %v3403, %v3402
        %v3493 = vpack.c.b16 %v3405, %v3404
        %v3494 = vpack.c.b16 %v3407, %v3406
        %v3495 = vpack.c.b16 %v3409, %v3408
        %v3496 = vpack.c.b16 %v3411, %v3410
        %v3497 = vpack.c.b16 %v3413, %v3412
        %v3498 = vpack.c.b16 %v3415, %v3414
        %v3499 = vpack.c.b16 %v3417, %v3416
        %v3500 = vpack.c.b16 %v3419, %v3418
        %v3501 = vpack.c.b16 %v3421, %v3420
        %v3502 = vpack.c.b16 %v3423, %v3422
        %v3503 = vpack.c.b16 %v3425, %v3424
        %v3504 = vpack.c.b16 %v3427, %v3426
        %v3505 = vpack.c.b16 %v3429, %v3428
        %v3506 = vpack.c.b16 %v3431, %v3430
        %v3507 = vpack.c.b16 %v3433, %v3432
        %v3508 = vpack.c.b16 %v3435, %v3434
        %v3509 = vpack.c.b16 %v3437, %v3436
        %3582 = vmatprep.subr.bf16.mxu0 0
        %3583 = vmatpush1.bf16.msra.mxu0 %v3445
        %3584 = vmatprep.subr.bf16.mxu0 0
        %3585 = vmatpush1.bf16.msra.mxu0 %v3444
        %3586 = vmatprep.subr.bf16.mxu0 0
        %3587 = vmatpush1.bf16.msra.mxu0 %v3443
        %3588 = vmatprep.subr.bf16.mxu0 0
        %3589 = vmatpush1.bf16.msra.mxu0 %v3442
        %3590 = vmatprep.subr.bf16.mxu0 0
        %3591 = vmatpush1.bf16.msra.mxu0 %v3441
        %3592 = vmatprep.subr.bf16.mxu0 0
        %3593 = vmatpush1.bf16.msra.mxu0 %v3440
        %3594 = vmatprep.subr.bf16.mxu0 0
        %3595 = vmatpush1.bf16.msra.mxu0 %v3439
        %3596 = vmatprep.subr.bf16.mxu0 0
        %3597 = vmatpush1.bf16.msra.mxu0 %v3438
        %3598 = vmatprep.subr.bf16.mxu0 0
        %3599 = vmatpush2.bf16.msra.mxu0 %v3453
        %3600 = vmatprep.subr.bf16.mxu0 0
        %3601 = vmatpush2.bf16.msra.mxu0 %v3452
        %3602 = vmatprep.subr.bf16.mxu0 0
        %3603 = vmatpush2.bf16.msra.mxu0 %v3451
        %3604 = vmatprep.subr.bf16.mxu0 0
        %3605 = vmatpush2.bf16.msra.mxu0 %v3450
        %3606 = vmatprep.subr.bf16.mxu0 0
        %3607 = vmatpush2.bf16.msra.mxu0 %v3449
        %3608 = vmatprep.subr.bf16.mxu0 0
        %3609 = vmatpush2.bf16.msra.mxu0 %v3448
        %3610 = vmatprep.subr.bf16.mxu0 0
        %3611 = vmatpush2.bf16.msra.mxu0 %v3447
        %3612 = vmatprep.subr.bf16.mxu0 0
        %3613 = vmatpush2.bf16.msra.mxu0 %v3446
        %3614 = vmatprep.mubr.bf16.mxu0 %v2863
        %3615 = vmatmul.mubr.bf16.gmra.mxu0 %v2862
        %v3616 = vpop.f32.mrf.mxu0
        %v3617 = vadd.f32 0.0, %v3616
        %v3618 = vpop.f32.mrf.mxu0
        %v3619 = vpop.f32.mrf.mxu0
        %v3620 = vadd.f32 0.0, %v3619
        %v3621 = vpop.f32.mrf.mxu0
        %3622 = vmatprep.mubr.bf16.mxu0 %v2872
        %3623 = vmatmul.mubr.bf16.gmra.mxu0 %v2871
        %v3624 = vpop.f32.mrf.mxu0
        %v3625 = vadd.f32 0.0, %v3624
        %v3626 = vpop.f32.mrf.mxu0
        %v3627 = vpop.f32.mrf.mxu0
        %v3628 = vadd.f32 0.0, %v3627
        %v3629 = vpop.f32.mrf.mxu0
        %3630 = vmatprep.mubr.bf16.mxu0 %v2881
        %3631 = vmatmul.mubr.bf16.gmra.mxu0 %v2880
        %v3632 = vpop.f32.mrf.mxu0
        %v3633 = vadd.f32 0.0, %v3632
        %v3634 = vpop.f32.mrf.mxu0
        %v3635 = vpop.f32.mrf.mxu0
        %v3636 = vadd.f32 0.0, %v3635
        %v3637 = vpop.f32.mrf.mxu0
        %3638 = vmatprep.mubr.bf16.mxu0 %v2890
        %3639 = vmatmul.mubr.bf16.gmra.mxu0 %v2889
        %v3640 = vpop.f32.mrf.mxu0
        %v3641 = vadd.f32 0.0, %v3640
        %v3642 = vpop.f32.mrf.mxu0
        %v3643 = vpop.f32.mrf.mxu0
        %v3644 = vadd.f32 0.0, %v3643
        %v3645 = vpop.f32.mrf.mxu0
        %3646 = vmatprep.mubr.bf16.mxu0 %v2899
        %3647 = vmatmul.mubr.bf16.gmra.mxu0 %v2898
        %v3648 = vpop.f32.mrf.mxu0
        %v3649 = vadd.f32 0.0, %v3648
        %v3650 = vpop.f32.mrf.mxu0
        %v3651 = vpop.f32.mrf.mxu0
        %v3652 = vadd.f32 0.0, %v3651
        %v3653 = vpop.f32.mrf.mxu0
        %3654 = vmatprep.mubr.bf16.mxu0 %v2908
        %3655 = vmatmul.mubr.bf16.gmra.mxu0 %v2907
        %v3656 = vpop.f32.mrf.mxu0
        %v3657 = vadd.f32 0.0, %v3656
        %v3658 = vpop.f32.mrf.mxu0
        %v3659 = vpop.f32.mrf.mxu0
        %v3660 = vadd.f32 0.0, %v3659
        %v3661 = vpop.f32.mrf.mxu0
        %3662 = vmatprep.mubr.bf16.mxu0 %v2917
        %3663 = vmatmul.mubr.bf16.gmra.mxu0 %v2916
        %v3664 = vpop.f32.mrf.mxu0
        %v3665 = vadd.f32 0.0, %v3664
        %v3666 = vpop.f32.mrf.mxu0
        %v3667 = vpop.f32.mrf.mxu0
        %v3668 = vadd.f32 0.0, %v3667
        %v3669 = vpop.f32.mrf.mxu0
        %3670 = vmatprep.mubr.bf16.mxu0 %v2926
        %3671 = vmatmul.mubr.bf16.gmra.mxu0 %v2925
        %v3672 = vpop.f32.mrf.mxu0
        %v3673 = vadd.f32 0.0, %v3672
        %v3674 = vpop.f32.mrf.mxu0
        %v3675 = vpop.f32.mrf.mxu0
        %v3676 = vadd.f32 0.0, %v3675
        %v3677 = vpop.f32.mrf.mxu0
        %3678 = vmatprep.mubr.bf16.mxu0 %v2935
        %3679 = vmatmul.mubr.bf16.gmra.mxu0 %v2934
        %v3680 = vpop.f32.mrf.mxu0
        %v3681 = vadd.f32 0.0, %v3680
        %v3682 = vpop.f32.mrf.mxu0
        %v3683 = vpop.f32.mrf.mxu0
        %v3684 = vadd.f32 0.0, %v3683
        %v3685 = vpop.f32.mrf.mxu0
        %3686 = vmatprep.mubr.bf16.mxu0 %v2944
        %3687 = vmatmul.mubr.bf16.gmra.mxu0 %v2943
        %v3688 = vpop.f32.mrf.mxu0
        %v3689 = vadd.f32 0.0, %v3688
        %v3690 = vpop.f32.mrf.mxu0
        %v3691 = vpop.f32.mrf.mxu0
        %v3692 = vadd.f32 0.0, %v3691
        %v3693 = vpop.f32.mrf.mxu0
        %3694 = vmatprep.mubr.bf16.mxu0 %v2953
        %3695 = vmatmul.mubr.bf16.gmra.mxu0 %v2952
        %v3696 = vpop.f32.mrf.mxu0
        %v3697 = vadd.f32 0.0, %v3696
        %v3698 = vpop.f32.mrf.mxu0
        %v3699 = vpop.f32.mrf.mxu0
        %v3700 = vadd.f32 0.0, %v3699
        %v3701 = vpop.f32.mrf.mxu0
        %3702 = vmatprep.mubr.bf16.mxu0 %v2962
        %3703 = vmatmul.mubr.bf16.gmra.mxu0 %v2961
        %v3704 = vpop.f32.mrf.mxu0
        %v3705 = vadd.f32 0.0, %v3704
        %v3706 = vpop.f32.mrf.mxu0
        %v3707 = vpop.f32.mrf.mxu0
        %v3708 = vadd.f32 0.0, %v3707
        %v3709 = vpop.f32.mrf.mxu0
        %3710 = vmatprep.mubr.bf16.mxu0 %v2971
        %3711 = vmatmul.mubr.bf16.gmra.mxu0 %v2970
        %v3712 = vpop.f32.mrf.mxu0
        %v3713 = vadd.f32 0.0, %v3712
        %v3714 = vpop.f32.mrf.mxu0
        %v3715 = vpop.f32.mrf.mxu0
        %v3716 = vadd.f32 0.0, %v3715
        %v3717 = vpop.f32.mrf.mxu0
        %3718 = vmatprep.mubr.bf16.mxu0 %v2980
        %3719 = vmatmul.mubr.bf16.gmra.mxu0 %v2979
        %v3720 = vpop.f32.mrf.mxu0
        %v3721 = vadd.f32 0.0, %v3720
        %v3722 = vpop.f32.mrf.mxu0
        %v3723 = vpop.f32.mrf.mxu0
        %v3724 = vadd.f32 0.0, %v3723
        %v3725 = vpop.f32.mrf.mxu0
        %3726 = vmatprep.mubr.bf16.mxu0 %v2989
        %3727 = vmatmul.mubr.bf16.gmra.mxu0 %v2988
        %v3728 = vpop.f32.mrf.mxu0
        %v3729 = vadd.f32 0.0, %v3728
        %v3730 = vpop.f32.mrf.mxu0
        %v3731 = vpop.f32.mrf.mxu0
        %v3732 = vadd.f32 0.0, %v3731
        %v3733 = vpop.f32.mrf.mxu0
        %3734 = vmatprep.mubr.bf16.mxu0 %v2998
        %3735 = vmatmul.mubr.bf16.gmra.mxu0 %v2997
        %v3736 = vpop.f32.mrf.mxu0
        %v3737 = vadd.f32 0.0, %v3736
        %v3738 = vpop.f32.mrf.mxu0
        %v3739 = vpop.f32.mrf.mxu0
        %v3740 = vadd.f32 0.0, %v3739
        %v3741 = vpop.f32.mrf.mxu0
        %3742 = vdwg.mxu0
        %3743 = vmatprep.subr.bf16.mxu0 0
        %3744 = vmatpush1.bf16.msra.mxu0 %v3461
        %3745 = vmatprep.subr.bf16.mxu0 0
        %3746 = vmatpush1.bf16.msra.mxu0 %v3460
        %3747 = vmatprep.subr.bf16.mxu0 0
        %3748 = vmatpush1.bf16.msra.mxu0 %v3459
        %3749 = vmatprep.subr.bf16.mxu0 0
        %3750 = vmatpush1.bf16.msra.mxu0 %v3458
        %3751 = vmatprep.subr.bf16.mxu0 0
        %3752 = vmatpush1.bf16.msra.mxu0 %v3457
        %3753 = vmatprep.subr.bf16.mxu0 0
        %3754 = vmatpush1.bf16.msra.mxu0 %v3456
        %3755 = vmatprep.subr.bf16.mxu0 0
        %3756 = vmatpush1.bf16.msra.mxu0 %v3455
        %3757 = vmatprep.subr.bf16.mxu0 0
        %3758 = vmatpush1.bf16.msra.mxu0 %v3454
        %3759 = vmatprep.subr.bf16.mxu0 0
        %3760 = vmatpush2.bf16.msra.mxu0 %v3469
        %3761 = vmatprep.subr.bf16.mxu0 0
        %3762 = vmatpush2.bf16.msra.mxu0 %v3468
        %3763 = vmatprep.subr.bf16.mxu0 0
        %3764 = vmatpush2.bf16.msra.mxu0 %v3467
        %3765 = vmatprep.subr.bf16.mxu0 0
        %3766 = vmatpush2.bf16.msra.mxu0 %v3466
        %3767 = vmatprep.subr.bf16.mxu0 0
        %3768 = vmatpush2.bf16.msra.mxu0 %v3465
        %3769 = vmatprep.subr.bf16.mxu0 0
        %3770 = vmatpush2.bf16.msra.mxu0 %v3464
        %3771 = vmatprep.subr.bf16.mxu0 0
        %3772 = vmatpush2.bf16.msra.mxu0 %v3463
        %3773 = vmatprep.subr.bf16.mxu0 0
        %3774 = vmatpush2.bf16.msra.mxu0 %v3462
        %3775 = vmatprep.mubr.bf16.mxu0 %v2865
        %3776 = vmatmul.mubr.bf16.gmra.mxu0 %v2864
        %v3777 = vpop.f32.mrf.mxu0
        %v3778 = vadd.f32 %v3617, %v3777
        %v3779 = vpop.f32.mrf.mxu0
        %v3780 = vpop.f32.mrf.mxu0
        %v3781 = vadd.f32 %v3620, %v3780
        %v3782 = vpop.f32.mrf.mxu0
        %3783 = vmatprep.mubr.bf16.mxu0 %v2874
        %3784 = vmatmul.mubr.bf16.gmra.mxu0 %v2873
        %v3785 = vpop.f32.mrf.mxu0
        %v3786 = vadd.f32 %v3625, %v3785
        %v3787 = vpop.f32.mrf.mxu0
        %v3788 = vpop.f32.mrf.mxu0
        %v3789 = vadd.f32 %v3628, %v3788
        %v3790 = vpop.f32.mrf.mxu0
        %3791 = vmatprep.mubr.bf16.mxu0 %v2883
        %3792 = vmatmul.mubr.bf16.gmra.mxu0 %v2882
        %v3793 = vpop.f32.mrf.mxu0
        %v3794 = vadd.f32 %v3633, %v3793
        %v3795 = vpop.f32.mrf.mxu0
        %v3796 = vpop.f32.mrf.mxu0
        %v3797 = vadd.f32 %v3636, %v3796
        %v3798 = vpop.f32.mrf.mxu0
        %3799 = vmatprep.mubr.bf16.mxu0 %v2892
        %3800 = vmatmul.mubr.bf16.gmra.mxu0 %v2891
        %v3801 = vpop.f32.mrf.mxu0
        %v3802 = vadd.f32 %v3641, %v3801
        %v3803 = vpop.f32.mrf.mxu0
        %v3804 = vpop.f32.mrf.mxu0
        %v3805 = vadd.f32 %v3644, %v3804
        %v3806 = vpop.f32.mrf.mxu0
        %3807 = vmatprep.mubr.bf16.mxu0 %v2901
        %3808 = vmatmul.mubr.bf16.gmra.mxu0 %v2900
        %v3809 = vpop.f32.mrf.mxu0
        %v3810 = vadd.f32 %v3649, %v3809
        %v3811 = vpop.f32.mrf.mxu0
        %v3812 = vpop.f32.mrf.mxu0
        %v3813 = vadd.f32 %v3652, %v3812
        %v3814 = vpop.f32.mrf.mxu0
        %3815 = vmatprep.mubr.bf16.mxu0 %v2910
        %3816 = vmatmul.mubr.bf16.gmra.mxu0 %v2909
        %v3817 = vpop.f32.mrf.mxu0
        %v3818 = vadd.f32 %v3657, %v3817
        %v3819 = vpop.f32.mrf.mxu0
        %v3820 = vpop.f32.mrf.mxu0
        %v3821 = vadd.f32 %v3660, %v3820
        %v3822 = vpop.f32.mrf.mxu0
        %3823 = vmatprep.mubr.bf16.mxu0 %v2919
        %3824 = vmatmul.mubr.bf16.gmra.mxu0 %v2918
        %v3825 = vpop.f32.mrf.mxu0
        %v3826 = vadd.f32 %v3665, %v3825
        %v3827 = vpop.f32.mrf.mxu0
        %v3828 = vpop.f32.mrf.mxu0
        %v3829 = vadd.f32 %v3668, %v3828
        %v3830 = vpop.f32.mrf.mxu0
        %3831 = vmatprep.mubr.bf16.mxu0 %v2928
        %3832 = vmatmul.mubr.bf16.gmra.mxu0 %v2927
        %v3833 = vpop.f32.mrf.mxu0
        %v3834 = vadd.f32 %v3673, %v3833
        %v3835 = vpop.f32.mrf.mxu0
        %v3836 = vpop.f32.mrf.mxu0
        %v3837 = vadd.f32 %v3676, %v3836
        %v3838 = vpop.f32.mrf.mxu0
        %3839 = vmatprep.mubr.bf16.mxu0 %v2937
        %3840 = vmatmul.mubr.bf16.gmra.mxu0 %v2936
        %v3841 = vpop.f32.mrf.mxu0
        %v3842 = vadd.f32 %v3681, %v3841
        %v3843 = vpop.f32.mrf.mxu0
        %v3844 = vpop.f32.mrf.mxu0
        %v3845 = vadd.f32 %v3684, %v3844
        %v3846 = vpop.f32.mrf.mxu0
        %3847 = vmatprep.mubr.bf16.mxu0 %v2946
        %3848 = vmatmul.mubr.bf16.gmra.mxu0 %v2945
        %v3849 = vpop.f32.mrf.mxu0
        %v3850 = vadd.f32 %v3689, %v3849
        %v3851 = vpop.f32.mrf.mxu0
        %v3852 = vpop.f32.mrf.mxu0
        %v3853 = vadd.f32 %v3692, %v3852
        %v3854 = vpop.f32.mrf.mxu0
        %3855 = vmatprep.mubr.bf16.mxu0 %v2955
        %3856 = vmatmul.mubr.bf16.gmra.mxu0 %v2954
        %v3857 = vpop.f32.mrf.mxu0
        %v3858 = vadd.f32 %v3697, %v3857
        %v3859 = vpop.f32.mrf.mxu0
        %v3860 = vpop.f32.mrf.mxu0
        %v3861 = vadd.f32 %v3700, %v3860
        %v3862 = vpop.f32.mrf.mxu0
        %3863 = vmatprep.mubr.bf16.mxu0 %v2964
        %3864 = vmatmul.mubr.bf16.gmra.mxu0 %v2963
        %v3865 = vpop.f32.mrf.mxu0
        %v3866 = vadd.f32 %v3705, %v3865
        %v3867 = vpop.f32.mrf.mxu0
        %v3868 = vpop.f32.mrf.mxu0
        %v3869 = vadd.f32 %v3708, %v3868
        %v3870 = vpop.f32.mrf.mxu0
        %3871 = vmatprep.mubr.bf16.mxu0 %v2973
        %3872 = vmatmul.mubr.bf16.gmra.mxu0 %v2972
        %v3873 = vpop.f32.mrf.mxu0
        %v3874 = vadd.f32 %v3713, %v3873
        %v3875 = vpop.f32.mrf.mxu0
        %v3876 = vpop.f32.mrf.mxu0
        %v3877 = vadd.f32 %v3716, %v3876
        %v3878 = vpop.f32.mrf.mxu0
        %3879 = vmatprep.mubr.bf16.mxu0 %v2982
        %3880 = vmatmul.mubr.bf16.gmra.mxu0 %v2981
        %v3881 = vpop.f32.mrf.mxu0
        %v3882 = vadd.f32 %v3721, %v3881
        %v3883 = vpop.f32.mrf.mxu0
        %v3884 = vpop.f32.mrf.mxu0
        %v3885 = vadd.f32 %v3724, %v3884
        %v3886 = vpop.f32.mrf.mxu0
        %3887 = vmatprep.mubr.bf16.mxu0 %v2991
        %3888 = vmatmul.mubr.bf16.gmra.mxu0 %v2990
        %v3889 = vpop.f32.mrf.mxu0
        %v3890 = vadd.f32 %v3729, %v3889
        %v3891 = vpop.f32.mrf.mxu0
        %v3892 = vpop.f32.mrf.mxu0
        %v3893 = vadd.f32 %v3732, %v3892
        %v3894 = vpop.f32.mrf.mxu0
        %3895 = vmatprep.mubr.bf16.mxu0 %v3000
        %3896 = vmatmul.mubr.bf16.gmra.mxu0 %v2999
        %v3897 = vpop.f32.mrf.mxu0
        %v3898 = vadd.f32 %v3737, %v3897
        %v3899 = vpop.f32.mrf.mxu0
        %v3900 = vpop.f32.mrf.mxu0
        %v3901 = vadd.f32 %v3740, %v3900
        %v3902 = vpop.f32.mrf.mxu0
        %3903 = vdwg.mxu0
        %3904 = vmatprep.subr.bf16.mxu0 0
        %3905 = vmatpush1.bf16.msra.mxu0 %v3477
        %3906 = vmatprep.subr.bf16.mxu0 0
        %3907 = vmatpush1.bf16.msra.mxu0 %v3476
        %3908 = vmatprep.subr.bf16.mxu0 0
        %3909 = vmatpush1.bf16.msra.mxu0 %v3475
        %3910 = vmatprep.subr.bf16.mxu0 0
        %3911 = vmatpush1.bf16.msra.mxu0 %v3474
        %3912 = vmatprep.subr.bf16.mxu0 0
        %3913 = vmatpush1.bf16.msra.mxu0 %v3473
        %3914 = vmatprep.subr.bf16.mxu0 0
        %3915 = vmatpush1.bf16.msra.mxu0 %v3472
        %3916 = vmatprep.subr.bf16.mxu0 0
        %3917 = vmatpush1.bf16.msra.mxu0 %v3471
        %3918 = vmatprep.subr.bf16.mxu0 0
        %3919 = vmatpush1.bf16.msra.mxu0 %v3470
        %3920 = vmatprep.subr.bf16.mxu0 0
        %3921 = vmatpush2.bf16.msra.mxu0 %v3485
        %3922 = vmatprep.subr.bf16.mxu0 0
        %3923 = vmatpush2.bf16.msra.mxu0 %v3484
        %3924 = vmatprep.subr.bf16.mxu0 0
        %3925 = vmatpush2.bf16.msra.mxu0 %v3483
        %3926 = vmatprep.subr.bf16.mxu0 0
        %3927 = vmatpush2.bf16.msra.mxu0 %v3482
        %3928 = vmatprep.subr.bf16.mxu0 0
        %3929 = vmatpush2.bf16.msra.mxu0 %v3481
        %3930 = vmatprep.subr.bf16.mxu0 0
        %3931 = vmatpush2.bf16.msra.mxu0 %v3480
        %3932 = vmatprep.subr.bf16.mxu0 0
        %3933 = vmatpush2.bf16.msra.mxu0 %v3479
        %3934 = vmatprep.subr.bf16.mxu0 0
        %3935 = vmatpush2.bf16.msra.mxu0 %v3478
        %3936 = vmatprep.mubr.bf16.mxu0 %v2867
        %3937 = vmatmul.mubr.bf16.gmra.mxu0 %v2866
        %v3938 = vpop.f32.mrf.mxu0
        %v3939 = vadd.f32 %v3778, %v3938
        %v3940 = vpop.f32.mrf.mxu0
        %v3941 = vpop.f32.mrf.mxu0
        %v3942 = vadd.f32 %v3781, %v3941
        %v3943 = vpop.f32.mrf.mxu0
        %3944 = vmatprep.mubr.bf16.mxu0 %v2876
        %3945 = vmatmul.mubr.bf16.gmra.mxu0 %v2875
        %v3946 = vpop.f32.mrf.mxu0
        %v3947 = vadd.f32 %v3786, %v3946
        %v3948 = vpop.f32.mrf.mxu0
        %v3949 = vpop.f32.mrf.mxu0
        %v3950 = vadd.f32 %v3789, %v3949
        %v3951 = vpop.f32.mrf.mxu0
        %3952 = vmatprep.mubr.bf16.mxu0 %v2885
        %3953 = vmatmul.mubr.bf16.gmra.mxu0 %v2884
        %v3954 = vpop.f32.mrf.mxu0
        %v3955 = vadd.f32 %v3794, %v3954
        %v3956 = vpop.f32.mrf.mxu0
        %v3957 = vpop.f32.mrf.mxu0
        %v3958 = vadd.f32 %v3797, %v3957
        %v3959 = vpop.f32.mrf.mxu0
        %3960 = vmatprep.mubr.bf16.mxu0 %v2894
        %3961 = vmatmul.mubr.bf16.gmra.mxu0 %v2893
        %v3962 = vpop.f32.mrf.mxu0
        %v3963 = vadd.f32 %v3802, %v3962
        %v3964 = vpop.f32.mrf.mxu0
        %v3965 = vpop.f32.mrf.mxu0
        %v3966 = vadd.f32 %v3805, %v3965
        %v3967 = vpop.f32.mrf.mxu0
        %3968 = vmatprep.mubr.bf16.mxu0 %v2903
        %3969 = vmatmul.mubr.bf16.gmra.mxu0 %v2902
        %v3970 = vpop.f32.mrf.mxu0
        %v3971 = vadd.f32 %v3810, %v3970
        %v3972 = vpop.f32.mrf.mxu0
        %v3973 = vpop.f32.mrf.mxu0
        %v3974 = vadd.f32 %v3813, %v3973
        %v3975 = vpop.f32.mrf.mxu0
        %3976 = vmatprep.mubr.bf16.mxu0 %v2912
        %3977 = vmatmul.mubr.bf16.gmra.mxu0 %v2911
        %v3978 = vpop.f32.mrf.mxu0
        %v3979 = vadd.f32 %v3818, %v3978
        %v3980 = vpop.f32.mrf.mxu0
        %v3981 = vpop.f32.mrf.mxu0
        %v3982 = vadd.f32 %v3821, %v3981
        %v3983 = vpop.f32.mrf.mxu0
        %3984 = vmatprep.mubr.bf16.mxu0 %v2921
        %3985 = vmatmul.mubr.bf16.gmra.mxu0 %v2920
        %v3986 = vpop.f32.mrf.mxu0
        %v3987 = vadd.f32 %v3826, %v3986
        %v3988 = vpop.f32.mrf.mxu0
        %v3989 = vpop.f32.mrf.mxu0
        %v3990 = vadd.f32 %v3829, %v3989
        %v3991 = vpop.f32.mrf.mxu0
        %3992 = vmatprep.mubr.bf16.mxu0 %v2930
        %3993 = vmatmul.mubr.bf16.gmra.mxu0 %v2929
        %v3994 = vpop.f32.mrf.mxu0
        %v3995 = vadd.f32 %v3834, %v3994
        %v3996 = vpop.f32.mrf.mxu0
        %v3997 = vpop.f32.mrf.mxu0
        %v3998 = vadd.f32 %v3837, %v3997
        %v3999 = vpop.f32.mrf.mxu0
        %4000 = vmatprep.mubr.bf16.mxu0 %v2939
        %4001 = vmatmul.mubr.bf16.gmra.mxu0 %v2938
        %v4002 = vpop.f32.mrf.mxu0
        %v4003 = vadd.f32 %v3842, %v4002
        %v4004 = vpop.f32.mrf.mxu0
        %v4005 = vpop.f32.mrf.mxu0
        %v4006 = vadd.f32 %v3845, %v4005
        %v4007 = vpop.f32.mrf.mxu0
        %4008 = vmatprep.mubr.bf16.mxu0 %v2948
        %4009 = vmatmul.mubr.bf16.gmra.mxu0 %v2947
        %v4010 = vpop.f32.mrf.mxu0
        %v4011 = vadd.f32 %v3850, %v4010
        %v4012 = vpop.f32.mrf.mxu0
        %v4013 = vpop.f32.mrf.mxu0
        %v4014 = vadd.f32 %v3853, %v4013
        %v4015 = vpop.f32.mrf.mxu0
        %4016 = vmatprep.mubr.bf16.mxu0 %v2957
        %4017 = vmatmul.mubr.bf16.gmra.mxu0 %v2956
        %v4018 = vpop.f32.mrf.mxu0
        %v4019 = vadd.f32 %v3858, %v4018
        %v4020 = vpop.f32.mrf.mxu0
        %v4021 = vpop.f32.mrf.mxu0
        %v4022 = vadd.f32 %v3861, %v4021
        %v4023 = vpop.f32.mrf.mxu0
        %4024 = vmatprep.mubr.bf16.mxu0 %v2966
        %4025 = vmatmul.mubr.bf16.gmra.mxu0 %v2965
        %v4026 = vpop.f32.mrf.mxu0
        %v4027 = vadd.f32 %v3866, %v4026
        %v4028 = vpop.f32.mrf.mxu0
        %v4029 = vpop.f32.mrf.mxu0
        %v4030 = vadd.f32 %v3869, %v4029
        %v4031 = vpop.f32.mrf.mxu0
        %4032 = vmatprep.mubr.bf16.mxu0 %v2975
        %4033 = vmatmul.mubr.bf16.gmra.mxu0 %v2974
        %v4034 = vpop.f32.mrf.mxu0
        %v4035 = vadd.f32 %v3874, %v4034
        %v4036 = vpop.f32.mrf.mxu0
        %v4037 = vpop.f32.mrf.mxu0
        %v4038 = vadd.f32 %v3877, %v4037
        %v4039 = vpop.f32.mrf.mxu0
        %4040 = vmatprep.mubr.bf16.mxu0 %v2984
        %4041 = vmatmul.mubr.bf16.gmra.mxu0 %v2983
        %v4042 = vpop.f32.mrf.mxu0
        %v4043 = vadd.f32 %v3882, %v4042
        %v4044 = vpop.f32.mrf.mxu0
        %v4045 = vpop.f32.mrf.mxu0
        %v4046 = vadd.f32 %v3885, %v4045
        %v4047 = vpop.f32.mrf.mxu0
        %4048 = vmatprep.mubr.bf16.mxu0 %v2993
        %4049 = vmatmul.mubr.bf16.gmra.mxu0 %v2992
        %v4050 = vpop.f32.mrf.mxu0
        %v4051 = vadd.f32 %v3890, %v4050
        %v4052 = vpop.f32.mrf.mxu0
        %v4053 = vpop.f32.mrf.mxu0
        %v4054 = vadd.f32 %v3893, %v4053
        %v4055 = vpop.f32.mrf.mxu0
        %4056 = vmatprep.mubr.bf16.mxu0 %v3002
        %4057 = vmatmul.mubr.bf16.gmra.mxu0 %v3001
        %v4058 = vpop.f32.mrf.mxu0
        %v4059 = vadd.f32 %v3898, %v4058
        %v4060 = vpop.f32.mrf.mxu0
        %v4061 = vpop.f32.mrf.mxu0
        %v4062 = vadd.f32 %v3901, %v4061
        %v4063 = vpop.f32.mrf.mxu0
        %4064 = vdwg.mxu0
        %4065 = vmatprep.subr.bf16.mxu0 0
        %4066 = vmatpush1.bf16.msra.mxu0 %v3493
        %4067 = vmatprep.subr.bf16.mxu0 0
        %4068 = vmatpush1.bf16.msra.mxu0 %v3492
        %4069 = vmatprep.subr.bf16.mxu0 0
        %4070 = vmatpush1.bf16.msra.mxu0 %v3491
        %4071 = vmatprep.subr.bf16.mxu0 0
        %4072 = vmatpush1.bf16.msra.mxu0 %v3490
        %4073 = vmatprep.subr.bf16.mxu0 0
        %4074 = vmatpush1.bf16.msra.mxu0 %v3489
        %4075 = vmatprep.subr.bf16.mxu0 0
        %4076 = vmatpush1.bf16.msra.mxu0 %v3488
        %4077 = vmatprep.subr.bf16.mxu0 0
        %4078 = vmatpush1.bf16.msra.mxu0 %v3487
        %4079 = vmatprep.subr.bf16.mxu0 0
        %4080 = vmatpush1.bf16.msra.mxu0 %v3486
        %4081 = vmatprep.subr.bf16.mxu0 0
        %4082 = vmatpush2.bf16.msra.mxu0 %v3501
        %4083 = vmatprep.subr.bf16.mxu0 0
        %4084 = vmatpush2.bf16.msra.mxu0 %v3500
        %4085 = vmatprep.subr.bf16.mxu0 0
        %4086 = vmatpush2.bf16.msra.mxu0 %v3499
        %4087 = vmatprep.subr.bf16.mxu0 0
        %4088 = vmatpush2.bf16.msra.mxu0 %v3498
        %4089 = vmatprep.subr.bf16.mxu0 0
        %4090 = vmatpush2.bf16.msra.mxu0 %v3497
        %4091 = vmatprep.subr.bf16.mxu0 0
        %4092 = vmatpush2.bf16.msra.mxu0 %v3496
        %4093 = vmatprep.subr.bf16.mxu0 0
        %4094 = vmatpush2.bf16.msra.mxu0 %v3495
        %4095 = vmatprep.subr.bf16.mxu0 0
        %4096 = vmatpush2.bf16.msra.mxu0 %v3494
        %4097 = vmatprep.mubr.bf16.mxu0 %v2869
        %4098 = vmatmul.mubr.bf16.gmra.mxu0 %v2868
        %v4099 = vpop.f32.mrf.mxu0
        %v4100 = vadd.f32 %v3939, %v4099
        %v4101 = vpop.f32.mrf.mxu0
        %v4102 = vpop.f32.mrf.mxu0
        %v4103 = vadd.f32 %v3942, %v4102
        %v4104 = vpop.f32.mrf.mxu0
        %4105 = vmatprep.mubr.bf16.mxu0 %v2878
        %4106 = vmatmul.mubr.bf16.gmra.mxu0 %v2877
        %v4107 = vpop.f32.mrf.mxu0
        %v4108 = vadd.f32 %v3947, %v4107
        %v4109 = vpop.f32.mrf.mxu0
        %v4110 = vpop.f32.mrf.mxu0
        %v4111 = vadd.f32 %v3950, %v4110
        %v4112 = vpop.f32.mrf.mxu0
        %4113 = vmatprep.mubr.bf16.mxu0 %v2887
        %4114 = vmatmul.mubr.bf16.gmra.mxu0 %v2886
        %v4115 = vpop.f32.mrf.mxu0
        %v4116 = vadd.f32 %v3955, %v4115
        %v4117 = vpop.f32.mrf.mxu0
        %v4118 = vpop.f32.mrf.mxu0
        %v4119 = vadd.f32 %v3958, %v4118
        %v4120 = vpop.f32.mrf.mxu0
        %4121 = vmatprep.mubr.bf16.mxu0 %v2896
        %4122 = vmatmul.mubr.bf16.gmra.mxu0 %v2895
        %v4123 = vpop.f32.mrf.mxu0
        %v4124 = vadd.f32 %v3963, %v4123
        %v4125 = vpop.f32.mrf.mxu0
        %v4126 = vpop.f32.mrf.mxu0
        %v4127 = vadd.f32 %v3966, %v4126
        %v4128 = vpop.f32.mrf.mxu0
        %4129 = vmatprep.mubr.bf16.mxu0 %v2905
        %4130 = vmatmul.mubr.bf16.gmra.mxu0 %v2904
        %v4131 = vpop.f32.mrf.mxu0
        %v4132 = vadd.f32 %v3971, %v4131
        %v4133 = vpop.f32.mrf.mxu0
        %v4134 = vpop.f32.mrf.mxu0
        %v4135 = vadd.f32 %v3974, %v4134
        %v4136 = vpop.f32.mrf.mxu0
        %4137 = vmatprep.mubr.bf16.mxu0 %v2914
        %4138 = vmatmul.mubr.bf16.gmra.mxu0 %v2913
        %v4139 = vpop.f32.mrf.mxu0
        %v4140 = vadd.f32 %v3979, %v4139
        %v4141 = vpop.f32.mrf.mxu0
        %v4142 = vpop.f32.mrf.mxu0
        %v4143 = vadd.f32 %v3982, %v4142
        %v4144 = vpop.f32.mrf.mxu0
        %4145 = vmatprep.mubr.bf16.mxu0 %v2923
        %4146 = vmatmul.mubr.bf16.gmra.mxu0 %v2922
        %v4147 = vpop.f32.mrf.mxu0
        %v4148 = vadd.f32 %v3987, %v4147
        %v4149 = vpop.f32.mrf.mxu0
        %v4150 = vpop.f32.mrf.mxu0
        %v4151 = vadd.f32 %v3990, %v4150
        %v4152 = vpop.f32.mrf.mxu0
        %4153 = vmatprep.mubr.bf16.mxu0 %v2932
        %4154 = vmatmul.mubr.bf16.gmra.mxu0 %v2931
        %v4155 = vpop.f32.mrf.mxu0
        %v4156 = vadd.f32 %v3995, %v4155
        %v4157 = vpop.f32.mrf.mxu0
        %v4158 = vpop.f32.mrf.mxu0
        %v4159 = vadd.f32 %v3998, %v4158
        %v4160 = vpop.f32.mrf.mxu0
        %4161 = vmatprep.mubr.bf16.mxu0 %v2941
        %4162 = vmatmul.mubr.bf16.gmra.mxu0 %v2940
        %v4163 = vpop.f32.mrf.mxu0
        %v4164 = vadd.f32 %v4003, %v4163
        %v4165 = vpop.f32.mrf.mxu0
        %v4166 = vpop.f32.mrf.mxu0
        %v4167 = vadd.f32 %v4006, %v4166
        %v4168 = vpop.f32.mrf.mxu0
        %4169 = vmatprep.mubr.bf16.mxu0 %v2950
        %4170 = vmatmul.mubr.bf16.gmra.mxu0 %v2949
        %v4171 = vpop.f32.mrf.mxu0
        %v4172 = vadd.f32 %v4011, %v4171
        %v4173 = vpop.f32.mrf.mxu0
        %v4174 = vpop.f32.mrf.mxu0
        %v4175 = vadd.f32 %v4014, %v4174
        %v4176 = vpop.f32.mrf.mxu0
        %4177 = vmatprep.mubr.bf16.mxu0 %v2959
        %4178 = vmatmul.mubr.bf16.gmra.mxu0 %v2958
        %v4179 = vpop.f32.mrf.mxu0
        %v4180 = vadd.f32 %v4019, %v4179
        %v4181 = vpop.f32.mrf.mxu0
        %v4182 = vpop.f32.mrf.mxu0
        %v4183 = vadd.f32 %v4022, %v4182
        %v4184 = vpop.f32.mrf.mxu0
        %4185 = vmatprep.mubr.bf16.mxu0 %v2968
        %4186 = vmatmul.mubr.bf16.gmra.mxu0 %v2967
        %v4187 = vpop.f32.mrf.mxu0
        %v4188 = vadd.f32 %v4027, %v4187
        %v4189 = vpop.f32.mrf.mxu0
        %v4190 = vpop.f32.mrf.mxu0
        %v4191 = vadd.f32 %v4030, %v4190
        %v4192 = vpop.f32.mrf.mxu0
        %4193 = vmatprep.mubr.bf16.mxu0 %v2977
        %4194 = vmatmul.mubr.bf16.gmra.mxu0 %v2976
        %v4195 = vpop.f32.mrf.mxu0
        %v4196 = vadd.f32 %v4035, %v4195
        %v4197 = vpop.f32.mrf.mxu0
        %v4198 = vpop.f32.mrf.mxu0
        %v4199 = vadd.f32 %v4038, %v4198
        %v4200 = vpop.f32.mrf.mxu0
        %4201 = vmatprep.mubr.bf16.mxu0 %v2986
        %4202 = vmatmul.mubr.bf16.gmra.mxu0 %v2985
        %v4203 = vpop.f32.mrf.mxu0
        %v4204 = vadd.f32 %v4043, %v4203
        %v4205 = vpop.f32.mrf.mxu0
        %v4206 = vpop.f32.mrf.mxu0
        %v4207 = vadd.f32 %v4046, %v4206
        %v4208 = vpop.f32.mrf.mxu0
        %4209 = vmatprep.mubr.bf16.mxu0 %v2995
        %4210 = vmatmul.mubr.bf16.gmra.mxu0 %v2994
        %v4211 = vpop.f32.mrf.mxu0
        %v4212 = vadd.f32 %v4051, %v4211
        %v4213 = vpop.f32.mrf.mxu0
        %v4214 = vpop.f32.mrf.mxu0
        %v4215 = vadd.f32 %v4054, %v4214
        %v4216 = vpop.f32.mrf.mxu0
        %4217 = vmatprep.mubr.bf16.mxu0 %v3004
        %4218 = vmatmul.mubr.bf16.gmra.mxu0 %v3003
        %v4219 = vpop.f32.mrf.mxu0
        %v4220 = vadd.f32 %v4059, %v4219
        %v4221 = vpop.f32.mrf.mxu0
        %v4222 = vpop.f32.mrf.mxu0
        %v4223 = vadd.f32 %v4062, %v4222
        %v4224 = vpop.f32.mrf.mxu0
        %4225 = vdwg.mxu0
        %4226 = vmatprep.subr.bf16.mxu0 0
        %4227 = vmatpush1.bf16.msra.mxu0 %v3509
        %4228 = vmatprep.subr.bf16.mxu0 0
        %4229 = vmatpush1.bf16.msra.mxu0 %v3508
        %4230 = vmatprep.subr.bf16.mxu0 0
        %4231 = vmatpush1.bf16.msra.mxu0 %v3507
        %4232 = vmatprep.subr.bf16.mxu0 0
        %4233 = vmatpush1.bf16.msra.mxu0 %v3506
        %4234 = vmatprep.subr.bf16.mxu0 0
        %4235 = vmatpush1.bf16.msra.mxu0 %v3505
        %4236 = vmatprep.subr.bf16.mxu0 0
        %4237 = vmatpush1.bf16.msra.mxu0 %v3504
        %4238 = vmatprep.subr.bf16.mxu0 0
        %4239 = vmatpush1.bf16.msra.mxu0 %v3503
        %4240 = vmatprep.subr.bf16.mxu0 0
        %4241 = vmatpush1.bf16.msra.mxu0 %v3502
        %4242 = vmatprep.subr.bf16.mxu0 0
        %4243 = vmatpush2.bf16.msra.mxu0 0
        %4244 = vmatprep.subr.bf16.mxu0 0
        %4245 = vmatpush2.bf16.msra.mxu0 0
        %4246 = vmatprep.subr.bf16.mxu0 0
        %4247 = vmatpush2.bf16.msra.mxu0 0
        %4248 = vmatprep.subr.bf16.mxu0 0
        %4249 = vmatpush2.bf16.msra.mxu0 0
        %4250 = vmatprep.subr.bf16.mxu0 0
        %4251 = vmatpush2.bf16.msra.mxu0 0
        %4252 = vmatprep.subr.bf16.mxu0 0
        %4253 = vmatpush2.bf16.msra.mxu0 0
        %4254 = vmatprep.subr.bf16.mxu0 0
        %4255 = vmatpush2.bf16.msra.mxu0 0
        %4256 = vmatprep.subr.bf16.mxu0 0
        %4257 = vmatpush2.bf16.msra.mxu0 0
        %4258 = vmatprep.mubr.bf16.mxu0 0
        %4259 = vmatmul.mubr.bf16.gmra.mxu0 %v2870
        %v4260 = vpop.f32.mrf.mxu0
        %v4261 = vadd.f32 %v4100, %v4260
        %v4262 = vpop.f32.mrf.mxu0
        %v4263 = vpop.f32.mrf.mxu0
        %v4264 = vadd.f32 %v4103, %v4263
        %v4265 = vpop.f32.mrf.mxu0
        %4266 = vmatprep.mubr.bf16.mxu0 0
        %4267 = vmatmul.mubr.bf16.gmra.mxu0 %v2879
        %v4268 = vpop.f32.mrf.mxu0
        %v4269 = vadd.f32 %v4108, %v4268
        %v4270 = vpop.f32.mrf.mxu0
        %v4271 = vpop.f32.mrf.mxu0
        %v4272 = vadd.f32 %v4111, %v4271
        %v4273 = vpop.f32.mrf.mxu0
        %4274 = vmatprep.mubr.bf16.mxu0 0
        %4275 = vmatmul.mubr.bf16.gmra.mxu0 %v2888
        %v4276 = vpop.f32.mrf.mxu0
        %v4277 = vadd.f32 %v4116, %v4276
        %v4278 = vpop.f32.mrf.mxu0
        %v4279 = vpop.f32.mrf.mxu0
        %v4280 = vadd.f32 %v4119, %v4279
        %v4281 = vpop.f32.mrf.mxu0
        %4282 = vmatprep.mubr.bf16.mxu0 0
        %4283 = vmatmul.mubr.bf16.gmra.mxu0 %v2897
        %v4284 = vpop.f32.mrf.mxu0
        %v4285 = vadd.f32 %v4124, %v4284
        %v4286 = vpop.f32.mrf.mxu0
        %v4287 = vpop.f32.mrf.mxu0
        %v4288 = vadd.f32 %v4127, %v4287
        %v4289 = vpop.f32.mrf.mxu0
        %4290 = vmatprep.mubr.bf16.mxu0 0
        %4291 = vmatmul.mubr.bf16.gmra.mxu0 %v2906
        %v4292 = vpop.f32.mrf.mxu0
        %v4293 = vadd.f32 %v4132, %v4292
        %v4294 = vpop.f32.mrf.mxu0
        %v4295 = vpop.f32.mrf.mxu0
        %v4296 = vadd.f32 %v4135, %v4295
        %v4297 = vpop.f32.mrf.mxu0
        %4298 = vmatprep.mubr.bf16.mxu0 0
        %4299 = vmatmul.mubr.bf16.gmra.mxu0 %v2915
        %v4300 = vpop.f32.mrf.mxu0
        %v4301 = vadd.f32 %v4140, %v4300
        %v4302 = vpop.f32.mrf.mxu0
        %v4303 = vpop.f32.mrf.mxu0
        %v4304 = vadd.f32 %v4143, %v4303
        %v4305 = vpop.f32.mrf.mxu0
        %4306 = vmatprep.mubr.bf16.mxu0 0
        %4307 = vmatmul.mubr.bf16.gmra.mxu0 %v2924
        %v4308 = vpop.f32.mrf.mxu0
        %v4309 = vadd.f32 %v4148, %v4308
        %v4310 = vpop.f32.mrf.mxu0
        %v4311 = vpop.f32.mrf.mxu0
        %v4312 = vadd.f32 %v4151, %v4311
        %v4313 = vpop.f32.mrf.mxu0
        %4314 = vmatprep.mubr.bf16.mxu0 0
        %4315 = vmatmul.mubr.bf16.gmra.mxu0 %v2933
        %v4316 = vpop.f32.mrf.mxu0
        %v4317 = vadd.f32 %v4156, %v4316
        %v4318 = vpop.f32.mrf.mxu0
        %v4319 = vpop.f32.mrf.mxu0
        %v4320 = vadd.f32 %v4159, %v4319
        %v4321 = vpop.f32.mrf.mxu0
        %4322 = vmatprep.mubr.bf16.mxu0 0
        %4323 = vmatmul.mubr.bf16.gmra.mxu0 %v2942
        %v4324 = vpop.f32.mrf.mxu0
        %v4325 = vadd.f32 %v4164, %v4324
        %v4326 = vpop.f32.mrf.mxu0
        %v4327 = vpop.f32.mrf.mxu0
        %v4328 = vadd.f32 %v4167, %v4327
        %v4329 = vpop.f32.mrf.mxu0
        %4330 = vmatprep.mubr.bf16.mxu0 0
        %4331 = vmatmul.mubr.bf16.gmra.mxu0 %v2951
        %v4332 = vpop.f32.mrf.mxu0
        %v4333 = vadd.f32 %v4172, %v4332
        %v4334 = vpop.f32.mrf.mxu0
        %v4335 = vpop.f32.mrf.mxu0
        %v4336 = vadd.f32 %v4175, %v4335
        %v4337 = vpop.f32.mrf.mxu0
        %4338 = vmatprep.mubr.bf16.mxu0 0
        %4339 = vmatmul.mubr.bf16.gmra.mxu0 %v2960
        %v4340 = vpop.f32.mrf.mxu0
        %v4341 = vadd.f32 %v4180, %v4340
        %v4342 = vpop.f32.mrf.mxu0
        %v4343 = vpop.f32.mrf.mxu0
        %v4344 = vadd.f32 %v4183, %v4343
        %v4345 = vpop.f32.mrf.mxu0
        %4346 = vmatprep.mubr.bf16.mxu0 0
        %4347 = vmatmul.mubr.bf16.gmra.mxu0 %v2969
        %v4348 = vpop.f32.mrf.mxu0
        %v4349 = vadd.f32 %v4188, %v4348
        %v4350 = vpop.f32.mrf.mxu0
        %v4351 = vpop.f32.mrf.mxu0
        %v4352 = vadd.f32 %v4191, %v4351
        %v4353 = vpop.f32.mrf.mxu0
        %4354 = vmatprep.mubr.bf16.mxu0 0
        %4355 = vmatmul.mubr.bf16.gmra.mxu0 %v2978
        %v4356 = vpop.f32.mrf.mxu0
        %v4357 = vadd.f32 %v4196, %v4356
        %v4358 = vpop.f32.mrf.mxu0
        %v4359 = vpop.f32.mrf.mxu0
        %v4360 = vadd.f32 %v4199, %v4359
        %v4361 = vpop.f32.mrf.mxu0
        %4362 = vmatprep.mubr.bf16.mxu0 0
        %4363 = vmatmul.mubr.bf16.gmra.mxu0 %v2987
        %v4364 = vpop.f32.mrf.mxu0
        %v4365 = vadd.f32 %v4204, %v4364
        %v4366 = vpop.f32.mrf.mxu0
        %v4367 = vpop.f32.mrf.mxu0
        %v4368 = vadd.f32 %v4207, %v4367
        %v4369 = vpop.f32.mrf.mxu0
        %4370 = vmatprep.mubr.bf16.mxu0 0
        %4371 = vmatmul.mubr.bf16.gmra.mxu0 %v2996
        %v4372 = vpop.f32.mrf.mxu0
        %v4373 = vadd.f32 %v4212, %v4372
        %v4374 = vpop.f32.mrf.mxu0
        %v4375 = vpop.f32.mrf.mxu0
        %v4376 = vadd.f32 %v4215, %v4375
        %v4377 = vpop.f32.mrf.mxu0
        %4378 = vmatprep.mubr.bf16.mxu0 0
        %4379 = vmatmul.mubr.bf16.gmra.mxu0 %v3005
        %v4380 = vpop.f32.mrf.mxu0
        %v4381 = vadd.f32 %v4220, %v4380
        %v4382 = vpop.f32.mrf.mxu0
        %v4383 = vpop.f32.mrf.mxu0
        %v4384 = vadd.f32 %v4223, %v4383
        %v4385 = vpop.f32.mrf.mxu0
        %4386 = vdwg.mxu0
        %4387 = vst [vmem:[#allocation4] sm:$0xff] %v4261
        %4388 = vst [vmem:[#allocation4 + $0x8] sm:$0xff] %v4264
        %4389 = vst [vmem:[#allocation4 + $0x10] sm:$0xff] %v4269
        %4390 = vst [vmem:[#allocation4 + $0x18] sm:$0xff] %v4272
        %4391 = vst [vmem:[#allocation4 + $0x20] sm:$0xff] %v4277
        %4392 = vst [vmem:[#allocation4 + $0x28] sm:$0xff] %v4280
        %4393 = vst [vmem:[#allocation4 + $0x30] sm:$0xff] %v4285
        %4394 = vst [vmem:[#allocation4 + $0x38] sm:$0xff] %v4288
        %4395 = vst [vmem:[#allocation4 + $0x40] sm:$0xff] %v4293
        %4396 = vst [vmem:[#allocation4 + $0x48] sm:$0xff] %v4296
        %4397 = vst [vmem:[#allocation4 + $0x50] sm:$0xff] %v4301
        %4398 = vst [vmem:[#allocation4 + $0x58] sm:$0xff] %v4304
        %4399 = vst [vmem:[#allocation4 + $0x60] sm:$0xff] %v4309
        %4400 = vst [vmem:[#allocation4 + $0x68] sm:$0xff] %v4312
        %4401 = vst [vmem:[#allocation4 + $0x70] sm:$0xff] %v4317
        %4402 = vst [vmem:[#allocation4 + $0x78] sm:$0xff] %v4320
        %4403 = vst [vmem:[#allocation4 + $0x80] sm:$0xff] %v4325
        %4404 = vst [vmem:[#allocation4 + $0x88] sm:$0xff] %v4328
        %4405 = vst [vmem:[#allocation4 + $0x90] sm:$0xff] %v4333
        %4406 = vst [vmem:[#allocation4 + $0x98] sm:$0xff] %v4336
        %4407 = vst [vmem:[#allocation4 + $0xa0] sm:$0xff] %v4341
        %4408 = vst [vmem:[#allocation4 + $0xa8] sm:$0xff] %v4344
        %4409 = vst [vmem:[#allocation4 + $0xb0] sm:$0xff] %v4349
        %4410 = vst [vmem:[#allocation4 + $0xb8] sm:$0xff] %v4352
        %4411 = vst [vmem:[#allocation4 + $0xc0] sm:$0xff] %v4357
        %4412 = vst [vmem:[#allocation4 + $0xc8] sm:$0xff] %v4360
        %4413 = vst [vmem:[#allocation4 + $0xd0] sm:$0xff] %v4365
        %4414 = vst [vmem:[#allocation4 + $0xd8] sm:$0xff] %v4368
        %4415 = vst [vmem:[#allocation4 + $0xe0] sm:$0xff] %v4373
        %4416 = vst [vmem:[#allocation4 + $0xe8] sm:$0xff] %v4376
        %4417 = vst [vmem:[#allocation4 + $0xf0] sm:$0xff] %v4381
        %4418 = vst [vmem:[#allocation4 + $0xf8] sm:$0xff] %v4384
        %v4419 = vld [vmem:[#allocation4] sm:$0xff]
        %v4420 = vld [vmem:[#allocation4 + $0x8] sm:$0xff]
        %v4421 = vld [vmem:[#allocation4 + $0x10] sm:$0xff]
        %v4422 = vld [vmem:[#allocation4 + $0x18] sm:$0xff]
        %v4423 = vld [vmem:[#allocation4 + $0x20] sm:$0xff]
        %v4424 = vld [vmem:[#allocation4 + $0x28] sm:$0xff]
        %v4425 = vld [vmem:[#allocation4 + $0x30] sm:$0xff]
        %v4426 = vld [vmem:[#allocation4 + $0x38] sm:$0xff]
        %v4427 = vld [vmem:[#allocation4 + $0x40] sm:$0xff]
        %v4428 = vld [vmem:[#allocation4 + $0x48] sm:$0xff]
        %v4429 = vld [vmem:[#allocation4 + $0x50] sm:$0xff]
        %v4430 = vld [vmem:[#allocation4 + $0x58] sm:$0xff]
        %v4431 = vld [vmem:[#allocation4 + $0x60] sm:$0xff]
        %v4432 = vld [vmem:[#allocation4 + $0x68] sm:$0xff]
        %v4433 = vld [vmem:[#allocation4 + $0x70] sm:$0xff]
        %v4434 = vld [vmem:[#allocation4 + $0x78] sm:$0xff]
        %v4435 = vld [vmem:[#allocation4 + $0x80] sm:$0xff]
        %v4436 = vld [vmem:[#allocation4 + $0x88] sm:$0xff]
        %v4437 = vld [vmem:[#allocation4 + $0x90] sm:$0xff]
        %v4438 = vld [vmem:[#allocation4 + $0x98] sm:$0xff]
        %v4439 = vld [vmem:[#allocation4 + $0xa0] sm:$0xff]
        %v4440 = vld [vmem:[#allocation4 + $0xa8] sm:$0xff]
        %v4441 = vld [vmem:[#allocation4 + $0xb0] sm:$0xff]
        %v4442 = vld [vmem:[#allocation4 + $0xb8] sm:$0xff]
        %v4443 = vld [vmem:[#allocation4 + $0xc0] sm:$0xff]
        %v4444 = vld [vmem:[#allocation4 + $0xc8] sm:$0xff]
        %v4445 = vld [vmem:[#allocation4 + $0xd0] sm:$0xff]
        %v4446 = vld [vmem:[#allocation4 + $0xd8] sm:$0xff]
        %v4447 = vld [vmem:[#allocation4 + $0xe0] sm:$0xff]
        %v4448 = vld [vmem:[#allocation4 + $0xe8] sm:$0xff]
        %v4449 = vld [vmem:[#allocation4 + $0xf0] sm:$0xff]
        %v4450 = vld [vmem:[#allocation4 + $0xf8] sm:$0xff]
        %v4451 = vld [vmem:[%s3] sm:$0x1]
        %v4453 = vlaneseq
        %v4454 = vshrl.u32 %v4453, 7
        %v4455 = vsub.s32 0, %v4454
        %v4456 = vrot.slane %v4451, %v4455
        %v4458 = vadd.f32 %v4419, %v4456
        %v4459 = vadd.f32 %v4420, %v4456
        %v4460 = vadd.f32 %v4421, %v4456
        %v4461 = vadd.f32 %v4422, %v4456
        %v4462 = vadd.f32 %v4423, %v4456
        %v4463 = vadd.f32 %v4424, %v4456
        %v4464 = vadd.f32 %v4425, %v4456
        %v4465 = vadd.f32 %v4426, %v4456
        %v4466 = vadd.f32 %v4427, %v4456
        %v4467 = vadd.f32 %v4428, %v4456
        %v4468 = vadd.f32 %v4429, %v4456
        %v4469 = vadd.f32 %v4430, %v4456
        %v4470 = vadd.f32 %v4431, %v4456
        %v4471 = vadd.f32 %v4432, %v4456
        %v4472 = vadd.f32 %v4433, %v4456
        %v4473 = vadd.f32 %v4434, %v4456
        %v4474 = vadd.f32 %v4435, %v4456
        %v4475 = vadd.f32 %v4436, %v4456
        %v4476 = vadd.f32 %v4437, %v4456
        %v4477 = vadd.f32 %v4438, %v4456
        %v4478 = vadd.f32 %v4439, %v4456
        %v4479 = vadd.f32 %v4440, %v4456
        %v4480 = vadd.f32 %v4441, %v4456
        %v4481 = vadd.f32 %v4442, %v4456
        %v4482 = vadd.f32 %v4443, %v4456
        %v4483 = vadd.f32 %v4444, %v4456
        %v4484 = vadd.f32 %v4445, %v4456
        %v4485 = vadd.f32 %v4446, %v4456
        %v4486 = vadd.f32 %v4447, %v4456
        %v4487 = vadd.f32 %v4448, %v4456
        %v4488 = vadd.f32 %v4449, %v4456
        %v4489 = vadd.f32 %v4450, %v4456
        %v4490 = vmax.f32 %v4458, 0.0
        %v4491 = vmax.f32 %v4459, 0.0
        %v4492 = vmax.f32 %v4460, 0.0
        %v4493 = vmax.f32 %v4461, 0.0
        %v4494 = vmax.f32 %v4462, 0.0
        %v4495 = vmax.f32 %v4463, 0.0
        %v4496 = vmax.f32 %v4464, 0.0
        %v4497 = vmax.f32 %v4465, 0.0
        %v4498 = vmax.f32 %v4466, 0.0
        %v4499 = vmax.f32 %v4467, 0.0
        %v4500 = vmax.f32 %v4468, 0.0
        %v4501 = vmax.f32 %v4469, 0.0
        %v4502 = vmax.f32 %v4470, 0.0
        %v4503 = vmax.f32 %v4471, 0.0
        %v4504 = vmax.f32 %v4472, 0.0
        %v4505 = vmax.f32 %v4473, 0.0
        %v4506 = vmax.f32 %v4474, 0.0
        %v4507 = vmax.f32 %v4475, 0.0
        %v4508 = vmax.f32 %v4476, 0.0
        %v4509 = vmax.f32 %v4477, 0.0
        %v4510 = vmax.f32 %v4478, 0.0
        %v4511 = vmax.f32 %v4479, 0.0
        %v4512 = vmax.f32 %v4480, 0.0
        %v4513 = vmax.f32 %v4481, 0.0
        %v4514 = vmax.f32 %v4482, 0.0
        %v4515 = vmax.f32 %v4483, 0.0
        %v4516 = vmax.f32 %v4484, 0.0
        %v4517 = vmax.f32 %v4485, 0.0
        %v4518 = vmax.f32 %v4486, 0.0
        %v4519 = vmax.f32 %v4487, 0.0
        %v4520 = vmax.f32 %v4488, 0.0
        %v4521 = vmax.f32 %v4489, 0.0
        %4522 = vst [vmem:[%s348 + $0x1] sm:$0xff] %v4490
        %4523 = vst [vmem:[%s348 + $0x9] sm:$0xff] %v4491
        %4524 = vst [vmem:[%s348 + $0x19] sm:$0xff] %v4492
        %4525 = vst [vmem:[%s348 + $0x21] sm:$0xff] %v4493
        %4526 = vst [vmem:[%s348 + $0x31] sm:$0xff] %v4494
        %4527 = vst [vmem:[%s348 + $0x39] sm:$0xff] %v4495
        %4528 = vst [vmem:[%s348 + $0x49] sm:$0xff] %v4496
        %4529 = vst [vmem:[%s348 + $0x51] sm:$0xff] %v4497
        %4530 = vst [vmem:[%s348 + $0x61] sm:$0xff] %v4498
        %4531 = vst [vmem:[%s348 + $0x69] sm:$0xff] %v4499
        %4532 = vst [vmem:[%s348 + $0x79] sm:$0xff] %v4500
        %4533 = vst [vmem:[%s348 + $0x81] sm:$0xff] %v4501
        %4534 = vst [vmem:[%s348 + $0x91] sm:$0xff] %v4502
        %4535 = vst [vmem:[%s348 + $0x99] sm:$0xff] %v4503
        %4536 = vst [vmem:[%s348 + $0xa9] sm:$0xff] %v4504
        %4537 = vst [vmem:[%s348 + $0xb1] sm:$0xff] %v4505
        %4538 = vst [vmem:[%s348 + $0xc1] sm:$0xff] %v4506
        %4539 = vst [vmem:[%s348 + $0xc9] sm:$0xff] %v4507
        %4540 = vst [vmem:[%s348 + $0xd9] sm:$0xff] %v4508
        %4541 = vst [vmem:[%s348 + $0xe1] sm:$0xff] %v4509
        %4542 = vst [vmem:[%s348 + $0xf1] sm:$0xff] %v4510
        %4543 = vst [vmem:[%s348 + $0xf9] sm:$0xff] %v4511
        %4544 = vst [vmem:[%s348 + $0x109] sm:$0xff] %v4512
        %4545 = vst [vmem:[%s348 + $0x111] sm:$0xff] %v4513
        %4546 = vst [vmem:[%s348 + $0x121] sm:$0xff] %v4514
        %4547 = vst [vmem:[%s348 + $0x129] sm:$0xff] %v4515
        %4548 = vst [vmem:[%s348 + $0x139] sm:$0xff] %v4516
        %4549 = vst [vmem:[%s348 + $0x141] sm:$0xff] %v4517
        %4550 = vst [vmem:[%s348 + $0x151] sm:$0xff] %v4518
        %4551 = vst [vmem:[%s348 + $0x159] sm:$0xff] %v4519
        %4552 = vst [vmem:[%s348 + $0x169] sm:$0xff] %v4520
        %4553 = vst [vmem:[%s348 + $0x171] sm:$0xff] %v4521
        %v4554 = vld [vmem:[#allocation2] sm:$0xff]
        %v4555 = vld [vmem:[#allocation2 + $0x8] sm:$0xff]
        %v4556 = vld [vmem:[#allocation2 + $0x18] sm:$0xff]
        %v4557 = vld [vmem:[#allocation2 + $0x20] sm:$0xff]
        %v4558 = vld [vmem:[#allocation2 + $0x30] sm:$0xff]
        %v4559 = vld [vmem:[#allocation2 + $0x38] sm:$0xff]
        %v4560 = vld [vmem:[#allocation2 + $0x48] sm:$0xff]
        %v4561 = vld [vmem:[#allocation2 + $0x50] sm:$0xff]
        %v4562 = vld [vmem:[#allocation2 + $0x60] sm:$0xff]
        %v4563 = vld [vmem:[#allocation2 + $0x68] sm:$0xff]
        %v4564 = vld [vmem:[#allocation2 + $0x78] sm:$0xff]
        %v4565 = vld [vmem:[#allocation2 + $0x80] sm:$0xff]
        %v4566 = vld [vmem:[#allocation2 + $0x90] sm:$0xff]
        %v4567 = vld [vmem:[#allocation2 + $0x98] sm:$0xff]
        %v4568 = vld [vmem:[#allocation2 + $0xa8] sm:$0xff]
        %v4569 = vld [vmem:[#allocation2 + $0xb0] sm:$0xff]
        %v4570 = vld [vmem:[#allocation2 + $0xc0] sm:$0xff]
        %v4571 = vld [vmem:[#allocation2 + $0xc8] sm:$0xff]
        %v4572 = vld [vmem:[#allocation2 + $0xd8] sm:$0xff]
        %v4573 = vld [vmem:[#allocation2 + $0xe0] sm:$0xff]
        %v4574 = vld [vmem:[#allocation2 + $0xf0] sm:$0xff]
        %v4575 = vld [vmem:[#allocation2 + $0xf8] sm:$0xff]
        %v4576 = vld [vmem:[#allocation2 + $0x108] sm:$0xff]
        %v4577 = vld [vmem:[#allocation2 + $0x110] sm:$0xff]
        %v4578 = vld [vmem:[#allocation2 + $0x120] sm:$0xff]
        %v4579 = vld [vmem:[#allocation2 + $0x128] sm:$0xff]
        %v4580 = vld [vmem:[#allocation2 + $0x138] sm:$0xff]
        %v4581 = vld [vmem:[#allocation2 + $0x140] sm:$0xff]
        %v4582 = vld [vmem:[#allocation2 + $0x150] sm:$0xff]
        %v4583 = vld [vmem:[#allocation2 + $0x158] sm:$0xff]
        %v4584 = vld [vmem:[#allocation2 + $0x168] sm:$0xff]
        %v4585 = vld [vmem:[#allocation2 + $0x170] sm:$0xff]
        %v4586 = vpack.c.bf16 %v4555, %v4554
        %v4587 = vpack.c.bf16 %v4557, %v4556
        %v4588 = vpack.c.bf16 %v4559, %v4558
        %v4589 = vpack.c.bf16 %v4561, %v4560
        %v4590 = vpack.c.bf16 %v4563, %v4562
        %v4591 = vpack.c.bf16 %v4565, %v4564
        %v4592 = vpack.c.bf16 %v4567, %v4566
        %v4593 = vpack.c.bf16 %v4569, %v4568
        %v4594 = vpack.c.bf16 %v4571, %v4570
        %v4595 = vpack.c.bf16 %v4573, %v4572
        %v4596 = vpack.c.bf16 %v4575, %v4574
        %v4597 = vpack.c.bf16 %v4577, %v4576
        %v4598 = vpack.c.bf16 %v4579, %v4578
        %v4599 = vpack.c.bf16 %v4581, %v4580
        %v4600 = vpack.c.bf16 %v4583, %v4582
        %v4601 = vpack.c.bf16 %v4585, %v4584
        %v4618 = vunpack.c.l.b16 %v4586
        %v4619 = vunpack.c.h.b16 %v4586
        %v4620 = vunpack.c.l.b16 %v4587
        %v4621 = vunpack.c.h.b16 %v4587
        %v4622 = vunpack.c.l.b16 %v4588
        %v4623 = vunpack.c.h.b16 %v4588
        %v4624 = vunpack.c.l.b16 %v4589
        %v4625 = vunpack.c.h.b16 %v4589
        %v4626 = vunpack.c.l.b16 %v4590
        %v4627 = vunpack.c.h.b16 %v4590
        %v4628 = vunpack.c.l.b16 %v4591
        %v4629 = vunpack.c.h.b16 %v4591
        %v4630 = vunpack.c.l.b16 %v4592
        %v4631 = vunpack.c.h.b16 %v4592
        %v4632 = vunpack.c.l.b16 %v4593
        %v4633 = vunpack.c.h.b16 %v4593
        %v4634 = vunpack.c.l.b16 %v4594
        %v4635 = vunpack.c.h.b16 %v4594
        %v4636 = vunpack.c.l.b16 %v4595
        %v4637 = vunpack.c.h.b16 %v4595
        %v4638 = vunpack.c.l.b16 %v4596
        %v4639 = vunpack.c.h.b16 %v4596
        %v4640 = vunpack.c.l.b16 %v4597
        %v4641 = vunpack.c.h.b16 %v4597
        %v4642 = vunpack.c.l.b16 %v4598
        %v4643 = vunpack.c.h.b16 %v4598
        %v4644 = vunpack.c.l.b16 %v4599
        %v4645 = vunpack.c.h.b16 %v4599
        %v4646 = vunpack.c.l.b16 %v4600
        %v4647 = vunpack.c.h.b16 %v4600
        %v4648 = vunpack.c.l.b16 %v4601
        %v4649 = vunpack.c.h.b16 %v4601
        %v4650 = vpack.c.b16 %v4618, %v4618
        %v4651 = vpack.c.b16 %v4619, %v4619
        %v4652 = vpack.c.b16 %v4620, %v4620
        %v4653 = vpack.c.b16 %v4621, %v4621
        %v4654 = vpack.c.b16 %v4622, %v4622
        %v4655 = vpack.c.b16 %v4623, %v4623
        %v4656 = vpack.c.b16 %v4624, %v4624
        %v4657 = vpack.c.b16 %v4625, %v4625
        %v4658 = vpack.c.b16 %v4626, %v4626
        %v4659 = vpack.c.b16 %v4627, %v4627
        %v4660 = vpack.c.b16 %v4628, %v4628
        %v4661 = vpack.c.b16 %v4629, %v4629
        %v4662 = vpack.c.b16 %v4630, %v4630
        %v4663 = vpack.c.b16 %v4631, %v4631
        %v4664 = vpack.c.b16 %v4632, %v4632
        %v4665 = vpack.c.b16 %v4633, %v4633
        %v4666 = vpack.c.b16 %v4634, %v4634
        %v4667 = vpack.c.b16 %v4635, %v4635
        %v4668 = vpack.c.b16 %v4636, %v4636
        %v4669 = vpack.c.b16 %v4637, %v4637
        %v4670 = vpack.c.b16 %v4638, %v4638
        %v4671 = vpack.c.b16 %v4639, %v4639
        %v4672 = vpack.c.b16 %v4640, %v4640
        %v4673 = vpack.c.b16 %v4641, %v4641
        %v4674 = vpack.c.b16 %v4642, %v4642
        %v4675 = vpack.c.b16 %v4643, %v4643
        %v4676 = vpack.c.b16 %v4644, %v4644
        %v4677 = vpack.c.b16 %v4645, %v4645
        %v4678 = vpack.c.b16 %v4646, %v4646
        %v4679 = vpack.c.b16 %v4647, %v4647
        %v4680 = vpack.c.b16 %v4648, %v4648
        %v4681 = vpack.c.b16 %v4649, %v4649
        %4714 = vst [vmem:[#allocation3] sm:$0xf] %v4650
        %4715 = vst [vmem:[#allocation3 + $0x24] sm:$0xf] %v4651
        %4716 = vst [vmem:[#allocation3 + $0x48] sm:$0xf] %v4652
        %4717 = vst [vmem:[#allocation3 + $0x6c] sm:$0xf] %v4653
        %4718 = vst [vmem:[#allocation3 + $0x90] sm:$0xf] %v4654
        %4719 = vst [vmem:[#allocation3 + $0xb4] sm:$0xf] %v4655
        %4720 = vst [vmem:[#allocation3 + $0xd8] sm:$0xf] %v4656
        %4721 = vst [vmem:[#allocation3 + $0xfc] sm:$0xf] %v4657
        %4722 = vst [vmem:[#allocation3 + $0x120] sm:$0xf] %v4658
        %4723 = vst [vmem:[#allocation3 + $0x144] sm:$0xf] %v4659
        %4724 = vst [vmem:[#allocation3 + $0x168] sm:$0xf] %v4660
        %4725 = vst [vmem:[#allocation3 + $0x18c] sm:$0xf] %v4661
        %4726 = vst [vmem:[#allocation3 + $0x1b0] sm:$0xf] %v4662
        %4727 = vst [vmem:[#allocation3 + $0x1d4] sm:$0xf] %v4663
        %4728 = vst [vmem:[#allocation3 + $0x1f8] sm:$0xf] %v4664
        %4729 = vst [vmem:[#allocation3 + $0x21c] sm:$0xf] %v4665
        %4730 = vst [vmem:[#allocation3 + $0x240] sm:$0xf] %v4666
        %4731 = vst [vmem:[#allocation3 + $0x264] sm:$0xf] %v4667
        %4732 = vst [vmem:[#allocation3 + $0x288] sm:$0xf] %v4668
        %4733 = vst [vmem:[#allocation3 + $0x2ac] sm:$0xf] %v4669
        %4734 = vst [vmem:[#allocation3 + $0x2d0] sm:$0xf] %v4670
        %4735 = vst [vmem:[#allocation3 + $0x2f4] sm:$0xf] %v4671
        %4736 = vst [vmem:[#allocation3 + $0x318] sm:$0xf] %v4672
        %4737 = vst [vmem:[#allocation3 + $0x33c] sm:$0xf] %v4673
        %4738 = vst [vmem:[#allocation3 + $0x360] sm:$0xf] %v4674
        %4739 = vst [vmem:[#allocation3 + $0x384] sm:$0xf] %v4675
        %4740 = vst [vmem:[#allocation3 + $0x3a8] sm:$0xf] %v4676
        %4741 = vst [vmem:[#allocation3 + $0x3cc] sm:$0xf] %v4677
        %4742 = vst [vmem:[#allocation3 + $0x3f0] sm:$0xf] %v4678
        %4743 = vst [vmem:[#allocation3 + $0x414] sm:$0xf] %v4679
        %4744 = vst [vmem:[#allocation3 + $0x438] sm:$0xf] %v4680
        %4745 = vst [vmem:[#allocation3 + $0x45c] sm:$0xf] %v4681
        %v4746 = vld [vmem:[#allocation2 + $0x1] sm:$0xff]
        %v4747 = vld [vmem:[#allocation2 + $0x9] sm:$0xff]
        %v4748 = vld [vmem:[#allocation2 + $0x19] sm:$0xff]
        %v4749 = vld [vmem:[#allocation2 + $0x21] sm:$0xff]
        %v4750 = vld [vmem:[#allocation2 + $0x31] sm:$0xff]
        %v4751 = vld [vmem:[#allocation2 + $0x39] sm:$0xff]
        %v4752 = vld [vmem:[#allocation2 + $0x49] sm:$0xff]
        %v4753 = vld [vmem:[#allocation2 + $0x51] sm:$0xff]
        %v4754 = vld [vmem:[#allocation2 + $0x61] sm:$0xff]
        %v4755 = vld [vmem:[#allocation2 + $0x69] sm:$0xff]
        %v4756 = vld [vmem:[#allocation2 + $0x79] sm:$0xff]
        %v4757 = vld [vmem:[#allocation2 + $0x81] sm:$0xff]
        %v4758 = vld [vmem:[#allocation2 + $0x91] sm:$0xff]
        %v4759 = vld [vmem:[#allocation2 + $0x99] sm:$0xff]
        %v4760 = vld [vmem:[#allocation2 + $0xa9] sm:$0xff]
        %v4761 = vld [vmem:[#allocation2 + $0xb1] sm:$0xff]
        %v4762 = vld [vmem:[#allocation2 + $0xc1] sm:$0xff]
        %v4763 = vld [vmem:[#allocation2 + $0xc9] sm:$0xff]
        %v4764 = vld [vmem:[#allocation2 + $0xd9] sm:$0xff]
        %v4765 = vld [vmem:[#allocation2 + $0xe1] sm:$0xff]
        %v4766 = vld [vmem:[#allocation2 + $0xf1] sm:$0xff]
        %v4767 = vld [vmem:[#allocation2 + $0xf9] sm:$0xff]
        %v4768 = vld [vmem:[#allocation2 + $0x109] sm:$0xff]
        %v4769 = vld [vmem:[#allocation2 + $0x111] sm:$0xff]
        %v4770 = vld [vmem:[#allocation2 + $0x121] sm:$0xff]
        %v4771 = vld [vmem:[#allocation2 + $0x129] sm:$0xff]
        %v4772 = vld [vmem:[#allocation2 + $0x139] sm:$0xff]
        %v4773 = vld [vmem:[#allocation2 + $0x141] sm:$0xff]
        %v4774 = vld [vmem:[#allocation2 + $0x151] sm:$0xff]
        %v4775 = vld [vmem:[#allocation2 + $0x159] sm:$0xff]
        %v4776 = vld [vmem:[#allocation2 + $0x169] sm:$0xff]
        %v4777 = vld [vmem:[#allocation2 + $0x171] sm:$0xff]
        %v4778 = vpack.c.bf16 %v4747, %v4746
        %v4779 = vpack.c.bf16 %v4749, %v4748
        %v4780 = vpack.c.bf16 %v4751, %v4750
        %v4781 = vpack.c.bf16 %v4753, %v4752
        %v4782 = vpack.c.bf16 %v4755, %v4754
        %v4783 = vpack.c.bf16 %v4757, %v4756
        %v4784 = vpack.c.bf16 %v4759, %v4758
        %v4785 = vpack.c.bf16 %v4761, %v4760
        %v4786 = vpack.c.bf16 %v4763, %v4762
        %v4787 = vpack.c.bf16 %v4765, %v4764
        %v4788 = vpack.c.bf16 %v4767, %v4766
        %v4789 = vpack.c.bf16 %v4769, %v4768
        %v4790 = vpack.c.bf16 %v4771, %v4770
        %v4791 = vpack.c.bf16 %v4773, %v4772
        %v4792 = vpack.c.bf16 %v4775, %v4774
        %v4793 = vpack.c.bf16 %v4777, %v4776
        %v4810 = vunpack.c.l.b16 %v4778
        %v4811 = vunpack.c.h.b16 %v4778
        %v4812 = vunpack.c.l.b16 %v4779
        %v4813 = vunpack.c.h.b16 %v4779
        %v4814 = vunpack.c.l.b16 %v4780
        %v4815 = vunpack.c.h.b16 %v4780
        %v4816 = vunpack.c.l.b16 %v4781
        %v4817 = vunpack.c.h.b16 %v4781
        %v4818 = vunpack.c.l.b16 %v4782
        %v4819 = vunpack.c.h.b16 %v4782
        %v4820 = vunpack.c.l.b16 %v4783
        %v4821 = vunpack.c.h.b16 %v4783
        %v4822 = vunpack.c.l.b16 %v4784
        %v4823 = vunpack.c.h.b16 %v4784
        %v4824 = vunpack.c.l.b16 %v4785
        %v4825 = vunpack.c.h.b16 %v4785
        %v4826 = vunpack.c.l.b16 %v4786
        %v4827 = vunpack.c.h.b16 %v4786
        %v4828 = vunpack.c.l.b16 %v4787
        %v4829 = vunpack.c.h.b16 %v4787
        %v4830 = vunpack.c.l.b16 %v4788
        %v4831 = vunpack.c.h.b16 %v4788
        %v4832 = vunpack.c.l.b16 %v4789
        %v4833 = vunpack.c.h.b16 %v4789
        %v4834 = vunpack.c.l.b16 %v4790
        %v4835 = vunpack.c.h.b16 %v4790
        %v4836 = vunpack.c.l.b16 %v4791
        %v4837 = vunpack.c.h.b16 %v4791
        %v4838 = vunpack.c.l.b16 %v4792
        %v4839 = vunpack.c.h.b16 %v4792
        %v4840 = vunpack.c.l.b16 %v4793
        %v4841 = vunpack.c.h.b16 %v4793
        %v4842 = vpack.c.b16 %v4810, %v4810
        %v4843 = vpack.c.b16 %v4811, %v4811
        %v4844 = vpack.c.b16 %v4812, %v4812
        %v4845 = vpack.c.b16 %v4813, %v4813
        %v4846 = vpack.c.b16 %v4814, %v4814
        %v4847 = vpack.c.b16 %v4815, %v4815
        %v4848 = vpack.c.b16 %v4816, %v4816
        %v4849 = vpack.c.b16 %v4817, %v4817
        %v4850 = vpack.c.b16 %v4818, %v4818
        %v4851 = vpack.c.b16 %v4819, %v4819
        %v4852 = vpack.c.b16 %v4820, %v4820
        %v4853 = vpack.c.b16 %v4821, %v4821
        %v4854 = vpack.c.b16 %v4822, %v4822
        %v4855 = vpack.c.b16 %v4823, %v4823
        %v4856 = vpack.c.b16 %v4824, %v4824
        %v4857 = vpack.c.b16 %v4825, %v4825
        %v4858 = vpack.c.b16 %v4826, %v4826
        %v4859 = vpack.c.b16 %v4827, %v4827
        %v4860 = vpack.c.b16 %v4828, %v4828
        %v4861 = vpack.c.b16 %v4829, %v4829
        %v4862 = vpack.c.b16 %v4830, %v4830
        %v4863 = vpack.c.b16 %v4831, %v4831
        %v4864 = vpack.c.b16 %v4832, %v4832
        %v4865 = vpack.c.b16 %v4833, %v4833
        %v4866 = vpack.c.b16 %v4834, %v4834
        %v4867 = vpack.c.b16 %v4835, %v4835
        %v4868 = vpack.c.b16 %v4836, %v4836
        %v4869 = vpack.c.b16 %v4837, %v4837
        %v4870 = vpack.c.b16 %v4838, %v4838
        %v4871 = vpack.c.b16 %v4839, %v4839
        %v4872 = vpack.c.b16 %v4840, %v4840
        %v4873 = vpack.c.b16 %v4841, %v4841
        %4906 = vst [vmem:[#allocation3 + $0x4] sm:$0xf] %v4842
        %4907 = vst [vmem:[#allocation3 + $0x28] sm:$0xf] %v4843
        %4908 = vst [vmem:[#allocation3 + $0x4c] sm:$0xf] %v4844
        %4909 = vst [vmem:[#allocation3 + $0x70] sm:$0xf] %v4845
        %4910 = vst [vmem:[#allocation3 + $0x94] sm:$0xf] %v4846
        %4911 = vst [vmem:[#allocation3 + $0xb8] sm:$0xf] %v4847
        %4912 = vst [vmem:[#allocation3 + $0xdc] sm:$0xf] %v4848
        %4913 = vst [vmem:[#allocation3 + $0x100] sm:$0xf] %v4849
        %4914 = vst [vmem:[#allocation3 + $0x124] sm:$0xf] %v4850
        %4915 = vst [vmem:[#allocation3 + $0x148] sm:$0xf] %v4851
        %4916 = vst [vmem:[#allocation3 + $0x16c] sm:$0xf] %v4852
        %4917 = vst [vmem:[#allocation3 + $0x190] sm:$0xf] %v4853
        %4918 = vst [vmem:[#allocation3 + $0x1b4] sm:$0xf] %v4854
        %4919 = vst [vmem:[#allocation3 + $0x1d8] sm:$0xf] %v4855
        %4920 = vst [vmem:[#allocation3 + $0x1fc] sm:$0xf] %v4856
        %4921 = vst [vmem:[#allocation3 + $0x220] sm:$0xf] %v4857
        %4922 = vst [vmem:[#allocation3 + $0x244] sm:$0xf] %v4858
        %4923 = vst [vmem:[#allocation3 + $0x268] sm:$0xf] %v4859
        %4924 = vst [vmem:[#allocation3 + $0x28c] sm:$0xf] %v4860
        %4925 = vst [vmem:[#allocation3 + $0x2b0] sm:$0xf] %v4861
        %4926 = vst [vmem:[#allocation3 + $0x2d4] sm:$0xf] %v4862
        %4927 = vst [vmem:[#allocation3 + $0x2f8] sm:$0xf] %v4863
        %4928 = vst [vmem:[#allocation3 + $0x31c] sm:$0xf] %v4864
        %4929 = vst [vmem:[#allocation3 + $0x340] sm:$0xf] %v4865
        %4930 = vst [vmem:[#allocation3 + $0x364] sm:$0xf] %v4866
        %4931 = vst [vmem:[#allocation3 + $0x388] sm:$0xf] %v4867
        %4932 = vst [vmem:[#allocation3 + $0x3ac] sm:$0xf] %v4868
        %4933 = vst [vmem:[#allocation3 + $0x3d0] sm:$0xf] %v4869
        %4934 = vst [vmem:[#allocation3 + $0x3f4] sm:$0xf] %v4870
        %4935 = vst [vmem:[#allocation3 + $0x418] sm:$0xf] %v4871
        %4936 = vst [vmem:[#allocation3 + $0x43c] sm:$0xf] %v4872
        %4937 = vst [vmem:[#allocation3 + $0x460] sm:$0xf] %v4873
        %v4938 = vld [vmem:[#allocation2 + $0x2] sm:$0xff]
        %v4939 = vld [vmem:[#allocation2 + $0xa] sm:$0xff]
        %v4940 = vld [vmem:[#allocation2 + $0x1a] sm:$0xff]
        %v4941 = vld [vmem:[#allocation2 + $0x22] sm:$0xff]
        %v4942 = vld [vmem:[#allocation2 + $0x32] sm:$0xff]
        %v4943 = vld [vmem:[#allocation2 + $0x3a] sm:$0xff]
        %v4944 = vld [vmem:[#allocation2 + $0x4a] sm:$0xff]
        %v4945 = vld [vmem:[#allocation2 + $0x52] sm:$0xff]
        %v4946 = vld [vmem:[#allocation2 + $0x62] sm:$0xff]
        %v4947 = vld [vmem:[#allocation2 + $0x6a] sm:$0xff]
        %v4948 = vld [vmem:[#allocation2 + $0x7a] sm:$0xff]
        %v4949 = vld [vmem:[#allocation2 + $0x82] sm:$0xff]
        %v4950 = vld [vmem:[#allocation2 + $0x92] sm:$0xff]
        %v4951 = vld [vmem:[#allocation2 + $0x9a] sm:$0xff]
        %v4952 = vld [vmem:[#allocation2 + $0xaa] sm:$0xff]
        %v4953 = vld [vmem:[#allocation2 + $0xb2] sm:$0xff]
        %v4954 = vld [vmem:[#allocation2 + $0xc2] sm:$0xff]
        %v4955 = vld [vmem:[#allocation2 + $0xca] sm:$0xff]
        %v4956 = vld [vmem:[#allocation2 + $0xda] sm:$0xff]
        %v4957 = vld [vmem:[#allocation2 + $0xe2] sm:$0xff]
        %v4958 = vld [vmem:[#allocation2 + $0xf2] sm:$0xff]
        %v4959 = vld [vmem:[#allocation2 + $0xfa] sm:$0xff]
        %v4960 = vld [vmem:[#allocation2 + $0x10a] sm:$0xff]
        %v4961 = vld [vmem:[#allocation2 + $0x112] sm:$0xff]
        %v4962 = vld [vmem:[#allocation2 + $0x122] sm:$0xff]
        %v4963 = vld [vmem:[#allocation2 + $0x12a] sm:$0xff]
        %v4964 = vld [vmem:[#allocation2 + $0x13a] sm:$0xff]
        %v4965 = vld [vmem:[#allocation2 + $0x142] sm:$0xff]
        %v4966 = vld [vmem:[#allocation2 + $0x152] sm:$0xff]
        %v4967 = vld [vmem:[#allocation2 + $0x15a] sm:$0xff]
        %v4968 = vld [vmem:[#allocation2 + $0x16a] sm:$0xff]
        %v4969 = vld [vmem:[#allocation2 + $0x172] sm:$0xff]
        %v4970 = vpack.c.bf16 %v4939, %v4938
        %v4971 = vpack.c.bf16 %v4941, %v4940
        %v4972 = vpack.c.bf16 %v4943, %v4942
        %v4973 = vpack.c.bf16 %v4945, %v4944
        %v4974 = vpack.c.bf16 %v4947, %v4946
        %v4975 = vpack.c.bf16 %v4949, %v4948
        %v4976 = vpack.c.bf16 %v4951, %v4950
        %v4977 = vpack.c.bf16 %v4953, %v4952
        %v4978 = vpack.c.bf16 %v4955, %v4954
        %v4979 = vpack.c.bf16 %v4957, %v4956
        %v4980 = vpack.c.bf16 %v4959, %v4958
        %v4981 = vpack.c.bf16 %v4961, %v4960
        %v4982 = vpack.c.bf16 %v4963, %v4962
        %v4983 = vpack.c.bf16 %v4965, %v4964
        %v4984 = vpack.c.bf16 %v4967, %v4966
        %v4985 = vpack.c.bf16 %v4969, %v4968
        %v5002 = vunpack.c.l.b16 %v4970
        %v5003 = vunpack.c.h.b16 %v4970
        %v5004 = vunpack.c.l.b16 %v4971
        %v5005 = vunpack.c.h.b16 %v4971
        %v5006 = vunpack.c.l.b16 %v4972
        %v5007 = vunpack.c.h.b16 %v4972
        %v5008 = vunpack.c.l.b16 %v4973
        %v5009 = vunpack.c.h.b16 %v4973
        %v5010 = vunpack.c.l.b16 %v4974
        %v5011 = vunpack.c.h.b16 %v4974
        %v5012 = vunpack.c.l.b16 %v4975
        %v5013 = vunpack.c.h.b16 %v4975
        %v5014 = vunpack.c.l.b16 %v4976
        %v5015 = vunpack.c.h.b16 %v4976
        %v5016 = vunpack.c.l.b16 %v4977
        %v5017 = vunpack.c.h.b16 %v4977
        %v5018 = vunpack.c.l.b16 %v4978
        %v5019 = vunpack.c.h.b16 %v4978
        %v5020 = vunpack.c.l.b16 %v4979
        %v5021 = vunpack.c.h.b16 %v4979
        %v5022 = vunpack.c.l.b16 %v4980
        %v5023 = vunpack.c.h.b16 %v4980
        %v5024 = vunpack.c.l.b16 %v4981
        %v5025 = vunpack.c.h.b16 %v4981
        %v5026 = vunpack.c.l.b16 %v4982
        %v5027 = vunpack.c.h.b16 %v4982
        %v5028 = vunpack.c.l.b16 %v4983
        %v5029 = vunpack.c.h.b16 %v4983
        %v5030 = vunpack.c.l.b16 %v4984
        %v5031 = vunpack.c.h.b16 %v4984
        %v5032 = vunpack.c.l.b16 %v4985
        %v5033 = vunpack.c.h.b16 %v4985
        %v5034 = vpack.c.b16 %v5002, %v5002
        %v5035 = vpack.c.b16 %v5003, %v5003
        %v5036 = vpack.c.b16 %v5004, %v5004
        %v5037 = vpack.c.b16 %v5005, %v5005
        %v5038 = vpack.c.b16 %v5006, %v5006
        %v5039 = vpack.c.b16 %v5007, %v5007
        %v5040 = vpack.c.b16 %v5008, %v5008
        %v5041 = vpack.c.b16 %v5009, %v5009
        %v5042 = vpack.c.b16 %v5010, %v5010
        %v5043 = vpack.c.b16 %v5011, %v5011
        %v5044 = vpack.c.b16 %v5012, %v5012
        %v5045 = vpack.c.b16 %v5013, %v5013
        %v5046 = vpack.c.b16 %v5014, %v5014
        %v5047 = vpack.c.b16 %v5015, %v5015
        %v5048 = vpack.c.b16 %v5016, %v5016
        %v5049 = vpack.c.b16 %v5017, %v5017
        %v5050 = vpack.c.b16 %v5018, %v5018
        %v5051 = vpack.c.b16 %v5019, %v5019
        %v5052 = vpack.c.b16 %v5020, %v5020
        %v5053 = vpack.c.b16 %v5021, %v5021
        %v5054 = vpack.c.b16 %v5022, %v5022
        %v5055 = vpack.c.b16 %v5023, %v5023
        %v5056 = vpack.c.b16 %v5024, %v5024
        %v5057 = vpack.c.b16 %v5025, %v5025
        %v5058 = vpack.c.b16 %v5026, %v5026
        %v5059 = vpack.c.b16 %v5027, %v5027
        %v5060 = vpack.c.b16 %v5028, %v5028
        %v5061 = vpack.c.b16 %v5029, %v5029
        %v5062 = vpack.c.b16 %v5030, %v5030
        %v5063 = vpack.c.b16 %v5031, %v5031
        %v5064 = vpack.c.b16 %v5032, %v5032
        %v5065 = vpack.c.b16 %v5033, %v5033
        %5098 = vst [vmem:[#allocation3 + $0x8] sm:$0xf] %v5034
        %5099 = vst [vmem:[#allocation3 + $0x2c] sm:$0xf] %v5035
        %5100 = vst [vmem:[#allocation3 + $0x50] sm:$0xf] %v5036
        %5101 = vst [vmem:[#allocation3 + $0x74] sm:$0xf] %v5037
        %5102 = vst [vmem:[#allocation3 + $0x98] sm:$0xf] %v5038
        %5103 = vst [vmem:[#allocation3 + $0xbc] sm:$0xf] %v5039
        %5104 = vst [vmem:[#allocation3 + $0xe0] sm:$0xf] %v5040
        %5105 = vst [vmem:[#allocation3 + $0x104] sm:$0xf] %v5041
        %5106 = vst [vmem:[#allocation3 + $0x128] sm:$0xf] %v5042
        %5107 = vst [vmem:[#allocation3 + $0x14c] sm:$0xf] %v5043
        %5108 = vst [vmem:[#allocation3 + $0x170] sm:$0xf] %v5044
        %5109 = vst [vmem:[#allocation3 + $0x194] sm:$0xf] %v5045
        %5110 = vst [vmem:[#allocation3 + $0x1b8] sm:$0xf] %v5046
        %5111 = vst [vmem:[#allocation3 + $0x1dc] sm:$0xf] %v5047
        %5112 = vst [vmem:[#allocation3 + $0x200] sm:$0xf] %v5048
        %5113 = vst [vmem:[#allocation3 + $0x224] sm:$0xf] %v5049
        %5114 = vst [vmem:[#allocation3 + $0x248] sm:$0xf] %v5050
        %5115 = vst [vmem:[#allocation3 + $0x26c] sm:$0xf] %v5051
        %5116 = vst [vmem:[#allocation3 + $0x290] sm:$0xf] %v5052
        %5117 = vst [vmem:[#allocation3 + $0x2b4] sm:$0xf] %v5053
        %5118 = vst [vmem:[#allocation3 + $0x2d8] sm:$0xf] %v5054
        %5119 = vst [vmem:[#allocation3 + $0x2fc] sm:$0xf] %v5055
        %5120 = vst [vmem:[#allocation3 + $0x320] sm:$0xf] %v5056
        %5121 = vst [vmem:[#allocation3 + $0x344] sm:$0xf] %v5057
        %5122 = vst [vmem:[#allocation3 + $0x368] sm:$0xf] %v5058
        %5123 = vst [vmem:[#allocation3 + $0x38c] sm:$0xf] %v5059
        %5124 = vst [vmem:[#allocation3 + $0x3b0] sm:$0xf] %v5060
        %5125 = vst [vmem:[#allocation3 + $0x3d4] sm:$0xf] %v5061
        %5126 = vst [vmem:[#allocation3 + $0x3f8] sm:$0xf] %v5062
        %5127 = vst [vmem:[#allocation3 + $0x41c] sm:$0xf] %v5063
        %5128 = vst [vmem:[#allocation3 + $0x440] sm:$0xf] %v5064
        %5129 = vst [vmem:[#allocation3 + $0x464] sm:$0xf] %v5065
        %v5130 = vld [vmem:[%s348] sm:$0xff]
        %v5131 = vld [vmem:[%s348 + $0x8] sm:$0xff]
        %v5132 = vld [vmem:[%s348 + $0x18] sm:$0xff]
        %v5133 = vld [vmem:[%s348 + $0x20] sm:$0xff]
        %v5134 = vld [vmem:[%s348 + $0x30] sm:$0xff]
        %v5135 = vld [vmem:[%s348 + $0x38] sm:$0xff]
        %v5136 = vld [vmem:[%s348 + $0x48] sm:$0xff]
        %v5137 = vld [vmem:[%s348 + $0x50] sm:$0xff]
        %v5138 = vld [vmem:[%s348 + $0x60] sm:$0xff]
        %v5139 = vld [vmem:[%s348 + $0x68] sm:$0xff]
        %v5140 = vld [vmem:[%s348 + $0x78] sm:$0xff]
        %v5141 = vld [vmem:[%s348 + $0x80] sm:$0xff]
        %v5142 = vld [vmem:[%s348 + $0x90] sm:$0xff]
        %v5143 = vld [vmem:[%s348 + $0x98] sm:$0xff]
        %v5144 = vld [vmem:[%s348 + $0xa8] sm:$0xff]
        %v5145 = vld [vmem:[%s348 + $0xb0] sm:$0xff]
        %v5146 = vld [vmem:[%s348 + $0xc0] sm:$0xff]
        %v5147 = vld [vmem:[%s348 + $0xc8] sm:$0xff]
        %v5148 = vld [vmem:[%s348 + $0xd8] sm:$0xff]
        %v5149 = vld [vmem:[%s348 + $0xe0] sm:$0xff]
        %v5150 = vld [vmem:[%s348 + $0xf0] sm:$0xff]
        %v5151 = vld [vmem:[%s348 + $0xf8] sm:$0xff]
        %v5152 = vld [vmem:[%s348 + $0x108] sm:$0xff]
        %v5153 = vld [vmem:[%s348 + $0x110] sm:$0xff]
        %v5154 = vld [vmem:[%s348 + $0x120] sm:$0xff]
        %v5155 = vld [vmem:[%s348 + $0x128] sm:$0xff]
        %v5156 = vld [vmem:[%s348 + $0x138] sm:$0xff]
        %v5157 = vld [vmem:[%s348 + $0x140] sm:$0xff]
        %v5158 = vld [vmem:[%s348 + $0x150] sm:$0xff]
        %v5159 = vld [vmem:[%s348 + $0x158] sm:$0xff]
        %v5160 = vld [vmem:[%s348 + $0x168] sm:$0xff]
        %v5161 = vld [vmem:[%s348 + $0x170] sm:$0xff]
        %v5162 = vpack.c.bf16 %v5131, %v5130
        %v5163 = vpack.c.bf16 %v5133, %v5132
        %v5164 = vpack.c.bf16 %v5135, %v5134
        %v5165 = vpack.c.bf16 %v5137, %v5136
        %v5166 = vpack.c.bf16 %v5139, %v5138
        %v5167 = vpack.c.bf16 %v5141, %v5140
        %v5168 = vpack.c.bf16 %v5143, %v5142
        %v5169 = vpack.c.bf16 %v5145, %v5144
        %v5170 = vpack.c.bf16 %v5147, %v5146
        %v5171 = vpack.c.bf16 %v5149, %v5148
        %v5172 = vpack.c.bf16 %v5151, %v5150
        %v5173 = vpack.c.bf16 %v5153, %v5152
        %v5174 = vpack.c.bf16 %v5155, %v5154
        %v5175 = vpack.c.bf16 %v5157, %v5156
        %v5176 = vpack.c.bf16 %v5159, %v5158
        %v5177 = vpack.c.bf16 %v5161, %v5160
        %v5194 = vunpack.c.l.b16 %v5162
        %v5195 = vunpack.c.h.b16 %v5162
        %v5196 = vunpack.c.l.b16 %v5163
        %v5197 = vunpack.c.h.b16 %v5163
        %v5198 = vunpack.c.l.b16 %v5164
        %v5199 = vunpack.c.h.b16 %v5164
        %v5200 = vunpack.c.l.b16 %v5165
        %v5201 = vunpack.c.h.b16 %v5165
        %v5202 = vunpack.c.l.b16 %v5166
        %v5203 = vunpack.c.h.b16 %v5166
        %v5204 = vunpack.c.l.b16 %v5167
        %v5205 = vunpack.c.h.b16 %v5167
        %v5206 = vunpack.c.l.b16 %v5168
        %v5207 = vunpack.c.h.b16 %v5168
        %v5208 = vunpack.c.l.b16 %v5169
        %v5209 = vunpack.c.h.b16 %v5169
        %v5210 = vunpack.c.l.b16 %v5170
        %v5211 = vunpack.c.h.b16 %v5170
        %v5212 = vunpack.c.l.b16 %v5171
        %v5213 = vunpack.c.h.b16 %v5171
        %v5214 = vunpack.c.l.b16 %v5172
        %v5215 = vunpack.c.h.b16 %v5172
        %v5216 = vunpack.c.l.b16 %v5173
        %v5217 = vunpack.c.h.b16 %v5173
        %v5218 = vunpack.c.l.b16 %v5174
        %v5219 = vunpack.c.h.b16 %v5174
        %v5220 = vunpack.c.l.b16 %v5175
        %v5221 = vunpack.c.h.b16 %v5175
        %v5222 = vunpack.c.l.b16 %v5176
        %v5223 = vunpack.c.h.b16 %v5176
        %v5224 = vunpack.c.l.b16 %v5177
        %v5225 = vunpack.c.h.b16 %v5177
        %v5226 = vpack.c.b16 %v5194, %v5194
        %v5227 = vpack.c.b16 %v5195, %v5195
        %v5228 = vpack.c.b16 %v5196, %v5196
        %v5229 = vpack.c.b16 %v5197, %v5197
        %v5230 = vpack.c.b16 %v5198, %v5198
        %v5231 = vpack.c.b16 %v5199, %v5199
        %v5232 = vpack.c.b16 %v5200, %v5200
        %v5233 = vpack.c.b16 %v5201, %v5201
        %v5234 = vpack.c.b16 %v5202, %v5202
        %v5235 = vpack.c.b16 %v5203, %v5203
        %v5236 = vpack.c.b16 %v5204, %v5204
        %v5237 = vpack.c.b16 %v5205, %v5205
        %v5238 = vpack.c.b16 %v5206, %v5206
        %v5239 = vpack.c.b16 %v5207, %v5207
        %v5240 = vpack.c.b16 %v5208, %v5208
        %v5241 = vpack.c.b16 %v5209, %v5209
        %v5242 = vpack.c.b16 %v5210, %v5210
        %v5243 = vpack.c.b16 %v5211, %v5211
        %v5244 = vpack.c.b16 %v5212, %v5212
        %v5245 = vpack.c.b16 %v5213, %v5213
        %v5246 = vpack.c.b16 %v5214, %v5214
        %v5247 = vpack.c.b16 %v5215, %v5215
        %v5248 = vpack.c.b16 %v5216, %v5216
        %v5249 = vpack.c.b16 %v5217, %v5217
        %v5250 = vpack.c.b16 %v5218, %v5218
        %v5251 = vpack.c.b16 %v5219, %v5219
        %v5252 = vpack.c.b16 %v5220, %v5220
        %v5253 = vpack.c.b16 %v5221, %v5221
        %v5254 = vpack.c.b16 %v5222, %v5222
        %v5255 = vpack.c.b16 %v5223, %v5223
        %v5256 = vpack.c.b16 %v5224, %v5224
        %v5257 = vpack.c.b16 %v5225, %v5225
        %5290 = vst [vmem:[#allocation3 + $0xc] sm:$0xf] %v5226
        %5291 = vst [vmem:[#allocation3 + $0x30] sm:$0xf] %v5227
        %5292 = vst [vmem:[#allocation3 + $0x54] sm:$0xf] %v5228
        %5293 = vst [vmem:[#allocation3 + $0x78] sm:$0xf] %v5229
        %5294 = vst [vmem:[#allocation3 + $0x9c] sm:$0xf] %v5230
        %5295 = vst [vmem:[#allocation3 + $0xc0] sm:$0xf] %v5231
        %5296 = vst [vmem:[#allocation3 + $0xe4] sm:$0xf] %v5232
        %5297 = vst [vmem:[#allocation3 + $0x108] sm:$0xf] %v5233
        %5298 = vst [vmem:[#allocation3 + $0x12c] sm:$0xf] %v5234
        %5299 = vst [vmem:[#allocation3 + $0x150] sm:$0xf] %v5235
        %5300 = vst [vmem:[#allocation3 + $0x174] sm:$0xf] %v5236
        %5301 = vst [vmem:[#allocation3 + $0x198] sm:$0xf] %v5237
        %5302 = vst [vmem:[#allocation3 + $0x1bc] sm:$0xf] %v5238
        %5303 = vst [vmem:[#allocation3 + $0x1e0] sm:$0xf] %v5239
        %5304 = vst [vmem:[#allocation3 + $0x204] sm:$0xf] %v5240
        %5305 = vst [vmem:[#allocation3 + $0x228] sm:$0xf] %v5241
        %5306 = vst [vmem:[#allocation3 + $0x24c] sm:$0xf] %v5242
        %5307 = vst [vmem:[#allocation3 + $0x270] sm:$0xf] %v5243
        %5308 = vst [vmem:[#allocation3 + $0x294] sm:$0xf] %v5244
        %5309 = vst [vmem:[#allocation3 + $0x2b8] sm:$0xf] %v5245
        %5310 = vst [vmem:[#allocation3 + $0x2dc] sm:$0xf] %v5246
        %5311 = vst [vmem:[#allocation3 + $0x300] sm:$0xf] %v5247
        %5312 = vst [vmem:[#allocation3 + $0x324] sm:$0xf] %v5248
        %5313 = vst [vmem:[#allocation3 + $0x348] sm:$0xf] %v5249
        %5314 = vst [vmem:[#allocation3 + $0x36c] sm:$0xf] %v5250
        %5315 = vst [vmem:[#allocation3 + $0x390] sm:$0xf] %v5251
        %5316 = vst [vmem:[#allocation3 + $0x3b4] sm:$0xf] %v5252
        %5317 = vst [vmem:[#allocation3 + $0x3d8] sm:$0xf] %v5253
        %5318 = vst [vmem:[#allocation3 + $0x3fc] sm:$0xf] %v5254
        %5319 = vst [vmem:[#allocation3 + $0x420] sm:$0xf] %v5255
        %5320 = vst [vmem:[#allocation3 + $0x444] sm:$0xf] %v5256
        %5321 = vst [vmem:[#allocation3 + $0x468] sm:$0xf] %v5257
        %v5322 = vld [vmem:[%s348 + $0x1] sm:$0xff]
        %v5323 = vld [vmem:[%s348 + $0x9] sm:$0xff]
        %v5324 = vld [vmem:[%s348 + $0x19] sm:$0xff]
        %v5325 = vld [vmem:[%s348 + $0x21] sm:$0xff]
        %v5326 = vld [vmem:[%s348 + $0x31] sm:$0xff]
        %v5327 = vld [vmem:[%s348 + $0x39] sm:$0xff]
        %v5328 = vld [vmem:[%s348 + $0x49] sm:$0xff]
        %v5329 = vld [vmem:[%s348 + $0x51] sm:$0xff]
        %v5330 = vld [vmem:[%s348 + $0x61] sm:$0xff]
        %v5331 = vld [vmem:[%s348 + $0x69] sm:$0xff]
        %v5332 = vld [vmem:[%s348 + $0x79] sm:$0xff]
        %v5333 = vld [vmem:[%s348 + $0x81] sm:$0xff]
        %v5334 = vld [vmem:[%s348 + $0x91] sm:$0xff]
        %v5335 = vld [vmem:[%s348 + $0x99] sm:$0xff]
        %v5336 = vld [vmem:[%s348 + $0xa9] sm:$0xff]
        %v5337 = vld [vmem:[%s348 + $0xb1] sm:$0xff]
        %v5338 = vld [vmem:[%s348 + $0xc1] sm:$0xff]
        %v5339 = vld [vmem:[%s348 + $0xc9] sm:$0xff]
        %v5340 = vld [vmem:[%s348 + $0xd9] sm:$0xff]
        %v5341 = vld [vmem:[%s348 + $0xe1] sm:$0xff]
        %v5342 = vld [vmem:[%s348 + $0xf1] sm:$0xff]
        %v5343 = vld [vmem:[%s348 + $0xf9] sm:$0xff]
        %v5344 = vld [vmem:[%s348 + $0x109] sm:$0xff]
        %v5345 = vld [vmem:[%s348 + $0x111] sm:$0xff]
        %v5346 = vld [vmem:[%s348 + $0x121] sm:$0xff]
        %v5347 = vld [vmem:[%s348 + $0x129] sm:$0xff]
        %v5348 = vld [vmem:[%s348 + $0x139] sm:$0xff]
        %v5349 = vld [vmem:[%s348 + $0x141] sm:$0xff]
        %v5350 = vld [vmem:[%s348 + $0x151] sm:$0xff]
        %v5351 = vld [vmem:[%s348 + $0x159] sm:$0xff]
        %v5352 = vld [vmem:[%s348 + $0x169] sm:$0xff]
        %v5353 = vld [vmem:[%s348 + $0x171] sm:$0xff]
        %v5354 = vpack.c.bf16 %v5323, %v5322
        %v5355 = vpack.c.bf16 %v5325, %v5324
        %v5356 = vpack.c.bf16 %v5327, %v5326
        %v5357 = vpack.c.bf16 %v5329, %v5328
        %v5358 = vpack.c.bf16 %v5331, %v5330
        %v5359 = vpack.c.bf16 %v5333, %v5332
        %v5360 = vpack.c.bf16 %v5335, %v5334
        %v5361 = vpack.c.bf16 %v5337, %v5336
        %v5362 = vpack.c.bf16 %v5339, %v5338
        %v5363 = vpack.c.bf16 %v5341, %v5340
        %v5364 = vpack.c.bf16 %v5343, %v5342
        %v5365 = vpack.c.bf16 %v5345, %v5344
        %v5366 = vpack.c.bf16 %v5347, %v5346
        %v5367 = vpack.c.bf16 %v5349, %v5348
        %v5368 = vpack.c.bf16 %v5351, %v5350
        %v5369 = vpack.c.bf16 %v5353, %v5352
        %v5386 = vunpack.c.l.b16 %v5354
        %v5387 = vunpack.c.h.b16 %v5354
        %v5388 = vunpack.c.l.b16 %v5355
        %v5389 = vunpack.c.h.b16 %v5355
        %v5390 = vunpack.c.l.b16 %v5356
        %v5391 = vunpack.c.h.b16 %v5356
        %v5392 = vunpack.c.l.b16 %v5357
        %v5393 = vunpack.c.h.b16 %v5357
        %v5394 = vunpack.c.l.b16 %v5358
        %v5395 = vunpack.c.h.b16 %v5358
        %v5396 = vunpack.c.l.b16 %v5359
        %v5397 = vunpack.c.h.b16 %v5359
        %v5398 = vunpack.c.l.b16 %v5360
        %v5399 = vunpack.c.h.b16 %v5360
        %v5400 = vunpack.c.l.b16 %v5361
        %v5401 = vunpack.c.h.b16 %v5361
        %v5402 = vunpack.c.l.b16 %v5362
        %v5403 = vunpack.c.h.b16 %v5362
        %v5404 = vunpack.c.l.b16 %v5363
        %v5405 = vunpack.c.h.b16 %v5363
        %v5406 = vunpack.c.l.b16 %v5364
        %v5407 = vunpack.c.h.b16 %v5364
        %v5408 = vunpack.c.l.b16 %v5365
        %v5409 = vunpack.c.h.b16 %v5365
        %v5410 = vunpack.c.l.b16 %v5366
        %v5411 = vunpack.c.h.b16 %v5366
        %v5412 = vunpack.c.l.b16 %v5367
        %v5413 = vunpack.c.h.b16 %v5367
        %v5414 = vunpack.c.l.b16 %v5368
        %v5415 = vunpack.c.h.b16 %v5368
        %v5416 = vunpack.c.l.b16 %v5369
        %v5417 = vunpack.c.h.b16 %v5369
        %v5418 = vpack.c.b16 %v5386, %v5386
        %v5419 = vpack.c.b16 %v5387, %v5387
        %v5420 = vpack.c.b16 %v5388, %v5388
        %v5421 = vpack.c.b16 %v5389, %v5389
        %v5422 = vpack.c.b16 %v5390, %v5390
        %v5423 = vpack.c.b16 %v5391, %v5391
        %v5424 = vpack.c.b16 %v5392, %v5392
        %v5425 = vpack.c.b16 %v5393, %v5393
        %v5426 = vpack.c.b16 %v5394, %v5394
        %v5427 = vpack.c.b16 %v5395, %v5395
        %v5428 = vpack.c.b16 %v5396, %v5396
        %v5429 = vpack.c.b16 %v5397, %v5397
        %v5430 = vpack.c.b16 %v5398, %v5398
        %v5431 = vpack.c.b16 %v5399, %v5399
        %v5432 = vpack.c.b16 %v5400, %v5400
        %v5433 = vpack.c.b16 %v5401, %v5401
        %v5434 = vpack.c.b16 %v5402, %v5402
        %v5435 = vpack.c.b16 %v5403, %v5403
        %v5436 = vpack.c.b16 %v5404, %v5404
        %v5437 = vpack.c.b16 %v5405, %v5405
        %v5438 = vpack.c.b16 %v5406, %v5406
        %v5439 = vpack.c.b16 %v5407, %v5407
        %v5440 = vpack.c.b16 %v5408, %v5408
        %v5441 = vpack.c.b16 %v5409, %v5409
        %v5442 = vpack.c.b16 %v5410, %v5410
        %v5443 = vpack.c.b16 %v5411, %v5411
        %v5444 = vpack.c.b16 %v5412, %v5412
        %v5445 = vpack.c.b16 %v5413, %v5413
        %v5446 = vpack.c.b16 %v5414, %v5414
        %v5447 = vpack.c.b16 %v5415, %v5415
        %v5448 = vpack.c.b16 %v5416, %v5416
        %v5449 = vpack.c.b16 %v5417, %v5417
        %5482 = vst [vmem:[#allocation3 + $0x10] sm:$0xf] %v5418
        %5483 = vst [vmem:[#allocation3 + $0x34] sm:$0xf] %v5419
        %5484 = vst [vmem:[#allocation3 + $0x58] sm:$0xf] %v5420
        %5485 = vst [vmem:[#allocation3 + $0x7c] sm:$0xf] %v5421
        %5486 = vst [vmem:[#allocation3 + $0xa0] sm:$0xf] %v5422
        %5487 = vst [vmem:[#allocation3 + $0xc4] sm:$0xf] %v5423
        %5488 = vst [vmem:[#allocation3 + $0xe8] sm:$0xf] %v5424
        %5489 = vst [vmem:[#allocation3 + $0x10c] sm:$0xf] %v5425
        %5490 = vst [vmem:[#allocation3 + $0x130] sm:$0xf] %v5426
        %5491 = vst [vmem:[#allocation3 + $0x154] sm:$0xf] %v5427
        %5492 = vst [vmem:[#allocation3 + $0x178] sm:$0xf] %v5428
        %5493 = vst [vmem:[#allocation3 + $0x19c] sm:$0xf] %v5429
        %5494 = vst [vmem:[#allocation3 + $0x1c0] sm:$0xf] %v5430
        %5495 = vst [vmem:[#allocation3 + $0x1e4] sm:$0xf] %v5431
        %5496 = vst [vmem:[#allocation3 + $0x208] sm:$0xf] %v5432
        %5497 = vst [vmem:[#allocation3 + $0x22c] sm:$0xf] %v5433
        %5498 = vst [vmem:[#allocation3 + $0x250] sm:$0xf] %v5434
        %5499 = vst [vmem:[#allocation3 + $0x274] sm:$0xf] %v5435
        %5500 = vst [vmem:[#allocation3 + $0x298] sm:$0xf] %v5436
        %5501 = vst [vmem:[#allocation3 + $0x2bc] sm:$0xf] %v5437
        %5502 = vst [vmem:[#allocation3 + $0x2e0] sm:$0xf] %v5438
        %5503 = vst [vmem:[#allocation3 + $0x304] sm:$0xf] %v5439
        %5504 = vst [vmem:[#allocation3 + $0x328] sm:$0xf] %v5440
        %5505 = vst [vmem:[#allocation3 + $0x34c] sm:$0xf] %v5441
        %5506 = vst [vmem:[#allocation3 + $0x370] sm:$0xf] %v5442
        %5507 = vst [vmem:[#allocation3 + $0x394] sm:$0xf] %v5443
        %5508 = vst [vmem:[#allocation3 + $0x3b8] sm:$0xf] %v5444
        %5509 = vst [vmem:[#allocation3 + $0x3dc] sm:$0xf] %v5445
        %5510 = vst [vmem:[#allocation3 + $0x400] sm:$0xf] %v5446
        %5511 = vst [vmem:[#allocation3 + $0x424] sm:$0xf] %v5447
        %5512 = vst [vmem:[#allocation3 + $0x448] sm:$0xf] %v5448
        %5513 = vst [vmem:[#allocation3 + $0x46c] sm:$0xf] %v5449
        %v5514 = vld [vmem:[%s348 + $0x2] sm:$0xff]
        %v5515 = vld [vmem:[%s348 + $0xa] sm:$0xff]
        %v5516 = vld [vmem:[%s348 + $0x1a] sm:$0xff]
        %v5517 = vld [vmem:[%s348 + $0x22] sm:$0xff]
        %v5518 = vld [vmem:[%s348 + $0x32] sm:$0xff]
        %v5519 = vld [vmem:[%s348 + $0x3a] sm:$0xff]
        %v5520 = vld [vmem:[%s348 + $0x4a] sm:$0xff]
        %v5521 = vld [vmem:[%s348 + $0x52] sm:$0xff]
        %v5522 = vld [vmem:[%s348 + $0x62] sm:$0xff]
        %v5523 = vld [vmem:[%s348 + $0x6a] sm:$0xff]
        %v5524 = vld [vmem:[%s348 + $0x7a] sm:$0xff]
        %v5525 = vld [vmem:[%s348 + $0x82] sm:$0xff]
        %v5526 = vld [vmem:[%s348 + $0x92] sm:$0xff]
        %v5527 = vld [vmem:[%s348 + $0x9a] sm:$0xff]
        %v5528 = vld [vmem:[%s348 + $0xaa] sm:$0xff]
        %v5529 = vld [vmem:[%s348 + $0xb2] sm:$0xff]
        %v5530 = vld [vmem:[%s348 + $0xc2] sm:$0xff]
        %v5531 = vld [vmem:[%s348 + $0xca] sm:$0xff]
        %v5532 = vld [vmem:[%s348 + $0xda] sm:$0xff]
        %v5533 = vld [vmem:[%s348 + $0xe2] sm:$0xff]
        %v5534 = vld [vmem:[%s348 + $0xf2] sm:$0xff]
        %v5535 = vld [vmem:[%s348 + $0xfa] sm:$0xff]
        %v5536 = vld [vmem:[%s348 + $0x10a] sm:$0xff]
        %v5537 = vld [vmem:[%s348 + $0x112] sm:$0xff]
        %v5538 = vld [vmem:[%s348 + $0x122] sm:$0xff]
        %v5539 = vld [vmem:[%s348 + $0x12a] sm:$0xff]
        %v5540 = vld [vmem:[%s348 + $0x13a] sm:$0xff]
        %v5541 = vld [vmem:[%s348 + $0x142] sm:$0xff]
        %v5542 = vld [vmem:[%s348 + $0x152] sm:$0xff]
        %v5543 = vld [vmem:[%s348 + $0x15a] sm:$0xff]
        %v5544 = vld [vmem:[%s348 + $0x16a] sm:$0xff]
        %v5545 = vld [vmem:[%s348 + $0x172] sm:$0xff]
        %v5546 = vpack.c.bf16 %v5515, %v5514
        %v5547 = vpack.c.bf16 %v5517, %v5516
        %v5548 = vpack.c.bf16 %v5519, %v5518
        %v5549 = vpack.c.bf16 %v5521, %v5520
        %v5550 = vpack.c.bf16 %v5523, %v5522
        %v5551 = vpack.c.bf16 %v5525, %v5524
        %v5552 = vpack.c.bf16 %v5527, %v5526
        %v5553 = vpack.c.bf16 %v5529, %v5528
        %v5554 = vpack.c.bf16 %v5531, %v5530
        %v5555 = vpack.c.bf16 %v5533, %v5532
        %v5556 = vpack.c.bf16 %v5535, %v5534
        %v5557 = vpack.c.bf16 %v5537, %v5536
        %v5558 = vpack.c.bf16 %v5539, %v5538
        %v5559 = vpack.c.bf16 %v5541, %v5540
        %v5560 = vpack.c.bf16 %v5543, %v5542
        %v5561 = vpack.c.bf16 %v5545, %v5544
        %v5578 = vunpack.c.l.b16 %v5546
        %v5579 = vunpack.c.h.b16 %v5546
        %v5580 = vunpack.c.l.b16 %v5547
        %v5581 = vunpack.c.h.b16 %v5547
        %v5582 = vunpack.c.l.b16 %v5548
        %v5583 = vunpack.c.h.b16 %v5548
        %v5584 = vunpack.c.l.b16 %v5549
        %v5585 = vunpack.c.h.b16 %v5549
        %v5586 = vunpack.c.l.b16 %v5550
        %v5587 = vunpack.c.h.b16 %v5550
        %v5588 = vunpack.c.l.b16 %v5551
        %v5589 = vunpack.c.h.b16 %v5551
        %v5590 = vunpack.c.l.b16 %v5552
        %v5591 = vunpack.c.h.b16 %v5552
        %v5592 = vunpack.c.l.b16 %v5553
        %v5593 = vunpack.c.h.b16 %v5553
        %v5594 = vunpack.c.l.b16 %v5554
        %v5595 = vunpack.c.h.b16 %v5554
        %v5596 = vunpack.c.l.b16 %v5555
        %v5597 = vunpack.c.h.b16 %v5555
        %v5598 = vunpack.c.l.b16 %v5556
        %v5599 = vunpack.c.h.b16 %v5556
        %v5600 = vunpack.c.l.b16 %v5557
        %v5601 = vunpack.c.h.b16 %v5557
        %v5602 = vunpack.c.l.b16 %v5558
        %v5603 = vunpack.c.h.b16 %v5558
        %v5604 = vunpack.c.l.b16 %v5559
        %v5605 = vunpack.c.h.b16 %v5559
        %v5606 = vunpack.c.l.b16 %v5560
        %v5607 = vunpack.c.h.b16 %v5560
        %v5608 = vunpack.c.l.b16 %v5561
        %v5609 = vunpack.c.h.b16 %v5561
        %v5610 = vpack.c.b16 %v5578, %v5578
        %v5611 = vpack.c.b16 %v5579, %v5579
        %v5612 = vpack.c.b16 %v5580, %v5580
        %v5613 = vpack.c.b16 %v5581, %v5581
        %v5614 = vpack.c.b16 %v5582, %v5582
        %v5615 = vpack.c.b16 %v5583, %v5583
        %v5616 = vpack.c.b16 %v5584, %v5584
        %v5617 = vpack.c.b16 %v5585, %v5585
        %v5618 = vpack.c.b16 %v5586, %v5586
        %v5619 = vpack.c.b16 %v5587, %v5587
        %v5620 = vpack.c.b16 %v5588, %v5588
        %v5621 = vpack.c.b16 %v5589, %v5589
        %v5622 = vpack.c.b16 %v5590, %v5590
        %v5623 = vpack.c.b16 %v5591, %v5591
        %v5624 = vpack.c.b16 %v5592, %v5592
        %v5625 = vpack.c.b16 %v5593, %v5593
        %v5626 = vpack.c.b16 %v5594, %v5594
        %v5627 = vpack.c.b16 %v5595, %v5595
        %v5628 = vpack.c.b16 %v5596, %v5596
        %v5629 = vpack.c.b16 %v5597, %v5597
        %v5630 = vpack.c.b16 %v5598, %v5598
        %v5631 = vpack.c.b16 %v5599, %v5599
        %v5632 = vpack.c.b16 %v5600, %v5600
        %v5633 = vpack.c.b16 %v5601, %v5601
        %v5634 = vpack.c.b16 %v5602, %v5602
        %v5635 = vpack.c.b16 %v5603, %v5603
        %v5636 = vpack.c.b16 %v5604, %v5604
        %v5637 = vpack.c.b16 %v5605, %v5605
        %v5638 = vpack.c.b16 %v5606, %v5606
        %v5639 = vpack.c.b16 %v5607, %v5607
        %v5640 = vpack.c.b16 %v5608, %v5608
        %v5641 = vpack.c.b16 %v5609, %v5609
        %5674 = vst [vmem:[#allocation3 + $0x14] sm:$0xf] %v5610
        %5675 = vst [vmem:[#allocation3 + $0x38] sm:$0xf] %v5611
        %5676 = vst [vmem:[#allocation3 + $0x5c] sm:$0xf] %v5612
        %5677 = vst [vmem:[#allocation3 + $0x80] sm:$0xf] %v5613
        %5678 = vst [vmem:[#allocation3 + $0xa4] sm:$0xf] %v5614
        %5679 = vst [vmem:[#allocation3 + $0xc8] sm:$0xf] %v5615
        %5680 = vst [vmem:[#allocation3 + $0xec] sm:$0xf] %v5616
        %5681 = vst [vmem:[#allocation3 + $0x110] sm:$0xf] %v5617
        %5682 = vst [vmem:[#allocation3 + $0x134] sm:$0xf] %v5618
        %5683 = vst [vmem:[#allocation3 + $0x158] sm:$0xf] %v5619
        %5684 = vst [vmem:[#allocation3 + $0x17c] sm:$0xf] %v5620
        %5685 = vst [vmem:[#allocation3 + $0x1a0] sm:$0xf] %v5621
        %5686 = vst [vmem:[#allocation3 + $0x1c4] sm:$0xf] %v5622
        %5687 = vst [vmem:[#allocation3 + $0x1e8] sm:$0xf] %v5623
        %5688 = vst [vmem:[#allocation3 + $0x20c] sm:$0xf] %v5624
        %5689 = vst [vmem:[#allocation3 + $0x230] sm:$0xf] %v5625
        %5690 = vst [vmem:[#allocation3 + $0x254] sm:$0xf] %v5626
        %5691 = vst [vmem:[#allocation3 + $0x278] sm:$0xf] %v5627
        %5692 = vst [vmem:[#allocation3 + $0x29c] sm:$0xf] %v5628
        %5693 = vst [vmem:[#allocation3 + $0x2c0] sm:$0xf] %v5629
        %5694 = vst [vmem:[#allocation3 + $0x2e4] sm:$0xf] %v5630
        %5695 = vst [vmem:[#allocation3 + $0x308] sm:$0xf] %v5631
        %5696 = vst [vmem:[#allocation3 + $0x32c] sm:$0xf] %v5632
        %5697 = vst [vmem:[#allocation3 + $0x350] sm:$0xf] %v5633
        %5698 = vst [vmem:[#allocation3 + $0x374] sm:$0xf] %v5634
        %5699 = vst [vmem:[#allocation3 + $0x398] sm:$0xf] %v5635
        %5700 = vst [vmem:[#allocation3 + $0x3bc] sm:$0xf] %v5636
        %5701 = vst [vmem:[#allocation3 + $0x3e0] sm:$0xf] %v5637
        %5702 = vst [vmem:[#allocation3 + $0x404] sm:$0xf] %v5638
        %5703 = vst [vmem:[#allocation3 + $0x428] sm:$0xf] %v5639
        %5704 = vst [vmem:[#allocation3 + $0x44c] sm:$0xf] %v5640
        %5705 = vst [vmem:[#allocation3 + $0x470] sm:$0xf] %v5641
        %v5706 = vld [vmem:[%s1533] sm:$0xff]
        %v5707 = vld [vmem:[%s1533 + $0x8] sm:$0xff]
        %v5708 = vld [vmem:[%s1533 + $0x18] sm:$0xff]
        %v5709 = vld [vmem:[%s1533 + $0x20] sm:$0xff]
        %v5710 = vld [vmem:[%s1533 + $0x30] sm:$0xff]
        %v5711 = vld [vmem:[%s1533 + $0x38] sm:$0xff]
        %v5712 = vld [vmem:[%s1533 + $0x48] sm:$0xff]
        %v5713 = vld [vmem:[%s1533 + $0x50] sm:$0xff]
        %v5714 = vld [vmem:[%s1533 + $0x60] sm:$0xff]
        %v5715 = vld [vmem:[%s1533 + $0x68] sm:$0xff]
        %v5716 = vld [vmem:[%s1533 + $0x78] sm:$0xff]
        %v5717 = vld [vmem:[%s1533 + $0x80] sm:$0xff]
        %v5718 = vld [vmem:[%s1533 + $0x90] sm:$0xff]
        %v5719 = vld [vmem:[%s1533 + $0x98] sm:$0xff]
        %v5720 = vld [vmem:[%s1533 + $0xa8] sm:$0xff]
        %v5721 = vld [vmem:[%s1533 + $0xb0] sm:$0xff]
        %v5722 = vld [vmem:[%s1533 + $0xc0] sm:$0xff]
        %v5723 = vld [vmem:[%s1533 + $0xc8] sm:$0xff]
        %v5724 = vld [vmem:[%s1533 + $0xd8] sm:$0xff]
        %v5725 = vld [vmem:[%s1533 + $0xe0] sm:$0xff]
        %v5726 = vld [vmem:[%s1533 + $0xf0] sm:$0xff]
        %v5727 = vld [vmem:[%s1533 + $0xf8] sm:$0xff]
        %v5728 = vld [vmem:[%s1533 + $0x108] sm:$0xff]
        %v5729 = vld [vmem:[%s1533 + $0x110] sm:$0xff]
        %v5730 = vld [vmem:[%s1533 + $0x120] sm:$0xff]
        %v5731 = vld [vmem:[%s1533 + $0x128] sm:$0xff]
        %v5732 = vld [vmem:[%s1533 + $0x138] sm:$0xff]
        %v5733 = vld [vmem:[%s1533 + $0x140] sm:$0xff]
        %v5734 = vld [vmem:[%s1533 + $0x150] sm:$0xff]
        %v5735 = vld [vmem:[%s1533 + $0x158] sm:$0xff]
        %v5736 = vld [vmem:[%s1533 + $0x168] sm:$0xff]
        %v5737 = vld [vmem:[%s1533 + $0x170] sm:$0xff]
        %v5738 = vpack.c.bf16 %v5707, %v5706
        %v5739 = vpack.c.bf16 %v5709, %v5708
        %v5740 = vpack.c.bf16 %v5711, %v5710
        %v5741 = vpack.c.bf16 %v5713, %v5712
        %v5742 = vpack.c.bf16 %v5715, %v5714
        %v5743 = vpack.c.bf16 %v5717, %v5716
        %v5744 = vpack.c.bf16 %v5719, %v5718
        %v5745 = vpack.c.bf16 %v5721, %v5720
        %v5746 = vpack.c.bf16 %v5723, %v5722
        %v5747 = vpack.c.bf16 %v5725, %v5724
        %v5748 = vpack.c.bf16 %v5727, %v5726
        %v5749 = vpack.c.bf16 %v5729, %v5728
        %v5750 = vpack.c.bf16 %v5731, %v5730
        %v5751 = vpack.c.bf16 %v5733, %v5732
        %v5752 = vpack.c.bf16 %v5735, %v5734
        %v5753 = vpack.c.bf16 %v5737, %v5736
        %v5770 = vunpack.c.l.b16 %v5738
        %v5771 = vunpack.c.h.b16 %v5738
        %v5772 = vunpack.c.l.b16 %v5739
        %v5773 = vunpack.c.h.b16 %v5739
        %v5774 = vunpack.c.l.b16 %v5740
        %v5775 = vunpack.c.h.b16 %v5740
        %v5776 = vunpack.c.l.b16 %v5741
        %v5777 = vunpack.c.h.b16 %v5741
        %v5778 = vunpack.c.l.b16 %v5742
        %v5779 = vunpack.c.h.b16 %v5742
        %v5780 = vunpack.c.l.b16 %v5743
        %v5781 = vunpack.c.h.b16 %v5743
        %v5782 = vunpack.c.l.b16 %v5744
        %v5783 = vunpack.c.h.b16 %v5744
        %v5784 = vunpack.c.l.b16 %v5745
        %v5785 = vunpack.c.h.b16 %v5745
        %v5786 = vunpack.c.l.b16 %v5746
        %v5787 = vunpack.c.h.b16 %v5746
        %v5788 = vunpack.c.l.b16 %v5747
        %v5789 = vunpack.c.h.b16 %v5747
        %v5790 = vunpack.c.l.b16 %v5748
        %v5791 = vunpack.c.h.b16 %v5748
        %v5792 = vunpack.c.l.b16 %v5749
        %v5793 = vunpack.c.h.b16 %v5749
        %v5794 = vunpack.c.l.b16 %v5750
        %v5795 = vunpack.c.h.b16 %v5750
        %v5796 = vunpack.c.l.b16 %v5751
        %v5797 = vunpack.c.h.b16 %v5751
        %v5798 = vunpack.c.l.b16 %v5752
        %v5799 = vunpack.c.h.b16 %v5752
        %v5800 = vunpack.c.l.b16 %v5753
        %v5801 = vunpack.c.h.b16 %v5753
        %v5802 = vpack.c.b16 %v5770, %v5770
        %v5803 = vpack.c.b16 %v5771, %v5771
        %v5804 = vpack.c.b16 %v5772, %v5772
        %v5805 = vpack.c.b16 %v5773, %v5773
        %v5806 = vpack.c.b16 %v5774, %v5774
        %v5807 = vpack.c.b16 %v5775, %v5775
        %v5808 = vpack.c.b16 %v5776, %v5776
        %v5809 = vpack.c.b16 %v5777, %v5777
        %v5810 = vpack.c.b16 %v5778, %v5778
        %v5811 = vpack.c.b16 %v5779, %v5779
        %v5812 = vpack.c.b16 %v5780, %v5780
        %v5813 = vpack.c.b16 %v5781, %v5781
        %v5814 = vpack.c.b16 %v5782, %v5782
        %v5815 = vpack.c.b16 %v5783, %v5783
        %v5816 = vpack.c.b16 %v5784, %v5784
        %v5817 = vpack.c.b16 %v5785, %v5785
        %v5818 = vpack.c.b16 %v5786, %v5786
        %v5819 = vpack.c.b16 %v5787, %v5787
        %v5820 = vpack.c.b16 %v5788, %v5788
        %v5821 = vpack.c.b16 %v5789, %v5789
        %v5822 = vpack.c.b16 %v5790, %v5790
        %v5823 = vpack.c.b16 %v5791, %v5791
        %v5824 = vpack.c.b16 %v5792, %v5792
        %v5825 = vpack.c.b16 %v5793, %v5793
        %v5826 = vpack.c.b16 %v5794, %v5794
        %v5827 = vpack.c.b16 %v5795, %v5795
        %v5828 = vpack.c.b16 %v5796, %v5796
        %v5829 = vpack.c.b16 %v5797, %v5797
        %v5830 = vpack.c.b16 %v5798, %v5798
        %v5831 = vpack.c.b16 %v5799, %v5799
        %v5832 = vpack.c.b16 %v5800, %v5800
        %v5833 = vpack.c.b16 %v5801, %v5801
        %5866 = vst [vmem:[#allocation3 + $0x18] sm:$0xf] %v5802
        %5867 = vst [vmem:[#allocation3 + $0x3c] sm:$0xf] %v5803
        %5868 = vst [vmem:[#allocation3 + $0x60] sm:$0xf] %v5804
        %5869 = vst [vmem:[#allocation3 + $0x84] sm:$0xf] %v5805
        %5870 = vst [vmem:[#allocation3 + $0xa8] sm:$0xf] %v5806
        %5871 = vst [vmem:[#allocation3 + $0xcc] sm:$0xf] %v5807
        %5872 = vst [vmem:[#allocation3 + $0xf0] sm:$0xf] %v5808
        %5873 = vst [vmem:[#allocation3 + $0x114] sm:$0xf] %v5809
        %5874 = vst [vmem:[#allocation3 + $0x138] sm:$0xf] %v5810
        %5875 = vst [vmem:[#allocation3 + $0x15c] sm:$0xf] %v5811
        %5876 = vst [vmem:[#allocation3 + $0x180] sm:$0xf] %v5812
        %5877 = vst [vmem:[#allocation3 + $0x1a4] sm:$0xf] %v5813
        %5878 = vst [vmem:[#allocation3 + $0x1c8] sm:$0xf] %v5814
        %5879 = vst [vmem:[#allocation3 + $0x1ec] sm:$0xf] %v5815
        %5880 = vst [vmem:[#allocation3 + $0x210] sm:$0xf] %v5816
        %5881 = vst [vmem:[#allocation3 + $0x234] sm:$0xf] %v5817
        %5882 = vst [vmem:[#allocation3 + $0x258] sm:$0xf] %v5818
        %5883 = vst [vmem:[#allocation3 + $0x27c] sm:$0xf] %v5819
        %5884 = vst [vmem:[#allocation3 + $0x2a0] sm:$0xf] %v5820
        %5885 = vst [vmem:[#allocation3 + $0x2c4] sm:$0xf] %v5821
        %5886 = vst [vmem:[#allocation3 + $0x2e8] sm:$0xf] %v5822
        %5887 = vst [vmem:[#allocation3 + $0x30c] sm:$0xf] %v5823
        %5888 = vst [vmem:[#allocation3 + $0x330] sm:$0xf] %v5824
        %5889 = vst [vmem:[#allocation3 + $0x354] sm:$0xf] %v5825
        %5890 = vst [vmem:[#allocation3 + $0x378] sm:$0xf] %v5826
        %5891 = vst [vmem:[#allocation3 + $0x39c] sm:$0xf] %v5827
        %5892 = vst [vmem:[#allocation3 + $0x3c0] sm:$0xf] %v5828
        %5893 = vst [vmem:[#allocation3 + $0x3e4] sm:$0xf] %v5829
        %5894 = vst [vmem:[#allocation3 + $0x408] sm:$0xf] %v5830
        %5895 = vst [vmem:[#allocation3 + $0x42c] sm:$0xf] %v5831
        %5896 = vst [vmem:[#allocation3 + $0x450] sm:$0xf] %v5832
        %5897 = vst [vmem:[#allocation3 + $0x474] sm:$0xf] %v5833
        %v5898 = vld [vmem:[%s1533 + $0x1] sm:$0xff]
        %v5899 = vld [vmem:[%s1533 + $0x9] sm:$0xff]
        %v5900 = vld [vmem:[%s1533 + $0x19] sm:$0xff]
        %v5901 = vld [vmem:[%s1533 + $0x21] sm:$0xff]
        %v5902 = vld [vmem:[%s1533 + $0x31] sm:$0xff]
        %v5903 = vld [vmem:[%s1533 + $0x39] sm:$0xff]
        %v5904 = vld [vmem:[%s1533 + $0x49] sm:$0xff]
        %v5905 = vld [vmem:[%s1533 + $0x51] sm:$0xff]
        %v5906 = vld [vmem:[%s1533 + $0x61] sm:$0xff]
        %v5907 = vld [vmem:[%s1533 + $0x69] sm:$0xff]
        %v5908 = vld [vmem:[%s1533 + $0x79] sm:$0xff]
        %v5909 = vld [vmem:[%s1533 + $0x81] sm:$0xff]
        %v5910 = vld [vmem:[%s1533 + $0x91] sm:$0xff]
        %v5911 = vld [vmem:[%s1533 + $0x99] sm:$0xff]
        %v5912 = vld [vmem:[%s1533 + $0xa9] sm:$0xff]
        %v5913 = vld [vmem:[%s1533 + $0xb1] sm:$0xff]
        %v5914 = vld [vmem:[%s1533 + $0xc1] sm:$0xff]
        %v5915 = vld [vmem:[%s1533 + $0xc9] sm:$0xff]
        %v5916 = vld [vmem:[%s1533 + $0xd9] sm:$0xff]
        %v5917 = vld [vmem:[%s1533 + $0xe1] sm:$0xff]
        %v5918 = vld [vmem:[%s1533 + $0xf1] sm:$0xff]
        %v5919 = vld [vmem:[%s1533 + $0xf9] sm:$0xff]
        %v5920 = vld [vmem:[%s1533 + $0x109] sm:$0xff]
        %v5921 = vld [vmem:[%s1533 + $0x111] sm:$0xff]
        %v5922 = vld [vmem:[%s1533 + $0x121] sm:$0xff]
        %v5923 = vld [vmem:[%s1533 + $0x129] sm:$0xff]
        %v5924 = vld [vmem:[%s1533 + $0x139] sm:$0xff]
        %v5925 = vld [vmem:[%s1533 + $0x141] sm:$0xff]
        %v5926 = vld [vmem:[%s1533 + $0x151] sm:$0xff]
        %v5927 = vld [vmem:[%s1533 + $0x159] sm:$0xff]
        %v5928 = vld [vmem:[%s1533 + $0x169] sm:$0xff]
        %v5929 = vld [vmem:[%s1533 + $0x171] sm:$0xff]
        %v5930 = vpack.c.bf16 %v5899, %v5898
        %v5931 = vpack.c.bf16 %v5901, %v5900
        %v5932 = vpack.c.bf16 %v5903, %v5902
        %v5933 = vpack.c.bf16 %v5905, %v5904
        %v5934 = vpack.c.bf16 %v5907, %v5906
        %v5935 = vpack.c.bf16 %v5909, %v5908
        %v5936 = vpack.c.bf16 %v5911, %v5910
        %v5937 = vpack.c.bf16 %v5913, %v5912
        %v5938 = vpack.c.bf16 %v5915, %v5914
        %v5939 = vpack.c.bf16 %v5917, %v5916
        %v5940 = vpack.c.bf16 %v5919, %v5918
        %v5941 = vpack.c.bf16 %v5921, %v5920
        %v5942 = vpack.c.bf16 %v5923, %v5922
        %v5943 = vpack.c.bf16 %v5925, %v5924
        %v5944 = vpack.c.bf16 %v5927, %v5926
        %v5945 = vpack.c.bf16 %v5929, %v5928
        %v5962 = vunpack.c.l.b16 %v5930
        %v5963 = vunpack.c.h.b16 %v5930
        %v5964 = vunpack.c.l.b16 %v5931
        %v5965 = vunpack.c.h.b16 %v5931
        %v5966 = vunpack.c.l.b16 %v5932
        %v5967 = vunpack.c.h.b16 %v5932
        %v5968 = vunpack.c.l.b16 %v5933
        %v5969 = vunpack.c.h.b16 %v5933
        %v5970 = vunpack.c.l.b16 %v5934
        %v5971 = vunpack.c.h.b16 %v5934
        %v5972 = vunpack.c.l.b16 %v5935
        %v5973 = vunpack.c.h.b16 %v5935
        %v5974 = vunpack.c.l.b16 %v5936
        %v5975 = vunpack.c.h.b16 %v5936
        %v5976 = vunpack.c.l.b16 %v5937
        %v5977 = vunpack.c.h.b16 %v5937
        %v5978 = vunpack.c.l.b16 %v5938
        %v5979 = vunpack.c.h.b16 %v5938
        %v5980 = vunpack.c.l.b16 %v5939
        %v5981 = vunpack.c.h.b16 %v5939
        %v5982 = vunpack.c.l.b16 %v5940
        %v5983 = vunpack.c.h.b16 %v5940
        %v5984 = vunpack.c.l.b16 %v5941
        %v5985 = vunpack.c.h.b16 %v5941
        %v5986 = vunpack.c.l.b16 %v5942
        %v5987 = vunpack.c.h.b16 %v5942
        %v5988 = vunpack.c.l.b16 %v5943
        %v5989 = vunpack.c.h.b16 %v5943
        %v5990 = vunpack.c.l.b16 %v5944
        %v5991 = vunpack.c.h.b16 %v5944
        %v5992 = vunpack.c.l.b16 %v5945
        %v5993 = vunpack.c.h.b16 %v5945
        %v5994 = vpack.c.b16 %v5962, %v5962
        %v5995 = vpack.c.b16 %v5963, %v5963
        %v5996 = vpack.c.b16 %v5964, %v5964
        %v5997 = vpack.c.b16 %v5965, %v5965
        %v5998 = vpack.c.b16 %v5966, %v5966
        %v5999 = vpack.c.b16 %v5967, %v5967
        %v6000 = vpack.c.b16 %v5968, %v5968
        %v6001 = vpack.c.b16 %v5969, %v5969
        %v6002 = vpack.c.b16 %v5970, %v5970
        %v6003 = vpack.c.b16 %v5971, %v5971
        %v6004 = vpack.c.b16 %v5972, %v5972
        %v6005 = vpack.c.b16 %v5973, %v5973
        %v6006 = vpack.c.b16 %v5974, %v5974
        %v6007 = vpack.c.b16 %v5975, %v5975
        %v6008 = vpack.c.b16 %v5976, %v5976
        %v6009 = vpack.c.b16 %v5977, %v5977
        %v6010 = vpack.c.b16 %v5978, %v5978
        %v6011 = vpack.c.b16 %v5979, %v5979
        %v6012 = vpack.c.b16 %v5980, %v5980
        %v6013 = vpack.c.b16 %v5981, %v5981
        %v6014 = vpack.c.b16 %v5982, %v5982
        %v6015 = vpack.c.b16 %v5983, %v5983
        %v6016 = vpack.c.b16 %v5984, %v5984
        %v6017 = vpack.c.b16 %v5985, %v5985
        %v6018 = vpack.c.b16 %v5986, %v5986
        %v6019 = vpack.c.b16 %v5987, %v5987
        %v6020 = vpack.c.b16 %v5988, %v5988
        %v6021 = vpack.c.b16 %v5989, %v5989
        %v6022 = vpack.c.b16 %v5990, %v5990
        %v6023 = vpack.c.b16 %v5991, %v5991
        %v6024 = vpack.c.b16 %v5992, %v5992
        %v6025 = vpack.c.b16 %v5993, %v5993
        %6058 = vst [vmem:[#allocation3 + $0x1c] sm:$0xf] %v5994
        %6059 = vst [vmem:[#allocation3 + $0x40] sm:$0xf] %v5995
        %6060 = vst [vmem:[#allocation3 + $0x64] sm:$0xf] %v5996
        %6061 = vst [vmem:[#allocation3 + $0x88] sm:$0xf] %v5997
        %6062 = vst [vmem:[#allocation3 + $0xac] sm:$0xf] %v5998
        %6063 = vst [vmem:[#allocation3 + $0xd0] sm:$0xf] %v5999
        %6064 = vst [vmem:[#allocation3 + $0xf4] sm:$0xf] %v6000
        %6065 = vst [vmem:[#allocation3 + $0x118] sm:$0xf] %v6001
        %6066 = vst [vmem:[#allocation3 + $0x13c] sm:$0xf] %v6002
        %6067 = vst [vmem:[#allocation3 + $0x160] sm:$0xf] %v6003
        %6068 = vst [vmem:[#allocation3 + $0x184] sm:$0xf] %v6004
        %6069 = vst [vmem:[#allocation3 + $0x1a8] sm:$0xf] %v6005
        %6070 = vst [vmem:[#allocation3 + $0x1cc] sm:$0xf] %v6006
        %6071 = vst [vmem:[#allocation3 + $0x1f0] sm:$0xf] %v6007
        %6072 = vst [vmem:[#allocation3 + $0x214] sm:$0xf] %v6008
        %6073 = vst [vmem:[#allocation3 + $0x238] sm:$0xf] %v6009
        %6074 = vst [vmem:[#allocation3 + $0x25c] sm:$0xf] %v6010
        %6075 = vst [vmem:[#allocation3 + $0x280] sm:$0xf] %v6011
        %6076 = vst [vmem:[#allocation3 + $0x2a4] sm:$0xf] %v6012
        %6077 = vst [vmem:[#allocation3 + $0x2c8] sm:$0xf] %v6013
        %6078 = vst [vmem:[#allocation3 + $0x2ec] sm:$0xf] %v6014
        %6079 = vst [vmem:[#allocation3 + $0x310] sm:$0xf] %v6015
        %6080 = vst [vmem:[#allocation3 + $0x334] sm:$0xf] %v6016
        %6081 = vst [vmem:[#allocation3 + $0x358] sm:$0xf] %v6017
        %6082 = vst [vmem:[#allocation3 + $0x37c] sm:$0xf] %v6018
        %6083 = vst [vmem:[#allocation3 + $0x3a0] sm:$0xf] %v6019
        %6084 = vst [vmem:[#allocation3 + $0x3c4] sm:$0xf] %v6020
        %6085 = vst [vmem:[#allocation3 + $0x3e8] sm:$0xf] %v6021
        %6086 = vst [vmem:[#allocation3 + $0x40c] sm:$0xf] %v6022
        %6087 = vst [vmem:[#allocation3 + $0x430] sm:$0xf] %v6023
        %6088 = vst [vmem:[#allocation3 + $0x454] sm:$0xf] %v6024
        %6089 = vst [vmem:[#allocation3 + $0x478] sm:$0xf] %v6025
        %v6090 = vld [vmem:[%s1533 + $0x2] sm:$0xff]
        %v6091 = vld [vmem:[%s1533 + $0xa] sm:$0xff]
        %v6092 = vld [vmem:[%s1533 + $0x1a] sm:$0xff]
        %v6093 = vld [vmem:[%s1533 + $0x22] sm:$0xff]
        %v6094 = vld [vmem:[%s1533 + $0x32] sm:$0xff]
        %v6095 = vld [vmem:[%s1533 + $0x3a] sm:$0xff]
        %v6096 = vld [vmem:[%s1533 + $0x4a] sm:$0xff]
        %v6097 = vld [vmem:[%s1533 + $0x52] sm:$0xff]
        %v6098 = vld [vmem:[%s1533 + $0x62] sm:$0xff]
        %v6099 = vld [vmem:[%s1533 + $0x6a] sm:$0xff]
        %v6100 = vld [vmem:[%s1533 + $0x7a] sm:$0xff]
        %v6101 = vld [vmem:[%s1533 + $0x82] sm:$0xff]
        %v6102 = vld [vmem:[%s1533 + $0x92] sm:$0xff]
        %v6103 = vld [vmem:[%s1533 + $0x9a] sm:$0xff]
        %v6104 = vld [vmem:[%s1533 + $0xaa] sm:$0xff]
        %v6105 = vld [vmem:[%s1533 + $0xb2] sm:$0xff]
        %v6106 = vld [vmem:[%s1533 + $0xc2] sm:$0xff]
        %v6107 = vld [vmem:[%s1533 + $0xca] sm:$0xff]
        %v6108 = vld [vmem:[%s1533 + $0xda] sm:$0xff]
        %v6109 = vld [vmem:[%s1533 + $0xe2] sm:$0xff]
        %v6110 = vld [vmem:[%s1533 + $0xf2] sm:$0xff]
        %v6111 = vld [vmem:[%s1533 + $0xfa] sm:$0xff]
        %v6112 = vld [vmem:[%s1533 + $0x10a] sm:$0xff]
        %v6113 = vld [vmem:[%s1533 + $0x112] sm:$0xff]
        %v6114 = vld [vmem:[%s1533 + $0x122] sm:$0xff]
        %v6115 = vld [vmem:[%s1533 + $0x12a] sm:$0xff]
        %v6116 = vld [vmem:[%s1533 + $0x13a] sm:$0xff]
        %v6117 = vld [vmem:[%s1533 + $0x142] sm:$0xff]
        %v6118 = vld [vmem:[%s1533 + $0x152] sm:$0xff]
        %v6119 = vld [vmem:[%s1533 + $0x15a] sm:$0xff]
        %v6120 = vld [vmem:[%s1533 + $0x16a] sm:$0xff]
        %v6121 = vld [vmem:[%s1533 + $0x172] sm:$0xff]
        %v6122 = vpack.c.bf16 %v6091, %v6090
        %v6123 = vpack.c.bf16 %v6093, %v6092
        %v6124 = vpack.c.bf16 %v6095, %v6094
        %v6125 = vpack.c.bf16 %v6097, %v6096
        %v6126 = vpack.c.bf16 %v6099, %v6098
        %v6127 = vpack.c.bf16 %v6101, %v6100
        %v6128 = vpack.c.bf16 %v6103, %v6102
        %v6129 = vpack.c.bf16 %v6105, %v6104
        %v6130 = vpack.c.bf16 %v6107, %v6106
        %v6131 = vpack.c.bf16 %v6109, %v6108
        %v6132 = vpack.c.bf16 %v6111, %v6110
        %v6133 = vpack.c.bf16 %v6113, %v6112
        %v6134 = vpack.c.bf16 %v6115, %v6114
        %v6135 = vpack.c.bf16 %v6117, %v6116
        %v6136 = vpack.c.bf16 %v6119, %v6118
        %v6137 = vpack.c.bf16 %v6121, %v6120
        %v6154 = vunpack.c.l.b16 %v6122
        %v6155 = vunpack.c.h.b16 %v6122
        %v6156 = vunpack.c.l.b16 %v6123
        %v6157 = vunpack.c.h.b16 %v6123
        %v6158 = vunpack.c.l.b16 %v6124
        %v6159 = vunpack.c.h.b16 %v6124
        %v6160 = vunpack.c.l.b16 %v6125
        %v6161 = vunpack.c.h.b16 %v6125
        %v6162 = vunpack.c.l.b16 %v6126
        %v6163 = vunpack.c.h.b16 %v6126
        %v6164 = vunpack.c.l.b16 %v6127
        %v6165 = vunpack.c.h.b16 %v6127
        %v6166 = vunpack.c.l.b16 %v6128
        %v6167 = vunpack.c.h.b16 %v6128
        %v6168 = vunpack.c.l.b16 %v6129
        %v6169 = vunpack.c.h.b16 %v6129
        %v6170 = vunpack.c.l.b16 %v6130
        %v6171 = vunpack.c.h.b16 %v6130
        %v6172 = vunpack.c.l.b16 %v6131
        %v6173 = vunpack.c.h.b16 %v6131
        %v6174 = vunpack.c.l.b16 %v6132
        %v6175 = vunpack.c.h.b16 %v6132
        %v6176 = vunpack.c.l.b16 %v6133
        %v6177 = vunpack.c.h.b16 %v6133
        %v6178 = vunpack.c.l.b16 %v6134
        %v6179 = vunpack.c.h.b16 %v6134
        %v6180 = vunpack.c.l.b16 %v6135
        %v6181 = vunpack.c.h.b16 %v6135
        %v6182 = vunpack.c.l.b16 %v6136
        %v6183 = vunpack.c.h.b16 %v6136
        %v6184 = vunpack.c.l.b16 %v6137
        %v6185 = vunpack.c.h.b16 %v6137
        %v6186 = vpack.c.b16 %v6154, %v6154
        %v6187 = vpack.c.b16 %v6155, %v6155
        %v6188 = vpack.c.b16 %v6156, %v6156
        %v6189 = vpack.c.b16 %v6157, %v6157
        %v6190 = vpack.c.b16 %v6158, %v6158
        %v6191 = vpack.c.b16 %v6159, %v6159
        %v6192 = vpack.c.b16 %v6160, %v6160
        %v6193 = vpack.c.b16 %v6161, %v6161
        %v6194 = vpack.c.b16 %v6162, %v6162
        %v6195 = vpack.c.b16 %v6163, %v6163
        %v6196 = vpack.c.b16 %v6164, %v6164
        %v6197 = vpack.c.b16 %v6165, %v6165
        %v6198 = vpack.c.b16 %v6166, %v6166
        %v6199 = vpack.c.b16 %v6167, %v6167
        %v6200 = vpack.c.b16 %v6168, %v6168
        %v6201 = vpack.c.b16 %v6169, %v6169
        %v6202 = vpack.c.b16 %v6170, %v6170
        %v6203 = vpack.c.b16 %v6171, %v6171
        %v6204 = vpack.c.b16 %v6172, %v6172
        %v6205 = vpack.c.b16 %v6173, %v6173
        %v6206 = vpack.c.b16 %v6174, %v6174
        %v6207 = vpack.c.b16 %v6175, %v6175
        %v6208 = vpack.c.b16 %v6176, %v6176
        %v6209 = vpack.c.b16 %v6177, %v6177
        %v6210 = vpack.c.b16 %v6178, %v6178
        %v6211 = vpack.c.b16 %v6179, %v6179
        %v6212 = vpack.c.b16 %v6180, %v6180
        %v6213 = vpack.c.b16 %v6181, %v6181
        %v6214 = vpack.c.b16 %v6182, %v6182
        %v6215 = vpack.c.b16 %v6183, %v6183
        %v6216 = vpack.c.b16 %v6184, %v6184
        %v6217 = vpack.c.b16 %v6185, %v6185
        %6250 = vst [vmem:[#allocation3 + $0x20] sm:$0xf] %v6186
        %6251 = vst [vmem:[#allocation3 + $0x44] sm:$0xf] %v6187
        %6252 = vst [vmem:[#allocation3 + $0x68] sm:$0xf] %v6188
        %6253 = vst [vmem:[#allocation3 + $0x8c] sm:$0xf] %v6189
        %6254 = vst [vmem:[#allocation3 + $0xb0] sm:$0xf] %v6190
        %6255 = vst [vmem:[#allocation3 + $0xd4] sm:$0xf] %v6191
        %6256 = vst [vmem:[#allocation3 + $0xf8] sm:$0xf] %v6192
        %6257 = vst [vmem:[#allocation3 + $0x11c] sm:$0xf] %v6193
        %6258 = vst [vmem:[#allocation3 + $0x140] sm:$0xf] %v6194
        %6259 = vst [vmem:[#allocation3 + $0x164] sm:$0xf] %v6195
        %6260 = vst [vmem:[#allocation3 + $0x188] sm:$0xf] %v6196
        %6261 = vst [vmem:[#allocation3 + $0x1ac] sm:$0xf] %v6197
        %6262 = vst [vmem:[#allocation3 + $0x1d0] sm:$0xf] %v6198
        %6263 = vst [vmem:[#allocation3 + $0x1f4] sm:$0xf] %v6199
        %6264 = vst [vmem:[#allocation3 + $0x218] sm:$0xf] %v6200
        %6265 = vst [vmem:[#allocation3 + $0x23c] sm:$0xf] %v6201
        %6266 = vst [vmem:[#allocation3 + $0x260] sm:$0xf] %v6202
        %6267 = vst [vmem:[#allocation3 + $0x284] sm:$0xf] %v6203
        %6268 = vst [vmem:[#allocation3 + $0x2a8] sm:$0xf] %v6204
        %6269 = vst [vmem:[#allocation3 + $0x2cc] sm:$0xf] %v6205
        %6270 = vst [vmem:[#allocation3 + $0x2f0] sm:$0xf] %v6206
        %6271 = vst [vmem:[#allocation3 + $0x314] sm:$0xf] %v6207
        %6272 = vst [vmem:[#allocation3 + $0x338] sm:$0xf] %v6208
        %6273 = vst [vmem:[#allocation3 + $0x35c] sm:$0xf] %v6209
        %6274 = vst [vmem:[#allocation3 + $0x380] sm:$0xf] %v6210
        %6275 = vst [vmem:[#allocation3 + $0x3a4] sm:$0xf] %v6211
        %6276 = vst [vmem:[#allocation3 + $0x3c8] sm:$0xf] %v6212
        %6277 = vst [vmem:[#allocation3 + $0x3ec] sm:$0xf] %v6213
        %6278 = vst [vmem:[#allocation3 + $0x410] sm:$0xf] %v6214
        %6279 = vst [vmem:[#allocation3 + $0x434] sm:$0xf] %v6215
        %6280 = vst [vmem:[#allocation3 + $0x458] sm:$0xf] %v6216
        %6281 = vst [vmem:[#allocation3 + $0x47c] sm:$0xf] %v6217
        %v6282 = vld [vmem:[#allocation3] sm:$0xff]
        %v6283 = vld [vmem:[#allocation3 + $0x8] sm:$0xff]
        %v6284 = vld [vmem:[#allocation3 + $0x10] sm:$0xff]
        %v6285 = vld [vmem:[#allocation3 + $0x18] sm:$0xff]
        %v6286 = vld [vmem:[#allocation3 + $0x20] sm:$0xf]
        %v6287 = vld [vmem:[#allocation3 + $0x24] sm:$0xff]
        %v6288 = vld [vmem:[#allocation3 + $0x2c] sm:$0xff]
        %v6289 = vld [vmem:[#allocation3 + $0x34] sm:$0xff]
        %v6290 = vld [vmem:[#allocation3 + $0x3c] sm:$0xff]
        %v6291 = vld [vmem:[#allocation3 + $0x44] sm:$0xf]
        %v6292 = vld [vmem:[#allocation3 + $0x48] sm:$0xff]
        %v6293 = vld [vmem:[#allocation3 + $0x50] sm:$0xff]
        %v6294 = vld [vmem:[#allocation3 + $0x58] sm:$0xff]
        %v6295 = vld [vmem:[#allocation3 + $0x60] sm:$0xff]
        %v6296 = vld [vmem:[#allocation3 + $0x68] sm:$0xf]
        %v6297 = vld [vmem:[#allocation3 + $0x6c] sm:$0xff]
        %v6298 = vld [vmem:[#allocation3 + $0x74] sm:$0xff]
        %v6299 = vld [vmem:[#allocation3 + $0x7c] sm:$0xff]
        %v6300 = vld [vmem:[#allocation3 + $0x84] sm:$0xff]
        %v6301 = vld [vmem:[#allocation3 + $0x8c] sm:$0xf]
        %v6302 = vld [vmem:[#allocation3 + $0x90] sm:$0xff]
        %v6303 = vld [vmem:[#allocation3 + $0x98] sm:$0xff]
        %v6304 = vld [vmem:[#allocation3 + $0xa0] sm:$0xff]
        %v6305 = vld [vmem:[#allocation3 + $0xa8] sm:$0xff]
        %v6306 = vld [vmem:[#allocation3 + $0xb0] sm:$0xf]
        %v6307 = vld [vmem:[#allocation3 + $0xb4] sm:$0xff]
        %v6308 = vld [vmem:[#allocation3 + $0xbc] sm:$0xff]
        %v6309 = vld [vmem:[#allocation3 + $0xc4] sm:$0xff]
        %v6310 = vld [vmem:[#allocation3 + $0xcc] sm:$0xff]
        %v6311 = vld [vmem:[#allocation3 + $0xd4] sm:$0xf]
        %v6312 = vld [vmem:[#allocation3 + $0xd8] sm:$0xff]
        %v6313 = vld [vmem:[#allocation3 + $0xe0] sm:$0xff]
        %v6314 = vld [vmem:[#allocation3 + $0xe8] sm:$0xff]
        %v6315 = vld [vmem:[#allocation3 + $0xf0] sm:$0xff]
        %v6316 = vld [vmem:[#allocation3 + $0xf8] sm:$0xf]
        %v6317 = vld [vmem:[#allocation3 + $0xfc] sm:$0xff]
        %v6318 = vld [vmem:[#allocation3 + $0x104] sm:$0xff]
        %v6319 = vld [vmem:[#allocation3 + $0x10c] sm:$0xff]
        %v6320 = vld [vmem:[#allocation3 + $0x114] sm:$0xff]
        %v6321 = vld [vmem:[#allocation3 + $0x11c] sm:$0xf]
        %v6322 = vld [vmem:[#allocation3 + $0x120] sm:$0xff]
        %v6323 = vld [vmem:[#allocation3 + $0x128] sm:$0xff]
        %v6324 = vld [vmem:[#allocation3 + $0x130] sm:$0xff]
        %v6325 = vld [vmem:[#allocation3 + $0x138] sm:$0xff]
        %v6326 = vld [vmem:[#allocation3 + $0x140] sm:$0xf]
        %v6327 = vld [vmem:[#allocation3 + $0x144] sm:$0xff]
        %v6328 = vld [vmem:[#allocation3 + $0x14c] sm:$0xff]
        %v6329 = vld [vmem:[#allocation3 + $0x154] sm:$0xff]
        %v6330 = vld [vmem:[#allocation3 + $0x15c] sm:$0xff]
        %v6331 = vld [vmem:[#allocation3 + $0x164] sm:$0xf]
        %v6332 = vld [vmem:[#allocation3 + $0x168] sm:$0xff]
        %v6333 = vld [vmem:[#allocation3 + $0x170] sm:$0xff]
        %v6334 = vld [vmem:[#allocation3 + $0x178] sm:$0xff]
        %v6335 = vld [vmem:[#allocation3 + $0x180] sm:$0xff]
        %v6336 = vld [vmem:[#allocation3 + $0x188] sm:$0xf]
        %v6337 = vld [vmem:[#allocation3 + $0x18c] sm:$0xff]
        %v6338 = vld [vmem:[#allocation3 + $0x194] sm:$0xff]
        %v6339 = vld [vmem:[#allocation3 + $0x19c] sm:$0xff]
        %v6340 = vld [vmem:[#allocation3 + $0x1a4] sm:$0xff]
        %v6341 = vld [vmem:[#allocation3 + $0x1ac] sm:$0xf]
        %v6342 = vld [vmem:[#allocation3 + $0x1b0] sm:$0xff]
        %v6343 = vld [vmem:[#allocation3 + $0x1b8] sm:$0xff]
        %v6344 = vld [vmem:[#allocation3 + $0x1c0] sm:$0xff]
        %v6345 = vld [vmem:[#allocation3 + $0x1c8] sm:$0xff]
        %v6346 = vld [vmem:[#allocation3 + $0x1d0] sm:$0xf]
        %v6347 = vld [vmem:[#allocation3 + $0x1d4] sm:$0xff]
        %v6348 = vld [vmem:[#allocation3 + $0x1dc] sm:$0xff]
        %v6349 = vld [vmem:[#allocation3 + $0x1e4] sm:$0xff]
        %v6350 = vld [vmem:[#allocation3 + $0x1ec] sm:$0xff]
        %v6351 = vld [vmem:[#allocation3 + $0x1f4] sm:$0xf]
        %v6352 = vld [vmem:[#allocation3 + $0x1f8] sm:$0xff]
        %v6353 = vld [vmem:[#allocation3 + $0x200] sm:$0xff]
        %v6354 = vld [vmem:[#allocation3 + $0x208] sm:$0xff]
        %v6355 = vld [vmem:[#allocation3 + $0x210] sm:$0xff]
        %v6356 = vld [vmem:[#allocation3 + $0x218] sm:$0xf]
        %v6357 = vld [vmem:[#allocation3 + $0x21c] sm:$0xff]
        %v6358 = vld [vmem:[#allocation3 + $0x224] sm:$0xff]
        %v6359 = vld [vmem:[#allocation3 + $0x22c] sm:$0xff]
        %v6360 = vld [vmem:[#allocation3 + $0x234] sm:$0xff]
        %v6361 = vld [vmem:[#allocation3 + $0x23c] sm:$0xf]
        %v6362 = vld [vmem:[#allocation3 + $0x240] sm:$0xff]
        %v6363 = vld [vmem:[#allocation3 + $0x248] sm:$0xff]
        %v6364 = vld [vmem:[#allocation3 + $0x250] sm:$0xff]
        %v6365 = vld [vmem:[#allocation3 + $0x258] sm:$0xff]
        %v6366 = vld [vmem:[#allocation3 + $0x260] sm:$0xf]
        %v6367 = vld [vmem:[#allocation3 + $0x264] sm:$0xff]
        %v6368 = vld [vmem:[#allocation3 + $0x26c] sm:$0xff]
        %v6369 = vld [vmem:[#allocation3 + $0x274] sm:$0xff]
        %v6370 = vld [vmem:[#allocation3 + $0x27c] sm:$0xff]
        %v6371 = vld [vmem:[#allocation3 + $0x284] sm:$0xf]
        %v6372 = vld [vmem:[#allocation3 + $0x288] sm:$0xff]
        %v6373 = vld [vmem:[#allocation3 + $0x290] sm:$0xff]
        %v6374 = vld [vmem:[#allocation3 + $0x298] sm:$0xff]
        %v6375 = vld [vmem:[#allocation3 + $0x2a0] sm:$0xff]
        %v6376 = vld [vmem:[#allocation3 + $0x2a8] sm:$0xf]
        %v6377 = vld [vmem:[#allocation3 + $0x2ac] sm:$0xff]
        %v6378 = vld [vmem:[#allocation3 + $0x2b4] sm:$0xff]
        %v6379 = vld [vmem:[#allocation3 + $0x2bc] sm:$0xff]
        %v6380 = vld [vmem:[#allocation3 + $0x2c4] sm:$0xff]
        %v6381 = vld [vmem:[#allocation3 + $0x2cc] sm:$0xf]
        %v6382 = vld [vmem:[#allocation3 + $0x2d0] sm:$0xff]
        %v6383 = vld [vmem:[#allocation3 + $0x2d8] sm:$0xff]
        %v6384 = vld [vmem:[#allocation3 + $0x2e0] sm:$0xff]
        %v6385 = vld [vmem:[#allocation3 + $0x2e8] sm:$0xff]
        %v6386 = vld [vmem:[#allocation3 + $0x2f0] sm:$0xf]
        %v6387 = vld [vmem:[#allocation3 + $0x2f4] sm:$0xff]
        %v6388 = vld [vmem:[#allocation3 + $0x2fc] sm:$0xff]
        %v6389 = vld [vmem:[#allocation3 + $0x304] sm:$0xff]
        %v6390 = vld [vmem:[#allocation3 + $0x30c] sm:$0xff]
        %v6391 = vld [vmem:[#allocation3 + $0x314] sm:$0xf]
        %v6392 = vld [vmem:[#allocation3 + $0x318] sm:$0xff]
        %v6393 = vld [vmem:[#allocation3 + $0x320] sm:$0xff]
        %v6394 = vld [vmem:[#allocation3 + $0x328] sm:$0xff]
        %v6395 = vld [vmem:[#allocation3 + $0x330] sm:$0xff]
        %v6396 = vld [vmem:[#allocation3 + $0x338] sm:$0xf]
        %v6397 = vld [vmem:[#allocation3 + $0x33c] sm:$0xff]
        %v6398 = vld [vmem:[#allocation3 + $0x344] sm:$0xff]
        %v6399 = vld [vmem:[#allocation3 + $0x34c] sm:$0xff]
        %v6400 = vld [vmem:[#allocation3 + $0x354] sm:$0xff]
        %v6401 = vld [vmem:[#allocation3 + $0x35c] sm:$0xf]
        %v6402 = vld [vmem:[#allocation3 + $0x360] sm:$0xff]
        %v6403 = vld [vmem:[#allocation3 + $0x368] sm:$0xff]
        %v6404 = vld [vmem:[#allocation3 + $0x370] sm:$0xff]
        %v6405 = vld [vmem:[#allocation3 + $0x378] sm:$0xff]
        %v6406 = vld [vmem:[#allocation3 + $0x380] sm:$0xf]
        %v6407 = vld [vmem:[#allocation3 + $0x384] sm:$0xff]
        %v6408 = vld [vmem:[#allocation3 + $0x38c] sm:$0xff]
        %v6409 = vld [vmem:[#allocation3 + $0x394] sm:$0xff]
        %v6410 = vld [vmem:[#allocation3 + $0x39c] sm:$0xff]
        %v6411 = vld [vmem:[#allocation3 + $0x3a4] sm:$0xf]
        %v6412 = vld [vmem:[#allocation3 + $0x3a8] sm:$0xff]
        %v6413 = vld [vmem:[#allocation3 + $0x3b0] sm:$0xff]
        %v6414 = vld [vmem:[#allocation3 + $0x3b8] sm:$0xff]
        %v6415 = vld [vmem:[#allocation3 + $0x3c0] sm:$0xff]
        %v6416 = vld [vmem:[#allocation3 + $0x3c8] sm:$0xf]
        %v6417 = vld [vmem:[#allocation3 + $0x3cc] sm:$0xff]
        %v6418 = vld [vmem:[#allocation3 + $0x3d4] sm:$0xff]
        %v6419 = vld [vmem:[#allocation3 + $0x3dc] sm:$0xff]
        %v6420 = vld [vmem:[#allocation3 + $0x3e4] sm:$0xff]
        %v6421 = vld [vmem:[#allocation3 + $0x3ec] sm:$0xf]
        %v6422 = vld [vmem:[#allocation3 + $0x3f0] sm:$0xff]
        %v6423 = vld [vmem:[#allocation3 + $0x3f8] sm:$0xff]
        %v6424 = vld [vmem:[#allocation3 + $0x400] sm:$0xff]
        %v6425 = vld [vmem:[#allocation3 + $0x408] sm:$0xff]
        %v6426 = vld [vmem:[#allocation3 + $0x410] sm:$0xf]
        %v6427 = vld [vmem:[#allocation3 + $0x414] sm:$0xff]
        %v6428 = vld [vmem:[#allocation3 + $0x41c] sm:$0xff]
        %v6429 = vld [vmem:[#allocation3 + $0x424] sm:$0xff]
        %v6430 = vld [vmem:[#allocation3 + $0x42c] sm:$0xff]
        %v6431 = vld [vmem:[#allocation3 + $0x434] sm:$0xf]
        %v6432 = vld [vmem:[#allocation3 + $0x438] sm:$0xff]
        %v6433 = vld [vmem:[#allocation3 + $0x440] sm:$0xff]
        %v6434 = vld [vmem:[#allocation3 + $0x448] sm:$0xff]
        %v6435 = vld [vmem:[#allocation3 + $0x450] sm:$0xff]
        %v6436 = vld [vmem:[#allocation3 + $0x458] sm:$0xf]
        %v6437 = vld [vmem:[#allocation3 + $0x45c] sm:$0xff]
        %v6438 = vld [vmem:[#allocation3 + $0x464] sm:$0xff]
        %v6439 = vld [vmem:[#allocation3 + $0x46c] sm:$0xff]
        %v6440 = vld [vmem:[#allocation3 + $0x474] sm:$0xff]
        %v6441 = vld [vmem:[#allocation3 + $0x47c] sm:$0xf]
        %v6442 = vld [vmem:[#allocation10] sm:$0xf]
        %v6443 = vld [vmem:[#allocation10 + $0x4] sm:$0xf]
        %v6444 = vld [vmem:[#allocation10 + $0x8] sm:$0xf]
        %v6445 = vld [vmem:[#allocation10 + $0xc] sm:$0xf]
        %v6446 = vld [vmem:[#allocation10 + $0x10] sm:$0xf]
        %v6447 = vld [vmem:[#allocation10 + $0x14] sm:$0xf]
        %v6448 = vld [vmem:[#allocation10 + $0x18] sm:$0xf]
        %v6449 = vld [vmem:[#allocation10 + $0x1c] sm:$0xf]
        %v6450 = vld [vmem:[#allocation10 + $0x20] sm:$0xf]
        %v6451 = vld [vmem:[#allocation10 + $0x24] sm:$0xf]
        %v6452 = vld [vmem:[#allocation10 + $0x28] sm:$0xf]
        %v6453 = vld [vmem:[#allocation10 + $0x2c] sm:$0xf]
        %v6454 = vld [vmem:[#allocation10 + $0x30] sm:$0xf]
        %v6455 = vld [vmem:[#allocation10 + $0x34] sm:$0xf]
        %v6456 = vld [vmem:[#allocation10 + $0x38] sm:$0xf]
        %v6457 = vld [vmem:[#allocation10 + $0x3c] sm:$0xf]
        %v6458 = vld [vmem:[#allocation10 + $0x40] sm:$0xf]
        %v6459 = vld [vmem:[#allocation10 + $0x44] sm:$0xf]
        %v6460 = vld [vmem:[#allocation10 + $0x48] sm:$0xf]
        %v6461 = vld [vmem:[#allocation10 + $0x4c] sm:$0xf]
        %v6462 = vld [vmem:[#allocation10 + $0x50] sm:$0xf]
        %v6463 = vld [vmem:[#allocation10 + $0x54] sm:$0xf]
        %v6464 = vld [vmem:[#allocation10 + $0x58] sm:$0xf]
        %v6465 = vld [vmem:[#allocation10 + $0x5c] sm:$0xf]
        %v6466 = vld [vmem:[#allocation10 + $0x60] sm:$0xf]
        %v6467 = vld [vmem:[#allocation10 + $0x64] sm:$0xf]
        %v6468 = vld [vmem:[#allocation10 + $0x68] sm:$0xf]
        %v6469 = vld [vmem:[#allocation10 + $0x6c] sm:$0xf]
        %v6470 = vld [vmem:[#allocation10 + $0x70] sm:$0xf]
        %v6471 = vld [vmem:[#allocation10 + $0x74] sm:$0xf]
        %v6472 = vld [vmem:[#allocation10 + $0x78] sm:$0xf]
        %v6473 = vld [vmem:[#allocation10 + $0x7c] sm:$0xf]
        %v6474 = vld [vmem:[#allocation10 + $0x80] sm:$0xf]
        %v6475 = vld [vmem:[#allocation10 + $0x84] sm:$0xf]
        %v6476 = vld [vmem:[#allocation10 + $0x88] sm:$0xf]
        %v6477 = vld [vmem:[#allocation10 + $0x8c] sm:$0xf]
        %v6478 = vld [vmem:[#allocation10 + $0x90] sm:$0xf]
        %v6479 = vld [vmem:[#allocation10 + $0x94] sm:$0xf]
        %v6480 = vld [vmem:[#allocation10 + $0x98] sm:$0xf]
        %v6481 = vld [vmem:[#allocation10 + $0x9c] sm:$0xf]
        %v6482 = vld [vmem:[#allocation10 + $0xa0] sm:$0xf]
        %v6483 = vld [vmem:[#allocation10 + $0xa4] sm:$0xf]
        %v6484 = vld [vmem:[#allocation10 + $0xa8] sm:$0xf]
        %v6485 = vld [vmem:[#allocation10 + $0xac] sm:$0xf]
        %v6486 = vld [vmem:[#allocation10 + $0xb0] sm:$0xf]
        %v6487 = vld [vmem:[#allocation10 + $0xb4] sm:$0xf]
        %v6488 = vld [vmem:[#allocation10 + $0xb8] sm:$0xf]
        %v6489 = vld [vmem:[#allocation10 + $0xbc] sm:$0xf]
        %v6490 = vld [vmem:[#allocation10 + $0xc0] sm:$0xf]
        %v6491 = vld [vmem:[#allocation10 + $0xc4] sm:$0xf]
        %v6492 = vld [vmem:[#allocation10 + $0xc8] sm:$0xf]
        %v6493 = vld [vmem:[#allocation10 + $0xcc] sm:$0xf]
        %v6494 = vld [vmem:[#allocation10 + $0xd0] sm:$0xf]
        %v6495 = vld [vmem:[#allocation10 + $0xd4] sm:$0xf]
        %v6496 = vld [vmem:[#allocation10 + $0xd8] sm:$0xf]
        %v6497 = vld [vmem:[#allocation10 + $0xdc] sm:$0xf]
        %v6498 = vld [vmem:[#allocation10 + $0xe0] sm:$0xf]
        %v6499 = vld [vmem:[#allocation10 + $0xe4] sm:$0xf]
        %v6500 = vld [vmem:[#allocation10 + $0xe8] sm:$0xf]
        %v6501 = vld [vmem:[#allocation10 + $0xec] sm:$0xf]
        %v6502 = vld [vmem:[#allocation10 + $0xf0] sm:$0xf]
        %v6503 = vld [vmem:[#allocation10 + $0xf4] sm:$0xf]
        %v6504 = vld [vmem:[#allocation10 + $0xf8] sm:$0xf]
        %v6505 = vld [vmem:[#allocation10 + $0xfc] sm:$0xf]
        %v6506 = vld [vmem:[#allocation10 + $0x100] sm:$0xf]
        %v6507 = vld [vmem:[#allocation10 + $0x104] sm:$0xf]
        %v6508 = vld [vmem:[#allocation10 + $0x108] sm:$0xf]
        %v6509 = vld [vmem:[#allocation10 + $0x10c] sm:$0xf]
        %v6510 = vld [vmem:[#allocation10 + $0x110] sm:$0xf]
        %v6511 = vld [vmem:[#allocation10 + $0x114] sm:$0xf]
        %v6512 = vld [vmem:[#allocation10 + $0x118] sm:$0xf]
        %v6513 = vld [vmem:[#allocation10 + $0x11c] sm:$0xf]
        %v6514 = vld [vmem:[#allocation10 + $0x120] sm:$0xf]
        %v6515 = vld [vmem:[#allocation10 + $0x124] sm:$0xf]
        %v6516 = vld [vmem:[#allocation10 + $0x128] sm:$0xf]
        %v6517 = vld [vmem:[#allocation10 + $0x12c] sm:$0xf]
        %v6518 = vld [vmem:[#allocation10 + $0x130] sm:$0xf]
        %v6519 = vld [vmem:[#allocation10 + $0x134] sm:$0xf]
        %v6520 = vld [vmem:[#allocation10 + $0x138] sm:$0xf]
        %v6521 = vld [vmem:[#allocation10 + $0x13c] sm:$0xf]
        %v6522 = vld [vmem:[#allocation10 + $0x140] sm:$0xf]
        %v6523 = vld [vmem:[#allocation10 + $0x144] sm:$0xf]
        %v6524 = vld [vmem:[#allocation10 + $0x148] sm:$0xf]
        %v6525 = vld [vmem:[#allocation10 + $0x14c] sm:$0xf]
        %v6526 = vld [vmem:[#allocation10 + $0x150] sm:$0xf]
        %v6527 = vld [vmem:[#allocation10 + $0x154] sm:$0xf]
        %v6528 = vld [vmem:[#allocation10 + $0x158] sm:$0xf]
        %v6529 = vld [vmem:[#allocation10 + $0x15c] sm:$0xf]
        %v6530 = vld [vmem:[#allocation10 + $0x160] sm:$0xf]
        %v6531 = vld [vmem:[#allocation10 + $0x164] sm:$0xf]
        %v6532 = vld [vmem:[#allocation10 + $0x168] sm:$0xf]
        %v6533 = vld [vmem:[#allocation10 + $0x16c] sm:$0xf]
        %v6534 = vld [vmem:[#allocation10 + $0x170] sm:$0xf]
        %v6535 = vld [vmem:[#allocation10 + $0x174] sm:$0xf]
        %v6536 = vld [vmem:[#allocation10 + $0x178] sm:$0xf]
        %v6537 = vld [vmem:[#allocation10 + $0x17c] sm:$0xf]
        %v6538 = vld [vmem:[#allocation10 + $0x180] sm:$0xf]
        %v6539 = vld [vmem:[#allocation10 + $0x184] sm:$0xf]
        %v6540 = vld [vmem:[#allocation10 + $0x188] sm:$0xf]
        %v6541 = vld [vmem:[#allocation10 + $0x18c] sm:$0xf]
        %v6542 = vld [vmem:[#allocation10 + $0x190] sm:$0xf]
        %v6543 = vld [vmem:[#allocation10 + $0x194] sm:$0xf]
        %v6544 = vld [vmem:[#allocation10 + $0x198] sm:$0xf]
        %v6545 = vld [vmem:[#allocation10 + $0x19c] sm:$0xf]
        %v6546 = vld [vmem:[#allocation10 + $0x1a0] sm:$0xf]
        %v6547 = vld [vmem:[#allocation10 + $0x1a4] sm:$0xf]
        %v6548 = vld [vmem:[#allocation10 + $0x1a8] sm:$0xf]
        %v6549 = vld [vmem:[#allocation10 + $0x1ac] sm:$0xf]
        %v6550 = vld [vmem:[#allocation10 + $0x1b0] sm:$0xf]
        %v6551 = vld [vmem:[#allocation10 + $0x1b4] sm:$0xf]
        %v6552 = vld [vmem:[#allocation10 + $0x1b8] sm:$0xf]
        %v6553 = vld [vmem:[#allocation10 + $0x1bc] sm:$0xf]
        %v6554 = vld [vmem:[#allocation10 + $0x1c0] sm:$0xf]
        %v6555 = vld [vmem:[#allocation10 + $0x1c4] sm:$0xf]
        %v6556 = vld [vmem:[#allocation10 + $0x1c8] sm:$0xf]
        %v6557 = vld [vmem:[#allocation10 + $0x1cc] sm:$0xf]
        %v6558 = vld [vmem:[#allocation10 + $0x1d0] sm:$0xf]
        %v6559 = vld [vmem:[#allocation10 + $0x1d4] sm:$0xf]
        %v6560 = vld [vmem:[#allocation10 + $0x1d8] sm:$0xf]
        %v6561 = vld [vmem:[#allocation10 + $0x1dc] sm:$0xf]
        %v6562 = vld [vmem:[#allocation10 + $0x1e0] sm:$0xf]
        %v6563 = vld [vmem:[#allocation10 + $0x1e4] sm:$0xf]
        %v6564 = vld [vmem:[#allocation10 + $0x1e8] sm:$0xf]
        %v6565 = vld [vmem:[#allocation10 + $0x1ec] sm:$0xf]
        %v6566 = vld [vmem:[#allocation10 + $0x1f0] sm:$0xf]
        %v6567 = vld [vmem:[#allocation10 + $0x1f4] sm:$0xf]
        %v6568 = vld [vmem:[#allocation10 + $0x1f8] sm:$0xf]
        %v6569 = vld [vmem:[#allocation10 + $0x1fc] sm:$0xf]
        %v6570 = vld [vmem:[#allocation10 + $0x200] sm:$0xf]
        %v6571 = vld [vmem:[#allocation10 + $0x204] sm:$0xf]
        %v6572 = vld [vmem:[#allocation10 + $0x208] sm:$0xf]
        %v6573 = vld [vmem:[#allocation10 + $0x20c] sm:$0xf]
        %v6574 = vld [vmem:[#allocation10 + $0x210] sm:$0xf]
        %v6575 = vld [vmem:[#allocation10 + $0x214] sm:$0xf]
        %v6576 = vld [vmem:[#allocation10 + $0x218] sm:$0xf]
        %v6577 = vld [vmem:[#allocation10 + $0x21c] sm:$0xf]
        %v6578 = vld [vmem:[#allocation10 + $0x220] sm:$0xf]
        %v6579 = vld [vmem:[#allocation10 + $0x224] sm:$0xf]
        %v6580 = vld [vmem:[#allocation10 + $0x228] sm:$0xf]
        %v6581 = vld [vmem:[#allocation10 + $0x22c] sm:$0xf]
        %v6582 = vld [vmem:[#allocation10 + $0x230] sm:$0xf]
        %v6583 = vld [vmem:[#allocation10 + $0x234] sm:$0xf]
        %v6584 = vld [vmem:[#allocation10 + $0x238] sm:$0xf]
        %v6585 = vld [vmem:[#allocation10 + $0x23c] sm:$0xf]
        %v6746 = vunpack.c.l.b16 %v6282
        %v6747 = vunpack.c.h.b16 %v6282
        %v6748 = vunpack.c.l.b16 %v6283
        %v6749 = vunpack.c.h.b16 %v6283
        %v6750 = vunpack.c.l.b16 %v6284
        %v6751 = vunpack.c.h.b16 %v6284
        %v6752 = vunpack.c.l.b16 %v6285
        %v6753 = vunpack.c.h.b16 %v6285
        %v6754 = vunpack.c.l.b16 %v6286
        %v6755 = vunpack.c.l.b16 %v6287
        %v6756 = vunpack.c.h.b16 %v6287
        %v6757 = vunpack.c.l.b16 %v6288
        %v6758 = vunpack.c.h.b16 %v6288
        %v6759 = vunpack.c.l.b16 %v6289
        %v6760 = vunpack.c.h.b16 %v6289
        %v6761 = vunpack.c.l.b16 %v6290
        %v6762 = vunpack.c.h.b16 %v6290
        %v6763 = vunpack.c.l.b16 %v6291
        %v6764 = vunpack.c.l.b16 %v6292
        %v6765 = vunpack.c.h.b16 %v6292
        %v6766 = vunpack.c.l.b16 %v6293
        %v6767 = vunpack.c.h.b16 %v6293
        %v6768 = vunpack.c.l.b16 %v6294
        %v6769 = vunpack.c.h.b16 %v6294
        %v6770 = vunpack.c.l.b16 %v6295
        %v6771 = vunpack.c.h.b16 %v6295
        %v6772 = vunpack.c.l.b16 %v6296
        %v6773 = vunpack.c.l.b16 %v6297
        %v6774 = vunpack.c.h.b16 %v6297
        %v6775 = vunpack.c.l.b16 %v6298
        %v6776 = vunpack.c.h.b16 %v6298
        %v6777 = vunpack.c.l.b16 %v6299
        %v6778 = vunpack.c.h.b16 %v6299
        %v6779 = vunpack.c.l.b16 %v6300
        %v6780 = vunpack.c.h.b16 %v6300
        %v6781 = vunpack.c.l.b16 %v6301
        %v6782 = vunpack.c.l.b16 %v6302
        %v6783 = vunpack.c.h.b16 %v6302
        %v6784 = vunpack.c.l.b16 %v6303
        %v6785 = vunpack.c.h.b16 %v6303
        %v6786 = vunpack.c.l.b16 %v6304
        %v6787 = vunpack.c.h.b16 %v6304
        %v6788 = vunpack.c.l.b16 %v6305
        %v6789 = vunpack.c.h.b16 %v6305
        %v6790 = vunpack.c.l.b16 %v6306
        %v6791 = vunpack.c.l.b16 %v6307
        %v6792 = vunpack.c.h.b16 %v6307
        %v6793 = vunpack.c.l.b16 %v6308
        %v6794 = vunpack.c.h.b16 %v6308
        %v6795 = vunpack.c.l.b16 %v6309
        %v6796 = vunpack.c.h.b16 %v6309
        %v6797 = vunpack.c.l.b16 %v6310
        %v6798 = vunpack.c.h.b16 %v6310
        %v6799 = vunpack.c.l.b16 %v6311
        %v6800 = vunpack.c.l.b16 %v6312
        %v6801 = vunpack.c.h.b16 %v6312
        %v6802 = vunpack.c.l.b16 %v6313
        %v6803 = vunpack.c.h.b16 %v6313
        %v6804 = vunpack.c.l.b16 %v6314
        %v6805 = vunpack.c.h.b16 %v6314
        %v6806 = vunpack.c.l.b16 %v6315
        %v6807 = vunpack.c.h.b16 %v6315
        %v6808 = vunpack.c.l.b16 %v6316
        %v6809 = vunpack.c.l.b16 %v6317
        %v6810 = vunpack.c.h.b16 %v6317
        %v6811 = vunpack.c.l.b16 %v6318
        %v6812 = vunpack.c.h.b16 %v6318
        %v6813 = vunpack.c.l.b16 %v6319
        %v6814 = vunpack.c.h.b16 %v6319
        %v6815 = vunpack.c.l.b16 %v6320
        %v6816 = vunpack.c.h.b16 %v6320
        %v6817 = vunpack.c.l.b16 %v6321
        %v6818 = vunpack.c.l.b16 %v6322
        %v6819 = vunpack.c.h.b16 %v6322
        %v6820 = vunpack.c.l.b16 %v6323
        %v6821 = vunpack.c.h.b16 %v6323
        %v6822 = vunpack.c.l.b16 %v6324
        %v6823 = vunpack.c.h.b16 %v6324
        %v6824 = vunpack.c.l.b16 %v6325
        %v6825 = vunpack.c.h.b16 %v6325
        %v6826 = vunpack.c.l.b16 %v6326
        %v6827 = vunpack.c.l.b16 %v6327
        %v6828 = vunpack.c.h.b16 %v6327
        %v6829 = vunpack.c.l.b16 %v6328
        %v6830 = vunpack.c.h.b16 %v6328
        %v6831 = vunpack.c.l.b16 %v6329
        %v6832 = vunpack.c.h.b16 %v6329
        %v6833 = vunpack.c.l.b16 %v6330
        %v6834 = vunpack.c.h.b16 %v6330
        %v6835 = vunpack.c.l.b16 %v6331
        %v6836 = vunpack.c.l.b16 %v6332
        %v6837 = vunpack.c.h.b16 %v6332
        %v6838 = vunpack.c.l.b16 %v6333
        %v6839 = vunpack.c.h.b16 %v6333
        %v6840 = vunpack.c.l.b16 %v6334
        %v6841 = vunpack.c.h.b16 %v6334
        %v6842 = vunpack.c.l.b16 %v6335
        %v6843 = vunpack.c.h.b16 %v6335
        %v6844 = vunpack.c.l.b16 %v6336
        %v6845 = vunpack.c.l.b16 %v6337
        %v6846 = vunpack.c.h.b16 %v6337
        %v6847 = vunpack.c.l.b16 %v6338
        %v6848 = vunpack.c.h.b16 %v6338
        %v6849 = vunpack.c.l.b16 %v6339
        %v6850 = vunpack.c.h.b16 %v6339
        %v6851 = vunpack.c.l.b16 %v6340
        %v6852 = vunpack.c.h.b16 %v6340
        %v6853 = vunpack.c.l.b16 %v6341
        %v6854 = vunpack.c.l.b16 %v6342
        %v6855 = vunpack.c.h.b16 %v6342
        %v6856 = vunpack.c.l.b16 %v6343
        %v6857 = vunpack.c.h.b16 %v6343
        %v6858 = vunpack.c.l.b16 %v6344
        %v6859 = vunpack.c.h.b16 %v6344
        %v6860 = vunpack.c.l.b16 %v6345
        %v6861 = vunpack.c.h.b16 %v6345
        %v6862 = vunpack.c.l.b16 %v6346
        %v6863 = vunpack.c.l.b16 %v6347
        %v6864 = vunpack.c.h.b16 %v6347
        %v6865 = vunpack.c.l.b16 %v6348
        %v6866 = vunpack.c.h.b16 %v6348
        %v6867 = vunpack.c.l.b16 %v6349
        %v6868 = vunpack.c.h.b16 %v6349
        %v6869 = vunpack.c.l.b16 %v6350
        %v6870 = vunpack.c.h.b16 %v6350
        %v6871 = vunpack.c.l.b16 %v6351
        %v6872 = vunpack.c.l.b16 %v6352
        %v6873 = vunpack.c.h.b16 %v6352
        %v6874 = vunpack.c.l.b16 %v6353
        %v6875 = vunpack.c.h.b16 %v6353
        %v6876 = vunpack.c.l.b16 %v6354
        %v6877 = vunpack.c.h.b16 %v6354
        %v6878 = vunpack.c.l.b16 %v6355
        %v6879 = vunpack.c.h.b16 %v6355
        %v6880 = vunpack.c.l.b16 %v6356
        %v6881 = vunpack.c.l.b16 %v6357
        %v6882 = vunpack.c.h.b16 %v6357
        %v6883 = vunpack.c.l.b16 %v6358
        %v6884 = vunpack.c.h.b16 %v6358
        %v6885 = vunpack.c.l.b16 %v6359
        %v6886 = vunpack.c.h.b16 %v6359
        %v6887 = vunpack.c.l.b16 %v6360
        %v6888 = vunpack.c.h.b16 %v6360
        %v6889 = vunpack.c.l.b16 %v6361
        %v6890 = vunpack.c.l.b16 %v6362
        %v6891 = vunpack.c.h.b16 %v6362
        %v6892 = vunpack.c.l.b16 %v6363
        %v6893 = vunpack.c.h.b16 %v6363
        %v6894 = vunpack.c.l.b16 %v6364
        %v6895 = vunpack.c.h.b16 %v6364
        %v6896 = vunpack.c.l.b16 %v6365
        %v6897 = vunpack.c.h.b16 %v6365
        %v6898 = vunpack.c.l.b16 %v6366
        %v6899 = vunpack.c.l.b16 %v6367
        %v6900 = vunpack.c.h.b16 %v6367
        %v6901 = vunpack.c.l.b16 %v6368
        %v6902 = vunpack.c.h.b16 %v6368
        %v6903 = vunpack.c.l.b16 %v6369
        %v6904 = vunpack.c.h.b16 %v6369
        %v6905 = vunpack.c.l.b16 %v6370
        %v6906 = vunpack.c.h.b16 %v6370
        %v6907 = vunpack.c.l.b16 %v6371
        %v6908 = vunpack.c.l.b16 %v6372
        %v6909 = vunpack.c.h.b16 %v6372
        %v6910 = vunpack.c.l.b16 %v6373
        %v6911 = vunpack.c.h.b16 %v6373
        %v6912 = vunpack.c.l.b16 %v6374
        %v6913 = vunpack.c.h.b16 %v6374
        %v6914 = vunpack.c.l.b16 %v6375
        %v6915 = vunpack.c.h.b16 %v6375
        %v6916 = vunpack.c.l.b16 %v6376
        %v6917 = vunpack.c.l.b16 %v6377
        %v6918 = vunpack.c.h.b16 %v6377
        %v6919 = vunpack.c.l.b16 %v6378
        %v6920 = vunpack.c.h.b16 %v6378
        %v6921 = vunpack.c.l.b16 %v6379
        %v6922 = vunpack.c.h.b16 %v6379
        %v6923 = vunpack.c.l.b16 %v6380
        %v6924 = vunpack.c.h.b16 %v6380
        %v6925 = vunpack.c.l.b16 %v6381
        %v6926 = vunpack.c.l.b16 %v6382
        %v6927 = vunpack.c.h.b16 %v6382
        %v6928 = vunpack.c.l.b16 %v6383
        %v6929 = vunpack.c.h.b16 %v6383
        %v6930 = vunpack.c.l.b16 %v6384
        %v6931 = vunpack.c.h.b16 %v6384
        %v6932 = vunpack.c.l.b16 %v6385
        %v6933 = vunpack.c.h.b16 %v6385
        %v6934 = vunpack.c.l.b16 %v6386
        %v6935 = vunpack.c.l.b16 %v6387
        %v6936 = vunpack.c.h.b16 %v6387
        %v6937 = vunpack.c.l.b16 %v6388
        %v6938 = vunpack.c.h.b16 %v6388
        %v6939 = vunpack.c.l.b16 %v6389
        %v6940 = vunpack.c.h.b16 %v6389
        %v6941 = vunpack.c.l.b16 %v6390
        %v6942 = vunpack.c.h.b16 %v6390
        %v6943 = vunpack.c.l.b16 %v6391
        %v6944 = vunpack.c.l.b16 %v6392
        %v6945 = vunpack.c.h.b16 %v6392
        %v6946 = vunpack.c.l.b16 %v6393
        %v6947 = vunpack.c.h.b16 %v6393
        %v6948 = vunpack.c.l.b16 %v6394
        %v6949 = vunpack.c.h.b16 %v6394
        %v6950 = vunpack.c.l.b16 %v6395
        %v6951 = vunpack.c.h.b16 %v6395
        %v6952 = vunpack.c.l.b16 %v6396
        %v6953 = vunpack.c.l.b16 %v6397
        %v6954 = vunpack.c.h.b16 %v6397
        %v6955 = vunpack.c.l.b16 %v6398
        %v6956 = vunpack.c.h.b16 %v6398
        %v6957 = vunpack.c.l.b16 %v6399
        %v6958 = vunpack.c.h.b16 %v6399
        %v6959 = vunpack.c.l.b16 %v6400
        %v6960 = vunpack.c.h.b16 %v6400
        %v6961 = vunpack.c.l.b16 %v6401
        %v6962 = vunpack.c.l.b16 %v6402
        %v6963 = vunpack.c.h.b16 %v6402
        %v6964 = vunpack.c.l.b16 %v6403
        %v6965 = vunpack.c.h.b16 %v6403
        %v6966 = vunpack.c.l.b16 %v6404
        %v6967 = vunpack.c.h.b16 %v6404
        %v6968 = vunpack.c.l.b16 %v6405
        %v6969 = vunpack.c.h.b16 %v6405
        %v6970 = vunpack.c.l.b16 %v6406
        %v6971 = vunpack.c.l.b16 %v6407
        %v6972 = vunpack.c.h.b16 %v6407
        %v6973 = vunpack.c.l.b16 %v6408
        %v6974 = vunpack.c.h.b16 %v6408
        %v6975 = vunpack.c.l.b16 %v6409
        %v6976 = vunpack.c.h.b16 %v6409
        %v6977 = vunpack.c.l.b16 %v6410
        %v6978 = vunpack.c.h.b16 %v6410
        %v6979 = vunpack.c.l.b16 %v6411
        %v6980 = vunpack.c.l.b16 %v6412
        %v6981 = vunpack.c.h.b16 %v6412
        %v6982 = vunpack.c.l.b16 %v6413
        %v6983 = vunpack.c.h.b16 %v6413
        %v6984 = vunpack.c.l.b16 %v6414
        %v6985 = vunpack.c.h.b16 %v6414
        %v6986 = vunpack.c.l.b16 %v6415
        %v6987 = vunpack.c.h.b16 %v6415
        %v6988 = vunpack.c.l.b16 %v6416
        %v6989 = vunpack.c.l.b16 %v6417
        %v6990 = vunpack.c.h.b16 %v6417
        %v6991 = vunpack.c.l.b16 %v6418
        %v6992 = vunpack.c.h.b16 %v6418
        %v6993 = vunpack.c.l.b16 %v6419
        %v6994 = vunpack.c.h.b16 %v6419
        %v6995 = vunpack.c.l.b16 %v6420
        %v6996 = vunpack.c.h.b16 %v6420
        %v6997 = vunpack.c.l.b16 %v6421
        %v6998 = vunpack.c.l.b16 %v6422
        %v6999 = vunpack.c.h.b16 %v6422
        %v7000 = vunpack.c.l.b16 %v6423
        %v7001 = vunpack.c.h.b16 %v6423
        %v7002 = vunpack.c.l.b16 %v6424
        %v7003 = vunpack.c.h.b16 %v6424
        %v7004 = vunpack.c.l.b16 %v6425
        %v7005 = vunpack.c.h.b16 %v6425
        %v7006 = vunpack.c.l.b16 %v6426
        %v7007 = vunpack.c.l.b16 %v6427
        %v7008 = vunpack.c.h.b16 %v6427
        %v7009 = vunpack.c.l.b16 %v6428
        %v7010 = vunpack.c.h.b16 %v6428
        %v7011 = vunpack.c.l.b16 %v6429
        %v7012 = vunpack.c.h.b16 %v6429
        %v7013 = vunpack.c.l.b16 %v6430
        %v7014 = vunpack.c.h.b16 %v6430
        %v7015 = vunpack.c.l.b16 %v6431
        %v7016 = vunpack.c.l.b16 %v6432
        %v7017 = vunpack.c.h.b16 %v6432
        %v7018 = vunpack.c.l.b16 %v6433
        %v7019 = vunpack.c.h.b16 %v6433
        %v7020 = vunpack.c.l.b16 %v6434
        %v7021 = vunpack.c.h.b16 %v6434
        %v7022 = vunpack.c.l.b16 %v6435
        %v7023 = vunpack.c.h.b16 %v6435
        %v7024 = vunpack.c.l.b16 %v6436
        %v7025 = vunpack.c.l.b16 %v6437
        %v7026 = vunpack.c.h.b16 %v6437
        %v7027 = vunpack.c.l.b16 %v6438
        %v7028 = vunpack.c.h.b16 %v6438
        %v7029 = vunpack.c.l.b16 %v6439
        %v7030 = vunpack.c.h.b16 %v6439
        %v7031 = vunpack.c.l.b16 %v6440
        %v7032 = vunpack.c.h.b16 %v6440
        %v7033 = vunpack.c.l.b16 %v6441
        %v7034 = vpack.c.b16 %v6755, %v6746
        %v7035 = vpack.c.b16 %v6756, %v6747
        %v7036 = vpack.c.b16 %v6757, %v6748
        %v7037 = vpack.c.b16 %v6758, %v6749
        %v7038 = vpack.c.b16 %v6759, %v6750
        %v7039 = vpack.c.b16 %v6760, %v6751
        %v7040 = vpack.c.b16 %v6761, %v6752
        %v7041 = vpack.c.b16 %v6762, %v6753
        %v7042 = vpack.c.b16 %v6763, %v6754
        %v7043 = vpack.c.b16 %v6773, %v6764
        %v7044 = vpack.c.b16 %v6774, %v6765
        %v7045 = vpack.c.b16 %v6775, %v6766
        %v7046 = vpack.c.b16 %v6776, %v6767
        %v7047 = vpack.c.b16 %v6777, %v6768
        %v7048 = vpack.c.b16 %v6778, %v6769
        %v7049 = vpack.c.b16 %v6779, %v6770
        %v7050 = vpack.c.b16 %v6780, %v6771
        %v7051 = vpack.c.b16 %v6781, %v6772
        %v7052 = vpack.c.b16 %v6791, %v6782
        %v7053 = vpack.c.b16 %v6792, %v6783
        %v7054 = vpack.c.b16 %v6793, %v6784
        %v7055 = vpack.c.b16 %v6794, %v6785
        %v7056 = vpack.c.b16 %v6795, %v6786
        %v7057 = vpack.c.b16 %v6796, %v6787
        %v7058 = vpack.c.b16 %v6797, %v6788
        %v7059 = vpack.c.b16 %v6798, %v6789
        %v7060 = vpack.c.b16 %v6799, %v6790
        %v7061 = vpack.c.b16 %v6809, %v6800
        %v7062 = vpack.c.b16 %v6810, %v6801
        %v7063 = vpack.c.b16 %v6811, %v6802
        %v7064 = vpack.c.b16 %v6812, %v6803
        %v7065 = vpack.c.b16 %v6813, %v6804
        %v7066 = vpack.c.b16 %v6814, %v6805
        %v7067 = vpack.c.b16 %v6815, %v6806
        %v7068 = vpack.c.b16 %v6816, %v6807
        %v7069 = vpack.c.b16 %v6817, %v6808
        %v7070 = vpack.c.b16 %v6827, %v6818
        %v7071 = vpack.c.b16 %v6828, %v6819
        %v7072 = vpack.c.b16 %v6829, %v6820
        %v7073 = vpack.c.b16 %v6830, %v6821
        %v7074 = vpack.c.b16 %v6831, %v6822
        %v7075 = vpack.c.b16 %v6832, %v6823
        %v7076 = vpack.c.b16 %v6833, %v6824
        %v7077 = vpack.c.b16 %v6834, %v6825
        %v7078 = vpack.c.b16 %v6835, %v6826
        %v7079 = vpack.c.b16 %v6845, %v6836
        %v7080 = vpack.c.b16 %v6846, %v6837
        %v7081 = vpack.c.b16 %v6847, %v6838
        %v7082 = vpack.c.b16 %v6848, %v6839
        %v7083 = vpack.c.b16 %v6849, %v6840
        %v7084 = vpack.c.b16 %v6850, %v6841
        %v7085 = vpack.c.b16 %v6851, %v6842
        %v7086 = vpack.c.b16 %v6852, %v6843
        %v7087 = vpack.c.b16 %v6853, %v6844
        %v7088 = vpack.c.b16 %v6863, %v6854
        %v7089 = vpack.c.b16 %v6864, %v6855
        %v7090 = vpack.c.b16 %v6865, %v6856
        %v7091 = vpack.c.b16 %v6866, %v6857
        %v7092 = vpack.c.b16 %v6867, %v6858
        %v7093 = vpack.c.b16 %v6868, %v6859
        %v7094 = vpack.c.b16 %v6869, %v6860
        %v7095 = vpack.c.b16 %v6870, %v6861
        %v7096 = vpack.c.b16 %v6871, %v6862
        %v7097 = vpack.c.b16 %v6881, %v6872
        %v7098 = vpack.c.b16 %v6882, %v6873
        %v7099 = vpack.c.b16 %v6883, %v6874
        %v7100 = vpack.c.b16 %v6884, %v6875
        %v7101 = vpack.c.b16 %v6885, %v6876
        %v7102 = vpack.c.b16 %v6886, %v6877
        %v7103 = vpack.c.b16 %v6887, %v6878
        %v7104 = vpack.c.b16 %v6888, %v6879
        %v7105 = vpack.c.b16 %v6889, %v6880
        %v7106 = vpack.c.b16 %v6899, %v6890
        %v7107 = vpack.c.b16 %v6900, %v6891
        %v7108 = vpack.c.b16 %v6901, %v6892
        %v7109 = vpack.c.b16 %v6902, %v6893
        %v7110 = vpack.c.b16 %v6903, %v6894
        %v7111 = vpack.c.b16 %v6904, %v6895
        %v7112 = vpack.c.b16 %v6905, %v6896
        %v7113 = vpack.c.b16 %v6906, %v6897
        %v7114 = vpack.c.b16 %v6907, %v6898
        %v7115 = vpack.c.b16 %v6917, %v6908
        %v7116 = vpack.c.b16 %v6918, %v6909
        %v7117 = vpack.c.b16 %v6919, %v6910
        %v7118 = vpack.c.b16 %v6920, %v6911
        %v7119 = vpack.c.b16 %v6921, %v6912
        %v7120 = vpack.c.b16 %v6922, %v6913
        %v7121 = vpack.c.b16 %v6923, %v6914
        %v7122 = vpack.c.b16 %v6924, %v6915
        %v7123 = vpack.c.b16 %v6925, %v6916
        %v7124 = vpack.c.b16 %v6935, %v6926
        %v7125 = vpack.c.b16 %v6936, %v6927
        %v7126 = vpack.c.b16 %v6937, %v6928
        %v7127 = vpack.c.b16 %v6938, %v6929
        %v7128 = vpack.c.b16 %v6939, %v6930
        %v7129 = vpack.c.b16 %v6940, %v6931
        %v7130 = vpack.c.b16 %v6941, %v6932
        %v7131 = vpack.c.b16 %v6942, %v6933
        %v7132 = vpack.c.b16 %v6943, %v6934
        %v7133 = vpack.c.b16 %v6953, %v6944
        %v7134 = vpack.c.b16 %v6954, %v6945
        %v7135 = vpack.c.b16 %v6955, %v6946
        %v7136 = vpack.c.b16 %v6956, %v6947
        %v7137 = vpack.c.b16 %v6957, %v6948
        %v7138 = vpack.c.b16 %v6958, %v6949
        %v7139 = vpack.c.b16 %v6959, %v6950
        %v7140 = vpack.c.b16 %v6960, %v6951
        %v7141 = vpack.c.b16 %v6961, %v6952
        %v7142 = vpack.c.b16 %v6971, %v6962
        %v7143 = vpack.c.b16 %v6972, %v6963
        %v7144 = vpack.c.b16 %v6973, %v6964
        %v7145 = vpack.c.b16 %v6974, %v6965
        %v7146 = vpack.c.b16 %v6975, %v6966
        %v7147 = vpack.c.b16 %v6976, %v6967
        %v7148 = vpack.c.b16 %v6977, %v6968
        %v7149 = vpack.c.b16 %v6978, %v6969
        %v7150 = vpack.c.b16 %v6979, %v6970
        %v7151 = vpack.c.b16 %v6989, %v6980
        %v7152 = vpack.c.b16 %v6990, %v6981
        %v7153 = vpack.c.b16 %v6991, %v6982
        %v7154 = vpack.c.b16 %v6992, %v6983
        %v7155 = vpack.c.b16 %v6993, %v6984
        %v7156 = vpack.c.b16 %v6994, %v6985
        %v7157 = vpack.c.b16 %v6995, %v6986
        %v7158 = vpack.c.b16 %v6996, %v6987
        %v7159 = vpack.c.b16 %v6997, %v6988
        %v7160 = vpack.c.b16 %v7007, %v6998
        %v7161 = vpack.c.b16 %v7008, %v6999
        %v7162 = vpack.c.b16 %v7009, %v7000
        %v7163 = vpack.c.b16 %v7010, %v7001
        %v7164 = vpack.c.b16 %v7011, %v7002
        %v7165 = vpack.c.b16 %v7012, %v7003
        %v7166 = vpack.c.b16 %v7013, %v7004
        %v7167 = vpack.c.b16 %v7014, %v7005
        %v7168 = vpack.c.b16 %v7015, %v7006
        %v7169 = vpack.c.b16 %v7025, %v7016
        %v7170 = vpack.c.b16 %v7026, %v7017
        %v7171 = vpack.c.b16 %v7027, %v7018
        %v7172 = vpack.c.b16 %v7028, %v7019
        %v7173 = vpack.c.b16 %v7029, %v7020
        %v7174 = vpack.c.b16 %v7030, %v7021
        %v7175 = vpack.c.b16 %v7031, %v7022
        %v7176 = vpack.c.b16 %v7032, %v7023
        %v7177 = vpack.c.b16 %v7033, %v7024
        %v7466 = vunpack.c.l.b16 %v6442
        %v7467 = vunpack.c.l.b16 %v6443
        %v7468 = vunpack.c.l.b16 %v6444
        %v7469 = vunpack.c.l.b16 %v6445
        %v7470 = vunpack.c.l.b16 %v6446
        %v7471 = vunpack.c.l.b16 %v6447
        %v7472 = vunpack.c.l.b16 %v6448
        %v7473 = vunpack.c.l.b16 %v6449
        %v7474 = vunpack.c.l.b16 %v6450
        %v7475 = vunpack.c.l.b16 %v6451
        %v7476 = vunpack.c.l.b16 %v6452
        %v7477 = vunpack.c.l.b16 %v6453
        %v7478 = vunpack.c.l.b16 %v6454
        %v7479 = vunpack.c.l.b16 %v6455
        %v7480 = vunpack.c.l.b16 %v6456
        %v7481 = vunpack.c.l.b16 %v6457
        %v7482 = vunpack.c.l.b16 %v6458
        %v7483 = vunpack.c.l.b16 %v6459
        %v7484 = vunpack.c.l.b16 %v6460
        %v7485 = vunpack.c.l.b16 %v6461
        %v7486 = vunpack.c.l.b16 %v6462
        %v7487 = vunpack.c.l.b16 %v6463
        %v7488 = vunpack.c.l.b16 %v6464
        %v7489 = vunpack.c.l.b16 %v6465
        %v7490 = vunpack.c.l.b16 %v6466
        %v7491 = vunpack.c.l.b16 %v6467
        %v7492 = vunpack.c.l.b16 %v6468
        %v7493 = vunpack.c.l.b16 %v6469
        %v7494 = vunpack.c.l.b16 %v6470
        %v7495 = vunpack.c.l.b16 %v6471
        %v7496 = vunpack.c.l.b16 %v6472
        %v7497 = vunpack.c.l.b16 %v6473
        %v7498 = vunpack.c.l.b16 %v6474
        %v7499 = vunpack.c.l.b16 %v6475
        %v7500 = vunpack.c.l.b16 %v6476
        %v7501 = vunpack.c.l.b16 %v6477
        %v7502 = vunpack.c.l.b16 %v6478
        %v7503 = vunpack.c.l.b16 %v6479
        %v7504 = vunpack.c.l.b16 %v6480
        %v7505 = vunpack.c.l.b16 %v6481
        %v7506 = vunpack.c.l.b16 %v6482
        %v7507 = vunpack.c.l.b16 %v6483
        %v7508 = vunpack.c.l.b16 %v6484
        %v7509 = vunpack.c.l.b16 %v6485
        %v7510 = vunpack.c.l.b16 %v6486
        %v7511 = vunpack.c.l.b16 %v6487
        %v7512 = vunpack.c.l.b16 %v6488
        %v7513 = vunpack.c.l.b16 %v6489
        %v7514 = vunpack.c.l.b16 %v6490
        %v7515 = vunpack.c.l.b16 %v6491
        %v7516 = vunpack.c.l.b16 %v6492
        %v7517 = vunpack.c.l.b16 %v6493
        %v7518 = vunpack.c.l.b16 %v6494
        %v7519 = vunpack.c.l.b16 %v6495
        %v7520 = vunpack.c.l.b16 %v6496
        %v7521 = vunpack.c.l.b16 %v6497
        %v7522 = vunpack.c.l.b16 %v6498
        %v7523 = vunpack.c.l.b16 %v6499
        %v7524 = vunpack.c.l.b16 %v6500
        %v7525 = vunpack.c.l.b16 %v6501
        %v7526 = vunpack.c.l.b16 %v6502
        %v7527 = vunpack.c.l.b16 %v6503
        %v7528 = vunpack.c.l.b16 %v6504
        %v7529 = vunpack.c.l.b16 %v6505
        %v7530 = vunpack.c.l.b16 %v6506
        %v7531 = vunpack.c.l.b16 %v6507
        %v7532 = vunpack.c.l.b16 %v6508
        %v7533 = vunpack.c.l.b16 %v6509
        %v7534 = vunpack.c.l.b16 %v6510
        %v7535 = vunpack.c.l.b16 %v6511
        %v7536 = vunpack.c.l.b16 %v6512
        %v7537 = vunpack.c.l.b16 %v6513
        %v7538 = vunpack.c.l.b16 %v6514
        %v7539 = vunpack.c.l.b16 %v6515
        %v7540 = vunpack.c.l.b16 %v6516
        %v7541 = vunpack.c.l.b16 %v6517
        %v7542 = vunpack.c.l.b16 %v6518
        %v7543 = vunpack.c.l.b16 %v6519
        %v7544 = vunpack.c.l.b16 %v6520
        %v7545 = vunpack.c.l.b16 %v6521
        %v7546 = vunpack.c.l.b16 %v6522
        %v7547 = vunpack.c.l.b16 %v6523
        %v7548 = vunpack.c.l.b16 %v6524
        %v7549 = vunpack.c.l.b16 %v6525
        %v7550 = vunpack.c.l.b16 %v6526
        %v7551 = vunpack.c.l.b16 %v6527
        %v7552 = vunpack.c.l.b16 %v6528
        %v7553 = vunpack.c.l.b16 %v6529
        %v7554 = vunpack.c.l.b16 %v6530
        %v7555 = vunpack.c.l.b16 %v6531
        %v7556 = vunpack.c.l.b16 %v6532
        %v7557 = vunpack.c.l.b16 %v6533
        %v7558 = vunpack.c.l.b16 %v6534
        %v7559 = vunpack.c.l.b16 %v6535
        %v7560 = vunpack.c.l.b16 %v6536
        %v7561 = vunpack.c.l.b16 %v6537
        %v7562 = vunpack.c.l.b16 %v6538
        %v7563 = vunpack.c.l.b16 %v6539
        %v7564 = vunpack.c.l.b16 %v6540
        %v7565 = vunpack.c.l.b16 %v6541
        %v7566 = vunpack.c.l.b16 %v6542
        %v7567 = vunpack.c.l.b16 %v6543
        %v7568 = vunpack.c.l.b16 %v6544
        %v7569 = vunpack.c.l.b16 %v6545
        %v7570 = vunpack.c.l.b16 %v6546
        %v7571 = vunpack.c.l.b16 %v6547
        %v7572 = vunpack.c.l.b16 %v6548
        %v7573 = vunpack.c.l.b16 %v6549
        %v7574 = vunpack.c.l.b16 %v6550
        %v7575 = vunpack.c.l.b16 %v6551
        %v7576 = vunpack.c.l.b16 %v6552
        %v7577 = vunpack.c.l.b16 %v6553
        %v7578 = vunpack.c.l.b16 %v6554
        %v7579 = vunpack.c.l.b16 %v6555
        %v7580 = vunpack.c.l.b16 %v6556
        %v7581 = vunpack.c.l.b16 %v6557
        %v7582 = vunpack.c.l.b16 %v6558
        %v7583 = vunpack.c.l.b16 %v6559
        %v7584 = vunpack.c.l.b16 %v6560
        %v7585 = vunpack.c.l.b16 %v6561
        %v7586 = vunpack.c.l.b16 %v6562
        %v7587 = vunpack.c.l.b16 %v6563
        %v7588 = vunpack.c.l.b16 %v6564
        %v7589 = vunpack.c.l.b16 %v6565
        %v7590 = vunpack.c.l.b16 %v6566
        %v7591 = vunpack.c.l.b16 %v6567
        %v7592 = vunpack.c.l.b16 %v6568
        %v7593 = vunpack.c.l.b16 %v6569
        %v7594 = vunpack.c.l.b16 %v6570
        %v7595 = vunpack.c.l.b16 %v6571
        %v7596 = vunpack.c.l.b16 %v6572
        %v7597 = vunpack.c.l.b16 %v6573
        %v7598 = vunpack.c.l.b16 %v6574
        %v7599 = vunpack.c.l.b16 %v6575
        %v7600 = vunpack.c.l.b16 %v6576
        %v7601 = vunpack.c.l.b16 %v6577
        %v7602 = vunpack.c.l.b16 %v6578
        %v7603 = vunpack.c.l.b16 %v6579
        %v7604 = vunpack.c.l.b16 %v6580
        %v7605 = vunpack.c.l.b16 %v6581
        %v7606 = vunpack.c.l.b16 %v6582
        %v7607 = vunpack.c.l.b16 %v6583
        %v7608 = vunpack.c.l.b16 %v6584
        %v7609 = vunpack.c.l.b16 %v6585
        %v7610 = vpack.c.b16 %v7467, %v7466
        %v7611 = vpack.c.b16 %v7469, %v7468
        %v7612 = vpack.c.b16 %v7471, %v7470
        %v7613 = vpack.c.b16 %v7473, %v7472
        %v7614 = vpack.c.b16 %v7475, %v7474
        %v7615 = vpack.c.b16 %v7477, %v7476
        %v7616 = vpack.c.b16 %v7479, %v7478
        %v7617 = vpack.c.b16 %v7481, %v7480
        %v7618 = vpack.c.b16 %v7483, %v7482
        %v7619 = vpack.c.b16 %v7485, %v7484
        %v7620 = vpack.c.b16 %v7487, %v7486
        %v7621 = vpack.c.b16 %v7489, %v7488
        %v7622 = vpack.c.b16 %v7491, %v7490
        %v7623 = vpack.c.b16 %v7493, %v7492
        %v7624 = vpack.c.b16 %v7495, %v7494
        %v7625 = vpack.c.b16 %v7497, %v7496
        %v7626 = vpack.c.b16 %v7499, %v7498
        %v7627 = vpack.c.b16 %v7501, %v7500
        %v7628 = vpack.c.b16 %v7503, %v7502
        %v7629 = vpack.c.b16 %v7505, %v7504
        %v7630 = vpack.c.b16 %v7507, %v7506
        %v7631 = vpack.c.b16 %v7509, %v7508
        %v7632 = vpack.c.b16 %v7511, %v7510
        %v7633 = vpack.c.b16 %v7513, %v7512
        %v7634 = vpack.c.b16 %v7515, %v7514
        %v7635 = vpack.c.b16 %v7517, %v7516
        %v7636 = vpack.c.b16 %v7519, %v7518
        %v7637 = vpack.c.b16 %v7521, %v7520
        %v7638 = vpack.c.b16 %v7523, %v7522
        %v7639 = vpack.c.b16 %v7525, %v7524
        %v7640 = vpack.c.b16 %v7527, %v7526
        %v7641 = vpack.c.b16 %v7529, %v7528
        %v7642 = vpack.c.b16 %v7531, %v7530
        %v7643 = vpack.c.b16 %v7533, %v7532
        %v7644 = vpack.c.b16 %v7535, %v7534
        %v7645 = vpack.c.b16 %v7537, %v7536
        %v7646 = vpack.c.b16 %v7539, %v7538
        %v7647 = vpack.c.b16 %v7541, %v7540
        %v7648 = vpack.c.b16 %v7543, %v7542
        %v7649 = vpack.c.b16 %v7545, %v7544
        %v7650 = vpack.c.b16 %v7547, %v7546
        %v7651 = vpack.c.b16 %v7549, %v7548
        %v7652 = vpack.c.b16 %v7551, %v7550
        %v7653 = vpack.c.b16 %v7553, %v7552
        %v7654 = vpack.c.b16 %v7555, %v7554
        %v7655 = vpack.c.b16 %v7557, %v7556
        %v7656 = vpack.c.b16 %v7559, %v7558
        %v7657 = vpack.c.b16 %v7561, %v7560
        %v7658 = vpack.c.b16 %v7563, %v7562
        %v7659 = vpack.c.b16 %v7565, %v7564
        %v7660 = vpack.c.b16 %v7567, %v7566
        %v7661 = vpack.c.b16 %v7569, %v7568
        %v7662 = vpack.c.b16 %v7571, %v7570
        %v7663 = vpack.c.b16 %v7573, %v7572
        %v7664 = vpack.c.b16 %v7575, %v7574
        %v7665 = vpack.c.b16 %v7577, %v7576
        %v7666 = vpack.c.b16 %v7579, %v7578
        %v7667 = vpack.c.b16 %v7581, %v7580
        %v7668 = vpack.c.b16 %v7583, %v7582
        %v7669 = vpack.c.b16 %v7585, %v7584
        %v7670 = vpack.c.b16 %v7587, %v7586
        %v7671 = vpack.c.b16 %v7589, %v7588
        %v7672 = vpack.c.b16 %v7591, %v7590
        %v7673 = vpack.c.b16 %v7593, %v7592
        %v7674 = vpack.c.b16 %v7595, %v7594
        %v7675 = vpack.c.b16 %v7597, %v7596
        %v7676 = vpack.c.b16 %v7599, %v7598
        %v7677 = vpack.c.b16 %v7601, %v7600
        %v7678 = vpack.c.b16 %v7603, %v7602
        %v7679 = vpack.c.b16 %v7605, %v7604
        %v7680 = vpack.c.b16 %v7607, %v7606
        %v7681 = vpack.c.b16 %v7609, %v7608
        %7754 = vmatprep.subr.bf16.mxu0 0
        %7755 = vmatpush1.bf16.msra.mxu0 %v7617
        %7756 = vmatprep.subr.bf16.mxu0 0
        %7757 = vmatpush1.bf16.msra.mxu0 %v7616
        %7758 = vmatprep.subr.bf16.mxu0 0
        %7759 = vmatpush1.bf16.msra.mxu0 %v7615
        %7760 = vmatprep.subr.bf16.mxu0 0
        %7761 = vmatpush1.bf16.msra.mxu0 %v7614
        %7762 = vmatprep.subr.bf16.mxu0 0
        %7763 = vmatpush1.bf16.msra.mxu0 %v7613
        %7764 = vmatprep.subr.bf16.mxu0 0
        %7765 = vmatpush1.bf16.msra.mxu0 %v7612
        %7766 = vmatprep.subr.bf16.mxu0 0
        %7767 = vmatpush1.bf16.msra.mxu0 %v7611
        %7768 = vmatprep.subr.bf16.mxu0 0
        %7769 = vmatpush1.bf16.msra.mxu0 %v7610
        %7770 = vmatprep.subr.bf16.mxu0 0
        %7771 = vmatpush2.bf16.msra.mxu0 %v7625
        %7772 = vmatprep.subr.bf16.mxu0 0
        %7773 = vmatpush2.bf16.msra.mxu0 %v7624
        %7774 = vmatprep.subr.bf16.mxu0 0
        %7775 = vmatpush2.bf16.msra.mxu0 %v7623
        %7776 = vmatprep.subr.bf16.mxu0 0
        %7777 = vmatpush2.bf16.msra.mxu0 %v7622
        %7778 = vmatprep.subr.bf16.mxu0 0
        %7779 = vmatpush2.bf16.msra.mxu0 %v7621
        %7780 = vmatprep.subr.bf16.mxu0 0
        %7781 = vmatpush2.bf16.msra.mxu0 %v7620
        %7782 = vmatprep.subr.bf16.mxu0 0
        %7783 = vmatpush2.bf16.msra.mxu0 %v7619
        %7784 = vmatprep.subr.bf16.mxu0 0
        %7785 = vmatpush2.bf16.msra.mxu0 %v7618
        %7786 = vmatprep.mubr.bf16.mxu0 %v7035
        %7787 = vmatmul.mubr.bf16.gmra.mxu0 %v7034
        %v7788 = vpop.f32.mrf.mxu0
        %v7789 = vadd.f32 0.0, %v7788
        %v7790 = vpop.f32.mrf.mxu0
        %v7791 = vpop.f32.mrf.mxu0
        %v7792 = vadd.f32 0.0, %v7791
        %v7793 = vpop.f32.mrf.mxu0
        %7794 = vmatprep.mubr.bf16.mxu0 %v7044
        %7795 = vmatmul.mubr.bf16.gmra.mxu0 %v7043
        %v7796 = vpop.f32.mrf.mxu0
        %v7797 = vadd.f32 0.0, %v7796
        %v7798 = vpop.f32.mrf.mxu0
        %v7799 = vpop.f32.mrf.mxu0
        %v7800 = vadd.f32 0.0, %v7799
        %v7801 = vpop.f32.mrf.mxu0
        %7802 = vmatprep.mubr.bf16.mxu0 %v7053
        %7803 = vmatmul.mubr.bf16.gmra.mxu0 %v7052
        %v7804 = vpop.f32.mrf.mxu0
        %v7805 = vadd.f32 0.0, %v7804
        %v7806 = vpop.f32.mrf.mxu0
        %v7807 = vpop.f32.mrf.mxu0
        %v7808 = vadd.f32 0.0, %v7807
        %v7809 = vpop.f32.mrf.mxu0
        %7810 = vmatprep.mubr.bf16.mxu0 %v7062
        %7811 = vmatmul.mubr.bf16.gmra.mxu0 %v7061
        %v7812 = vpop.f32.mrf.mxu0
        %v7813 = vadd.f32 0.0, %v7812
        %v7814 = vpop.f32.mrf.mxu0
        %v7815 = vpop.f32.mrf.mxu0
        %v7816 = vadd.f32 0.0, %v7815
        %v7817 = vpop.f32.mrf.mxu0
        %7818 = vmatprep.mubr.bf16.mxu0 %v7071
        %7819 = vmatmul.mubr.bf16.gmra.mxu0 %v7070
        %v7820 = vpop.f32.mrf.mxu0
        %v7821 = vadd.f32 0.0, %v7820
        %v7822 = vpop.f32.mrf.mxu0
        %v7823 = vpop.f32.mrf.mxu0
        %v7824 = vadd.f32 0.0, %v7823
        %v7825 = vpop.f32.mrf.mxu0
        %7826 = vmatprep.mubr.bf16.mxu0 %v7080
        %7827 = vmatmul.mubr.bf16.gmra.mxu0 %v7079
        %v7828 = vpop.f32.mrf.mxu0
        %v7829 = vadd.f32 0.0, %v7828
        %v7830 = vpop.f32.mrf.mxu0
        %v7831 = vpop.f32.mrf.mxu0
        %v7832 = vadd.f32 0.0, %v7831
        %v7833 = vpop.f32.mrf.mxu0
        %7834 = vmatprep.mubr.bf16.mxu0 %v7089
        %7835 = vmatmul.mubr.bf16.gmra.mxu0 %v7088
        %v7836 = vpop.f32.mrf.mxu0
        %v7837 = vadd.f32 0.0, %v7836
        %v7838 = vpop.f32.mrf.mxu0
        %v7839 = vpop.f32.mrf.mxu0
        %v7840 = vadd.f32 0.0, %v7839
        %v7841 = vpop.f32.mrf.mxu0
        %7842 = vmatprep.mubr.bf16.mxu0 %v7098
        %7843 = vmatmul.mubr.bf16.gmra.mxu0 %v7097
        %v7844 = vpop.f32.mrf.mxu0
        %v7845 = vadd.f32 0.0, %v7844
        %v7846 = vpop.f32.mrf.mxu0
        %v7847 = vpop.f32.mrf.mxu0
        %v7848 = vadd.f32 0.0, %v7847
        %v7849 = vpop.f32.mrf.mxu0
        %7850 = vmatprep.mubr.bf16.mxu0 %v7107
        %7851 = vmatmul.mubr.bf16.gmra.mxu0 %v7106
        %v7852 = vpop.f32.mrf.mxu0
        %v7853 = vadd.f32 0.0, %v7852
        %v7854 = vpop.f32.mrf.mxu0
        %v7855 = vpop.f32.mrf.mxu0
        %v7856 = vadd.f32 0.0, %v7855
        %v7857 = vpop.f32.mrf.mxu0
        %7858 = vmatprep.mubr.bf16.mxu0 %v7116
        %7859 = vmatmul.mubr.bf16.gmra.mxu0 %v7115
        %v7860 = vpop.f32.mrf.mxu0
        %v7861 = vadd.f32 0.0, %v7860
        %v7862 = vpop.f32.mrf.mxu0
        %v7863 = vpop.f32.mrf.mxu0
        %v7864 = vadd.f32 0.0, %v7863
        %v7865 = vpop.f32.mrf.mxu0
        %7866 = vmatprep.mubr.bf16.mxu0 %v7125
        %7867 = vmatmul.mubr.bf16.gmra.mxu0 %v7124
        %v7868 = vpop.f32.mrf.mxu0
        %v7869 = vadd.f32 0.0, %v7868
        %v7870 = vpop.f32.mrf.mxu0
        %v7871 = vpop.f32.mrf.mxu0
        %v7872 = vadd.f32 0.0, %v7871
        %v7873 = vpop.f32.mrf.mxu0
        %7874 = vmatprep.mubr.bf16.mxu0 %v7134
        %7875 = vmatmul.mubr.bf16.gmra.mxu0 %v7133
        %v7876 = vpop.f32.mrf.mxu0
        %v7877 = vadd.f32 0.0, %v7876
        %v7878 = vpop.f32.mrf.mxu0
        %v7879 = vpop.f32.mrf.mxu0
        %v7880 = vadd.f32 0.0, %v7879
        %v7881 = vpop.f32.mrf.mxu0
        %7882 = vmatprep.mubr.bf16.mxu0 %v7143
        %7883 = vmatmul.mubr.bf16.gmra.mxu0 %v7142
        %v7884 = vpop.f32.mrf.mxu0
        %v7885 = vadd.f32 0.0, %v7884
        %v7886 = vpop.f32.mrf.mxu0
        %v7887 = vpop.f32.mrf.mxu0
        %v7888 = vadd.f32 0.0, %v7887
        %v7889 = vpop.f32.mrf.mxu0
        %7890 = vmatprep.mubr.bf16.mxu0 %v7152
        %7891 = vmatmul.mubr.bf16.gmra.mxu0 %v7151
        %v7892 = vpop.f32.mrf.mxu0
        %v7893 = vadd.f32 0.0, %v7892
        %v7894 = vpop.f32.mrf.mxu0
        %v7895 = vpop.f32.mrf.mxu0
        %v7896 = vadd.f32 0.0, %v7895
        %v7897 = vpop.f32.mrf.mxu0
        %7898 = vmatprep.mubr.bf16.mxu0 %v7161
        %7899 = vmatmul.mubr.bf16.gmra.mxu0 %v7160
        %v7900 = vpop.f32.mrf.mxu0
        %v7901 = vadd.f32 0.0, %v7900
        %v7902 = vpop.f32.mrf.mxu0
        %v7903 = vpop.f32.mrf.mxu0
        %v7904 = vadd.f32 0.0, %v7903
        %v7905 = vpop.f32.mrf.mxu0
        %7906 = vmatprep.mubr.bf16.mxu0 %v7170
        %7907 = vmatmul.mubr.bf16.gmra.mxu0 %v7169
        %v7908 = vpop.f32.mrf.mxu0
        %v7909 = vadd.f32 0.0, %v7908
        %v7910 = vpop.f32.mrf.mxu0
        %v7911 = vpop.f32.mrf.mxu0
        %v7912 = vadd.f32 0.0, %v7911
        %v7913 = vpop.f32.mrf.mxu0
        %7914 = vdwg.mxu0
        %7915 = vmatprep.subr.bf16.mxu0 0
        %7916 = vmatpush1.bf16.msra.mxu0 %v7633
        %7917 = vmatprep.subr.bf16.mxu0 0
        %7918 = vmatpush1.bf16.msra.mxu0 %v7632
        %7919 = vmatprep.subr.bf16.mxu0 0
        %7920 = vmatpush1.bf16.msra.mxu0 %v7631
        %7921 = vmatprep.subr.bf16.mxu0 0
        %7922 = vmatpush1.bf16.msra.mxu0 %v7630
        %7923 = vmatprep.subr.bf16.mxu0 0
        %7924 = vmatpush1.bf16.msra.mxu0 %v7629
        %7925 = vmatprep.subr.bf16.mxu0 0
        %7926 = vmatpush1.bf16.msra.mxu0 %v7628
        %7927 = vmatprep.subr.bf16.mxu0 0
        %7928 = vmatpush1.bf16.msra.mxu0 %v7627
        %7929 = vmatprep.subr.bf16.mxu0 0
        %7930 = vmatpush1.bf16.msra.mxu0 %v7626
        %7931 = vmatprep.subr.bf16.mxu0 0
        %7932 = vmatpush2.bf16.msra.mxu0 %v7641
        %7933 = vmatprep.subr.bf16.mxu0 0
        %7934 = vmatpush2.bf16.msra.mxu0 %v7640
        %7935 = vmatprep.subr.bf16.mxu0 0
        %7936 = vmatpush2.bf16.msra.mxu0 %v7639
        %7937 = vmatprep.subr.bf16.mxu0 0
        %7938 = vmatpush2.bf16.msra.mxu0 %v7638
        %7939 = vmatprep.subr.bf16.mxu0 0
        %7940 = vmatpush2.bf16.msra.mxu0 %v7637
        %7941 = vmatprep.subr.bf16.mxu0 0
        %7942 = vmatpush2.bf16.msra.mxu0 %v7636
        %7943 = vmatprep.subr.bf16.mxu0 0
        %7944 = vmatpush2.bf16.msra.mxu0 %v7635
        %7945 = vmatprep.subr.bf16.mxu0 0
        %7946 = vmatpush2.bf16.msra.mxu0 %v7634
        %7947 = vmatprep.mubr.bf16.mxu0 %v7037
        %7948 = vmatmul.mubr.bf16.gmra.mxu0 %v7036
        %v7949 = vpop.f32.mrf.mxu0
        %v7950 = vadd.f32 %v7789, %v7949
        %v7951 = vpop.f32.mrf.mxu0
        %v7952 = vpop.f32.mrf.mxu0
        %v7953 = vadd.f32 %v7792, %v7952
        %v7954 = vpop.f32.mrf.mxu0
        %7955 = vmatprep.mubr.bf16.mxu0 %v7046
        %7956 = vmatmul.mubr.bf16.gmra.mxu0 %v7045
        %v7957 = vpop.f32.mrf.mxu0
        %v7958 = vadd.f32 %v7797, %v7957
        %v7959 = vpop.f32.mrf.mxu0
        %v7960 = vpop.f32.mrf.mxu0
        %v7961 = vadd.f32 %v7800, %v7960
        %v7962 = vpop.f32.mrf.mxu0
        %7963 = vmatprep.mubr.bf16.mxu0 %v7055
        %7964 = vmatmul.mubr.bf16.gmra.mxu0 %v7054
        %v7965 = vpop.f32.mrf.mxu0
        %v7966 = vadd.f32 %v7805, %v7965
        %v7967 = vpop.f32.mrf.mxu0
        %v7968 = vpop.f32.mrf.mxu0
        %v7969 = vadd.f32 %v7808, %v7968
        %v7970 = vpop.f32.mrf.mxu0
        %7971 = vmatprep.mubr.bf16.mxu0 %v7064
        %7972 = vmatmul.mubr.bf16.gmra.mxu0 %v7063
        %v7973 = vpop.f32.mrf.mxu0
        %v7974 = vadd.f32 %v7813, %v7973
        %v7975 = vpop.f32.mrf.mxu0
        %v7976 = vpop.f32.mrf.mxu0
        %v7977 = vadd.f32 %v7816, %v7976
        %v7978 = vpop.f32.mrf.mxu0
        %7979 = vmatprep.mubr.bf16.mxu0 %v7073
        %7980 = vmatmul.mubr.bf16.gmra.mxu0 %v7072
        %v7981 = vpop.f32.mrf.mxu0
        %v7982 = vadd.f32 %v7821, %v7981
        %v7983 = vpop.f32.mrf.mxu0
        %v7984 = vpop.f32.mrf.mxu0
        %v7985 = vadd.f32 %v7824, %v7984
        %v7986 = vpop.f32.mrf.mxu0
        %7987 = vmatprep.mubr.bf16.mxu0 %v7082
        %7988 = vmatmul.mubr.bf16.gmra.mxu0 %v7081
        %v7989 = vpop.f32.mrf.mxu0
        %v7990 = vadd.f32 %v7829, %v7989
        %v7991 = vpop.f32.mrf.mxu0
        %v7992 = vpop.f32.mrf.mxu0
        %v7993 = vadd.f32 %v7832, %v7992
        %v7994 = vpop.f32.mrf.mxu0
        %7995 = vmatprep.mubr.bf16.mxu0 %v7091
        %7996 = vmatmul.mubr.bf16.gmra.mxu0 %v7090
        %v7997 = vpop.f32.mrf.mxu0
        %v7998 = vadd.f32 %v7837, %v7997
        %v7999 = vpop.f32.mrf.mxu0
        %v8000 = vpop.f32.mrf.mxu0
        %v8001 = vadd.f32 %v7840, %v8000
        %v8002 = vpop.f32.mrf.mxu0
        %8003 = vmatprep.mubr.bf16.mxu0 %v7100
        %8004 = vmatmul.mubr.bf16.gmra.mxu0 %v7099
        %v8005 = vpop.f32.mrf.mxu0
        %v8006 = vadd.f32 %v7845, %v8005
        %v8007 = vpop.f32.mrf.mxu0
        %v8008 = vpop.f32.mrf.mxu0
        %v8009 = vadd.f32 %v7848, %v8008
        %v8010 = vpop.f32.mrf.mxu0
        %8011 = vmatprep.mubr.bf16.mxu0 %v7109
        %8012 = vmatmul.mubr.bf16.gmra.mxu0 %v7108
        %v8013 = vpop.f32.mrf.mxu0
        %v8014 = vadd.f32 %v7853, %v8013
        %v8015 = vpop.f32.mrf.mxu0
        %v8016 = vpop.f32.mrf.mxu0
        %v8017 = vadd.f32 %v7856, %v8016
        %v8018 = vpop.f32.mrf.mxu0
        %8019 = vmatprep.mubr.bf16.mxu0 %v7118
        %8020 = vmatmul.mubr.bf16.gmra.mxu0 %v7117
        %v8021 = vpop.f32.mrf.mxu0
        %v8022 = vadd.f32 %v7861, %v8021
        %v8023 = vpop.f32.mrf.mxu0
        %v8024 = vpop.f32.mrf.mxu0
        %v8025 = vadd.f32 %v7864, %v8024
        %v8026 = vpop.f32.mrf.mxu0
        %8027 = vmatprep.mubr.bf16.mxu0 %v7127
        %8028 = vmatmul.mubr.bf16.gmra.mxu0 %v7126
        %v8029 = vpop.f32.mrf.mxu0
        %v8030 = vadd.f32 %v7869, %v8029
        %v8031 = vpop.f32.mrf.mxu0
        %v8032 = vpop.f32.mrf.mxu0
        %v8033 = vadd.f32 %v7872, %v8032
        %v8034 = vpop.f32.mrf.mxu0
        %8035 = vmatprep.mubr.bf16.mxu0 %v7136
        %8036 = vmatmul.mubr.bf16.gmra.mxu0 %v7135
        %v8037 = vpop.f32.mrf.mxu0
        %v8038 = vadd.f32 %v7877, %v8037
        %v8039 = vpop.f32.mrf.mxu0
        %v8040 = vpop.f32.mrf.mxu0
        %v8041 = vadd.f32 %v7880, %v8040
        %v8042 = vpop.f32.mrf.mxu0
        %8043 = vmatprep.mubr.bf16.mxu0 %v7145
        %8044 = vmatmul.mubr.bf16.gmra.mxu0 %v7144
        %v8045 = vpop.f32.mrf.mxu0
        %v8046 = vadd.f32 %v7885, %v8045
        %v8047 = vpop.f32.mrf.mxu0
        %v8048 = vpop.f32.mrf.mxu0
        %v8049 = vadd.f32 %v7888, %v8048
        %v8050 = vpop.f32.mrf.mxu0
        %8051 = vmatprep.mubr.bf16.mxu0 %v7154
        %8052 = vmatmul.mubr.bf16.gmra.mxu0 %v7153
        %v8053 = vpop.f32.mrf.mxu0
        %v8054 = vadd.f32 %v7893, %v8053
        %v8055 = vpop.f32.mrf.mxu0
        %v8056 = vpop.f32.mrf.mxu0
        %v8057 = vadd.f32 %v7896, %v8056
        %v8058 = vpop.f32.mrf.mxu0
        %8059 = vmatprep.mubr.bf16.mxu0 %v7163
        %8060 = vmatmul.mubr.bf16.gmra.mxu0 %v7162
        %v8061 = vpop.f32.mrf.mxu0
        %v8062 = vadd.f32 %v7901, %v8061
        %v8063 = vpop.f32.mrf.mxu0
        %v8064 = vpop.f32.mrf.mxu0
        %v8065 = vadd.f32 %v7904, %v8064
        %v8066 = vpop.f32.mrf.mxu0
        %8067 = vmatprep.mubr.bf16.mxu0 %v7172
        %8068 = vmatmul.mubr.bf16.gmra.mxu0 %v7171
        %v8069 = vpop.f32.mrf.mxu0
        %v8070 = vadd.f32 %v7909, %v8069
        %v8071 = vpop.f32.mrf.mxu0
        %v8072 = vpop.f32.mrf.mxu0
        %v8073 = vadd.f32 %v7912, %v8072
        %v8074 = vpop.f32.mrf.mxu0
        %8075 = vdwg.mxu0
        %8076 = vmatprep.subr.bf16.mxu0 0
        %8077 = vmatpush1.bf16.msra.mxu0 %v7649
        %8078 = vmatprep.subr.bf16.mxu0 0
        %8079 = vmatpush1.bf16.msra.mxu0 %v7648
        %8080 = vmatprep.subr.bf16.mxu0 0
        %8081 = vmatpush1.bf16.msra.mxu0 %v7647
        %8082 = vmatprep.subr.bf16.mxu0 0
        %8083 = vmatpush1.bf16.msra.mxu0 %v7646
        %8084 = vmatprep.subr.bf16.mxu0 0
        %8085 = vmatpush1.bf16.msra.mxu0 %v7645
        %8086 = vmatprep.subr.bf16.mxu0 0
        %8087 = vmatpush1.bf16.msra.mxu0 %v7644
        %8088 = vmatprep.subr.bf16.mxu0 0
        %8089 = vmatpush1.bf16.msra.mxu0 %v7643
        %8090 = vmatprep.subr.bf16.mxu0 0
        %8091 = vmatpush1.bf16.msra.mxu0 %v7642
        %8092 = vmatprep.subr.bf16.mxu0 0
        %8093 = vmatpush2.bf16.msra.mxu0 %v7657
        %8094 = vmatprep.subr.bf16.mxu0 0
        %8095 = vmatpush2.bf16.msra.mxu0 %v7656
        %8096 = vmatprep.subr.bf16.mxu0 0
        %8097 = vmatpush2.bf16.msra.mxu0 %v7655
        %8098 = vmatprep.subr.bf16.mxu0 0
        %8099 = vmatpush2.bf16.msra.mxu0 %v7654
        %8100 = vmatprep.subr.bf16.mxu0 0
        %8101 = vmatpush2.bf16.msra.mxu0 %v7653
        %8102 = vmatprep.subr.bf16.mxu0 0
        %8103 = vmatpush2.bf16.msra.mxu0 %v7652
        %8104 = vmatprep.subr.bf16.mxu0 0
        %8105 = vmatpush2.bf16.msra.mxu0 %v7651
        %8106 = vmatprep.subr.bf16.mxu0 0
        %8107 = vmatpush2.bf16.msra.mxu0 %v7650
        %8108 = vmatprep.mubr.bf16.mxu0 %v7039
        %8109 = vmatmul.mubr.bf16.gmra.mxu0 %v7038
        %v8110 = vpop.f32.mrf.mxu0
        %v8111 = vadd.f32 %v7950, %v8110
        %v8112 = vpop.f32.mrf.mxu0
        %v8113 = vpop.f32.mrf.mxu0
        %v8114 = vadd.f32 %v7953, %v8113
        %v8115 = vpop.f32.mrf.mxu0
        %8116 = vmatprep.mubr.bf16.mxu0 %v7048
        %8117 = vmatmul.mubr.bf16.gmra.mxu0 %v7047
        %v8118 = vpop.f32.mrf.mxu0
        %v8119 = vadd.f32 %v7958, %v8118
        %v8120 = vpop.f32.mrf.mxu0
        %v8121 = vpop.f32.mrf.mxu0
        %v8122 = vadd.f32 %v7961, %v8121
        %v8123 = vpop.f32.mrf.mxu0
        %8124 = vmatprep.mubr.bf16.mxu0 %v7057
        %8125 = vmatmul.mubr.bf16.gmra.mxu0 %v7056
        %v8126 = vpop.f32.mrf.mxu0
        %v8127 = vadd.f32 %v7966, %v8126
        %v8128 = vpop.f32.mrf.mxu0
        %v8129 = vpop.f32.mrf.mxu0
        %v8130 = vadd.f32 %v7969, %v8129
        %v8131 = vpop.f32.mrf.mxu0
        %8132 = vmatprep.mubr.bf16.mxu0 %v7066
        %8133 = vmatmul.mubr.bf16.gmra.mxu0 %v7065
        %v8134 = vpop.f32.mrf.mxu0
        %v8135 = vadd.f32 %v7974, %v8134
        %v8136 = vpop.f32.mrf.mxu0
        %v8137 = vpop.f32.mrf.mxu0
        %v8138 = vadd.f32 %v7977, %v8137
        %v8139 = vpop.f32.mrf.mxu0
        %8140 = vmatprep.mubr.bf16.mxu0 %v7075
        %8141 = vmatmul.mubr.bf16.gmra.mxu0 %v7074
        %v8142 = vpop.f32.mrf.mxu0
        %v8143 = vadd.f32 %v7982, %v8142
        %v8144 = vpop.f32.mrf.mxu0
        %v8145 = vpop.f32.mrf.mxu0
        %v8146 = vadd.f32 %v7985, %v8145
        %v8147 = vpop.f32.mrf.mxu0
        %8148 = vmatprep.mubr.bf16.mxu0 %v7084
        %8149 = vmatmul.mubr.bf16.gmra.mxu0 %v7083
        %v8150 = vpop.f32.mrf.mxu0
        %v8151 = vadd.f32 %v7990, %v8150
        %v8152 = vpop.f32.mrf.mxu0
        %v8153 = vpop.f32.mrf.mxu0
        %v8154 = vadd.f32 %v7993, %v8153
        %v8155 = vpop.f32.mrf.mxu0
        %8156 = vmatprep.mubr.bf16.mxu0 %v7093
        %8157 = vmatmul.mubr.bf16.gmra.mxu0 %v7092
        %v8158 = vpop.f32.mrf.mxu0
        %v8159 = vadd.f32 %v7998, %v8158
        %v8160 = vpop.f32.mrf.mxu0
        %v8161 = vpop.f32.mrf.mxu0
        %v8162 = vadd.f32 %v8001, %v8161
        %v8163 = vpop.f32.mrf.mxu0
        %8164 = vmatprep.mubr.bf16.mxu0 %v7102
        %8165 = vmatmul.mubr.bf16.gmra.mxu0 %v7101
        %v8166 = vpop.f32.mrf.mxu0
        %v8167 = vadd.f32 %v8006, %v8166
        %v8168 = vpop.f32.mrf.mxu0
        %v8169 = vpop.f32.mrf.mxu0
        %v8170 = vadd.f32 %v8009, %v8169
        %v8171 = vpop.f32.mrf.mxu0
        %8172 = vmatprep.mubr.bf16.mxu0 %v7111
        %8173 = vmatmul.mubr.bf16.gmra.mxu0 %v7110
        %v8174 = vpop.f32.mrf.mxu0
        %v8175 = vadd.f32 %v8014, %v8174
        %v8176 = vpop.f32.mrf.mxu0
        %v8177 = vpop.f32.mrf.mxu0
        %v8178 = vadd.f32 %v8017, %v8177
        %v8179 = vpop.f32.mrf.mxu0
        %8180 = vmatprep.mubr.bf16.mxu0 %v7120
        %8181 = vmatmul.mubr.bf16.gmra.mxu0 %v7119
        %v8182 = vpop.f32.mrf.mxu0
        %v8183 = vadd.f32 %v8022, %v8182
        %v8184 = vpop.f32.mrf.mxu0
        %v8185 = vpop.f32.mrf.mxu0
        %v8186 = vadd.f32 %v8025, %v8185
        %v8187 = vpop.f32.mrf.mxu0
        %8188 = vmatprep.mubr.bf16.mxu0 %v7129
        %8189 = vmatmul.mubr.bf16.gmra.mxu0 %v7128
        %v8190 = vpop.f32.mrf.mxu0
        %v8191 = vadd.f32 %v8030, %v8190
        %v8192 = vpop.f32.mrf.mxu0
        %v8193 = vpop.f32.mrf.mxu0
        %v8194 = vadd.f32 %v8033, %v8193
        %v8195 = vpop.f32.mrf.mxu0
        %8196 = vmatprep.mubr.bf16.mxu0 %v7138
        %8197 = vmatmul.mubr.bf16.gmra.mxu0 %v7137
        %v8198 = vpop.f32.mrf.mxu0
        %v8199 = vadd.f32 %v8038, %v8198
        %v8200 = vpop.f32.mrf.mxu0
        %v8201 = vpop.f32.mrf.mxu0
        %v8202 = vadd.f32 %v8041, %v8201
        %v8203 = vpop.f32.mrf.mxu0
        %8204 = vmatprep.mubr.bf16.mxu0 %v7147
        %8205 = vmatmul.mubr.bf16.gmra.mxu0 %v7146
        %v8206 = vpop.f32.mrf.mxu0
        %v8207 = vadd.f32 %v8046, %v8206
        %v8208 = vpop.f32.mrf.mxu0
        %v8209 = vpop.f32.mrf.mxu0
        %v8210 = vadd.f32 %v8049, %v8209
        %v8211 = vpop.f32.mrf.mxu0
        %8212 = vmatprep.mubr.bf16.mxu0 %v7156
        %8213 = vmatmul.mubr.bf16.gmra.mxu0 %v7155
        %v8214 = vpop.f32.mrf.mxu0
        %v8215 = vadd.f32 %v8054, %v8214
        %v8216 = vpop.f32.mrf.mxu0
        %v8217 = vpop.f32.mrf.mxu0
        %v8218 = vadd.f32 %v8057, %v8217
        %v8219 = vpop.f32.mrf.mxu0
        %8220 = vmatprep.mubr.bf16.mxu0 %v7165
        %8221 = vmatmul.mubr.bf16.gmra.mxu0 %v7164
        %v8222 = vpop.f32.mrf.mxu0
        %v8223 = vadd.f32 %v8062, %v8222
        %v8224 = vpop.f32.mrf.mxu0
        %v8225 = vpop.f32.mrf.mxu0
        %v8226 = vadd.f32 %v8065, %v8225
        %v8227 = vpop.f32.mrf.mxu0
        %8228 = vmatprep.mubr.bf16.mxu0 %v7174
        %8229 = vmatmul.mubr.bf16.gmra.mxu0 %v7173
        %v8230 = vpop.f32.mrf.mxu0
        %v8231 = vadd.f32 %v8070, %v8230
        %v8232 = vpop.f32.mrf.mxu0
        %v8233 = vpop.f32.mrf.mxu0
        %v8234 = vadd.f32 %v8073, %v8233
        %v8235 = vpop.f32.mrf.mxu0
        %8236 = vdwg.mxu0
        %8237 = vmatprep.subr.bf16.mxu0 0
        %8238 = vmatpush1.bf16.msra.mxu0 %v7665
        %8239 = vmatprep.subr.bf16.mxu0 0
        %8240 = vmatpush1.bf16.msra.mxu0 %v7664
        %8241 = vmatprep.subr.bf16.mxu0 0
        %8242 = vmatpush1.bf16.msra.mxu0 %v7663
        %8243 = vmatprep.subr.bf16.mxu0 0
        %8244 = vmatpush1.bf16.msra.mxu0 %v7662
        %8245 = vmatprep.subr.bf16.mxu0 0
        %8246 = vmatpush1.bf16.msra.mxu0 %v7661
        %8247 = vmatprep.subr.bf16.mxu0 0
        %8248 = vmatpush1.bf16.msra.mxu0 %v7660
        %8249 = vmatprep.subr.bf16.mxu0 0
        %8250 = vmatpush1.bf16.msra.mxu0 %v7659
        %8251 = vmatprep.subr.bf16.mxu0 0
        %8252 = vmatpush1.bf16.msra.mxu0 %v7658
        %8253 = vmatprep.subr.bf16.mxu0 0
        %8254 = vmatpush2.bf16.msra.mxu0 %v7673
        %8255 = vmatprep.subr.bf16.mxu0 0
        %8256 = vmatpush2.bf16.msra.mxu0 %v7672
        %8257 = vmatprep.subr.bf16.mxu0 0
        %8258 = vmatpush2.bf16.msra.mxu0 %v7671
        %8259 = vmatprep.subr.bf16.mxu0 0
        %8260 = vmatpush2.bf16.msra.mxu0 %v7670
        %8261 = vmatprep.subr.bf16.mxu0 0
        %8262 = vmatpush2.bf16.msra.mxu0 %v7669
        %8263 = vmatprep.subr.bf16.mxu0 0
        %8264 = vmatpush2.bf16.msra.mxu0 %v7668
        %8265 = vmatprep.subr.bf16.mxu0 0
        %8266 = vmatpush2.bf16.msra.mxu0 %v7667
        %8267 = vmatprep.subr.bf16.mxu0 0
        %8268 = vmatpush2.bf16.msra.mxu0 %v7666
        %8269 = vmatprep.mubr.bf16.mxu0 %v7041
        %8270 = vmatmul.mubr.bf16.gmra.mxu0 %v7040
        %v8271 = vpop.f32.mrf.mxu0
        %v8272 = vadd.f32 %v8111, %v8271
        %v8273 = vpop.f32.mrf.mxu0
        %v8274 = vpop.f32.mrf.mxu0
        %v8275 = vadd.f32 %v8114, %v8274
        %v8276 = vpop.f32.mrf.mxu0
        %8277 = vmatprep.mubr.bf16.mxu0 %v7050
        %8278 = vmatmul.mubr.bf16.gmra.mxu0 %v7049
        %v8279 = vpop.f32.mrf.mxu0
        %v8280 = vadd.f32 %v8119, %v8279
        %v8281 = vpop.f32.mrf.mxu0
        %v8282 = vpop.f32.mrf.mxu0
        %v8283 = vadd.f32 %v8122, %v8282
        %v8284 = vpop.f32.mrf.mxu0
        %8285 = vmatprep.mubr.bf16.mxu0 %v7059
        %8286 = vmatmul.mubr.bf16.gmra.mxu0 %v7058
        %v8287 = vpop.f32.mrf.mxu0
        %v8288 = vadd.f32 %v8127, %v8287
        %v8289 = vpop.f32.mrf.mxu0
        %v8290 = vpop.f32.mrf.mxu0
        %v8291 = vadd.f32 %v8130, %v8290
        %v8292 = vpop.f32.mrf.mxu0
        %8293 = vmatprep.mubr.bf16.mxu0 %v7068
        %8294 = vmatmul.mubr.bf16.gmra.mxu0 %v7067
        %v8295 = vpop.f32.mrf.mxu0
        %v8296 = vadd.f32 %v8135, %v8295
        %v8297 = vpop.f32.mrf.mxu0
        %v8298 = vpop.f32.mrf.mxu0
        %v8299 = vadd.f32 %v8138, %v8298
        %v8300 = vpop.f32.mrf.mxu0
        %8301 = vmatprep.mubr.bf16.mxu0 %v7077
        %8302 = vmatmul.mubr.bf16.gmra.mxu0 %v7076
        %v8303 = vpop.f32.mrf.mxu0
        %v8304 = vadd.f32 %v8143, %v8303
        %v8305 = vpop.f32.mrf.mxu0
        %v8306 = vpop.f32.mrf.mxu0
        %v8307 = vadd.f32 %v8146, %v8306
        %v8308 = vpop.f32.mrf.mxu0
        %8309 = vmatprep.mubr.bf16.mxu0 %v7086
        %8310 = vmatmul.mubr.bf16.gmra.mxu0 %v7085
        %v8311 = vpop.f32.mrf.mxu0
        %v8312 = vadd.f32 %v8151, %v8311
        %v8313 = vpop.f32.mrf.mxu0
        %v8314 = vpop.f32.mrf.mxu0
        %v8315 = vadd.f32 %v8154, %v8314
        %v8316 = vpop.f32.mrf.mxu0
        %8317 = vmatprep.mubr.bf16.mxu0 %v7095
        %8318 = vmatmul.mubr.bf16.gmra.mxu0 %v7094
        %v8319 = vpop.f32.mrf.mxu0
        %v8320 = vadd.f32 %v8159, %v8319
        %v8321 = vpop.f32.mrf.mxu0
        %v8322 = vpop.f32.mrf.mxu0
        %v8323 = vadd.f32 %v8162, %v8322
        %v8324 = vpop.f32.mrf.mxu0
        %8325 = vmatprep.mubr.bf16.mxu0 %v7104
        %8326 = vmatmul.mubr.bf16.gmra.mxu0 %v7103
        %v8327 = vpop.f32.mrf.mxu0
        %v8328 = vadd.f32 %v8167, %v8327
        %v8329 = vpop.f32.mrf.mxu0
        %v8330 = vpop.f32.mrf.mxu0
        %v8331 = vadd.f32 %v8170, %v8330
        %v8332 = vpop.f32.mrf.mxu0
        %8333 = vmatprep.mubr.bf16.mxu0 %v7113
        %8334 = vmatmul.mubr.bf16.gmra.mxu0 %v7112
        %v8335 = vpop.f32.mrf.mxu0
        %v8336 = vadd.f32 %v8175, %v8335
        %v8337 = vpop.f32.mrf.mxu0
        %v8338 = vpop.f32.mrf.mxu0
        %v8339 = vadd.f32 %v8178, %v8338
        %v8340 = vpop.f32.mrf.mxu0
        %8341 = vmatprep.mubr.bf16.mxu0 %v7122
        %8342 = vmatmul.mubr.bf16.gmra.mxu0 %v7121
        %v8343 = vpop.f32.mrf.mxu0
        %v8344 = vadd.f32 %v8183, %v8343
        %v8345 = vpop.f32.mrf.mxu0
        %v8346 = vpop.f32.mrf.mxu0
        %v8347 = vadd.f32 %v8186, %v8346
        %v8348 = vpop.f32.mrf.mxu0
        %8349 = vmatprep.mubr.bf16.mxu0 %v7131
        %8350 = vmatmul.mubr.bf16.gmra.mxu0 %v7130
        %v8351 = vpop.f32.mrf.mxu0
        %v8352 = vadd.f32 %v8191, %v8351
        %v8353 = vpop.f32.mrf.mxu0
        %v8354 = vpop.f32.mrf.mxu0
        %v8355 = vadd.f32 %v8194, %v8354
        %v8356 = vpop.f32.mrf.mxu0
        %8357 = vmatprep.mubr.bf16.mxu0 %v7140
        %8358 = vmatmul.mubr.bf16.gmra.mxu0 %v7139
        %v8359 = vpop.f32.mrf.mxu0
        %v8360 = vadd.f32 %v8199, %v8359
        %v8361 = vpop.f32.mrf.mxu0
        %v8362 = vpop.f32.mrf.mxu0
        %v8363 = vadd.f32 %v8202, %v8362
        %v8364 = vpop.f32.mrf.mxu0
        %8365 = vmatprep.mubr.bf16.mxu0 %v7149
        %8366 = vmatmul.mubr.bf16.gmra.mxu0 %v7148
        %v8367 = vpop.f32.mrf.mxu0
        %v8368 = vadd.f32 %v8207, %v8367
        %v8369 = vpop.f32.mrf.mxu0
        %v8370 = vpop.f32.mrf.mxu0
        %v8371 = vadd.f32 %v8210, %v8370
        %v8372 = vpop.f32.mrf.mxu0
        %8373 = vmatprep.mubr.bf16.mxu0 %v7158
        %8374 = vmatmul.mubr.bf16.gmra.mxu0 %v7157
        %v8375 = vpop.f32.mrf.mxu0
        %v8376 = vadd.f32 %v8215, %v8375
        %v8377 = vpop.f32.mrf.mxu0
        %v8378 = vpop.f32.mrf.mxu0
        %v8379 = vadd.f32 %v8218, %v8378
        %v8380 = vpop.f32.mrf.mxu0
        %8381 = vmatprep.mubr.bf16.mxu0 %v7167
        %8382 = vmatmul.mubr.bf16.gmra.mxu0 %v7166
        %v8383 = vpop.f32.mrf.mxu0
        %v8384 = vadd.f32 %v8223, %v8383
        %v8385 = vpop.f32.mrf.mxu0
        %v8386 = vpop.f32.mrf.mxu0
        %v8387 = vadd.f32 %v8226, %v8386
        %v8388 = vpop.f32.mrf.mxu0
        %8389 = vmatprep.mubr.bf16.mxu0 %v7176
        %8390 = vmatmul.mubr.bf16.gmra.mxu0 %v7175
        %v8391 = vpop.f32.mrf.mxu0
        %v8392 = vadd.f32 %v8231, %v8391
        %v8393 = vpop.f32.mrf.mxu0
        %v8394 = vpop.f32.mrf.mxu0
        %v8395 = vadd.f32 %v8234, %v8394
        %v8396 = vpop.f32.mrf.mxu0
        %8397 = vdwg.mxu0
        %8398 = vmatprep.subr.bf16.mxu0 0
        %8399 = vmatpush1.bf16.msra.mxu0 %v7681
        %8400 = vmatprep.subr.bf16.mxu0 0
        %8401 = vmatpush1.bf16.msra.mxu0 %v7680
        %8402 = vmatprep.subr.bf16.mxu0 0
        %8403 = vmatpush1.bf16.msra.mxu0 %v7679
        %8404 = vmatprep.subr.bf16.mxu0 0
        %8405 = vmatpush1.bf16.msra.mxu0 %v7678
        %8406 = vmatprep.subr.bf16.mxu0 0
        %8407 = vmatpush1.bf16.msra.mxu0 %v7677
        %8408 = vmatprep.subr.bf16.mxu0 0
        %8409 = vmatpush1.bf16.msra.mxu0 %v7676
        %8410 = vmatprep.subr.bf16.mxu0 0
        %8411 = vmatpush1.bf16.msra.mxu0 %v7675
        %8412 = vmatprep.subr.bf16.mxu0 0
        %8413 = vmatpush1.bf16.msra.mxu0 %v7674
        %8414 = vmatprep.subr.bf16.mxu0 0
        %8415 = vmatpush2.bf16.msra.mxu0 0
        %8416 = vmatprep.subr.bf16.mxu0 0
        %8417 = vmatpush2.bf16.msra.mxu0 0
        %8418 = vmatprep.subr.bf16.mxu0 0
        %8419 = vmatpush2.bf16.msra.mxu0 0
        %8420 = vmatprep.subr.bf16.mxu0 0
        %8421 = vmatpush2.bf16.msra.mxu0 0
        %8422 = vmatprep.subr.bf16.mxu0 0
        %8423 = vmatpush2.bf16.msra.mxu0 0
        %8424 = vmatprep.subr.bf16.mxu0 0
        %8425 = vmatpush2.bf16.msra.mxu0 0
        %8426 = vmatprep.subr.bf16.mxu0 0
        %8427 = vmatpush2.bf16.msra.mxu0 0
        %8428 = vmatprep.subr.bf16.mxu0 0
        %8429 = vmatpush2.bf16.msra.mxu0 0
        %8430 = vmatprep.mubr.bf16.mxu0 0
        %8431 = vmatmul.mubr.bf16.gmra.mxu0 %v7042
        %v8432 = vpop.f32.mrf.mxu0
        %v8433 = vadd.f32 %v8272, %v8432
        %v8434 = vpop.f32.mrf.mxu0
        %v8435 = vpop.f32.mrf.mxu0
        %v8436 = vadd.f32 %v8275, %v8435
        %v8437 = vpop.f32.mrf.mxu0
        %8438 = vmatprep.mubr.bf16.mxu0 0
        %8439 = vmatmul.mubr.bf16.gmra.mxu0 %v7051
        %v8440 = vpop.f32.mrf.mxu0
        %v8441 = vadd.f32 %v8280, %v8440
        %v8442 = vpop.f32.mrf.mxu0
        %v8443 = vpop.f32.mrf.mxu0
        %v8444 = vadd.f32 %v8283, %v8443
        %v8445 = vpop.f32.mrf.mxu0
        %8446 = vmatprep.mubr.bf16.mxu0 0
        %8447 = vmatmul.mubr.bf16.gmra.mxu0 %v7060
        %v8448 = vpop.f32.mrf.mxu0
        %v8449 = vadd.f32 %v8288, %v8448
        %v8450 = vpop.f32.mrf.mxu0
        %v8451 = vpop.f32.mrf.mxu0
        %v8452 = vadd.f32 %v8291, %v8451
        %v8453 = vpop.f32.mrf.mxu0
        %8454 = vmatprep.mubr.bf16.mxu0 0
        %8455 = vmatmul.mubr.bf16.gmra.mxu0 %v7069
        %v8456 = vpop.f32.mrf.mxu0
        %v8457 = vadd.f32 %v8296, %v8456
        %v8458 = vpop.f32.mrf.mxu0
        %v8459 = vpop.f32.mrf.mxu0
        %v8460 = vadd.f32 %v8299, %v8459
        %v8461 = vpop.f32.mrf.mxu0
        %8462 = vmatprep.mubr.bf16.mxu0 0
        %8463 = vmatmul.mubr.bf16.gmra.mxu0 %v7078
        %v8464 = vpop.f32.mrf.mxu0
        %v8465 = vadd.f32 %v8304, %v8464
        %v8466 = vpop.f32.mrf.mxu0
        %v8467 = vpop.f32.mrf.mxu0
        %v8468 = vadd.f32 %v8307, %v8467
        %v8469 = vpop.f32.mrf.mxu0
        %8470 = vmatprep.mubr.bf16.mxu0 0
        %8471 = vmatmul.mubr.bf16.gmra.mxu0 %v7087
        %v8472 = vpop.f32.mrf.mxu0
        %v8473 = vadd.f32 %v8312, %v8472
        %v8474 = vpop.f32.mrf.mxu0
        %v8475 = vpop.f32.mrf.mxu0
        %v8476 = vadd.f32 %v8315, %v8475
        %v8477 = vpop.f32.mrf.mxu0
        %8478 = vmatprep.mubr.bf16.mxu0 0
        %8479 = vmatmul.mubr.bf16.gmra.mxu0 %v7096
        %v8480 = vpop.f32.mrf.mxu0
        %v8481 = vadd.f32 %v8320, %v8480
        %v8482 = vpop.f32.mrf.mxu0
        %v8483 = vpop.f32.mrf.mxu0
        %v8484 = vadd.f32 %v8323, %v8483
        %v8485 = vpop.f32.mrf.mxu0
        %8486 = vmatprep.mubr.bf16.mxu0 0
        %8487 = vmatmul.mubr.bf16.gmra.mxu0 %v7105
        %v8488 = vpop.f32.mrf.mxu0
        %v8489 = vadd.f32 %v8328, %v8488
        %v8490 = vpop.f32.mrf.mxu0
        %v8491 = vpop.f32.mrf.mxu0
        %v8492 = vadd.f32 %v8331, %v8491
        %v8493 = vpop.f32.mrf.mxu0
        %8494 = vmatprep.mubr.bf16.mxu0 0
        %8495 = vmatmul.mubr.bf16.gmra.mxu0 %v7114
        %v8496 = vpop.f32.mrf.mxu0
        %v8497 = vadd.f32 %v8336, %v8496
        %v8498 = vpop.f32.mrf.mxu0
        %v8499 = vpop.f32.mrf.mxu0
        %v8500 = vadd.f32 %v8339, %v8499
        %v8501 = vpop.f32.mrf.mxu0
        %8502 = vmatprep.mubr.bf16.mxu0 0
        %8503 = vmatmul.mubr.bf16.gmra.mxu0 %v7123
        %v8504 = vpop.f32.mrf.mxu0
        %v8505 = vadd.f32 %v8344, %v8504
        %v8506 = vpop.f32.mrf.mxu0
        %v8507 = vpop.f32.mrf.mxu0
        %v8508 = vadd.f32 %v8347, %v8507
        %v8509 = vpop.f32.mrf.mxu0
        %8510 = vmatprep.mubr.bf16.mxu0 0
        %8511 = vmatmul.mubr.bf16.gmra.mxu0 %v7132
        %v8512 = vpop.f32.mrf.mxu0
        %v8513 = vadd.f32 %v8352, %v8512
        %v8514 = vpop.f32.mrf.mxu0
        %v8515 = vpop.f32.mrf.mxu0
        %v8516 = vadd.f32 %v8355, %v8515
        %v8517 = vpop.f32.mrf.mxu0
        %8518 = vmatprep.mubr.bf16.mxu0 0
        %8519 = vmatmul.mubr.bf16.gmra.mxu0 %v7141
        %v8520 = vpop.f32.mrf.mxu0
        %v8521 = vadd.f32 %v8360, %v8520
        %v8522 = vpop.f32.mrf.mxu0
        %v8523 = vpop.f32.mrf.mxu0
        %v8524 = vadd.f32 %v8363, %v8523
        %v8525 = vpop.f32.mrf.mxu0
        %8526 = vmatprep.mubr.bf16.mxu0 0
        %8527 = vmatmul.mubr.bf16.gmra.mxu0 %v7150
        %v8528 = vpop.f32.mrf.mxu0
        %v8529 = vadd.f32 %v8368, %v8528
        %v8530 = vpop.f32.mrf.mxu0
        %v8531 = vpop.f32.mrf.mxu0
        %v8532 = vadd.f32 %v8371, %v8531
        %v8533 = vpop.f32.mrf.mxu0
        %8534 = vmatprep.mubr.bf16.mxu0 0
        %8535 = vmatmul.mubr.bf16.gmra.mxu0 %v7159
        %v8536 = vpop.f32.mrf.mxu0
        %v8537 = vadd.f32 %v8376, %v8536
        %v8538 = vpop.f32.mrf.mxu0
        %v8539 = vpop.f32.mrf.mxu0
        %v8540 = vadd.f32 %v8379, %v8539
        %v8541 = vpop.f32.mrf.mxu0
        %8542 = vmatprep.mubr.bf16.mxu0 0
        %8543 = vmatmul.mubr.bf16.gmra.mxu0 %v7168
        %v8544 = vpop.f32.mrf.mxu0
        %v8545 = vadd.f32 %v8384, %v8544
        %v8546 = vpop.f32.mrf.mxu0
        %v8547 = vpop.f32.mrf.mxu0
        %v8548 = vadd.f32 %v8387, %v8547
        %v8549 = vpop.f32.mrf.mxu0
        %8550 = vmatprep.mubr.bf16.mxu0 0
        %8551 = vmatmul.mubr.bf16.gmra.mxu0 %v7177
        %v8552 = vpop.f32.mrf.mxu0
        %v8553 = vadd.f32 %v8392, %v8552
        %v8554 = vpop.f32.mrf.mxu0
        %v8555 = vpop.f32.mrf.mxu0
        %v8556 = vadd.f32 %v8395, %v8555
        %v8557 = vpop.f32.mrf.mxu0
        %8558 = vdwg.mxu0
        %8559 = vst [vmem:[#allocation4] sm:$0xff] %v8433
        %8560 = vst [vmem:[#allocation4 + $0x8] sm:$0xff] %v8436
        %8561 = vst [vmem:[#allocation4 + $0x10] sm:$0xff] %v8441
        %8562 = vst [vmem:[#allocation4 + $0x18] sm:$0xff] %v8444
        %8563 = vst [vmem:[#allocation4 + $0x20] sm:$0xff] %v8449
        %8564 = vst [vmem:[#allocation4 + $0x28] sm:$0xff] %v8452
        %8565 = vst [vmem:[#allocation4 + $0x30] sm:$0xff] %v8457
        %8566 = vst [vmem:[#allocation4 + $0x38] sm:$0xff] %v8460
        %8567 = vst [vmem:[#allocation4 + $0x40] sm:$0xff] %v8465
        %8568 = vst [vmem:[#allocation4 + $0x48] sm:$0xff] %v8468
        %8569 = vst [vmem:[#allocation4 + $0x50] sm:$0xff] %v8473
        %8570 = vst [vmem:[#allocation4 + $0x58] sm:$0xff] %v8476
        %8571 = vst [vmem:[#allocation4 + $0x60] sm:$0xff] %v8481
        %8572 = vst [vmem:[#allocation4 + $0x68] sm:$0xff] %v8484
        %8573 = vst [vmem:[#allocation4 + $0x70] sm:$0xff] %v8489
        %8574 = vst [vmem:[#allocation4 + $0x78] sm:$0xff] %v8492
        %8575 = vst [vmem:[#allocation4 + $0x80] sm:$0xff] %v8497
        %8576 = vst [vmem:[#allocation4 + $0x88] sm:$0xff] %v8500
        %8577 = vst [vmem:[#allocation4 + $0x90] sm:$0xff] %v8505
        %8578 = vst [vmem:[#allocation4 + $0x98] sm:$0xff] %v8508
        %8579 = vst [vmem:[#allocation4 + $0xa0] sm:$0xff] %v8513
        %8580 = vst [vmem:[#allocation4 + $0xa8] sm:$0xff] %v8516
        %8581 = vst [vmem:[#allocation4 + $0xb0] sm:$0xff] %v8521
        %8582 = vst [vmem:[#allocation4 + $0xb8] sm:$0xff] %v8524
        %8583 = vst [vmem:[#allocation4 + $0xc0] sm:$0xff] %v8529
        %8584 = vst [vmem:[#allocation4 + $0xc8] sm:$0xff] %v8532
        %8585 = vst [vmem:[#allocation4 + $0xd0] sm:$0xff] %v8537
        %8586 = vst [vmem:[#allocation4 + $0xd8] sm:$0xff] %v8540
        %8587 = vst [vmem:[#allocation4 + $0xe0] sm:$0xff] %v8545
        %8588 = vst [vmem:[#allocation4 + $0xe8] sm:$0xff] %v8548
        %8589 = vst [vmem:[#allocation4 + $0xf0] sm:$0xff] %v8553
        %8590 = vst [vmem:[#allocation4 + $0xf8] sm:$0xff] %v8556
        %v8591 = vld [vmem:[#allocation4] sm:$0xff]
        %v8592 = vld [vmem:[#allocation4 + $0x8] sm:$0xff]
        %v8593 = vld [vmem:[#allocation4 + $0x10] sm:$0xff]
        %v8594 = vld [vmem:[#allocation4 + $0x18] sm:$0xff]
        %v8595 = vld [vmem:[#allocation4 + $0x20] sm:$0xff]
        %v8596 = vld [vmem:[#allocation4 + $0x28] sm:$0xff]
        %v8597 = vld [vmem:[#allocation4 + $0x30] sm:$0xff]
        %v8598 = vld [vmem:[#allocation4 + $0x38] sm:$0xff]
        %v8599 = vld [vmem:[#allocation4 + $0x40] sm:$0xff]
        %v8600 = vld [vmem:[#allocation4 + $0x48] sm:$0xff]
        %v8601 = vld [vmem:[#allocation4 + $0x50] sm:$0xff]
        %v8602 = vld [vmem:[#allocation4 + $0x58] sm:$0xff]
        %v8603 = vld [vmem:[#allocation4 + $0x60] sm:$0xff]
        %v8604 = vld [vmem:[#allocation4 + $0x68] sm:$0xff]
        %v8605 = vld [vmem:[#allocation4 + $0x70] sm:$0xff]
        %v8606 = vld [vmem:[#allocation4 + $0x78] sm:$0xff]
        %v8607 = vld [vmem:[#allocation4 + $0x80] sm:$0xff]
        %v8608 = vld [vmem:[#allocation4 + $0x88] sm:$0xff]
        %v8609 = vld [vmem:[#allocation4 + $0x90] sm:$0xff]
        %v8610 = vld [vmem:[#allocation4 + $0x98] sm:$0xff]
        %v8611 = vld [vmem:[#allocation4 + $0xa0] sm:$0xff]
        %v8612 = vld [vmem:[#allocation4 + $0xa8] sm:$0xff]
        %v8613 = vld [vmem:[#allocation4 + $0xb0] sm:$0xff]
        %v8614 = vld [vmem:[#allocation4 + $0xb8] sm:$0xff]
        %v8615 = vld [vmem:[#allocation4 + $0xc0] sm:$0xff]
        %v8616 = vld [vmem:[#allocation4 + $0xc8] sm:$0xff]
        %v8617 = vld [vmem:[#allocation4 + $0xd0] sm:$0xff]
        %v8618 = vld [vmem:[#allocation4 + $0xd8] sm:$0xff]
        %v8619 = vld [vmem:[#allocation4 + $0xe0] sm:$0xff]
        %v8620 = vld [vmem:[#allocation4 + $0xe8] sm:$0xff]
        %v8621 = vld [vmem:[#allocation4 + $0xf0] sm:$0xff]
        %v8622 = vld [vmem:[#allocation4 + $0xf8] sm:$0xff]
        %v8623 = vld [vmem:[%s4] sm:$0x1]
        %v8625 = vlaneseq
        %v8626 = vshrl.u32 %v8625, 7
        %v8627 = vsub.s32 0, %v8626
        %v8628 = vrot.slane %v8623, %v8627
        %v8630 = vadd.f32 %v8591, %v8628
        %v8631 = vadd.f32 %v8592, %v8628
        %v8632 = vadd.f32 %v8593, %v8628
        %v8633 = vadd.f32 %v8594, %v8628
        %v8634 = vadd.f32 %v8595, %v8628
        %v8635 = vadd.f32 %v8596, %v8628
        %v8636 = vadd.f32 %v8597, %v8628
        %v8637 = vadd.f32 %v8598, %v8628
        %v8638 = vadd.f32 %v8599, %v8628
        %v8639 = vadd.f32 %v8600, %v8628
        %v8640 = vadd.f32 %v8601, %v8628
        %v8641 = vadd.f32 %v8602, %v8628
        %v8642 = vadd.f32 %v8603, %v8628
        %v8643 = vadd.f32 %v8604, %v8628
        %v8644 = vadd.f32 %v8605, %v8628
        %v8645 = vadd.f32 %v8606, %v8628
        %v8646 = vadd.f32 %v8607, %v8628
        %v8647 = vadd.f32 %v8608, %v8628
        %v8648 = vadd.f32 %v8609, %v8628
        %v8649 = vadd.f32 %v8610, %v8628
        %v8650 = vadd.f32 %v8611, %v8628
        %v8651 = vadd.f32 %v8612, %v8628
        %v8652 = vadd.f32 %v8613, %v8628
        %v8653 = vadd.f32 %v8614, %v8628
        %v8654 = vadd.f32 %v8615, %v8628
        %v8655 = vadd.f32 %v8616, %v8628
        %v8656 = vadd.f32 %v8617, %v8628
        %v8657 = vadd.f32 %v8618, %v8628
        %v8658 = vadd.f32 %v8619, %v8628
        %v8659 = vadd.f32 %v8620, %v8628
        %v8660 = vadd.f32 %v8621, %v8628
        %v8661 = vadd.f32 %v8622, %v8628
        %v8662 = vld [vmem:[%s237] sm:$0xff]
        %v8663 = vld [vmem:[%s237 + $0x8] sm:$0xff]
        %v8664 = vld [vmem:[%s237 + $0x10] sm:$0xff]
        %v8665 = vld [vmem:[%s237 + $0x18] sm:$0xff]
        %v8666 = vld [vmem:[%s237 + $0x20] sm:$0xff]
        %v8667 = vld [vmem:[%s237 + $0x28] sm:$0xff]
        %v8668 = vld [vmem:[%s237 + $0x30] sm:$0xff]
        %v8669 = vld [vmem:[%s237 + $0x38] sm:$0xff]
        %v8670 = vld [vmem:[%s237 + $0x40] sm:$0xff]
        %v8671 = vld [vmem:[%s237 + $0x48] sm:$0xff]
        %v8672 = vld [vmem:[%s237 + $0x50] sm:$0xff]
        %v8673 = vld [vmem:[%s237 + $0x58] sm:$0xff]
        %v8674 = vld [vmem:[%s237 + $0x60] sm:$0xff]
        %v8675 = vld [vmem:[%s237 + $0x68] sm:$0xff]
        %v8676 = vld [vmem:[%s237 + $0x70] sm:$0xff]
        %v8677 = vld [vmem:[%s237 + $0x78] sm:$0xff]
        %v8678 = vld [vmem:[%s237 + $0x80] sm:$0xff]
        %v8679 = vld [vmem:[%s237 + $0x88] sm:$0xff]
        %v8680 = vld [vmem:[%s237 + $0x90] sm:$0xff]
        %v8681 = vld [vmem:[%s237 + $0x98] sm:$0xff]
        %v8682 = vld [vmem:[%s237 + $0xa0] sm:$0xff]
        %v8683 = vld [vmem:[%s237 + $0xa8] sm:$0xff]
        %v8684 = vld [vmem:[%s237 + $0xb0] sm:$0xff]
        %v8685 = vld [vmem:[%s237 + $0xb8] sm:$0xff]
        %v8686 = vld [vmem:[%s237 + $0xc0] sm:$0xff]
        %v8687 = vld [vmem:[%s237 + $0xc8] sm:$0xff]
        %v8688 = vld [vmem:[%s237 + $0xd0] sm:$0xff]
        %v8689 = vld [vmem:[%s237 + $0xd8] sm:$0xff]
        %v8690 = vld [vmem:[%s237 + $0xe0] sm:$0xff]
        %v8691 = vld [vmem:[%s237 + $0xe8] sm:$0xff]
        %v8692 = vld [vmem:[%s237 + $0xf0] sm:$0xff]
        %v8693 = vld [vmem:[%s237 + $0xf8] sm:$0xff]
        %v8694 = vadd.f32 %v8630, %v8662
        %v8695 = vadd.f32 %v8631, %v8663
        %v8696 = vadd.f32 %v8632, %v8664
        %v8697 = vadd.f32 %v8633, %v8665
        %v8698 = vadd.f32 %v8634, %v8666
        %v8699 = vadd.f32 %v8635, %v8667
        %v8700 = vadd.f32 %v8636, %v8668
        %v8701 = vadd.f32 %v8637, %v8669
        %v8702 = vadd.f32 %v8638, %v8670
        %v8703 = vadd.f32 %v8639, %v8671
        %v8704 = vadd.f32 %v8640, %v8672
        %v8705 = vadd.f32 %v8641, %v8673
        %v8706 = vadd.f32 %v8642, %v8674
        %v8707 = vadd.f32 %v8643, %v8675
        %v8708 = vadd.f32 %v8644, %v8676
        %v8709 = vadd.f32 %v8645, %v8677
        %v8710 = vadd.f32 %v8646, %v8678
        %v8711 = vadd.f32 %v8647, %v8679
        %v8712 = vadd.f32 %v8648, %v8680
        %v8713 = vadd.f32 %v8649, %v8681
        %v8714 = vadd.f32 %v8650, %v8682
        %v8715 = vadd.f32 %v8651, %v8683
        %v8716 = vadd.f32 %v8652, %v8684
        %v8717 = vadd.f32 %v8653, %v8685
        %v8718 = vadd.f32 %v8654, %v8686
        %v8719 = vadd.f32 %v8655, %v8687
        %v8720 = vadd.f32 %v8656, %v8688
        %v8721 = vadd.f32 %v8657, %v8689
        %v8722 = vadd.f32 %v8658, %v8690
        %v8723 = vadd.f32 %v8659, %v8691
        %v8724 = vadd.f32 %v8660, %v8692
        %v8725 = vadd.f32 %v8661, %v8693
        %v8726 = vmax.f32 %v8694, 0.0
        %v8727 = vmax.f32 %v8695, 0.0
        %v8728 = vmax.f32 %v8696, 0.0
        %v8729 = vmax.f32 %v8697, 0.0
        %v8730 = vmax.f32 %v8698, 0.0
        %v8731 = vmax.f32 %v8699, 0.0
        %v8732 = vmax.f32 %v8700, 0.0
        %v8733 = vmax.f32 %v8701, 0.0
        %v8734 = vmax.f32 %v8702, 0.0
        %v8735 = vmax.f32 %v8703, 0.0
        %v8736 = vmax.f32 %v8704, 0.0
        %v8737 = vmax.f32 %v8705, 0.0
        %v8738 = vmax.f32 %v8706, 0.0
        %v8739 = vmax.f32 %v8707, 0.0
        %v8740 = vmax.f32 %v8708, 0.0
        %v8741 = vmax.f32 %v8709, 0.0
        %v8742 = vmax.f32 %v8710, 0.0
        %v8743 = vmax.f32 %v8711, 0.0
        %v8744 = vmax.f32 %v8712, 0.0
        %v8745 = vmax.f32 %v8713, 0.0
        %v8746 = vmax.f32 %v8714, 0.0
        %v8747 = vmax.f32 %v8715, 0.0
        %v8748 = vmax.f32 %v8716, 0.0
        %v8749 = vmax.f32 %v8717, 0.0
        %v8750 = vmax.f32 %v8718, 0.0
        %v8751 = vmax.f32 %v8719, 0.0
        %v8752 = vmax.f32 %v8720, 0.0
        %v8753 = vmax.f32 %v8721, 0.0
        %v8754 = vmax.f32 %v8722, 0.0
        %v8755 = vmax.f32 %v8723, 0.0
        %v8756 = vmax.f32 %v8724, 0.0
        %v8757 = vmax.f32 %v8725, 0.0
        %8758 = vst [vmem:[%s271] sm:$0xff] %v8726
        %8759 = vst [vmem:[%s271 + $0x8] sm:$0xff] %v8727
        %8760 = vst [vmem:[%s271 + $0x10] sm:$0xff] %v8728
        %8761 = vst [vmem:[%s271 + $0x18] sm:$0xff] %v8729
        %8762 = vst [vmem:[%s271 + $0x20] sm:$0xff] %v8730
        %8763 = vst [vmem:[%s271 + $0x28] sm:$0xff] %v8731
        %8764 = vst [vmem:[%s271 + $0x30] sm:$0xff] %v8732
        %8765 = vst [vmem:[%s271 + $0x38] sm:$0xff] %v8733
        %8766 = vst [vmem:[%s271 + $0x40] sm:$0xff] %v8734
        %8767 = vst [vmem:[%s271 + $0x48] sm:$0xff] %v8735
        %8768 = vst [vmem:[%s271 + $0x50] sm:$0xff] %v8736
        %8769 = vst [vmem:[%s271 + $0x58] sm:$0xff] %v8737
        %8770 = vst [vmem:[%s271 + $0x60] sm:$0xff] %v8738
        %8771 = vst [vmem:[%s271 + $0x68] sm:$0xff] %v8739
        %8772 = vst [vmem:[%s271 + $0x70] sm:$0xff] %v8740
        %8773 = vst [vmem:[%s271 + $0x78] sm:$0xff] %v8741
        %8774 = vst [vmem:[%s271 + $0x80] sm:$0xff] %v8742
        %8775 = vst [vmem:[%s271 + $0x88] sm:$0xff] %v8743
        %8776 = vst [vmem:[%s271 + $0x90] sm:$0xff] %v8744
        %8777 = vst [vmem:[%s271 + $0x98] sm:$0xff] %v8745
        %8778 = vst [vmem:[%s271 + $0xa0] sm:$0xff] %v8746
        %8779 = vst [vmem:[%s271 + $0xa8] sm:$0xff] %v8747
        %8780 = vst [vmem:[%s271 + $0xb0] sm:$0xff] %v8748
        %8781 = vst [vmem:[%s271 + $0xb8] sm:$0xff] %v8749
        %8782 = vst [vmem:[%s271 + $0xc0] sm:$0xff] %v8750
        %8783 = vst [vmem:[%s271 + $0xc8] sm:$0xff] %v8751
        %8784 = vst [vmem:[%s271 + $0xd0] sm:$0xff] %v8752
        %8785 = vst [vmem:[%s271 + $0xd8] sm:$0xff] %v8753
        %8786 = vst [vmem:[%s271 + $0xe0] sm:$0xff] %v8754
        %8787 = vst [vmem:[%s271 + $0xe8] sm:$0xff] %v8755
        %8788 = vst [vmem:[%s271 + $0xf0] sm:$0xff] %v8756
        %8789 = vst [vmem:[%s271 + $0xf8] sm:$0xff] %v8757
        %s8790 = sand.u32 %s141, 1
        %s8791 = scalar_lea.sflag [#allocation7], %s8790
        %s8792 = sand.u32 %s141, 1
        %s8793 = smul.addr %s8792, 256
        %s8794 = scalar_lea.vmem [#allocation11], %s8793
        // Predicated region
        $region53: #{tpu_custom_call.1} parent=39 // pred_check
          %p8795 = pneg %p151
        $region54: #{tpu_custom_call.1} parent=39 // pred_check_branch
          %8797 = sbr.rel (%p8795) target = $region56
        $region55: #{tpu_custom_call.1} parent=39 // pred_region
          %s8799 = ssub.s32 4096, 4096
          %8800 = vsyncadd %s8791, %s8799
          %s8801 = smul.addr %s23, 32
          %s8802 = smul.addr %s8801, 128
          %s8803 = scalar_lea.hbm %s5, %s8802
          %s8804 = sshll.u32 %s8794, 4
          %s8805 = int_to_ptr.vmem [resolvable:$true] %s8804
          %8810 = dma.vmem_to_hbm [thread:$0]  %s8805, 4096, %s8803, %s8791, 128, 128, 8
        $region56: #{tpu_custom_call.1} parent=39 // pred_fallthru
          _
      $region40: #{tpu_custom_call.1} parent=5 // pred_fallthru
        _
      %p8811 = scmp.le.s32.totalorder 2, %s18
      // Predicated region
      $region57: #{tpu_custom_call.1} parent=5 // pred_check
        %p8812 = pneg %p8811
      $region58: #{tpu_custom_call.1} parent=5 // pred_check_branch
        %8814 = sbr.rel (%p8812) target = $region60
      $region59: #{tpu_custom_call.1} parent=5 // pred_region
        %s8815 = ssub.s32 %s18, 2
        // Predicated region
        $region61: #{tpu_custom_call.1} parent=59 // pred_check
          %p8816 = pneg %p157
        $region62: #{tpu_custom_call.1} parent=59 // pred_check_branch
          %8818 = sbr.rel (%p8816) target = $region64
        $region63: #{tpu_custom_call.1} parent=59 // pred_region
          %s8819 = sand.u32 %s142, 1
          %s8820 = scalar_lea.sflag [#allocation7], %s8819
          %s8821 = sand.u32 %s142, 1
          %s8822 = smul.addr %s8821, 256
          %s8823 = scalar_lea.vmem [#allocation11], %s8822
          %8824 = dma.done %s8820, 4096
        $region64: #{tpu_custom_call.1} parent=59 // pred_fallthru
          _
      $region60: #{tpu_custom_call.1} parent=5 // pred_fallthru
        _
    $region6: #{tpu_custom_call.1} parent=1 // loop_footer
      %s22 = sadd.s32 1, %s18
    $region7: #{tpu_custom_call.1} parent=1 // loop_footer_branch
      %17 = sbr.rel target = $region3
    $region8: #{tpu_custom_call.1} parent=1 // loop_exit
      _
    %8825 = vsyncpa [#allocation6], 1
    %s8826 = scalar_lea.sflag [#allocation6], 1
    %8827 = vsyncpa %s8826, 1
    %8828 = vsyncpa [#allocation9], 1
    %8829 = vsyncpa [#allocation7], 1
    %s8830 = scalar_lea.sflag [#allocation7], 1
    %8831 = vsyncpa %s8830, 1

</llo_original>
